<compile_context>
chip_gen: v5e
topology: v5e:2x2
jax: 0.10.0
libtpu: 0.0.40
codegen_flags: <defaults>
</compile_context>

<pallas_src>
import math
import jax
import jax.numpy as jnp
from jax.experimental import pallas as pl
from jax.experimental.pallas import tpu as pltpu


# ---------------------------------------------------------------------------
# Pallas kernel: fused two-head pose decoder MLP on pooled features
# ---------------------------------------------------------------------------
def pose_decoder_kernel(pooled_ref,
                        w1_ref, b1_ref, w2_ref, b2_ref, w3_ref, b3_ref,
                        out_ref):
    # pooled_ref: [B, C] float32 (already adaptive-avg-pooled + flattened).
    pooled = pooled_ref[...].astype(jnp.bfloat16)                      # [B, C]

    # Layer 1 (both heads concatenated): [C, 1024] bf16 weights, f32 accumulate.
    h1 = jnp.dot(pooled, w1_ref[...],
                 preferred_element_type=jnp.float32) + b1_ref[...]      # [B, 1024]
    h1 = jnp.maximum(h1, 0.0).astype(jnp.bfloat16)                      # ReLU

    # Layer 2 (block-diagonal over the two heads): [1024, 256].
    h2 = jnp.dot(h1, w2_ref[...],
                 preferred_element_type=jnp.float32) + b2_ref[...]      # [B, 256]
    h2 = jnp.maximum(h2, 0.0).astype(jnp.bfloat16)                      # ReLU

    # Layer 3 (block-diagonal): [256, 2] -> column 0 = height, column 1 = angle.
    y = jnp.dot(h2, w3_ref[...],
                preferred_element_type=jnp.float32) + b3_ref[...]       # [B, 2]

    # camera_angle = pi/2 * sigmoid(angle_logit); camera_height is raw.
    col = jax.lax.broadcasted_iota(jnp.int32, y.shape, 1)
    out_ref[...] = jnp.where(col == 0, y,
                             (math.pi / 2.0) * jax.nn.sigmoid(y))


# ---------------------------------------------------------------------------
# Wrapper
# ---------------------------------------------------------------------------
def posenet_forward(feat_nchw, fused):
    """feat_nchw: [B, C, H, W] encoder features (PyTorch NCHW convention).
    fused: pre-fused bf16 decoder weights (see fuse_params)."""
    B = feat_nchw.shape[0]
    # AdaptiveAvgPool2d((1,1)) + Flatten, done outside the kernel: [B, C].
    pooled = jnp.mean(feat_nchw.astype(jnp.float32), axis=(2, 3))

    vmem = pl.BlockSpec(memory_space=pltpu.MemorySpace.VMEM)

    out = pl.pallas_call(
        pose_decoder_kernel,
        out_shape=jax.ShapeDtypeStruct((B, 2), jnp.float32),
        in_specs=[vmem] * 7,
        out_specs=vmem,
    )(pooled, fused["w1"], fused["b1"], fused["w2"], fused["b2"],
      fused["w3"], fused["b3"])

    # torch: .flatten() on a [B, 1] tensor -> [B]
    return dict(camera_height=out[:, 0], camera_angle=out[:, 1])


# ---------------------------------------------------------------------------
# Parameter init (shapes match PoseDecoder._make_fc defaults) + head fusion
# ---------------------------------------------------------------------------
def init_params(key, in_channels):
    dims = [(in_channels, 512), (512, 128), (128, 1)]
    params = {}
    keys = jax.random.split(key, 12)
    ki = 0
    for head in ("h", "a"):
        for li, (fan_in, fan_out) in enumerate(dims, start=1):
            bound = 1.0 / math.sqrt(fan_in)
            w = jax.random.uniform(keys[ki], (fan_in, fan_out),
                                   jnp.float32, -bound, bound)
            ki += 1
            b = jax.random.uniform(keys[ki], (1, fan_out),
                                   jnp.float32, -bound, bound)
            ki += 1
            params[f"w{li}{head}"] = w
            params[f"b{li}{head}"] = b
    return params


def fuse_params(params, weight_dtype=jnp.bfloat16):
    """Fuse the two per-head MLPs into one (concat / block-diagonal) and cast
    weights to bf16. Done once, offline w.r.t. the kernel."""
    d1 = params["w1h"].shape[1]   # 512
    d2 = params["w2h"].shape[1]   # 128

    w1 = jnp.concatenate([params["w1h"], params["w1a"]], axis=1)        # [C, 1024]
    b1 = jnp.concatenate([params["b1h"], params["b1a"]], axis=1)        # [1, 1024]

    w2 = jnp.zeros((2 * d1, 2 * d2), jnp.float32)                       # [1024, 256]
    w2 = w2.at[:d1, :d2].set(params["w2h"]).at[d1:, d2:].set(params["w2a"])
    b2 = jnp.concatenate([params["b2h"], params["b2a"]], axis=1)        # [1, 256]

    w3 = jnp.zeros((2 * d2, 2), jnp.float32)                            # [256, 2]
    w3 = w3.at[:d2, 0:1].set(params["w3h"]).at[d2:, 1:2].set(params["w3a"])
    b3 = jnp.concatenate([params["b3h"], params["b3a"]], axis=1)        # [1, 2]

    return dict(w1=w1.astype(weight_dtype), b1=b1.astype(jnp.float32),
                w2=w2.astype(weight_dtype), b2=b2.astype(jnp.float32),
                w3=w3.astype(weight_dtype), b3=b3.astype(jnp.float32))


# ---------------------------------------------------------------------------
# References for correctness checks
# ---------------------------------------------------------------------------
def posenet_ref_fused(feat_nchw, fused):
    """Mirrors the kernel math (bf16 weights/activations, f32 accumulate)."""
    pooled = jnp.mean(feat_nchw.astype(jnp.float32), axis=(2, 3)).astype(jnp.bfloat16)
    h1 = jnp.maximum(jnp.dot(pooled, fused["w1"],
                             preferred_element_type=jnp.float32) + fused["b1"], 0.0)
    h2 = jnp.maximum(jnp.dot(h1.astype(jnp.bfloat16), fused["w2"],
                             preferred_element_type=jnp.float32) + fused["b2"], 0.0)
    y = jnp.dot(h2.astype(jnp.bfloat16), fused["w3"],
                preferred_element_type=jnp.float32) + fused["b3"]
    return dict(camera_height=y[:, 0],
                camera_angle=(math.pi / 2.0) * jax.nn.sigmoid(y[:, 1]))


def posenet_ref_f32(feat_nchw, params):
    """Original full-f32 PoseDecoder math (torch eval-mode semantics)."""
    B, C, H, W = feat_nchw.shape
    pooled = jnp.mean(feat_nchw.reshape(B, C, H * W), axis=2)  # [B, C]

    def head(tag):
        h = jnp.maximum(pooled @ params[f"w1{tag}"] + params[f"b1{tag}"], 0.0)
        h = jnp.maximum(h @ params[f"w2{tag}"] + params[f"b2{tag}"], 0.0)
        return h @ params[f"w3{tag}"] + params[f"b3{tag}"]

    return dict(camera_height=head("h").reshape(-1),
                camera_angle=(math.pi / 2.0) * jax.nn.sigmoid(head("a")).reshape(-1))


if __name__ == "__main__":
    key = jax.random.PRNGKey(0)
    k_feat, k_param = jax.random.split(key)

    # Small encoder-output feature map consistent with PoseDecoder defaults:
    # resnet branch -> in_channels=2048, avgpool_size=(1,1). Batch=2, spatial 4x4.
    B, C, H, W = 2, 2048, 4, 4
    feat = jax.random.normal(k_feat, (B, C, H, W), jnp.float32)
    params = init_params(k_param, C)
    fused = fuse_params(params)

    out = posenet_forward(feat, fused)
    out = jax.tree_util.tree_map(jax.block_until_ready, out)

    assert out["camera_height"].shape == (B,)
    assert out["camera_angle"].shape == (B,)

    # Check 1: matches a JAX reference with identical bf16 math (tight).
    ref_bf16 = posenet_ref_fused(feat, fused)
    assert jnp.allclose(out["camera_height"], ref_bf16["camera_height"],
                        atol=1e-3, rtol=1e-3)
    assert jnp.allclose(out["camera_angle"], ref_bf16["camera_angle"],
                        atol=1e-3, rtol=1e-3)

    # Check 2: close to the original full-f32 module semantics (loose, bf16 weights).
    ref_f32 = posenet_ref_f32(feat, params)
    assert jnp.allclose(out["camera_height"], ref_f32["camera_height"],
                        atol=5e-2, rtol=5e-2)
    assert jnp.allclose(out["camera_angle"], ref_f32["camera_angle"],
                        atol=5e-2, rtol=5e-2)

    print("KERNEL_OK")
</pallas_src>

<mosaic_0001>
module attributes {stable_mosaic.version = 11 : i64} {
  func.func @pose_decoder_kernel(%arg0: memref<2x2048xf32, #tpu.memory_space<vmem>>, %arg1: memref<2048x1024xbf16, #tpu.memory_space<vmem>>, %arg2: memref<1x1024xf32, #tpu.memory_space<vmem>>, %arg3: memref<1024x256xbf16, #tpu.memory_space<vmem>>, %arg4: memref<1x256xf32, #tpu.memory_space<vmem>>, %arg5: memref<256x2xbf16, #tpu.memory_space<vmem>>, %arg6: memref<1x2xf32, #tpu.memory_space<vmem>>, %arg7: memref<2x2xf32, #tpu.memory_space<vmem>>) attributes {dimension_semantics = [], scalar_prefetch = 0 : i64, scratch_operands = 0 : i64, tpu.core_type = #tpu.core_type<tc>} {
    %c0 = arith.constant 0 : index
    %c0_0 = arith.constant 0 : index
    %0 = vector.load %arg0[%c0, %c0_0] : memref<2x2048xf32, #tpu.memory_space<vmem>>, vector<2x2048xf32>
    %1 = arith.truncf %0 : vector<2x2048xf32> to vector<2x2048xbf16>
    %c0_1 = arith.constant 0 : index
    %c0_2 = arith.constant 0 : index
    %2 = vector.load %arg1[%c0_1, %c0_2] : memref<2048x1024xbf16, #tpu.memory_space<vmem>>, vector<2048x1024xbf16>
    %cst = arith.constant dense<0.000000e+00> : vector<2x1024xf32>
    %3 = tpu.matmul %1, %2, %cst {dimension_numbers = #tpu.dot_dimension_numbers<[1], [0], [0], [1], [0, 0, 1, 1], [], []>} : vector<2x2048xbf16>, vector<2048x1024xbf16>, vector<2x1024xf32> -> vector<2x1024xf32>
    %c0_3 = arith.constant 0 : index
    %c0_4 = arith.constant 0 : index
    %4 = vector.load %arg2[%c0_3, %c0_4] : memref<1x1024xf32, #tpu.memory_space<vmem>>, vector<1x1024xf32>
    %5 = vector.broadcast %4 : vector<1x1024xf32> to vector<2x1024xf32>
    %6 = arith.addf %3, %5 : vector<2x1024xf32>
    %cst_5 = arith.constant 0.000000e+00 : f32
    %7 = vector.broadcast %cst_5 : f32 to vector<2x1024xf32>
    %8 = arith.maximumf %6, %7 : vector<2x1024xf32>
    %9 = arith.truncf %8 : vector<2x1024xf32> to vector<2x1024xbf16>
    %c0_6 = arith.constant 0 : index
    %c0_7 = arith.constant 0 : index
    %10 = vector.load %arg3[%c0_6, %c0_7] : memref<1024x256xbf16, #tpu.memory_space<vmem>>, vector<1024x256xbf16>
    %cst_8 = arith.constant dense<0.000000e+00> : vector<2x256xf32>
    %11 = tpu.matmul %9, %10, %cst_8 {dimension_numbers = #tpu.dot_dimension_numbers<[1], [0], [0], [1], [0, 0, 1, 1], [], []>} : vector<2x1024xbf16>, vector<1024x256xbf16>, vector<2x256xf32> -> vector<2x256xf32>
    %c0_9 = arith.constant 0 : index
    %c0_10 = arith.constant 0 : index
    %12 = vector.load %arg4[%c0_9, %c0_10] : memref<1x256xf32, #tpu.memory_space<vmem>>, vector<1x256xf32>
    %13 = vector.broadcast %12 : vector<1x256xf32> to vector<2x256xf32>
    %14 = arith.addf %11, %13 : vector<2x256xf32>
    %cst_11 = arith.constant 0.000000e+00 : f32
    %15 = vector.broadcast %cst_11 : f32 to vector<2x256xf32>
    %16 = arith.maximumf %14, %15 : vector<2x256xf32>
    %17 = arith.truncf %16 : vector<2x256xf32> to vector<2x256xbf16>
    %c0_12 = arith.constant 0 : index
    %c0_13 = arith.constant 0 : index
    %18 = vector.load %arg5[%c0_12, %c0_13] : memref<256x2xbf16, #tpu.memory_space<vmem>>, vector<256x2xbf16>
    %cst_14 = arith.constant dense<0.000000e+00> : vector<2x2xf32>
    %19 = tpu.matmul %17, %18, %cst_14 {dimension_numbers = #tpu.dot_dimension_numbers<[1], [0], [0], [1], [0, 0, 1, 1], [], []>} : vector<2x256xbf16>, vector<256x2xbf16>, vector<2x2xf32> -> vector<2x2xf32>
    %c0_15 = arith.constant 0 : index
    %c0_16 = arith.constant 0 : index
    %20 = vector.load %arg6[%c0_15, %c0_16] : memref<1x2xf32, #tpu.memory_space<vmem>>, vector<1x2xf32>
    %21 = vector.broadcast %20 : vector<1x2xf32> to vector<2x2xf32>
    %22 = arith.addf %19, %21 : vector<2x2xf32>
    %23 = tpu.iota {dimensions = array<i32: 1>} : vector<2x2xi32>
    %c0_i32 = arith.constant 0 : i32
    %24 = vector.broadcast %c0_i32 : i32 to vector<2x2xi32>
    %25 = arith.cmpi eq, %23, %24 : vector<2x2xi32>
    %26 = arith.negf %22 : vector<2x2xf32>
    %27 = math.exp %26 : vector<2x2xf32>
    %cst_17 = arith.constant 1.000000e+00 : f32
    %28 = vector.broadcast %cst_17 : f32 to vector<2x2xf32>
    %29 = arith.addf %28, %27 : vector<2x2xf32>
    %30 = arith.divf %28, %29 : vector<2x2xf32>
    %cst_18 = arith.constant 1.57079637 : f32
    %31 = vector.broadcast %cst_18 : f32 to vector<2x2xf32>
    %32 = arith.mulf %31, %30 : vector<2x2xf32>
    %33 = arith.select %25, %22, %32 : vector<2x2xi1>, vector<2x2xf32>
    %c0_19 = arith.constant 0 : index
    %c0_20 = arith.constant 0 : index
    %34 = vector.load %arg7[%c0_19, %c0_20] : memref<2x2xf32, #tpu.memory_space<vmem>>, vector<2x2xf32>
    tpu.vector_store %arg7[%c0_19, %c0_20], %33 {strides = array<i32>} : memref<2x2xf32, #tpu.memory_space<vmem>>, vector<2x2xf32>,
    return
  }
}

</mosaic_0001>

<llo_original>
// kernel: tpu_custom_call.1
$region0: #{tpu_custom_call.1}
  #allocation0 [shape = 'u32[]', space=smem, size = 0x4, offset = 0x4, fixed_abs, tag = 'smem constant byte address 0x4 - core index']
  #allocation1 [shape = 'u32[72,128]{1,0:T(1,128)}', space=vmem, size = 0x9000, scoped, tag = 'internal scratch']
  %s0 = inlined_call_operand.hbm [shape: f32[2,2048], index: 0, kind: input, shape index: {}]
  %s1 = inlined_call_operand.hbm [shape: bf16[2048,1024], index: 1, kind: input, shape index: {}]
  %s2 = inlined_call_operand.hbm [shape: f32[1,1024], index: 2, kind: input, shape index: {}]
  %s3 = inlined_call_operand.hbm [shape: bf16[1024,256], index: 3, kind: input, shape index: {}]
  %s4 = inlined_call_operand.hbm [shape: f32[1,256], index: 4, kind: input, shape index: {}]
  %s5 = inlined_call_operand.vmem [shape: bf16[256,2], index: 5, kind: input, shape index: {}]
  %s6 = inlined_call_operand.hbm [shape: f32[1,2], index: 6, kind: input, shape index: {}]
  %s7 = inlined_call_operand.hbm [shape: f32[2,2], index: 7, kind: output, shape index: {}]
  %s8 = sld [smem:[#allocation0]]
  $region62: #{tpu_custom_call.1} parent=0
    _
  %s10 = ssub.s32 1, %s8
  %s11 = scalar_select 0, %s10, %s8
  $region1: #{tpu_custom_call.1} parent=0
    #allocation2 [shape = 'u8[16384]{0}', space=vmem, size = 0x4000, scoped, tag = 'input window, operand 0, single buffered']
    #allocation3 [shape = 's32[1]{0}', space=sflag, size = 0x4, scoped, tag = 'scoped memory for tpu_custom_call.1']
    #allocation4 [shape = 's32[1]{0}', space=sflag, size = 0x4, scoped, tag = 'scoped memory for tpu_custom_call.1']
    #allocation5 [shape = 'u8[4194304]{0}', space=vmem, size = 0x400000, scoped, tag = 'input window, operand 1, single buffered']
    #allocation6 [shape = 's32[1]{0}', space=sflag, size = 0x4, scoped, tag = 'scoped memory for tpu_custom_call.1']
    #allocation7 [shape = 'u8[4096]{0}', space=vmem, size = 0x1000, scoped, tag = 'input window, operand 2, single buffered']
    #allocation8 [shape = 'u8[524288]{0}', space=vmem, size = 0x80000, scoped, tag = 'input window, operand 3, single buffered']
    #allocation9 [shape = 's32[1]{0}', space=sflag, size = 0x4, scoped, tag = 'scoped memory for tpu_custom_call.1']
    #allocation10 [shape = 'u8[1024]{0}', space=vmem, size = 0x400, scoped, tag = 'input window, operand 4, single buffered']
    #allocation11 [shape = 'u8[512]{0}', space=vmem, size = 0x400, scoped, tag = 'input window, operand 6, single buffered']
    #allocation12 [shape = 's32[1]{0}', space=sflag, size = 0x4, scoped, tag = 'scoped memory for tpu_custom_call.1']
    #allocation13 [shape = 'u8[1024]{0}', space=vmem, size = 0x400, scoped, tag = 'output window, operand 0, single buffered']
    %12 = vsyncpa [#allocation3], 0
    %13 = vsyncpa [#allocation6], 0
    %14 = vsyncpa [#allocation9], 0
    %15 = vsyncpa [#allocation12], 0
    %16 = vsyncpa [#allocation4], 0
    // Predicated region
    $region2: #{tpu_custom_call.1} parent=1 // pred_check
      _
    $region3: #{tpu_custom_call.1} parent=1 // pred_check_branch
      %18 = sbr.rel (0) target = $region5
    $region4: #{tpu_custom_call.1} parent=1 // pred_region
      %20 = vsyncadd [#allocation3], 0
      %s22 = sshll.u32 %s0, 4
      %s23 = int_to_ptr.hbm [resolvable:$true] %s22
      %s24 = sshll.u32 [#allocation2], 4
      %s25 = int_to_ptr.vmem [resolvable:$true] %s24
      %27 = dma.hbm_to_vmem [thread:$0]  %s23, 512, %s25, [#allocation3]
    $region5: #{tpu_custom_call.1} parent=1 // pred_fallthru
      _
    // Predicated region
    $region6: #{tpu_custom_call.1} parent=1 // pred_check
      _
    $region7: #{tpu_custom_call.1} parent=1 // pred_check_branch
      %29 = sbr.rel (0) target = $region9
    $region8: #{tpu_custom_call.1} parent=1 // pred_region
      %31 = vsyncadd [#allocation6], 0
      %s32 = sshll.u32 %s1, 4
      %s33 = int_to_ptr.hbm [resolvable:$true] %s32
      %s34 = sshll.u32 [#allocation5], 4
      %s35 = int_to_ptr.vmem [resolvable:$true] %s34
      %40 = dma.hbm_to_vmem [thread:$0]  %s33, 131072, %s35, [#allocation6], 512, 512, 32
    $region9: #{tpu_custom_call.1} parent=1 // pred_fallthru
      _
    // Predicated region
    $region10: #{tpu_custom_call.1} parent=1 // pred_check
      _
    $region11: #{tpu_custom_call.1} parent=1 // pred_check_branch
      %42 = sbr.rel (0) target = $region13
    $region12: #{tpu_custom_call.1} parent=1 // pred_region
      %44 = vsyncadd [#allocation6], 0
      %s46 = sshll.u32 %s2, 4
      %s47 = int_to_ptr.hbm [resolvable:$true] %s46
      %s48 = sshll.u32 [#allocation7], 4
      %s49 = int_to_ptr.vmem [resolvable:$true] %s48
      %51 = dma.hbm_to_vmem [thread:$0]  %s47, 128, %s49, [#allocation6]
    $region13: #{tpu_custom_call.1} parent=1 // pred_fallthru
      _
    // Predicated region
    $region14: #{tpu_custom_call.1} parent=1 // pred_check
      _
    $region15: #{tpu_custom_call.1} parent=1 // pred_check_branch
      %53 = sbr.rel (0) target = $region17
    $region16: #{tpu_custom_call.1} parent=1 // pred_region
      %55 = vsyncadd [#allocation9], 0
      %s56 = sshll.u32 %s3, 4
      %s57 = int_to_ptr.hbm [resolvable:$true] %s56
      %s58 = sshll.u32 [#allocation8], 4
      %s59 = int_to_ptr.vmem [resolvable:$true] %s58
      %64 = dma.hbm_to_vmem [thread:$0]  %s57, 16384, %s59, [#allocation9], 128, 128, 8
    $region17: #{tpu_custom_call.1} parent=1 // pred_fallthru
      _
    // Predicated region
    $region18: #{tpu_custom_call.1} parent=1 // pred_check
      _
    $region19: #{tpu_custom_call.1} parent=1 // pred_check_branch
      %66 = sbr.rel (0) target = $region21
    $region20: #{tpu_custom_call.1} parent=1 // pred_region
      %68 = vsyncadd [#allocation9], 0
      %s70 = sshll.u32 %s4, 4
      %s71 = int_to_ptr.hbm [resolvable:$true] %s70
      %s72 = sshll.u32 [#allocation10], 4
      %s73 = int_to_ptr.vmem [resolvable:$true] %s72
      %75 = dma.hbm_to_vmem [thread:$0]  %s71, 32, %s73, [#allocation9]
    $region21: #{tpu_custom_call.1} parent=1 // pred_fallthru
      _
    // Predicated region
    $region22: #{tpu_custom_call.1} parent=1 // pred_check
      _
    $region23: #{tpu_custom_call.1} parent=1 // pred_check_branch
      %77 = sbr.rel (0) target = $region25
    $region24: #{tpu_custom_call.1} parent=1 // pred_region
      _
    $region25: #{tpu_custom_call.1} parent=1 // pred_fallthru
      _
    // Predicated region
    $region26: #{tpu_custom_call.1} parent=1 // pred_check
      _
    $region27: #{tpu_custom_call.1} parent=1 // pred_check_branch
      %79 = sbr.rel (0) target = $region29
    $region28: #{tpu_custom_call.1} parent=1 // pred_region
      %81 = vsyncadd [#allocation12], 0
      %s83 = sshll.u32 %s6, 4
      %s84 = int_to_ptr.hbm [resolvable:$true] %s83
      %s85 = sshll.u32 [#allocation11], 4
      %s86 = int_to_ptr.vmem [resolvable:$true] %s85
      %88 = dma.hbm_to_vmem [thread:$0]  %s84, 16, %s86, [#allocation12]
    $region29: #{tpu_custom_call.1} parent=1 // pred_fallthru
      _
    // Predicated region
    $region30: #{tpu_custom_call.1} parent=1 // pred_check
      _
    $region31: #{tpu_custom_call.1} parent=1 // pred_check_branch
      %90 = sbr.rel (0) target = $region33
    $region32: #{tpu_custom_call.1} parent=1 // pred_region
      %92 = dma.done [#allocation3], 512
    $region33: #{tpu_custom_call.1} parent=1 // pred_fallthru
      _
    // Predicated region
    $region34: #{tpu_custom_call.1} parent=1 // pred_check
      _
    $region35: #{tpu_custom_call.1} parent=1 // pred_check_branch
      %94 = sbr.rel (0) target = $region37
    $region36: #{tpu_custom_call.1} parent=1 // pred_region
      %96 = dma.done [#allocation6], 131072
    $region37: #{tpu_custom_call.1} parent=1 // pred_fallthru
      _
    // Predicated region
    $region38: #{tpu_custom_call.1} parent=1 // pred_check
      _
    $region39: #{tpu_custom_call.1} parent=1 // pred_check_branch
      %98 = sbr.rel (0) target = $region41
    $region40: #{tpu_custom_call.1} parent=1 // pred_region
      %100 = dma.done [#allocation6], 128
    $region41: #{tpu_custom_call.1} parent=1 // pred_fallthru
      _
    // Predicated region
    $region42: #{tpu_custom_call.1} parent=1 // pred_check
      _
    $region43: #{tpu_custom_call.1} parent=1 // pred_check_branch
      %102 = sbr.rel (0) target = $region45
    $region44: #{tpu_custom_call.1} parent=1 // pred_region
      %104 = dma.done [#allocation9], 16384
    $region45: #{tpu_custom_call.1} parent=1 // pred_fallthru
      _
    // Predicated region
    $region46: #{tpu_custom_call.1} parent=1 // pred_check
      _
    $region47: #{tpu_custom_call.1} parent=1 // pred_check_branch
      %106 = sbr.rel (0) target = $region49
    $region48: #{tpu_custom_call.1} parent=1 // pred_region
      %108 = dma.done [#allocation9], 32
    $region49: #{tpu_custom_call.1} parent=1 // pred_fallthru
      _
    // Predicated region
    $region50: #{tpu_custom_call.1} parent=1 // pred_check
      _
    $region51: #{tpu_custom_call.1} parent=1 // pred_check_branch
      %110 = sbr.rel (0) target = $region53
    $region52: #{tpu_custom_call.1} parent=1 // pred_region
      %112 = dma.done [#allocation12], 16
    $region53: #{tpu_custom_call.1} parent=1 // pred_fallthru
      _
    %v113 = vld [vmem:[#allocation2] sm:$0xff]
    %v114 = vld [vmem:[#allocation2 + $0x8] sm:$0xff]
    %v115 = vld [vmem:[#allocation2 + $0x10] sm:$0xff]
    %v116 = vld [vmem:[#allocation2 + $0x18] sm:$0xff]
    %121 = vst [vmem:[#allocation1] ss:$4 sm:$0xff] %v113
    %s122 = scalar_lea.vmem [#allocation1], 32
    %123 = vst [vmem:[%s122] ss:$4 sm:$0xff] %v114
    %v124 = vld.sshfl [vmem:[#allocation1] sm:$0xff pattern:$0x73625140]
    %v125 = vld.sshfl [vmem:[#allocation1 + $0x8] sm:$0xff pattern:$0x73625140]
    %v126 = vld.sshfl [vmem:[#allocation1 + $0x10] sm:$0xff pattern:$0x73625140]
    %v127 = vld.sshfl [vmem:[#allocation1 + $0x18] sm:$0xff pattern:$0x73625140]
    %v128 = vld.sshfl [vmem:[#allocation1 + $0x20] sm:$0xff pattern:$0x73625140]
    %v129 = vld.sshfl [vmem:[#allocation1 + $0x28] sm:$0xff pattern:$0x73625140]
    %v130 = vld.sshfl [vmem:[#allocation1 + $0x30] sm:$0xff pattern:$0x73625140]
    %v131 = vld.sshfl [vmem:[#allocation1 + $0x38] sm:$0xff pattern:$0x73625140]
    %132 = vst [vmem:[#allocation1] ss:$4 sm:$0xff] %v115
    %133 = vst [vmem:[%s122] ss:$4 sm:$0xff] %v116
    %v134 = vld.sshfl [vmem:[#allocation1] sm:$0xff pattern:$0x73625140]
    %v135 = vld.sshfl [vmem:[#allocation1 + $0x8] sm:$0xff pattern:$0x73625140]
    %v136 = vld.sshfl [vmem:[#allocation1 + $0x10] sm:$0xff pattern:$0x73625140]
    %v137 = vld.sshfl [vmem:[#allocation1 + $0x18] sm:$0xff pattern:$0x73625140]
    %v138 = vld.sshfl [vmem:[#allocation1 + $0x20] sm:$0xff pattern:$0x73625140]
    %v139 = vld.sshfl [vmem:[#allocation1 + $0x28] sm:$0xff pattern:$0x73625140]
    %v140 = vld.sshfl [vmem:[#allocation1 + $0x30] sm:$0xff pattern:$0x73625140]
    %v141 = vld.sshfl [vmem:[#allocation1 + $0x38] sm:$0xff pattern:$0x73625140]
    %v158 = vpack.c.bf16 %v124, %v124
    %v159 = vpack.c.bf16 %v125, %v125
    %v160 = vpack.c.bf16 %v126, %v126
    %v161 = vpack.c.bf16 %v127, %v127
    %v162 = vpack.c.bf16 %v128, %v128
    %v163 = vpack.c.bf16 %v129, %v129
    %v164 = vpack.c.bf16 %v130, %v130
    %v165 = vpack.c.bf16 %v131, %v131
    %v166 = vpack.c.bf16 %v134, %v134
    %v167 = vpack.c.bf16 %v135, %v135
    %v168 = vpack.c.bf16 %v136, %v136
    %v169 = vpack.c.bf16 %v137, %v137
    %v170 = vpack.c.bf16 %v138, %v138
    %v171 = vpack.c.bf16 %v139, %v139
    %v172 = vpack.c.bf16 %v140, %v140
    %v173 = vpack.c.bf16 %v141, %v141
    %v174 = vld [vmem:[#allocation5] sm:$0xff]
    %v175 = vld [vmem:[#allocation5 + $0x8] sm:$0xff]
    %v176 = vld [vmem:[#allocation5 + $0x10] sm:$0xff]
    %v177 = vld [vmem:[#allocation5 + $0x18] sm:$0xff]
    %v178 = vld [vmem:[#allocation5 + $0x20] sm:$0xff]
    %v179 = vld [vmem:[#allocation5 + $0x28] sm:$0xff]
    %v180 = vld [vmem:[#allocation5 + $0x30] sm:$0xff]
    %v181 = vld [vmem:[#allocation5 + $0x38] sm:$0xff]
    %v182 = vld [vmem:[#allocation5 + $0x40] sm:$0xff]
    %v183 = vld [vmem:[#allocation5 + $0x48] sm:$0xff]
    %v184 = vld [vmem:[#allocation5 + $0x50] sm:$0xff]
    %v185 = vld [vmem:[#allocation5 + $0x58] sm:$0xff]
    %v186 = vld [vmem:[#allocation5 + $0x60] sm:$0xff]
    %v187 = vld [vmem:[#allocation5 + $0x68] sm:$0xff]
    %v188 = vld [vmem:[#allocation5 + $0x70] sm:$0xff]
    %v189 = vld [vmem:[#allocation5 + $0x78] sm:$0xff]
    %v190 = vld [vmem:[#allocation5 + $0x80] sm:$0xff]
    %v191 = vld [vmem:[#allocation5 + $0x88] sm:$0xff]
    %v192 = vld [vmem:[#allocation5 + $0x90] sm:$0xff]
    %v193 = vld [vmem:[#allocation5 + $0x98] sm:$0xff]
    %v194 = vld [vmem:[#allocation5 + $0xa0] sm:$0xff]
    %v195 = vld [vmem:[#allocation5 + $0xa8] sm:$0xff]
    %v196 = vld [vmem:[#allocation5 + $0xb0] sm:$0xff]
    %v197 = vld [vmem:[#allocation5 + $0xb8] sm:$0xff]
    %v198 = vld [vmem:[#allocation5 + $0xc0] sm:$0xff]
    %v199 = vld [vmem:[#allocation5 + $0xc8] sm:$0xff]
    %v200 = vld [vmem:[#allocation5 + $0xd0] sm:$0xff]
    %v201 = vld [vmem:[#allocation5 + $0xd8] sm:$0xff]
    %v202 = vld [vmem:[#allocation5 + $0xe0] sm:$0xff]
    %v203 = vld [vmem:[#allocation5 + $0xe8] sm:$0xff]
    %v204 = vld [vmem:[#allocation5 + $0xf0] sm:$0xff]
    %v205 = vld [vmem:[#allocation5 + $0xf8] sm:$0xff]
    %v206 = vld [vmem:[#allocation5 + $0x100] sm:$0xff]
    %v207 = vld [vmem:[#allocation5 + $0x108] sm:$0xff]
    %v208 = vld [vmem:[#allocation5 + $0x110] sm:$0xff]
    %v209 = vld [vmem:[#allocation5 + $0x118] sm:$0xff]
    %v210 = vld [vmem:[#allocation5 + $0x120] sm:$0xff]
    %v211 = vld [vmem:[#allocation5 + $0x128] sm:$0xff]
    %v212 = vld [vmem:[#allocation5 + $0x130] sm:$0xff]
    %v213 = vld [vmem:[#allocation5 + $0x138] sm:$0xff]
    %v214 = vld [vmem:[#allocation5 + $0x140] sm:$0xff]
    %v215 = vld [vmem:[#allocation5 + $0x148] sm:$0xff]
    %v216 = vld [vmem:[#allocation5 + $0x150] sm:$0xff]
    %v217 = vld [vmem:[#allocation5 + $0x158] sm:$0xff]
    %v218 = vld [vmem:[#allocation5 + $0x160] sm:$0xff]
    %v219 = vld [vmem:[#allocation5 + $0x168] sm:$0xff]
    %v220 = vld [vmem:[#allocation5 + $0x170] sm:$0xff]
    %v221 = vld [vmem:[#allocation5 + $0x178] sm:$0xff]
    %v222 = vld [vmem:[#allocation5 + $0x180] sm:$0xff]
    %v223 = vld [vmem:[#allocation5 + $0x188] sm:$0xff]
    %v224 = vld [vmem:[#allocation5 + $0x190] sm:$0xff]
    %v225 = vld [vmem:[#allocation5 + $0x198] sm:$0xff]
    %v226 = vld [vmem:[#allocation5 + $0x1a0] sm:$0xff]
    %v227 = vld [vmem:[#allocation5 + $0x1a8] sm:$0xff]
    %v228 = vld [vmem:[#allocation5 + $0x1b0] sm:$0xff]
    %v229 = vld [vmem:[#allocation5 + $0x1b8] sm:$0xff]
    %v230 = vld [vmem:[#allocation5 + $0x1c0] sm:$0xff]
    %v231 = vld [vmem:[#allocation5 + $0x1c8] sm:$0xff]
    %v232 = vld [vmem:[#allocation5 + $0x1d0] sm:$0xff]
    %v233 = vld [vmem:[#allocation5 + $0x1d8] sm:$0xff]
    %v234 = vld [vmem:[#allocation5 + $0x1e0] sm:$0xff]
    %v235 = vld [vmem:[#allocation5 + $0x1e8] sm:$0xff]
    %v236 = vld [vmem:[#allocation5 + $0x1f0] sm:$0xff]
    %v237 = vld [vmem:[#allocation5 + $0x1f8] sm:$0xff]
    %v238 = vld [vmem:[#allocation5 + $0x200] sm:$0xff]
    %v239 = vld [vmem:[#allocation5 + $0x208] sm:$0xff]
    %v240 = vld [vmem:[#allocation5 + $0x210] sm:$0xff]
    %v241 = vld [vmem:[#allocation5 + $0x218] sm:$0xff]
    %v242 = vld [vmem:[#allocation5 + $0x220] sm:$0xff]
    %v243 = vld [vmem:[#allocation5 + $0x228] sm:$0xff]
    %v244 = vld [vmem:[#allocation5 + $0x230] sm:$0xff]
    %v245 = vld [vmem:[#allocation5 + $0x238] sm:$0xff]
    %v246 = vld [vmem:[#allocation5 + $0x240] sm:$0xff]
    %v247 = vld [vmem:[#allocation5 + $0x248] sm:$0xff]
    %v248 = vld [vmem:[#allocation5 + $0x250] sm:$0xff]
    %v249 = vld [vmem:[#allocation5 + $0x258] sm:$0xff]
    %v250 = vld [vmem:[#allocation5 + $0x260] sm:$0xff]
    %v251 = vld [vmem:[#allocation5 + $0x268] sm:$0xff]
    %v252 = vld [vmem:[#allocation5 + $0x270] sm:$0xff]
    %v253 = vld [vmem:[#allocation5 + $0x278] sm:$0xff]
    %v254 = vld [vmem:[#allocation5 + $0x280] sm:$0xff]
    %v255 = vld [vmem:[#allocation5 + $0x288] sm:$0xff]
    %v256 = vld [vmem:[#allocation5 + $0x290] sm:$0xff]
    %v257 = vld [vmem:[#allocation5 + $0x298] sm:$0xff]
    %v258 = vld [vmem:[#allocation5 + $0x2a0] sm:$0xff]
    %v259 = vld [vmem:[#allocation5 + $0x2a8] sm:$0xff]
    %v260 = vld [vmem:[#allocation5 + $0x2b0] sm:$0xff]
    %v261 = vld [vmem:[#allocation5 + $0x2b8] sm:$0xff]
    %v262 = vld [vmem:[#allocation5 + $0x2c0] sm:$0xff]
    %v263 = vld [vmem:[#allocation5 + $0x2c8] sm:$0xff]
    %v264 = vld [vmem:[#allocation5 + $0x2d0] sm:$0xff]
    %v265 = vld [vmem:[#allocation5 + $0x2d8] sm:$0xff]
    %v266 = vld [vmem:[#allocation5 + $0x2e0] sm:$0xff]
    %v267 = vld [vmem:[#allocation5 + $0x2e8] sm:$0xff]
    %v268 = vld [vmem:[#allocation5 + $0x2f0] sm:$0xff]
    %v269 = vld [vmem:[#allocation5 + $0x2f8] sm:$0xff]
    %v270 = vld [vmem:[#allocation5 + $0x300] sm:$0xff]
    %v271 = vld [vmem:[#allocation5 + $0x308] sm:$0xff]
    %v272 = vld [vmem:[#allocation5 + $0x310] sm:$0xff]
    %v273 = vld [vmem:[#allocation5 + $0x318] sm:$0xff]
    %v274 = vld [vmem:[#allocation5 + $0x320] sm:$0xff]
    %v275 = vld [vmem:[#allocation5 + $0x328] sm:$0xff]
    %v276 = vld [vmem:[#allocation5 + $0x330] sm:$0xff]
    %v277 = vld [vmem:[#allocation5 + $0x338] sm:$0xff]
    %v278 = vld [vmem:[#allocation5 + $0x340] sm:$0xff]
    %v279 = vld [vmem:[#allocation5 + $0x348] sm:$0xff]
    %v280 = vld [vmem:[#allocation5 + $0x350] sm:$0xff]
    %v281 = vld [vmem:[#allocation5 + $0x358] sm:$0xff]
    %v282 = vld [vmem:[#allocation5 + $0x360] sm:$0xff]
    %v283 = vld [vmem:[#allocation5 + $0x368] sm:$0xff]
    %v284 = vld [vmem:[#allocation5 + $0x370] sm:$0xff]
    %v285 = vld [vmem:[#allocation5 + $0x378] sm:$0xff]
    %v286 = vld [vmem:[#allocation5 + $0x380] sm:$0xff]
    %v287 = vld [vmem:[#allocation5 + $0x388] sm:$0xff]
    %v288 = vld [vmem:[#allocation5 + $0x390] sm:$0xff]
    %v289 = vld [vmem:[#allocation5 + $0x398] sm:$0xff]
    %v290 = vld [vmem:[#allocation5 + $0x3a0] sm:$0xff]
    %v291 = vld [vmem:[#allocation5 + $0x3a8] sm:$0xff]
    %v292 = vld [vmem:[#allocation5 + $0x3b0] sm:$0xff]
    %v293 = vld [vmem:[#allocation5 + $0x3b8] sm:$0xff]
    %v294 = vld [vmem:[#allocation5 + $0x3c0] sm:$0xff]
    %v295 = vld [vmem:[#allocation5 + $0x3c8] sm:$0xff]
    %v296 = vld [vmem:[#allocation5 + $0x3d0] sm:$0xff]
    %v297 = vld [vmem:[#allocation5 + $0x3d8] sm:$0xff]
    %v298 = vld [vmem:[#allocation5 + $0x3e0] sm:$0xff]
    %v299 = vld [vmem:[#allocation5 + $0x3e8] sm:$0xff]
    %v300 = vld [vmem:[#allocation5 + $0x3f0] sm:$0xff]
    %v301 = vld [vmem:[#allocation5 + $0x3f8] sm:$0xff]
    %v302 = vld [vmem:[#allocation5 + $0x400] sm:$0xff]
    %v303 = vld [vmem:[#allocation5 + $0x408] sm:$0xff]
    %v304 = vld [vmem:[#allocation5 + $0x410] sm:$0xff]
    %v305 = vld [vmem:[#allocation5 + $0x418] sm:$0xff]
    %v306 = vld [vmem:[#allocation5 + $0x420] sm:$0xff]
    %v307 = vld [vmem:[#allocation5 + $0x428] sm:$0xff]
    %v308 = vld [vmem:[#allocation5 + $0x430] sm:$0xff]
    %v309 = vld [vmem:[#allocation5 + $0x438] sm:$0xff]
    %v310 = vld [vmem:[#allocation5 + $0x440] sm:$0xff]
    %v311 = vld [vmem:[#allocation5 + $0x448] sm:$0xff]
    %v312 = vld [vmem:[#allocation5 + $0x450] sm:$0xff]
    %v313 = vld [vmem:[#allocation5 + $0x458] sm:$0xff]
    %v314 = vld [vmem:[#allocation5 + $0x460] sm:$0xff]
    %v315 = vld [vmem:[#allocation5 + $0x468] sm:$0xff]
    %v316 = vld [vmem:[#allocation5 + $0x470] sm:$0xff]
    %v317 = vld [vmem:[#allocation5 + $0x478] sm:$0xff]
    %v318 = vld [vmem:[#allocation5 + $0x480] sm:$0xff]
    %v319 = vld [vmem:[#allocation5 + $0x488] sm:$0xff]
    %v320 = vld [vmem:[#allocation5 + $0x490] sm:$0xff]
    %v321 = vld [vmem:[#allocation5 + $0x498] sm:$0xff]
    %v322 = vld [vmem:[#allocation5 + $0x4a0] sm:$0xff]
    %v323 = vld [vmem:[#allocation5 + $0x4a8] sm:$0xff]
    %v324 = vld [vmem:[#allocation5 + $0x4b0] sm:$0xff]
    %v325 = vld [vmem:[#allocation5 + $0x4b8] sm:$0xff]
    %v326 = vld [vmem:[#allocation5 + $0x4c0] sm:$0xff]
    %v327 = vld [vmem:[#allocation5 + $0x4c8] sm:$0xff]
    %v328 = vld [vmem:[#allocation5 + $0x4d0] sm:$0xff]
    %v329 = vld [vmem:[#allocation5 + $0x4d8] sm:$0xff]
    %v330 = vld [vmem:[#allocation5 + $0x4e0] sm:$0xff]
    %v331 = vld [vmem:[#allocation5 + $0x4e8] sm:$0xff]
    %v332 = vld [vmem:[#allocation5 + $0x4f0] sm:$0xff]
    %v333 = vld [vmem:[#allocation5 + $0x4f8] sm:$0xff]
    %v334 = vld [vmem:[#allocation5 + $0x500] sm:$0xff]
    %v335 = vld [vmem:[#allocation5 + $0x508] sm:$0xff]
    %v336 = vld [vmem:[#allocation5 + $0x510] sm:$0xff]
    %v337 = vld [vmem:[#allocation5 + $0x518] sm:$0xff]
    %v338 = vld [vmem:[#allocation5 + $0x520] sm:$0xff]
    %v339 = vld [vmem:[#allocation5 + $0x528] sm:$0xff]
    %v340 = vld [vmem:[#allocation5 + $0x530] sm:$0xff]
    %v341 = vld [vmem:[#allocation5 + $0x538] sm:$0xff]
    %v342 = vld [vmem:[#allocation5 + $0x540] sm:$0xff]
    %v343 = vld [vmem:[#allocation5 + $0x548] sm:$0xff]
    %v344 = vld [vmem:[#allocation5 + $0x550] sm:$0xff]
    %v345 = vld [vmem:[#allocation5 + $0x558] sm:$0xff]
    %v346 = vld [vmem:[#allocation5 + $0x560] sm:$0xff]
    %v347 = vld [vmem:[#allocation5 + $0x568] sm:$0xff]
    %v348 = vld [vmem:[#allocation5 + $0x570] sm:$0xff]
    %v349 = vld [vmem:[#allocation5 + $0x578] sm:$0xff]
    %v350 = vld [vmem:[#allocation5 + $0x580] sm:$0xff]
    %v351 = vld [vmem:[#allocation5 + $0x588] sm:$0xff]
    %v352 = vld [vmem:[#allocation5 + $0x590] sm:$0xff]
    %v353 = vld [vmem:[#allocation5 + $0x598] sm:$0xff]
    %v354 = vld [vmem:[#allocation5 + $0x5a0] sm:$0xff]
    %v355 = vld [vmem:[#allocation5 + $0x5a8] sm:$0xff]
    %v356 = vld [vmem:[#allocation5 + $0x5b0] sm:$0xff]
    %v357 = vld [vmem:[#allocation5 + $0x5b8] sm:$0xff]
    %v358 = vld [vmem:[#allocation5 + $0x5c0] sm:$0xff]
    %v359 = vld [vmem:[#allocation5 + $0x5c8] sm:$0xff]
    %v360 = vld [vmem:[#allocation5 + $0x5d0] sm:$0xff]
    %v361 = vld [vmem:[#allocation5 + $0x5d8] sm:$0xff]
    %v362 = vld [vmem:[#allocation5 + $0x5e0] sm:$0xff]
    %v363 = vld [vmem:[#allocation5 + $0x5e8] sm:$0xff]
    %v364 = vld [vmem:[#allocation5 + $0x5f0] sm:$0xff]
    %v365 = vld [vmem:[#allocation5 + $0x5f8] sm:$0xff]
    %v366 = vld [vmem:[#allocation5 + $0x600] sm:$0xff]
    %v367 = vld [vmem:[#allocation5 + $0x608] sm:$0xff]
    %v368 = vld [vmem:[#allocation5 + $0x610] sm:$0xff]
    %v369 = vld [vmem:[#allocation5 + $0x618] sm:$0xff]
    %v370 = vld [vmem:[#allocation5 + $0x620] sm:$0xff]
    %v371 = vld [vmem:[#allocation5 + $0x628] sm:$0xff]
    %v372 = vld [vmem:[#allocation5 + $0x630] sm:$0xff]
    %v373 = vld [vmem:[#allocation5 + $0x638] sm:$0xff]
    %v374 = vld [vmem:[#allocation5 + $0x640] sm:$0xff]
    %v375 = vld [vmem:[#allocation5 + $0x648] sm:$0xff]
    %v376 = vld [vmem:[#allocation5 + $0x650] sm:$0xff]
    %v377 = vld [vmem:[#allocation5 + $0x658] sm:$0xff]
    %v378 = vld [vmem:[#allocation5 + $0x660] sm:$0xff]
    %v379 = vld [vmem:[#allocation5 + $0x668] sm:$0xff]
    %v380 = vld [vmem:[#allocation5 + $0x670] sm:$0xff]
    %v381 = vld [vmem:[#allocation5 + $0x678] sm:$0xff]
    %v382 = vld [vmem:[#allocation5 + $0x680] sm:$0xff]
    %v383 = vld [vmem:[#allocation5 + $0x688] sm:$0xff]
    %v384 = vld [vmem:[#allocation5 + $0x690] sm:$0xff]
    %v385 = vld [vmem:[#allocation5 + $0x698] sm:$0xff]
    %v386 = vld [vmem:[#allocation5 + $0x6a0] sm:$0xff]
    %v387 = vld [vmem:[#allocation5 + $0x6a8] sm:$0xff]
    %v388 = vld [vmem:[#allocation5 + $0x6b0] sm:$0xff]
    %v389 = vld [vmem:[#allocation5 + $0x6b8] sm:$0xff]
    %v390 = vld [vmem:[#allocation5 + $0x6c0] sm:$0xff]
    %v391 = vld [vmem:[#allocation5 + $0x6c8] sm:$0xff]
    %v392 = vld [vmem:[#allocation5 + $0x6d0] sm:$0xff]
    %v393 = vld [vmem:[#allocation5 + $0x6d8] sm:$0xff]
    %v394 = vld [vmem:[#allocation5 + $0x6e0] sm:$0xff]
    %v395 = vld [vmem:[#allocation5 + $0x6e8] sm:$0xff]
    %v396 = vld [vmem:[#allocation5 + $0x6f0] sm:$0xff]
    %v397 = vld [vmem:[#allocation5 + $0x6f8] sm:$0xff]
    %v398 = vld [vmem:[#allocation5 + $0x700] sm:$0xff]
    %v399 = vld [vmem:[#allocation5 + $0x708] sm:$0xff]
    %v400 = vld [vmem:[#allocation5 + $0x710] sm:$0xff]
    %v401 = vld [vmem:[#allocation5 + $0x718] sm:$0xff]
    %v402 = vld [vmem:[#allocation5 + $0x720] sm:$0xff]
    %v403 = vld [vmem:[#allocation5 + $0x728] sm:$0xff]
    %v404 = vld [vmem:[#allocation5 + $0x730] sm:$0xff]
    %v405 = vld [vmem:[#allocation5 + $0x738] sm:$0xff]
    %v406 = vld [vmem:[#allocation5 + $0x740] sm:$0xff]
    %v407 = vld [vmem:[#allocation5 + $0x748] sm:$0xff]
    %v408 = vld [vmem:[#allocation5 + $0x750] sm:$0xff]
    %v409 = vld [vmem:[#allocation5 + $0x758] sm:$0xff]
    %v410 = vld [vmem:[#allocation5 + $0x760] sm:$0xff]
    %v411 = vld [vmem:[#allocation5 + $0x768] sm:$0xff]
    %v412 = vld [vmem:[#allocation5 + $0x770] sm:$0xff]
    %v413 = vld [vmem:[#allocation5 + $0x778] sm:$0xff]
    %v414 = vld [vmem:[#allocation5 + $0x780] sm:$0xff]
    %v415 = vld [vmem:[#allocation5 + $0x788] sm:$0xff]
    %v416 = vld [vmem:[#allocation5 + $0x790] sm:$0xff]
    %v417 = vld [vmem:[#allocation5 + $0x798] sm:$0xff]
    %v418 = vld [vmem:[#allocation5 + $0x7a0] sm:$0xff]
    %v419 = vld [vmem:[#allocation5 + $0x7a8] sm:$0xff]
    %v420 = vld [vmem:[#allocation5 + $0x7b0] sm:$0xff]
    %v421 = vld [vmem:[#allocation5 + $0x7b8] sm:$0xff]
    %v422 = vld [vmem:[#allocation5 + $0x7c0] sm:$0xff]
    %v423 = vld [vmem:[#allocation5 + $0x7c8] sm:$0xff]
    %v424 = vld [vmem:[#allocation5 + $0x7d0] sm:$0xff]
    %v425 = vld [vmem:[#allocation5 + $0x7d8] sm:$0xff]
    %v426 = vld [vmem:[#allocation5 + $0x7e0] sm:$0xff]
    %v427 = vld [vmem:[#allocation5 + $0x7e8] sm:$0xff]
    %v428 = vld [vmem:[#allocation5 + $0x7f0] sm:$0xff]
    %v429 = vld [vmem:[#allocation5 + $0x7f8] sm:$0xff]
    %v430 = vld [vmem:[#allocation5 + $0x800] sm:$0xff]
    %v431 = vld [vmem:[#allocation5 + $0x808] sm:$0xff]
    %v432 = vld [vmem:[#allocation5 + $0x810] sm:$0xff]
    %v433 = vld [vmem:[#allocation5 + $0x818] sm:$0xff]
    %v434 = vld [vmem:[#allocation5 + $0x820] sm:$0xff]
    %v435 = vld [vmem:[#allocation5 + $0x828] sm:$0xff]
    %v436 = vld [vmem:[#allocation5 + $0x830] sm:$0xff]
    %v437 = vld [vmem:[#allocation5 + $0x838] sm:$0xff]
    %v438 = vld [vmem:[#allocation5 + $0x840] sm:$0xff]
    %v439 = vld [vmem:[#allocation5 + $0x848] sm:$0xff]
    %v440 = vld [vmem:[#allocation5 + $0x850] sm:$0xff]
    %v441 = vld [vmem:[#allocation5 + $0x858] sm:$0xff]
    %v442 = vld [vmem:[#allocation5 + $0x860] sm:$0xff]
    %v443 = vld [vmem:[#allocation5 + $0x868] sm:$0xff]
    %v444 = vld [vmem:[#allocation5 + $0x870] sm:$0xff]
    %v445 = vld [vmem:[#allocation5 + $0x878] sm:$0xff]
    %v446 = vld [vmem:[#allocation5 + $0x880] sm:$0xff]
    %v447 = vld [vmem:[#allocation5 + $0x888] sm:$0xff]
    %v448 = vld [vmem:[#allocation5 + $0x890] sm:$0xff]
    %v449 = vld [vmem:[#allocation5 + $0x898] sm:$0xff]
    %v450 = vld [vmem:[#allocation5 + $0x8a0] sm:$0xff]
    %v451 = vld [vmem:[#allocation5 + $0x8a8] sm:$0xff]
    %v452 = vld [vmem:[#allocation5 + $0x8b0] sm:$0xff]
    %v453 = vld [vmem:[#allocation5 + $0x8b8] sm:$0xff]
    %v454 = vld [vmem:[#allocation5 + $0x8c0] sm:$0xff]
    %v455 = vld [vmem:[#allocation5 + $0x8c8] sm:$0xff]
    %v456 = vld [vmem:[#allocation5 + $0x8d0] sm:$0xff]
    %v457 = vld [vmem:[#allocation5 + $0x8d8] sm:$0xff]
    %v458 = vld [vmem:[#allocation5 + $0x8e0] sm:$0xff]
    %v459 = vld [vmem:[#allocation5 + $0x8e8] sm:$0xff]
    %v460 = vld [vmem:[#allocation5 + $0x8f0] sm:$0xff]
    %v461 = vld [vmem:[#allocation5 + $0x8f8] sm:$0xff]
    %v462 = vld [vmem:[#allocation5 + $0x900] sm:$0xff]
    %v463 = vld [vmem:[#allocation5 + $0x908] sm:$0xff]
    %v464 = vld [vmem:[#allocation5 + $0x910] sm:$0xff]
    %v465 = vld [vmem:[#allocation5 + $0x918] sm:$0xff]
    %v466 = vld [vmem:[#allocation5 + $0x920] sm:$0xff]
    %v467 = vld [vmem:[#allocation5 + $0x928] sm:$0xff]
    %v468 = vld [vmem:[#allocation5 + $0x930] sm:$0xff]
    %v469 = vld [vmem:[#allocation5 + $0x938] sm:$0xff]
    %v470 = vld [vmem:[#allocation5 + $0x940] sm:$0xff]
    %v471 = vld [vmem:[#allocation5 + $0x948] sm:$0xff]
    %v472 = vld [vmem:[#allocation5 + $0x950] sm:$0xff]
    %v473 = vld [vmem:[#allocation5 + $0x958] sm:$0xff]
    %v474 = vld [vmem:[#allocation5 + $0x960] sm:$0xff]
    %v475 = vld [vmem:[#allocation5 + $0x968] sm:$0xff]
    %v476 = vld [vmem:[#allocation5 + $0x970] sm:$0xff]
    %v477 = vld [vmem:[#allocation5 + $0x978] sm:$0xff]
    %v478 = vld [vmem:[#allocation5 + $0x980] sm:$0xff]
    %v479 = vld [vmem:[#allocation5 + $0x988] sm:$0xff]
    %v480 = vld [vmem:[#allocation5 + $0x990] sm:$0xff]
    %v481 = vld [vmem:[#allocation5 + $0x998] sm:$0xff]
    %v482 = vld [vmem:[#allocation5 + $0x9a0] sm:$0xff]
    %v483 = vld [vmem:[#allocation5 + $0x9a8] sm:$0xff]
    %v484 = vld [vmem:[#allocation5 + $0x9b0] sm:$0xff]
    %v485 = vld [vmem:[#allocation5 + $0x9b8] sm:$0xff]
    %v486 = vld [vmem:[#allocation5 + $0x9c0] sm:$0xff]
    %v487 = vld [vmem:[#allocation5 + $0x9c8] sm:$0xff]
    %v488 = vld [vmem:[#allocation5 + $0x9d0] sm:$0xff]
    %v489 = vld [vmem:[#allocation5 + $0x9d8] sm:$0xff]
    %v490 = vld [vmem:[#allocation5 + $0x9e0] sm:$0xff]
    %v491 = vld [vmem:[#allocation5 + $0x9e8] sm:$0xff]
    %v492 = vld [vmem:[#allocation5 + $0x9f0] sm:$0xff]
    %v493 = vld [vmem:[#allocation5 + $0x9f8] sm:$0xff]
    %v494 = vld [vmem:[#allocation5 + $0xa00] sm:$0xff]
    %v495 = vld [vmem:[#allocation5 + $0xa08] sm:$0xff]
    %v496 = vld [vmem:[#allocation5 + $0xa10] sm:$0xff]
    %v497 = vld [vmem:[#allocation5 + $0xa18] sm:$0xff]
    %v498 = vld [vmem:[#allocation5 + $0xa20] sm:$0xff]
    %v499 = vld [vmem:[#allocation5 + $0xa28] sm:$0xff]
    %v500 = vld [vmem:[#allocation5 + $0xa30] sm:$0xff]
    %v501 = vld [vmem:[#allocation5 + $0xa38] sm:$0xff]
    %v502 = vld [vmem:[#allocation5 + $0xa40] sm:$0xff]
    %v503 = vld [vmem:[#allocation5 + $0xa48] sm:$0xff]
    %v504 = vld [vmem:[#allocation5 + $0xa50] sm:$0xff]
    %v505 = vld [vmem:[#allocation5 + $0xa58] sm:$0xff]
    %v506 = vld [vmem:[#allocation5 + $0xa60] sm:$0xff]
    %v507 = vld [vmem:[#allocation5 + $0xa68] sm:$0xff]
    %v508 = vld [vmem:[#allocation5 + $0xa70] sm:$0xff]
    %v509 = vld [vmem:[#allocation5 + $0xa78] sm:$0xff]
    %v510 = vld [vmem:[#allocation5 + $0xa80] sm:$0xff]
    %v511 = vld [vmem:[#allocation5 + $0xa88] sm:$0xff]
    %v512 = vld [vmem:[#allocation5 + $0xa90] sm:$0xff]
    %v513 = vld [vmem:[#allocation5 + $0xa98] sm:$0xff]
    %v514 = vld [vmem:[#allocation5 + $0xaa0] sm:$0xff]
    %v515 = vld [vmem:[#allocation5 + $0xaa8] sm:$0xff]
    %v516 = vld [vmem:[#allocation5 + $0xab0] sm:$0xff]
    %v517 = vld [vmem:[#allocation5 + $0xab8] sm:$0xff]
    %v518 = vld [vmem:[#allocation5 + $0xac0] sm:$0xff]
    %v519 = vld [vmem:[#allocation5 + $0xac8] sm:$0xff]
    %v520 = vld [vmem:[#allocation5 + $0xad0] sm:$0xff]
    %v521 = vld [vmem:[#allocation5 + $0xad8] sm:$0xff]
    %v522 = vld [vmem:[#allocation5 + $0xae0] sm:$0xff]
    %v523 = vld [vmem:[#allocation5 + $0xae8] sm:$0xff]
    %v524 = vld [vmem:[#allocation5 + $0xaf0] sm:$0xff]
    %v525 = vld [vmem:[#allocation5 + $0xaf8] sm:$0xff]
    %v526 = vld [vmem:[#allocation5 + $0xb00] sm:$0xff]
    %v527 = vld [vmem:[#allocation5 + $0xb08] sm:$0xff]
    %v528 = vld [vmem:[#allocation5 + $0xb10] sm:$0xff]
    %v529 = vld [vmem:[#allocation5 + $0xb18] sm:$0xff]
    %v530 = vld [vmem:[#allocation5 + $0xb20] sm:$0xff]
    %v531 = vld [vmem:[#allocation5 + $0xb28] sm:$0xff]
    %v532 = vld [vmem:[#allocation5 + $0xb30] sm:$0xff]
    %v533 = vld [vmem:[#allocation5 + $0xb38] sm:$0xff]
    %v534 = vld [vmem:[#allocation5 + $0xb40] sm:$0xff]
    %v535 = vld [vmem:[#allocation5 + $0xb48] sm:$0xff]
    %v536 = vld [vmem:[#allocation5 + $0xb50] sm:$0xff]
    %v537 = vld [vmem:[#allocation5 + $0xb58] sm:$0xff]
    %v538 = vld [vmem:[#allocation5 + $0xb60] sm:$0xff]
    %v539 = vld [vmem:[#allocation5 + $0xb68] sm:$0xff]
    %v540 = vld [vmem:[#allocation5 + $0xb70] sm:$0xff]
    %v541 = vld [vmem:[#allocation5 + $0xb78] sm:$0xff]
    %v542 = vld [vmem:[#allocation5 + $0xb80] sm:$0xff]
    %v543 = vld [vmem:[#allocation5 + $0xb88] sm:$0xff]
    %v544 = vld [vmem:[#allocation5 + $0xb90] sm:$0xff]
    %v545 = vld [vmem:[#allocation5 + $0xb98] sm:$0xff]
    %v546 = vld [vmem:[#allocation5 + $0xba0] sm:$0xff]
    %v547 = vld [vmem:[#allocation5 + $0xba8] sm:$0xff]
    %v548 = vld [vmem:[#allocation5 + $0xbb0] sm:$0xff]
    %v549 = vld [vmem:[#allocation5 + $0xbb8] sm:$0xff]
    %v550 = vld [vmem:[#allocation5 + $0xbc0] sm:$0xff]
    %v551 = vld [vmem:[#allocation5 + $0xbc8] sm:$0xff]
    %v552 = vld [vmem:[#allocation5 + $0xbd0] sm:$0xff]
    %v553 = vld [vmem:[#allocation5 + $0xbd8] sm:$0xff]
    %v554 = vld [vmem:[#allocation5 + $0xbe0] sm:$0xff]
    %v555 = vld [vmem:[#allocation5 + $0xbe8] sm:$0xff]
    %v556 = vld [vmem:[#allocation5 + $0xbf0] sm:$0xff]
    %v557 = vld [vmem:[#allocation5 + $0xbf8] sm:$0xff]
    %v558 = vld [vmem:[#allocation5 + $0xc00] sm:$0xff]
    %v559 = vld [vmem:[#allocation5 + $0xc08] sm:$0xff]
    %v560 = vld [vmem:[#allocation5 + $0xc10] sm:$0xff]
    %v561 = vld [vmem:[#allocation5 + $0xc18] sm:$0xff]
    %v562 = vld [vmem:[#allocation5 + $0xc20] sm:$0xff]
    %v563 = vld [vmem:[#allocation5 + $0xc28] sm:$0xff]
    %v564 = vld [vmem:[#allocation5 + $0xc30] sm:$0xff]
    %v565 = vld [vmem:[#allocation5 + $0xc38] sm:$0xff]
    %v566 = vld [vmem:[#allocation5 + $0xc40] sm:$0xff]
    %v567 = vld [vmem:[#allocation5 + $0xc48] sm:$0xff]
    %v568 = vld [vmem:[#allocation5 + $0xc50] sm:$0xff]
    %v569 = vld [vmem:[#allocation5 + $0xc58] sm:$0xff]
    %v570 = vld [vmem:[#allocation5 + $0xc60] sm:$0xff]
    %v571 = vld [vmem:[#allocation5 + $0xc68] sm:$0xff]
    %v572 = vld [vmem:[#allocation5 + $0xc70] sm:$0xff]
    %v573 = vld [vmem:[#allocation5 + $0xc78] sm:$0xff]
    %v574 = vld [vmem:[#allocation5 + $0xc80] sm:$0xff]
    %v575 = vld [vmem:[#allocation5 + $0xc88] sm:$0xff]
    %v576 = vld [vmem:[#allocation5 + $0xc90] sm:$0xff]
    %v577 = vld [vmem:[#allocation5 + $0xc98] sm:$0xff]
    %v578 = vld [vmem:[#allocation5 + $0xca0] sm:$0xff]
    %v579 = vld [vmem:[#allocation5 + $0xca8] sm:$0xff]
    %v580 = vld [vmem:[#allocation5 + $0xcb0] sm:$0xff]
    %v581 = vld [vmem:[#allocation5 + $0xcb8] sm:$0xff]
    %v582 = vld [vmem:[#allocation5 + $0xcc0] sm:$0xff]
    %v583 = vld [vmem:[#allocation5 + $0xcc8] sm:$0xff]
    %v584 = vld [vmem:[#allocation5 + $0xcd0] sm:$0xff]
    %v585 = vld [vmem:[#allocation5 + $0xcd8] sm:$0xff]
    %v586 = vld [vmem:[#allocation5 + $0xce0] sm:$0xff]
    %v587 = vld [vmem:[#allocation5 + $0xce8] sm:$0xff]
    %v588 = vld [vmem:[#allocation5 + $0xcf0] sm:$0xff]
    %v589 = vld [vmem:[#allocation5 + $0xcf8] sm:$0xff]
    %v590 = vld [vmem:[#allocation5 + $0xd00] sm:$0xff]
    %v591 = vld [vmem:[#allocation5 + $0xd08] sm:$0xff]
    %v592 = vld [vmem:[#allocation5 + $0xd10] sm:$0xff]
    %v593 = vld [vmem:[#allocation5 + $0xd18] sm:$0xff]
    %v594 = vld [vmem:[#allocation5 + $0xd20] sm:$0xff]
    %v595 = vld [vmem:[#allocation5 + $0xd28] sm:$0xff]
    %v596 = vld [vmem:[#allocation5 + $0xd30] sm:$0xff]
    %v597 = vld [vmem:[#allocation5 + $0xd38] sm:$0xff]
    %v598 = vld [vmem:[#allocation5 + $0xd40] sm:$0xff]
    %v599 = vld [vmem:[#allocation5 + $0xd48] sm:$0xff]
    %v600 = vld [vmem:[#allocation5 + $0xd50] sm:$0xff]
    %v601 = vld [vmem:[#allocation5 + $0xd58] sm:$0xff]
    %v602 = vld [vmem:[#allocation5 + $0xd60] sm:$0xff]
    %v603 = vld [vmem:[#allocation5 + $0xd68] sm:$0xff]
    %v604 = vld [vmem:[#allocation5 + $0xd70] sm:$0xff]
    %v605 = vld [vmem:[#allocation5 + $0xd78] sm:$0xff]
    %v606 = vld [vmem:[#allocation5 + $0xd80] sm:$0xff]
    %v607 = vld [vmem:[#allocation5 + $0xd88] sm:$0xff]
    %v608 = vld [vmem:[#allocation5 + $0xd90] sm:$0xff]
    %v609 = vld [vmem:[#allocation5 + $0xd98] sm:$0xff]
    %v610 = vld [vmem:[#allocation5 + $0xda0] sm:$0xff]
    %v611 = vld [vmem:[#allocation5 + $0xda8] sm:$0xff]
    %v612 = vld [vmem:[#allocation5 + $0xdb0] sm:$0xff]
    %v613 = vld [vmem:[#allocation5 + $0xdb8] sm:$0xff]
    %v614 = vld [vmem:[#allocation5 + $0xdc0] sm:$0xff]
    %v615 = vld [vmem:[#allocation5 + $0xdc8] sm:$0xff]
    %v616 = vld [vmem:[#allocation5 + $0xdd0] sm:$0xff]
    %v617 = vld [vmem:[#allocation5 + $0xdd8] sm:$0xff]
    %v618 = vld [vmem:[#allocation5 + $0xde0] sm:$0xff]
    %v619 = vld [vmem:[#allocation5 + $0xde8] sm:$0xff]
    %v620 = vld [vmem:[#allocation5 + $0xdf0] sm:$0xff]
    %v621 = vld [vmem:[#allocation5 + $0xdf8] sm:$0xff]
    %v622 = vld [vmem:[#allocation5 + $0xe00] sm:$0xff]
    %v623 = vld [vmem:[#allocation5 + $0xe08] sm:$0xff]
    %v624 = vld [vmem:[#allocation5 + $0xe10] sm:$0xff]
    %v625 = vld [vmem:[#allocation5 + $0xe18] sm:$0xff]
    %v626 = vld [vmem:[#allocation5 + $0xe20] sm:$0xff]
    %v627 = vld [vmem:[#allocation5 + $0xe28] sm:$0xff]
    %v628 = vld [vmem:[#allocation5 + $0xe30] sm:$0xff]
    %v629 = vld [vmem:[#allocation5 + $0xe38] sm:$0xff]
    %v630 = vld [vmem:[#allocation5 + $0xe40] sm:$0xff]
    %v631 = vld [vmem:[#allocation5 + $0xe48] sm:$0xff]
    %v632 = vld [vmem:[#allocation5 + $0xe50] sm:$0xff]
    %v633 = vld [vmem:[#allocation5 + $0xe58] sm:$0xff]
    %v634 = vld [vmem:[#allocation5 + $0xe60] sm:$0xff]
    %v635 = vld [vmem:[#allocation5 + $0xe68] sm:$0xff]
    %v636 = vld [vmem:[#allocation5 + $0xe70] sm:$0xff]
    %v637 = vld [vmem:[#allocation5 + $0xe78] sm:$0xff]
    %v638 = vld [vmem:[#allocation5 + $0xe80] sm:$0xff]
    %v639 = vld [vmem:[#allocation5 + $0xe88] sm:$0xff]
    %v640 = vld [vmem:[#allocation5 + $0xe90] sm:$0xff]
    %v641 = vld [vmem:[#allocation5 + $0xe98] sm:$0xff]
    %v642 = vld [vmem:[#allocation5 + $0xea0] sm:$0xff]
    %v643 = vld [vmem:[#allocation5 + $0xea8] sm:$0xff]
    %v644 = vld [vmem:[#allocation5 + $0xeb0] sm:$0xff]
    %v645 = vld [vmem:[#allocation5 + $0xeb8] sm:$0xff]
    %v646 = vld [vmem:[#allocation5 + $0xec0] sm:$0xff]
    %v647 = vld [vmem:[#allocation5 + $0xec8] sm:$0xff]
    %v648 = vld [vmem:[#allocation5 + $0xed0] sm:$0xff]
    %v649 = vld [vmem:[#allocation5 + $0xed8] sm:$0xff]
    %v650 = vld [vmem:[#allocation5 + $0xee0] sm:$0xff]
    %v651 = vld [vmem:[#allocation5 + $0xee8] sm:$0xff]
    %v652 = vld [vmem:[#allocation5 + $0xef0] sm:$0xff]
    %v653 = vld [vmem:[#allocation5 + $0xef8] sm:$0xff]
    %v654 = vld [vmem:[#allocation5 + $0xf00] sm:$0xff]
    %v655 = vld [vmem:[#allocation5 + $0xf08] sm:$0xff]
    %v656 = vld [vmem:[#allocation5 + $0xf10] sm:$0xff]
    %v657 = vld [vmem:[#allocation5 + $0xf18] sm:$0xff]
    %v658 = vld [vmem:[#allocation5 + $0xf20] sm:$0xff]
    %v659 = vld [vmem:[#allocation5 + $0xf28] sm:$0xff]
    %v660 = vld [vmem:[#allocation5 + $0xf30] sm:$0xff]
    %v661 = vld [vmem:[#allocation5 + $0xf38] sm:$0xff]
    %v662 = vld [vmem:[#allocation5 + $0xf40] sm:$0xff]
    %v663 = vld [vmem:[#allocation5 + $0xf48] sm:$0xff]
    %v664 = vld [vmem:[#allocation5 + $0xf50] sm:$0xff]
    %v665 = vld [vmem:[#allocation5 + $0xf58] sm:$0xff]
    %v666 = vld [vmem:[#allocation5 + $0xf60] sm:$0xff]
    %v667 = vld [vmem:[#allocation5 + $0xf68] sm:$0xff]
    %v668 = vld [vmem:[#allocation5 + $0xf70] sm:$0xff]
    %v669 = vld [vmem:[#allocation5 + $0xf78] sm:$0xff]
    %v670 = vld [vmem:[#allocation5 + $0xf80] sm:$0xff]
    %v671 = vld [vmem:[#allocation5 + $0xf88] sm:$0xff]
    %v672 = vld [vmem:[#allocation5 + $0xf90] sm:$0xff]
    %v673 = vld [vmem:[#allocation5 + $0xf98] sm:$0xff]
    %v674 = vld [vmem:[#allocation5 + $0xfa0] sm:$0xff]
    %v675 = vld [vmem:[#allocation5 + $0xfa8] sm:$0xff]
    %v676 = vld [vmem:[#allocation5 + $0xfb0] sm:$0xff]
    %v677 = vld [vmem:[#allocation5 + $0xfb8] sm:$0xff]
    %v678 = vld [vmem:[#allocation5 + $0xfc0] sm:$0xff]
    %v679 = vld [vmem:[#allocation5 + $0xfc8] sm:$0xff]
    %v680 = vld [vmem:[#allocation5 + $0xfd0] sm:$0xff]
    %v681 = vld [vmem:[#allocation5 + $0xfd8] sm:$0xff]
    %v682 = vld [vmem:[#allocation5 + $0xfe0] sm:$0xff]
    %v683 = vld [vmem:[#allocation5 + $0xfe8] sm:$0xff]
    %v684 = vld [vmem:[#allocation5 + $0xff0] sm:$0xff]
    %v685 = vld [vmem:[#allocation5 + $0xff8] sm:$0xff]
    %v686 = vld [vmem:[#allocation5 + $0x1000] sm:$0xff]
    %v687 = vld [vmem:[#allocation5 + $0x1008] sm:$0xff]
    %v688 = vld [vmem:[#allocation5 + $0x1010] sm:$0xff]
    %v689 = vld [vmem:[#allocation5 + $0x1018] sm:$0xff]
    %v690 = vld [vmem:[#allocation5 + $0x1020] sm:$0xff]
    %v691 = vld [vmem:[#allocation5 + $0x1028] sm:$0xff]
    %v692 = vld [vmem:[#allocation5 + $0x1030] sm:$0xff]
    %v693 = vld [vmem:[#allocation5 + $0x1038] sm:$0xff]
    %v694 = vld [vmem:[#allocation5 + $0x1040] sm:$0xff]
    %v695 = vld [vmem:[#allocation5 + $0x1048] sm:$0xff]
    %v696 = vld [vmem:[#allocation5 + $0x1050] sm:$0xff]
    %v697 = vld [vmem:[#allocation5 + $0x1058] sm:$0xff]
    %v698 = vld [vmem:[#allocation5 + $0x1060] sm:$0xff]
    %v699 = vld [vmem:[#allocation5 + $0x1068] sm:$0xff]
    %v700 = vld [vmem:[#allocation5 + $0x1070] sm:$0xff]
    %v701 = vld [vmem:[#allocation5 + $0x1078] sm:$0xff]
    %v702 = vld [vmem:[#allocation5 + $0x1080] sm:$0xff]
    %v703 = vld [vmem:[#allocation5 + $0x1088] sm:$0xff]
    %v704 = vld [vmem:[#allocation5 + $0x1090] sm:$0xff]
    %v705 = vld [vmem:[#allocation5 + $0x1098] sm:$0xff]
    %v706 = vld [vmem:[#allocation5 + $0x10a0] sm:$0xff]
    %v707 = vld [vmem:[#allocation5 + $0x10a8] sm:$0xff]
    %v708 = vld [vmem:[#allocation5 + $0x10b0] sm:$0xff]
    %v709 = vld [vmem:[#allocation5 + $0x10b8] sm:$0xff]
    %v710 = vld [vmem:[#allocation5 + $0x10c0] sm:$0xff]
    %v711 = vld [vmem:[#allocation5 + $0x10c8] sm:$0xff]
    %v712 = vld [vmem:[#allocation5 + $0x10d0] sm:$0xff]
    %v713 = vld [vmem:[#allocation5 + $0x10d8] sm:$0xff]
    %v714 = vld [vmem:[#allocation5 + $0x10e0] sm:$0xff]
    %v715 = vld [vmem:[#allocation5 + $0x10e8] sm:$0xff]
    %v716 = vld [vmem:[#allocation5 + $0x10f0] sm:$0xff]
    %v717 = vld [vmem:[#allocation5 + $0x10f8] sm:$0xff]
    %v718 = vld [vmem:[#allocation5 + $0x1100] sm:$0xff]
    %v719 = vld [vmem:[#allocation5 + $0x1108] sm:$0xff]
    %v720 = vld [vmem:[#allocation5 + $0x1110] sm:$0xff]
    %v721 = vld [vmem:[#allocation5 + $0x1118] sm:$0xff]
    %v722 = vld [vmem:[#allocation5 + $0x1120] sm:$0xff]
    %v723 = vld [vmem:[#allocation5 + $0x1128] sm:$0xff]
    %v724 = vld [vmem:[#allocation5 + $0x1130] sm:$0xff]
    %v725 = vld [vmem:[#allocation5 + $0x1138] sm:$0xff]
    %v726 = vld [vmem:[#allocation5 + $0x1140] sm:$0xff]
    %v727 = vld [vmem:[#allocation5 + $0x1148] sm:$0xff]
    %v728 = vld [vmem:[#allocation5 + $0x1150] sm:$0xff]
    %v729 = vld [vmem:[#allocation5 + $0x1158] sm:$0xff]
    %v730 = vld [vmem:[#allocation5 + $0x1160] sm:$0xff]
    %v731 = vld [vmem:[#allocation5 + $0x1168] sm:$0xff]
    %v732 = vld [vmem:[#allocation5 + $0x1170] sm:$0xff]
    %v733 = vld [vmem:[#allocation5 + $0x1178] sm:$0xff]
    %v734 = vld [vmem:[#allocation5 + $0x1180] sm:$0xff]
    %v735 = vld [vmem:[#allocation5 + $0x1188] sm:$0xff]
    %v736 = vld [vmem:[#allocation5 + $0x1190] sm:$0xff]
    %v737 = vld [vmem:[#allocation5 + $0x1198] sm:$0xff]
    %v738 = vld [vmem:[#allocation5 + $0x11a0] sm:$0xff]
    %v739 = vld [vmem:[#allocation5 + $0x11a8] sm:$0xff]
    %v740 = vld [vmem:[#allocation5 + $0x11b0] sm:$0xff]
    %v741 = vld [vmem:[#allocation5 + $0x11b8] sm:$0xff]
    %v742 = vld [vmem:[#allocation5 + $0x11c0] sm:$0xff]
    %v743 = vld [vmem:[#allocation5 + $0x11c8] sm:$0xff]
    %v744 = vld [vmem:[#allocation5 + $0x11d0] sm:$0xff]
    %v745 = vld [vmem:[#allocation5 + $0x11d8] sm:$0xff]
    %v746 = vld [vmem:[#allocation5 + $0x11e0] sm:$0xff]
    %v747 = vld [vmem:[#allocation5 + $0x11e8] sm:$0xff]
    %v748 = vld [vmem:[#allocation5 + $0x11f0] sm:$0xff]
    %v749 = vld [vmem:[#allocation5 + $0x11f8] sm:$0xff]
    %v750 = vld [vmem:[#allocation5 + $0x1200] sm:$0xff]
    %v751 = vld [vmem:[#allocation5 + $0x1208] sm:$0xff]
    %v752 = vld [vmem:[#allocation5 + $0x1210] sm:$0xff]
    %v753 = vld [vmem:[#allocation5 + $0x1218] sm:$0xff]
    %v754 = vld [vmem:[#allocation5 + $0x1220] sm:$0xff]
    %v755 = vld [vmem:[#allocation5 + $0x1228] sm:$0xff]
    %v756 = vld [vmem:[#allocation5 + $0x1230] sm:$0xff]
    %v757 = vld [vmem:[#allocation5 + $0x1238] sm:$0xff]
    %v758 = vld [vmem:[#allocation5 + $0x1240] sm:$0xff]
    %v759 = vld [vmem:[#allocation5 + $0x1248] sm:$0xff]
    %v760 = vld [vmem:[#allocation5 + $0x1250] sm:$0xff]
    %v761 = vld [vmem:[#allocation5 + $0x1258] sm:$0xff]
    %v762 = vld [vmem:[#allocation5 + $0x1260] sm:$0xff]
    %v763 = vld [vmem:[#allocation5 + $0x1268] sm:$0xff]
    %v764 = vld [vmem:[#allocation5 + $0x1270] sm:$0xff]
    %v765 = vld [vmem:[#allocation5 + $0x1278] sm:$0xff]
    %v766 = vld [vmem:[#allocation5 + $0x1280] sm:$0xff]
    %v767 = vld [vmem:[#allocation5 + $0x1288] sm:$0xff]
    %v768 = vld [vmem:[#allocation5 + $0x1290] sm:$0xff]
    %v769 = vld [vmem:[#allocation5 + $0x1298] sm:$0xff]
    %v770 = vld [vmem:[#allocation5 + $0x12a0] sm:$0xff]
    %v771 = vld [vmem:[#allocation5 + $0x12a8] sm:$0xff]
    %v772 = vld [vmem:[#allocation5 + $0x12b0] sm:$0xff]
    %v773 = vld [vmem:[#allocation5 + $0x12b8] sm:$0xff]
    %v774 = vld [vmem:[#allocation5 + $0x12c0] sm:$0xff]
    %v775 = vld [vmem:[#allocation5 + $0x12c8] sm:$0xff]
    %v776 = vld [vmem:[#allocation5 + $0x12d0] sm:$0xff]
    %v777 = vld [vmem:[#allocation5 + $0x12d8] sm:$0xff]
    %v778 = vld [vmem:[#allocation5 + $0x12e0] sm:$0xff]
    %v779 = vld [vmem:[#allocation5 + $0x12e8] sm:$0xff]
    %v780 = vld [vmem:[#allocation5 + $0x12f0] sm:$0xff]
    %v781 = vld [vmem:[#allocation5 + $0x12f8] sm:$0xff]
    %v782 = vld [vmem:[#allocation5 + $0x1300] sm:$0xff]
    %v783 = vld [vmem:[#allocation5 + $0x1308] sm:$0xff]
    %v784 = vld [vmem:[#allocation5 + $0x1310] sm:$0xff]
    %v785 = vld [vmem:[#allocation5 + $0x1318] sm:$0xff]
    %v786 = vld [vmem:[#allocation5 + $0x1320] sm:$0xff]
    %v787 = vld [vmem:[#allocation5 + $0x1328] sm:$0xff]
    %v788 = vld [vmem:[#allocation5 + $0x1330] sm:$0xff]
    %v789 = vld [vmem:[#allocation5 + $0x1338] sm:$0xff]
    %v790 = vld [vmem:[#allocation5 + $0x1340] sm:$0xff]
    %v791 = vld [vmem:[#allocation5 + $0x1348] sm:$0xff]
    %v792 = vld [vmem:[#allocation5 + $0x1350] sm:$0xff]
    %v793 = vld [vmem:[#allocation5 + $0x1358] sm:$0xff]
    %v794 = vld [vmem:[#allocation5 + $0x1360] sm:$0xff]
    %v795 = vld [vmem:[#allocation5 + $0x1368] sm:$0xff]
    %v796 = vld [vmem:[#allocation5 + $0x1370] sm:$0xff]
    %v797 = vld [vmem:[#allocation5 + $0x1378] sm:$0xff]
    %v798 = vld [vmem:[#allocation5 + $0x1380] sm:$0xff]
    %v799 = vld [vmem:[#allocation5 + $0x1388] sm:$0xff]
    %v800 = vld [vmem:[#allocation5 + $0x1390] sm:$0xff]
    %v801 = vld [vmem:[#allocation5 + $0x1398] sm:$0xff]
    %v802 = vld [vmem:[#allocation5 + $0x13a0] sm:$0xff]
    %v803 = vld [vmem:[#allocation5 + $0x13a8] sm:$0xff]
    %v804 = vld [vmem:[#allocation5 + $0x13b0] sm:$0xff]
    %v805 = vld [vmem:[#allocation5 + $0x13b8] sm:$0xff]
    %v806 = vld [vmem:[#allocation5 + $0x13c0] sm:$0xff]
    %v807 = vld [vmem:[#allocation5 + $0x13c8] sm:$0xff]
    %v808 = vld [vmem:[#allocation5 + $0x13d0] sm:$0xff]
    %v809 = vld [vmem:[#allocation5 + $0x13d8] sm:$0xff]
    %v810 = vld [vmem:[#allocation5 + $0x13e0] sm:$0xff]
    %v811 = vld [vmem:[#allocation5 + $0x13e8] sm:$0xff]
    %v812 = vld [vmem:[#allocation5 + $0x13f0] sm:$0xff]
    %v813 = vld [vmem:[#allocation5 + $0x13f8] sm:$0xff]
    %v814 = vld [vmem:[#allocation5 + $0x1400] sm:$0xff]
    %v815 = vld [vmem:[#allocation5 + $0x1408] sm:$0xff]
    %v816 = vld [vmem:[#allocation5 + $0x1410] sm:$0xff]
    %v817 = vld [vmem:[#allocation5 + $0x1418] sm:$0xff]
    %v818 = vld [vmem:[#allocation5 + $0x1420] sm:$0xff]
    %v819 = vld [vmem:[#allocation5 + $0x1428] sm:$0xff]
    %v820 = vld [vmem:[#allocation5 + $0x1430] sm:$0xff]
    %v821 = vld [vmem:[#allocation5 + $0x1438] sm:$0xff]
    %v822 = vld [vmem:[#allocation5 + $0x1440] sm:$0xff]
    %v823 = vld [vmem:[#allocation5 + $0x1448] sm:$0xff]
    %v824 = vld [vmem:[#allocation5 + $0x1450] sm:$0xff]
    %v825 = vld [vmem:[#allocation5 + $0x1458] sm:$0xff]
    %v826 = vld [vmem:[#allocation5 + $0x1460] sm:$0xff]
    %v827 = vld [vmem:[#allocation5 + $0x1468] sm:$0xff]
    %v828 = vld [vmem:[#allocation5 + $0x1470] sm:$0xff]
    %v829 = vld [vmem:[#allocation5 + $0x1478] sm:$0xff]
    %v830 = vld [vmem:[#allocation5 + $0x1480] sm:$0xff]
    %v831 = vld [vmem:[#allocation5 + $0x1488] sm:$0xff]
    %v832 = vld [vmem:[#allocation5 + $0x1490] sm:$0xff]
    %v833 = vld [vmem:[#allocation5 + $0x1498] sm:$0xff]
    %v834 = vld [vmem:[#allocation5 + $0x14a0] sm:$0xff]
    %v835 = vld [vmem:[#allocation5 + $0x14a8] sm:$0xff]
    %v836 = vld [vmem:[#allocation5 + $0x14b0] sm:$0xff]
    %v837 = vld [vmem:[#allocation5 + $0x14b8] sm:$0xff]
    %v838 = vld [vmem:[#allocation5 + $0x14c0] sm:$0xff]
    %v839 = vld [vmem:[#allocation5 + $0x14c8] sm:$0xff]
    %v840 = vld [vmem:[#allocation5 + $0x14d0] sm:$0xff]
    %v841 = vld [vmem:[#allocation5 + $0x14d8] sm:$0xff]
    %v842 = vld [vmem:[#allocation5 + $0x14e0] sm:$0xff]
    %v843 = vld [vmem:[#allocation5 + $0x14e8] sm:$0xff]
    %v844 = vld [vmem:[#allocation5 + $0x14f0] sm:$0xff]
    %v845 = vld [vmem:[#allocation5 + $0x14f8] sm:$0xff]
    %v846 = vld [vmem:[#allocation5 + $0x1500] sm:$0xff]
    %v847 = vld [vmem:[#allocation5 + $0x1508] sm:$0xff]
    %v848 = vld [vmem:[#allocation5 + $0x1510] sm:$0xff]
    %v849 = vld [vmem:[#allocation5 + $0x1518] sm:$0xff]
    %v850 = vld [vmem:[#allocation5 + $0x1520] sm:$0xff]
    %v851 = vld [vmem:[#allocation5 + $0x1528] sm:$0xff]
    %v852 = vld [vmem:[#allocation5 + $0x1530] sm:$0xff]
    %v853 = vld [vmem:[#allocation5 + $0x1538] sm:$0xff]
    %v854 = vld [vmem:[#allocation5 + $0x1540] sm:$0xff]
    %v855 = vld [vmem:[#allocation5 + $0x1548] sm:$0xff]
    %v856 = vld [vmem:[#allocation5 + $0x1550] sm:$0xff]
    %v857 = vld [vmem:[#allocation5 + $0x1558] sm:$0xff]
    %v858 = vld [vmem:[#allocation5 + $0x1560] sm:$0xff]
    %v859 = vld [vmem:[#allocation5 + $0x1568] sm:$0xff]
    %v860 = vld [vmem:[#allocation5 + $0x1570] sm:$0xff]
    %v861 = vld [vmem:[#allocation5 + $0x1578] sm:$0xff]
    %v862 = vld [vmem:[#allocation5 + $0x1580] sm:$0xff]
    %v863 = vld [vmem:[#allocation5 + $0x1588] sm:$0xff]
    %v864 = vld [vmem:[#allocation5 + $0x1590] sm:$0xff]
    %v865 = vld [vmem:[#allocation5 + $0x1598] sm:$0xff]
    %v866 = vld [vmem:[#allocation5 + $0x15a0] sm:$0xff]
    %v867 = vld [vmem:[#allocation5 + $0x15a8] sm:$0xff]
    %v868 = vld [vmem:[#allocation5 + $0x15b0] sm:$0xff]
    %v869 = vld [vmem:[#allocation5 + $0x15b8] sm:$0xff]
    %v870 = vld [vmem:[#allocation5 + $0x15c0] sm:$0xff]
    %v871 = vld [vmem:[#allocation5 + $0x15c8] sm:$0xff]
    %v872 = vld [vmem:[#allocation5 + $0x15d0] sm:$0xff]
    %v873 = vld [vmem:[#allocation5 + $0x15d8] sm:$0xff]
    %v874 = vld [vmem:[#allocation5 + $0x15e0] sm:$0xff]
    %v875 = vld [vmem:[#allocation5 + $0x15e8] sm:$0xff]
    %v876 = vld [vmem:[#allocation5 + $0x15f0] sm:$0xff]
    %v877 = vld [vmem:[#allocation5 + $0x15f8] sm:$0xff]
    %v878 = vld [vmem:[#allocation5 + $0x1600] sm:$0xff]
    %v879 = vld [vmem:[#allocation5 + $0x1608] sm:$0xff]
    %v880 = vld [vmem:[#allocation5 + $0x1610] sm:$0xff]
    %v881 = vld [vmem:[#allocation5 + $0x1618] sm:$0xff]
    %v882 = vld [vmem:[#allocation5 + $0x1620] sm:$0xff]
    %v883 = vld [vmem:[#allocation5 + $0x1628] sm:$0xff]
    %v884 = vld [vmem:[#allocation5 + $0x1630] sm:$0xff]
    %v885 = vld [vmem:[#allocation5 + $0x1638] sm:$0xff]
    %v886 = vld [vmem:[#allocation5 + $0x1640] sm:$0xff]
    %v887 = vld [vmem:[#allocation5 + $0x1648] sm:$0xff]
    %v888 = vld [vmem:[#allocation5 + $0x1650] sm:$0xff]
    %v889 = vld [vmem:[#allocation5 + $0x1658] sm:$0xff]
    %v890 = vld [vmem:[#allocation5 + $0x1660] sm:$0xff]
    %v891 = vld [vmem:[#allocation5 + $0x1668] sm:$0xff]
    %v892 = vld [vmem:[#allocation5 + $0x1670] sm:$0xff]
    %v893 = vld [vmem:[#allocation5 + $0x1678] sm:$0xff]
    %v894 = vld [vmem:[#allocation5 + $0x1680] sm:$0xff]
    %v895 = vld [vmem:[#allocation5 + $0x1688] sm:$0xff]
    %v896 = vld [vmem:[#allocation5 + $0x1690] sm:$0xff]
    %v897 = vld [vmem:[#allocation5 + $0x1698] sm:$0xff]
    %v898 = vld [vmem:[#allocation5 + $0x16a0] sm:$0xff]
    %v899 = vld [vmem:[#allocation5 + $0x16a8] sm:$0xff]
    %v900 = vld [vmem:[#allocation5 + $0x16b0] sm:$0xff]
    %v901 = vld [vmem:[#allocation5 + $0x16b8] sm:$0xff]
    %v902 = vld [vmem:[#allocation5 + $0x16c0] sm:$0xff]
    %v903 = vld [vmem:[#allocation5 + $0x16c8] sm:$0xff]
    %v904 = vld [vmem:[#allocation5 + $0x16d0] sm:$0xff]
    %v905 = vld [vmem:[#allocation5 + $0x16d8] sm:$0xff]
    %v906 = vld [vmem:[#allocation5 + $0x16e0] sm:$0xff]
    %v907 = vld [vmem:[#allocation5 + $0x16e8] sm:$0xff]
    %v908 = vld [vmem:[#allocation5 + $0x16f0] sm:$0xff]
    %v909 = vld [vmem:[#allocation5 + $0x16f8] sm:$0xff]
    %v910 = vld [vmem:[#allocation5 + $0x1700] sm:$0xff]
    %v911 = vld [vmem:[#allocation5 + $0x1708] sm:$0xff]
    %v912 = vld [vmem:[#allocation5 + $0x1710] sm:$0xff]
    %v913 = vld [vmem:[#allocation5 + $0x1718] sm:$0xff]
    %v914 = vld [vmem:[#allocation5 + $0x1720] sm:$0xff]
    %v915 = vld [vmem:[#allocation5 + $0x1728] sm:$0xff]
    %v916 = vld [vmem:[#allocation5 + $0x1730] sm:$0xff]
    %v917 = vld [vmem:[#allocation5 + $0x1738] sm:$0xff]
    %v918 = vld [vmem:[#allocation5 + $0x1740] sm:$0xff]
    %v919 = vld [vmem:[#allocation5 + $0x1748] sm:$0xff]
    %v920 = vld [vmem:[#allocation5 + $0x1750] sm:$0xff]
    %v921 = vld [vmem:[#allocation5 + $0x1758] sm:$0xff]
    %v922 = vld [vmem:[#allocation5 + $0x1760] sm:$0xff]
    %v923 = vld [vmem:[#allocation5 + $0x1768] sm:$0xff]
    %v924 = vld [vmem:[#allocation5 + $0x1770] sm:$0xff]
    %v925 = vld [vmem:[#allocation5 + $0x1778] sm:$0xff]
    %v926 = vld [vmem:[#allocation5 + $0x1780] sm:$0xff]
    %v927 = vld [vmem:[#allocation5 + $0x1788] sm:$0xff]
    %v928 = vld [vmem:[#allocation5 + $0x1790] sm:$0xff]
    %v929 = vld [vmem:[#allocation5 + $0x1798] sm:$0xff]
    %v930 = vld [vmem:[#allocation5 + $0x17a0] sm:$0xff]
    %v931 = vld [vmem:[#allocation5 + $0x17a8] sm:$0xff]
    %v932 = vld [vmem:[#allocation5 + $0x17b0] sm:$0xff]
    %v933 = vld [vmem:[#allocation5 + $0x17b8] sm:$0xff]
    %v934 = vld [vmem:[#allocation5 + $0x17c0] sm:$0xff]
    %v935 = vld [vmem:[#allocation5 + $0x17c8] sm:$0xff]
    %v936 = vld [vmem:[#allocation5 + $0x17d0] sm:$0xff]
    %v937 = vld [vmem:[#allocation5 + $0x17d8] sm:$0xff]
    %v938 = vld [vmem:[#allocation5 + $0x17e0] sm:$0xff]
    %v939 = vld [vmem:[#allocation5 + $0x17e8] sm:$0xff]
    %v940 = vld [vmem:[#allocation5 + $0x17f0] sm:$0xff]
    %v941 = vld [vmem:[#allocation5 + $0x17f8] sm:$0xff]
    %v942 = vld [vmem:[#allocation5 + $0x1800] sm:$0xff]
    %v943 = vld [vmem:[#allocation5 + $0x1808] sm:$0xff]
    %v944 = vld [vmem:[#allocation5 + $0x1810] sm:$0xff]
    %v945 = vld [vmem:[#allocation5 + $0x1818] sm:$0xff]
    %v946 = vld [vmem:[#allocation5 + $0x1820] sm:$0xff]
    %v947 = vld [vmem:[#allocation5 + $0x1828] sm:$0xff]
    %v948 = vld [vmem:[#allocation5 + $0x1830] sm:$0xff]
    %v949 = vld [vmem:[#allocation5 + $0x1838] sm:$0xff]
    %v950 = vld [vmem:[#allocation5 + $0x1840] sm:$0xff]
    %v951 = vld [vmem:[#allocation5 + $0x1848] sm:$0xff]
    %v952 = vld [vmem:[#allocation5 + $0x1850] sm:$0xff]
    %v953 = vld [vmem:[#allocation5 + $0x1858] sm:$0xff]
    %v954 = vld [vmem:[#allocation5 + $0x1860] sm:$0xff]
    %v955 = vld [vmem:[#allocation5 + $0x1868] sm:$0xff]
    %v956 = vld [vmem:[#allocation5 + $0x1870] sm:$0xff]
    %v957 = vld [vmem:[#allocation5 + $0x1878] sm:$0xff]
    %v958 = vld [vmem:[#allocation5 + $0x1880] sm:$0xff]
    %v959 = vld [vmem:[#allocation5 + $0x1888] sm:$0xff]
    %v960 = vld [vmem:[#allocation5 + $0x1890] sm:$0xff]
    %v961 = vld [vmem:[#allocation5 + $0x1898] sm:$0xff]
    %v962 = vld [vmem:[#allocation5 + $0x18a0] sm:$0xff]
    %v963 = vld [vmem:[#allocation5 + $0x18a8] sm:$0xff]
    %v964 = vld [vmem:[#allocation5 + $0x18b0] sm:$0xff]
    %v965 = vld [vmem:[#allocation5 + $0x18b8] sm:$0xff]
    %v966 = vld [vmem:[#allocation5 + $0x18c0] sm:$0xff]
    %v967 = vld [vmem:[#allocation5 + $0x18c8] sm:$0xff]
    %v968 = vld [vmem:[#allocation5 + $0x18d0] sm:$0xff]
    %v969 = vld [vmem:[#allocation5 + $0x18d8] sm:$0xff]
    %v970 = vld [vmem:[#allocation5 + $0x18e0] sm:$0xff]
    %v971 = vld [vmem:[#allocation5 + $0x18e8] sm:$0xff]
    %v972 = vld [vmem:[#allocation5 + $0x18f0] sm:$0xff]
    %v973 = vld [vmem:[#allocation5 + $0x18f8] sm:$0xff]
    %v974 = vld [vmem:[#allocation5 + $0x1900] sm:$0xff]
    %v975 = vld [vmem:[#allocation5 + $0x1908] sm:$0xff]
    %v976 = vld [vmem:[#allocation5 + $0x1910] sm:$0xff]
    %v977 = vld [vmem:[#allocation5 + $0x1918] sm:$0xff]
    %v978 = vld [vmem:[#allocation5 + $0x1920] sm:$0xff]
    %v979 = vld [vmem:[#allocation5 + $0x1928] sm:$0xff]
    %v980 = vld [vmem:[#allocation5 + $0x1930] sm:$0xff]
    %v981 = vld [vmem:[#allocation5 + $0x1938] sm:$0xff]
    %v982 = vld [vmem:[#allocation5 + $0x1940] sm:$0xff]
    %v983 = vld [vmem:[#allocation5 + $0x1948] sm:$0xff]
    %v984 = vld [vmem:[#allocation5 + $0x1950] sm:$0xff]
    %v985 = vld [vmem:[#allocation5 + $0x1958] sm:$0xff]
    %v986 = vld [vmem:[#allocation5 + $0x1960] sm:$0xff]
    %v987 = vld [vmem:[#allocation5 + $0x1968] sm:$0xff]
    %v988 = vld [vmem:[#allocation5 + $0x1970] sm:$0xff]
    %v989 = vld [vmem:[#allocation5 + $0x1978] sm:$0xff]
    %v990 = vld [vmem:[#allocation5 + $0x1980] sm:$0xff]
    %v991 = vld [vmem:[#allocation5 + $0x1988] sm:$0xff]
    %v992 = vld [vmem:[#allocation5 + $0x1990] sm:$0xff]
    %v993 = vld [vmem:[#allocation5 + $0x1998] sm:$0xff]
    %v994 = vld [vmem:[#allocation5 + $0x19a0] sm:$0xff]
    %v995 = vld [vmem:[#allocation5 + $0x19a8] sm:$0xff]
    %v996 = vld [vmem:[#allocation5 + $0x19b0] sm:$0xff]
    %v997 = vld [vmem:[#allocation5 + $0x19b8] sm:$0xff]
    %v998 = vld [vmem:[#allocation5 + $0x19c0] sm:$0xff]
    %v999 = vld [vmem:[#allocation5 + $0x19c8] sm:$0xff]
    %v1000 = vld [vmem:[#allocation5 + $0x19d0] sm:$0xff]
    %v1001 = vld [vmem:[#allocation5 + $0x19d8] sm:$0xff]
    %v1002 = vld [vmem:[#allocation5 + $0x19e0] sm:$0xff]
    %v1003 = vld [vmem:[#allocation5 + $0x19e8] sm:$0xff]
    %v1004 = vld [vmem:[#allocation5 + $0x19f0] sm:$0xff]
    %v1005 = vld [vmem:[#allocation5 + $0x19f8] sm:$0xff]
    %v1006 = vld [vmem:[#allocation5 + $0x1a00] sm:$0xff]
    %v1007 = vld [vmem:[#allocation5 + $0x1a08] sm:$0xff]
    %v1008 = vld [vmem:[#allocation5 + $0x1a10] sm:$0xff]
    %v1009 = vld [vmem:[#allocation5 + $0x1a18] sm:$0xff]
    %v1010 = vld [vmem:[#allocation5 + $0x1a20] sm:$0xff]
    %v1011 = vld [vmem:[#allocation5 + $0x1a28] sm:$0xff]
    %v1012 = vld [vmem:[#allocation5 + $0x1a30] sm:$0xff]
    %v1013 = vld [vmem:[#allocation5 + $0x1a38] sm:$0xff]
    %v1014 = vld [vmem:[#allocation5 + $0x1a40] sm:$0xff]
    %v1015 = vld [vmem:[#allocation5 + $0x1a48] sm:$0xff]
    %v1016 = vld [vmem:[#allocation5 + $0x1a50] sm:$0xff]
    %v1017 = vld [vmem:[#allocation5 + $0x1a58] sm:$0xff]
    %v1018 = vld [vmem:[#allocation5 + $0x1a60] sm:$0xff]
    %v1019 = vld [vmem:[#allocation5 + $0x1a68] sm:$0xff]
    %v1020 = vld [vmem:[#allocation5 + $0x1a70] sm:$0xff]
    %v1021 = vld [vmem:[#allocation5 + $0x1a78] sm:$0xff]
    %v1022 = vld [vmem:[#allocation5 + $0x1a80] sm:$0xff]
    %v1023 = vld [vmem:[#allocation5 + $0x1a88] sm:$0xff]
    %v1024 = vld [vmem:[#allocation5 + $0x1a90] sm:$0xff]
    %v1025 = vld [vmem:[#allocation5 + $0x1a98] sm:$0xff]
    %v1026 = vld [vmem:[#allocation5 + $0x1aa0] sm:$0xff]
    %v1027 = vld [vmem:[#allocation5 + $0x1aa8] sm:$0xff]
    %v1028 = vld [vmem:[#allocation5 + $0x1ab0] sm:$0xff]
    %v1029 = vld [vmem:[#allocation5 + $0x1ab8] sm:$0xff]
    %v1030 = vld [vmem:[#allocation5 + $0x1ac0] sm:$0xff]
    %v1031 = vld [vmem:[#allocation5 + $0x1ac8] sm:$0xff]
    %v1032 = vld [vmem:[#allocation5 + $0x1ad0] sm:$0xff]
    %v1033 = vld [vmem:[#allocation5 + $0x1ad8] sm:$0xff]
    %v1034 = vld [vmem:[#allocation5 + $0x1ae0] sm:$0xff]
    %v1035 = vld [vmem:[#allocation5 + $0x1ae8] sm:$0xff]
    %v1036 = vld [vmem:[#allocation5 + $0x1af0] sm:$0xff]
    %v1037 = vld [vmem:[#allocation5 + $0x1af8] sm:$0xff]
    %v1038 = vld [vmem:[#allocation5 + $0x1b00] sm:$0xff]
    %v1039 = vld [vmem:[#allocation5 + $0x1b08] sm:$0xff]
    %v1040 = vld [vmem:[#allocation5 + $0x1b10] sm:$0xff]
    %v1041 = vld [vmem:[#allocation5 + $0x1b18] sm:$0xff]
    %v1042 = vld [vmem:[#allocation5 + $0x1b20] sm:$0xff]
    %v1043 = vld [vmem:[#allocation5 + $0x1b28] sm:$0xff]
    %v1044 = vld [vmem:[#allocation5 + $0x1b30] sm:$0xff]
    %v1045 = vld [vmem:[#allocation5 + $0x1b38] sm:$0xff]
    %v1046 = vld [vmem:[#allocation5 + $0x1b40] sm:$0xff]
    %v1047 = vld [vmem:[#allocation5 + $0x1b48] sm:$0xff]
    %v1048 = vld [vmem:[#allocation5 + $0x1b50] sm:$0xff]
    %v1049 = vld [vmem:[#allocation5 + $0x1b58] sm:$0xff]
    %v1050 = vld [vmem:[#allocation5 + $0x1b60] sm:$0xff]
    %v1051 = vld [vmem:[#allocation5 + $0x1b68] sm:$0xff]
    %v1052 = vld [vmem:[#allocation5 + $0x1b70] sm:$0xff]
    %v1053 = vld [vmem:[#allocation5 + $0x1b78] sm:$0xff]
    %v1054 = vld [vmem:[#allocation5 + $0x1b80] sm:$0xff]
    %v1055 = vld [vmem:[#allocation5 + $0x1b88] sm:$0xff]
    %v1056 = vld [vmem:[#allocation5 + $0x1b90] sm:$0xff]
    %v1057 = vld [vmem:[#allocation5 + $0x1b98] sm:$0xff]
    %v1058 = vld [vmem:[#allocation5 + $0x1ba0] sm:$0xff]
    %v1059 = vld [vmem:[#allocation5 + $0x1ba8] sm:$0xff]
    %v1060 = vld [vmem:[#allocation5 + $0x1bb0] sm:$0xff]
    %v1061 = vld [vmem:[#allocation5 + $0x1bb8] sm:$0xff]
    %v1062 = vld [vmem:[#allocation5 + $0x1bc0] sm:$0xff]
    %v1063 = vld [vmem:[#allocation5 + $0x1bc8] sm:$0xff]
    %v1064 = vld [vmem:[#allocation5 + $0x1bd0] sm:$0xff]
    %v1065 = vld [vmem:[#allocation5 + $0x1bd8] sm:$0xff]
    %v1066 = vld [vmem:[#allocation5 + $0x1be0] sm:$0xff]
    %v1067 = vld [vmem:[#allocation5 + $0x1be8] sm:$0xff]
    %v1068 = vld [vmem:[#allocation5 + $0x1bf0] sm:$0xff]
    %v1069 = vld [vmem:[#allocation5 + $0x1bf8] sm:$0xff]
    %v1070 = vld [vmem:[#allocation5 + $0x1c00] sm:$0xff]
    %v1071 = vld [vmem:[#allocation5 + $0x1c08] sm:$0xff]
    %v1072 = vld [vmem:[#allocation5 + $0x1c10] sm:$0xff]
    %v1073 = vld [vmem:[#allocation5 + $0x1c18] sm:$0xff]
    %v1074 = vld [vmem:[#allocation5 + $0x1c20] sm:$0xff]
    %v1075 = vld [vmem:[#allocation5 + $0x1c28] sm:$0xff]
    %v1076 = vld [vmem:[#allocation5 + $0x1c30] sm:$0xff]
    %v1077 = vld [vmem:[#allocation5 + $0x1c38] sm:$0xff]
    %v1078 = vld [vmem:[#allocation5 + $0x1c40] sm:$0xff]
    %v1079 = vld [vmem:[#allocation5 + $0x1c48] sm:$0xff]
    %v1080 = vld [vmem:[#allocation5 + $0x1c50] sm:$0xff]
    %v1081 = vld [vmem:[#allocation5 + $0x1c58] sm:$0xff]
    %v1082 = vld [vmem:[#allocation5 + $0x1c60] sm:$0xff]
    %v1083 = vld [vmem:[#allocation5 + $0x1c68] sm:$0xff]
    %v1084 = vld [vmem:[#allocation5 + $0x1c70] sm:$0xff]
    %v1085 = vld [vmem:[#allocation5 + $0x1c78] sm:$0xff]
    %v1086 = vld [vmem:[#allocation5 + $0x1c80] sm:$0xff]
    %v1087 = vld [vmem:[#allocation5 + $0x1c88] sm:$0xff]
    %v1088 = vld [vmem:[#allocation5 + $0x1c90] sm:$0xff]
    %v1089 = vld [vmem:[#allocation5 + $0x1c98] sm:$0xff]
    %v1090 = vld [vmem:[#allocation5 + $0x1ca0] sm:$0xff]
    %v1091 = vld [vmem:[#allocation5 + $0x1ca8] sm:$0xff]
    %v1092 = vld [vmem:[#allocation5 + $0x1cb0] sm:$0xff]
    %v1093 = vld [vmem:[#allocation5 + $0x1cb8] sm:$0xff]
    %v1094 = vld [vmem:[#allocation5 + $0x1cc0] sm:$0xff]
    %v1095 = vld [vmem:[#allocation5 + $0x1cc8] sm:$0xff]
    %v1096 = vld [vmem:[#allocation5 + $0x1cd0] sm:$0xff]
    %v1097 = vld [vmem:[#allocation5 + $0x1cd8] sm:$0xff]
    %v1098 = vld [vmem:[#allocation5 + $0x1ce0] sm:$0xff]
    %v1099 = vld [vmem:[#allocation5 + $0x1ce8] sm:$0xff]
    %v1100 = vld [vmem:[#allocation5 + $0x1cf0] sm:$0xff]
    %v1101 = vld [vmem:[#allocation5 + $0x1cf8] sm:$0xff]
    %v1102 = vld [vmem:[#allocation5 + $0x1d00] sm:$0xff]
    %v1103 = vld [vmem:[#allocation5 + $0x1d08] sm:$0xff]
    %v1104 = vld [vmem:[#allocation5 + $0x1d10] sm:$0xff]
    %v1105 = vld [vmem:[#allocation5 + $0x1d18] sm:$0xff]
    %v1106 = vld [vmem:[#allocation5 + $0x1d20] sm:$0xff]
    %v1107 = vld [vmem:[#allocation5 + $0x1d28] sm:$0xff]
    %v1108 = vld [vmem:[#allocation5 + $0x1d30] sm:$0xff]
    %v1109 = vld [vmem:[#allocation5 + $0x1d38] sm:$0xff]
    %v1110 = vld [vmem:[#allocation5 + $0x1d40] sm:$0xff]
    %v1111 = vld [vmem:[#allocation5 + $0x1d48] sm:$0xff]
    %v1112 = vld [vmem:[#allocation5 + $0x1d50] sm:$0xff]
    %v1113 = vld [vmem:[#allocation5 + $0x1d58] sm:$0xff]
    %v1114 = vld [vmem:[#allocation5 + $0x1d60] sm:$0xff]
    %v1115 = vld [vmem:[#allocation5 + $0x1d68] sm:$0xff]
    %v1116 = vld [vmem:[#allocation5 + $0x1d70] sm:$0xff]
    %v1117 = vld [vmem:[#allocation5 + $0x1d78] sm:$0xff]
    %v1118 = vld [vmem:[#allocation5 + $0x1d80] sm:$0xff]
    %v1119 = vld [vmem:[#allocation5 + $0x1d88] sm:$0xff]
    %v1120 = vld [vmem:[#allocation5 + $0x1d90] sm:$0xff]
    %v1121 = vld [vmem:[#allocation5 + $0x1d98] sm:$0xff]
    %v1122 = vld [vmem:[#allocation5 + $0x1da0] sm:$0xff]
    %v1123 = vld [vmem:[#allocation5 + $0x1da8] sm:$0xff]
    %v1124 = vld [vmem:[#allocation5 + $0x1db0] sm:$0xff]
    %v1125 = vld [vmem:[#allocation5 + $0x1db8] sm:$0xff]
    %v1126 = vld [vmem:[#allocation5 + $0x1dc0] sm:$0xff]
    %v1127 = vld [vmem:[#allocation5 + $0x1dc8] sm:$0xff]
    %v1128 = vld [vmem:[#allocation5 + $0x1dd0] sm:$0xff]
    %v1129 = vld [vmem:[#allocation5 + $0x1dd8] sm:$0xff]
    %v1130 = vld [vmem:[#allocation5 + $0x1de0] sm:$0xff]
    %v1131 = vld [vmem:[#allocation5 + $0x1de8] sm:$0xff]
    %v1132 = vld [vmem:[#allocation5 + $0x1df0] sm:$0xff]
    %v1133 = vld [vmem:[#allocation5 + $0x1df8] sm:$0xff]
    %v1134 = vld [vmem:[#allocation5 + $0x1e00] sm:$0xff]
    %v1135 = vld [vmem:[#allocation5 + $0x1e08] sm:$0xff]
    %v1136 = vld [vmem:[#allocation5 + $0x1e10] sm:$0xff]
    %v1137 = vld [vmem:[#allocation5 + $0x1e18] sm:$0xff]
    %v1138 = vld [vmem:[#allocation5 + $0x1e20] sm:$0xff]
    %v1139 = vld [vmem:[#allocation5 + $0x1e28] sm:$0xff]
    %v1140 = vld [vmem:[#allocation5 + $0x1e30] sm:$0xff]
    %v1141 = vld [vmem:[#allocation5 + $0x1e38] sm:$0xff]
    %v1142 = vld [vmem:[#allocation5 + $0x1e40] sm:$0xff]
    %v1143 = vld [vmem:[#allocation5 + $0x1e48] sm:$0xff]
    %v1144 = vld [vmem:[#allocation5 + $0x1e50] sm:$0xff]
    %v1145 = vld [vmem:[#allocation5 + $0x1e58] sm:$0xff]
    %v1146 = vld [vmem:[#allocation5 + $0x1e60] sm:$0xff]
    %v1147 = vld [vmem:[#allocation5 + $0x1e68] sm:$0xff]
    %v1148 = vld [vmem:[#allocation5 + $0x1e70] sm:$0xff]
    %v1149 = vld [vmem:[#allocation5 + $0x1e78] sm:$0xff]
    %v1150 = vld [vmem:[#allocation5 + $0x1e80] sm:$0xff]
    %v1151 = vld [vmem:[#allocation5 + $0x1e88] sm:$0xff]
    %v1152 = vld [vmem:[#allocation5 + $0x1e90] sm:$0xff]
    %v1153 = vld [vmem:[#allocation5 + $0x1e98] sm:$0xff]
    %v1154 = vld [vmem:[#allocation5 + $0x1ea0] sm:$0xff]
    %v1155 = vld [vmem:[#allocation5 + $0x1ea8] sm:$0xff]
    %v1156 = vld [vmem:[#allocation5 + $0x1eb0] sm:$0xff]
    %v1157 = vld [vmem:[#allocation5 + $0x1eb8] sm:$0xff]
    %v1158 = vld [vmem:[#allocation5 + $0x1ec0] sm:$0xff]
    %v1159 = vld [vmem:[#allocation5 + $0x1ec8] sm:$0xff]
    %v1160 = vld [vmem:[#allocation5 + $0x1ed0] sm:$0xff]
    %v1161 = vld [vmem:[#allocation5 + $0x1ed8] sm:$0xff]
    %v1162 = vld [vmem:[#allocation5 + $0x1ee0] sm:$0xff]
    %v1163 = vld [vmem:[#allocation5 + $0x1ee8] sm:$0xff]
    %v1164 = vld [vmem:[#allocation5 + $0x1ef0] sm:$0xff]
    %v1165 = vld [vmem:[#allocation5 + $0x1ef8] sm:$0xff]
    %v1166 = vld [vmem:[#allocation5 + $0x1f00] sm:$0xff]
    %v1167 = vld [vmem:[#allocation5 + $0x1f08] sm:$0xff]
    %v1168 = vld [vmem:[#allocation5 + $0x1f10] sm:$0xff]
    %v1169 = vld [vmem:[#allocation5 + $0x1f18] sm:$0xff]
    %v1170 = vld [vmem:[#allocation5 + $0x1f20] sm:$0xff]
    %v1171 = vld [vmem:[#allocation5 + $0x1f28] sm:$0xff]
    %v1172 = vld [vmem:[#allocation5 + $0x1f30] sm:$0xff]
    %v1173 = vld [vmem:[#allocation5 + $0x1f38] sm:$0xff]
    %v1174 = vld [vmem:[#allocation5 + $0x1f40] sm:$0xff]
    %v1175 = vld [vmem:[#allocation5 + $0x1f48] sm:$0xff]
    %v1176 = vld [vmem:[#allocation5 + $0x1f50] sm:$0xff]
    %v1177 = vld [vmem:[#allocation5 + $0x1f58] sm:$0xff]
    %v1178 = vld [vmem:[#allocation5 + $0x1f60] sm:$0xff]
    %v1179 = vld [vmem:[#allocation5 + $0x1f68] sm:$0xff]
    %v1180 = vld [vmem:[#allocation5 + $0x1f70] sm:$0xff]
    %v1181 = vld [vmem:[#allocation5 + $0x1f78] sm:$0xff]
    %v1182 = vld [vmem:[#allocation5 + $0x1f80] sm:$0xff]
    %v1183 = vld [vmem:[#allocation5 + $0x1f88] sm:$0xff]
    %v1184 = vld [vmem:[#allocation5 + $0x1f90] sm:$0xff]
    %v1185 = vld [vmem:[#allocation5 + $0x1f98] sm:$0xff]
    %v1186 = vld [vmem:[#allocation5 + $0x1fa0] sm:$0xff]
    %v1187 = vld [vmem:[#allocation5 + $0x1fa8] sm:$0xff]
    %v1188 = vld [vmem:[#allocation5 + $0x1fb0] sm:$0xff]
    %v1189 = vld [vmem:[#allocation5 + $0x1fb8] sm:$0xff]
    %v1190 = vld [vmem:[#allocation5 + $0x1fc0] sm:$0xff]
    %v1191 = vld [vmem:[#allocation5 + $0x1fc8] sm:$0xff]
    %v1192 = vld [vmem:[#allocation5 + $0x1fd0] sm:$0xff]
    %v1193 = vld [vmem:[#allocation5 + $0x1fd8] sm:$0xff]
    %v1194 = vld [vmem:[#allocation5 + $0x1fe0] sm:$0xff]
    %v1195 = vld [vmem:[#allocation5 + $0x1fe8] sm:$0xff]
    %v1196 = vld [vmem:[#allocation5 + $0x1ff0] sm:$0xff]
    %v1197 = vld [vmem:[#allocation5 + $0x1ff8] sm:$0xff]
    %v1198 = vld [vmem:[#allocation7] sm:$0xff]
    %v1200 = vperm.slane %v1198, 0
    %v1201 = vperm.slane %v1198, 1
    %v1202 = vperm.slane %v1198, 2
    %v1203 = vperm.slane %v1198, 3
    %v1204 = vperm.slane %v1198, 4
    %v1205 = vperm.slane %v1198, 5
    %v1206 = vperm.slane %v1198, 6
    %v1207 = vperm.slane %v1198, 7
    %v2240 = vunpack.c.l.b16 %v174
    %v2241 = vunpack.c.h.b16 %v174
    %v2242 = vunpack.c.l.b16 %v175
    %v2243 = vunpack.c.h.b16 %v175
    %v2244 = vunpack.c.l.b16 %v176
    %v2245 = vunpack.c.h.b16 %v176
    %v2246 = vunpack.c.l.b16 %v177
    %v2247 = vunpack.c.h.b16 %v177
    %v2248 = vunpack.c.l.b16 %v178
    %v2249 = vunpack.c.h.b16 %v178
    %v2250 = vunpack.c.l.b16 %v179
    %v2251 = vunpack.c.h.b16 %v179
    %v2252 = vunpack.c.l.b16 %v180
    %v2253 = vunpack.c.h.b16 %v180
    %v2254 = vunpack.c.l.b16 %v181
    %v2255 = vunpack.c.h.b16 %v181
    %v2256 = vunpack.c.l.b16 %v182
    %v2257 = vunpack.c.h.b16 %v182
    %v2258 = vunpack.c.l.b16 %v183
    %v2259 = vunpack.c.h.b16 %v183
    %v2260 = vunpack.c.l.b16 %v184
    %v2261 = vunpack.c.h.b16 %v184
    %v2262 = vunpack.c.l.b16 %v185
    %v2263 = vunpack.c.h.b16 %v185
    %v2264 = vunpack.c.l.b16 %v186
    %v2265 = vunpack.c.h.b16 %v186
    %v2266 = vunpack.c.l.b16 %v187
    %v2267 = vunpack.c.h.b16 %v187
    %v2268 = vunpack.c.l.b16 %v188
    %v2269 = vunpack.c.h.b16 %v188
    %v2270 = vunpack.c.l.b16 %v189
    %v2271 = vunpack.c.h.b16 %v189
    %v2272 = vunpack.c.l.b16 %v190
    %v2273 = vunpack.c.h.b16 %v190
    %v2274 = vunpack.c.l.b16 %v191
    %v2275 = vunpack.c.h.b16 %v191
    %v2276 = vunpack.c.l.b16 %v192
    %v2277 = vunpack.c.h.b16 %v192
    %v2278 = vunpack.c.l.b16 %v193
    %v2279 = vunpack.c.h.b16 %v193
    %v2280 = vunpack.c.l.b16 %v194
    %v2281 = vunpack.c.h.b16 %v194
    %v2282 = vunpack.c.l.b16 %v195
    %v2283 = vunpack.c.h.b16 %v195
    %v2284 = vunpack.c.l.b16 %v196
    %v2285 = vunpack.c.h.b16 %v196
    %v2286 = vunpack.c.l.b16 %v197
    %v2287 = vunpack.c.h.b16 %v197
    %v2288 = vunpack.c.l.b16 %v198
    %v2289 = vunpack.c.h.b16 %v198
    %v2290 = vunpack.c.l.b16 %v199
    %v2291 = vunpack.c.h.b16 %v199
    %v2292 = vunpack.c.l.b16 %v200
    %v2293 = vunpack.c.h.b16 %v200
    %v2294 = vunpack.c.l.b16 %v201
    %v2295 = vunpack.c.h.b16 %v201
    %v2296 = vunpack.c.l.b16 %v202
    %v2297 = vunpack.c.h.b16 %v202
    %v2298 = vunpack.c.l.b16 %v203
    %v2299 = vunpack.c.h.b16 %v203
    %v2300 = vunpack.c.l.b16 %v204
    %v2301 = vunpack.c.h.b16 %v204
    %v2302 = vunpack.c.l.b16 %v205
    %v2303 = vunpack.c.h.b16 %v205
    %v2304 = vunpack.c.l.b16 %v206
    %v2305 = vunpack.c.h.b16 %v206
    %v2306 = vunpack.c.l.b16 %v207
    %v2307 = vunpack.c.h.b16 %v207
    %v2308 = vunpack.c.l.b16 %v208
    %v2309 = vunpack.c.h.b16 %v208
    %v2310 = vunpack.c.l.b16 %v209
    %v2311 = vunpack.c.h.b16 %v209
    %v2312 = vunpack.c.l.b16 %v210
    %v2313 = vunpack.c.h.b16 %v210
    %v2314 = vunpack.c.l.b16 %v211
    %v2315 = vunpack.c.h.b16 %v211
    %v2316 = vunpack.c.l.b16 %v212
    %v2317 = vunpack.c.h.b16 %v212
    %v2318 = vunpack.c.l.b16 %v213
    %v2319 = vunpack.c.h.b16 %v213
    %v2320 = vunpack.c.l.b16 %v214
    %v2321 = vunpack.c.h.b16 %v214
    %v2322 = vunpack.c.l.b16 %v215
    %v2323 = vunpack.c.h.b16 %v215
    %v2324 = vunpack.c.l.b16 %v216
    %v2325 = vunpack.c.h.b16 %v216
    %v2326 = vunpack.c.l.b16 %v217
    %v2327 = vunpack.c.h.b16 %v217
    %v2328 = vunpack.c.l.b16 %v218
    %v2329 = vunpack.c.h.b16 %v218
    %v2330 = vunpack.c.l.b16 %v219
    %v2331 = vunpack.c.h.b16 %v219
    %v2332 = vunpack.c.l.b16 %v220
    %v2333 = vunpack.c.h.b16 %v220
    %v2334 = vunpack.c.l.b16 %v221
    %v2335 = vunpack.c.h.b16 %v221
    %v2336 = vunpack.c.l.b16 %v222
    %v2337 = vunpack.c.h.b16 %v222
    %v2338 = vunpack.c.l.b16 %v223
    %v2339 = vunpack.c.h.b16 %v223
    %v2340 = vunpack.c.l.b16 %v224
    %v2341 = vunpack.c.h.b16 %v224
    %v2342 = vunpack.c.l.b16 %v225
    %v2343 = vunpack.c.h.b16 %v225
    %v2344 = vunpack.c.l.b16 %v226
    %v2345 = vunpack.c.h.b16 %v226
    %v2346 = vunpack.c.l.b16 %v227
    %v2347 = vunpack.c.h.b16 %v227
    %v2348 = vunpack.c.l.b16 %v228
    %v2349 = vunpack.c.h.b16 %v228
    %v2350 = vunpack.c.l.b16 %v229
    %v2351 = vunpack.c.h.b16 %v229
    %v2352 = vunpack.c.l.b16 %v230
    %v2353 = vunpack.c.h.b16 %v230
    %v2354 = vunpack.c.l.b16 %v231
    %v2355 = vunpack.c.h.b16 %v231
    %v2356 = vunpack.c.l.b16 %v232
    %v2357 = vunpack.c.h.b16 %v232
    %v2358 = vunpack.c.l.b16 %v233
    %v2359 = vunpack.c.h.b16 %v233
    %v2360 = vunpack.c.l.b16 %v234
    %v2361 = vunpack.c.h.b16 %v234
    %v2362 = vunpack.c.l.b16 %v235
    %v2363 = vunpack.c.h.b16 %v235
    %v2364 = vunpack.c.l.b16 %v236
    %v2365 = vunpack.c.h.b16 %v236
    %v2366 = vunpack.c.l.b16 %v237
    %v2367 = vunpack.c.h.b16 %v237
    %v2368 = vunpack.c.l.b16 %v238
    %v2369 = vunpack.c.h.b16 %v238
    %v2370 = vunpack.c.l.b16 %v239
    %v2371 = vunpack.c.h.b16 %v239
    %v2372 = vunpack.c.l.b16 %v240
    %v2373 = vunpack.c.h.b16 %v240
    %v2374 = vunpack.c.l.b16 %v241
    %v2375 = vunpack.c.h.b16 %v241
    %v2376 = vunpack.c.l.b16 %v242
    %v2377 = vunpack.c.h.b16 %v242
    %v2378 = vunpack.c.l.b16 %v243
    %v2379 = vunpack.c.h.b16 %v243
    %v2380 = vunpack.c.l.b16 %v244
    %v2381 = vunpack.c.h.b16 %v244
    %v2382 = vunpack.c.l.b16 %v245
    %v2383 = vunpack.c.h.b16 %v245
    %v2384 = vunpack.c.l.b16 %v246
    %v2385 = vunpack.c.h.b16 %v246
    %v2386 = vunpack.c.l.b16 %v247
    %v2387 = vunpack.c.h.b16 %v247
    %v2388 = vunpack.c.l.b16 %v248
    %v2389 = vunpack.c.h.b16 %v248
    %v2390 = vunpack.c.l.b16 %v249
    %v2391 = vunpack.c.h.b16 %v249
    %v2392 = vunpack.c.l.b16 %v250
    %v2393 = vunpack.c.h.b16 %v250
    %v2394 = vunpack.c.l.b16 %v251
    %v2395 = vunpack.c.h.b16 %v251
    %v2396 = vunpack.c.l.b16 %v252
    %v2397 = vunpack.c.h.b16 %v252
    %v2398 = vunpack.c.l.b16 %v253
    %v2399 = vunpack.c.h.b16 %v253
    %v2400 = vunpack.c.l.b16 %v254
    %v2401 = vunpack.c.h.b16 %v254
    %v2402 = vunpack.c.l.b16 %v255
    %v2403 = vunpack.c.h.b16 %v255
    %v2404 = vunpack.c.l.b16 %v256
    %v2405 = vunpack.c.h.b16 %v256
    %v2406 = vunpack.c.l.b16 %v257
    %v2407 = vunpack.c.h.b16 %v257
    %v2408 = vunpack.c.l.b16 %v258
    %v2409 = vunpack.c.h.b16 %v258
    %v2410 = vunpack.c.l.b16 %v259
    %v2411 = vunpack.c.h.b16 %v259
    %v2412 = vunpack.c.l.b16 %v260
    %v2413 = vunpack.c.h.b16 %v260
    %v2414 = vunpack.c.l.b16 %v261
    %v2415 = vunpack.c.h.b16 %v261
    %v2416 = vunpack.c.l.b16 %v262
    %v2417 = vunpack.c.h.b16 %v262
    %v2418 = vunpack.c.l.b16 %v263
    %v2419 = vunpack.c.h.b16 %v263
    %v2420 = vunpack.c.l.b16 %v264
    %v2421 = vunpack.c.h.b16 %v264
    %v2422 = vunpack.c.l.b16 %v265
    %v2423 = vunpack.c.h.b16 %v265
    %v2424 = vunpack.c.l.b16 %v266
    %v2425 = vunpack.c.h.b16 %v266
    %v2426 = vunpack.c.l.b16 %v267
    %v2427 = vunpack.c.h.b16 %v267
    %v2428 = vunpack.c.l.b16 %v268
    %v2429 = vunpack.c.h.b16 %v268
    %v2430 = vunpack.c.l.b16 %v269
    %v2431 = vunpack.c.h.b16 %v269
    %v2432 = vunpack.c.l.b16 %v270
    %v2433 = vunpack.c.h.b16 %v270
    %v2434 = vunpack.c.l.b16 %v271
    %v2435 = vunpack.c.h.b16 %v271
    %v2436 = vunpack.c.l.b16 %v272
    %v2437 = vunpack.c.h.b16 %v272
    %v2438 = vunpack.c.l.b16 %v273
    %v2439 = vunpack.c.h.b16 %v273
    %v2440 = vunpack.c.l.b16 %v274
    %v2441 = vunpack.c.h.b16 %v274
    %v2442 = vunpack.c.l.b16 %v275
    %v2443 = vunpack.c.h.b16 %v275
    %v2444 = vunpack.c.l.b16 %v276
    %v2445 = vunpack.c.h.b16 %v276
    %v2446 = vunpack.c.l.b16 %v277
    %v2447 = vunpack.c.h.b16 %v277
    %v2448 = vunpack.c.l.b16 %v278
    %v2449 = vunpack.c.h.b16 %v278
    %v2450 = vunpack.c.l.b16 %v279
    %v2451 = vunpack.c.h.b16 %v279
    %v2452 = vunpack.c.l.b16 %v280
    %v2453 = vunpack.c.h.b16 %v280
    %v2454 = vunpack.c.l.b16 %v281
    %v2455 = vunpack.c.h.b16 %v281
    %v2456 = vunpack.c.l.b16 %v282
    %v2457 = vunpack.c.h.b16 %v282
    %v2458 = vunpack.c.l.b16 %v283
    %v2459 = vunpack.c.h.b16 %v283
    %v2460 = vunpack.c.l.b16 %v284
    %v2461 = vunpack.c.h.b16 %v284
    %v2462 = vunpack.c.l.b16 %v285
    %v2463 = vunpack.c.h.b16 %v285
    %v2464 = vunpack.c.l.b16 %v286
    %v2465 = vunpack.c.h.b16 %v286
    %v2466 = vunpack.c.l.b16 %v287
    %v2467 = vunpack.c.h.b16 %v287
    %v2468 = vunpack.c.l.b16 %v288
    %v2469 = vunpack.c.h.b16 %v288
    %v2470 = vunpack.c.l.b16 %v289
    %v2471 = vunpack.c.h.b16 %v289
    %v2472 = vunpack.c.l.b16 %v290
    %v2473 = vunpack.c.h.b16 %v290
    %v2474 = vunpack.c.l.b16 %v291
    %v2475 = vunpack.c.h.b16 %v291
    %v2476 = vunpack.c.l.b16 %v292
    %v2477 = vunpack.c.h.b16 %v292
    %v2478 = vunpack.c.l.b16 %v293
    %v2479 = vunpack.c.h.b16 %v293
    %v2480 = vunpack.c.l.b16 %v294
    %v2481 = vunpack.c.h.b16 %v294
    %v2482 = vunpack.c.l.b16 %v295
    %v2483 = vunpack.c.h.b16 %v295
    %v2484 = vunpack.c.l.b16 %v296
    %v2485 = vunpack.c.h.b16 %v296
    %v2486 = vunpack.c.l.b16 %v297
    %v2487 = vunpack.c.h.b16 %v297
    %v2488 = vunpack.c.l.b16 %v298
    %v2489 = vunpack.c.h.b16 %v298
    %v2490 = vunpack.c.l.b16 %v299
    %v2491 = vunpack.c.h.b16 %v299
    %v2492 = vunpack.c.l.b16 %v300
    %v2493 = vunpack.c.h.b16 %v300
    %v2494 = vunpack.c.l.b16 %v301
    %v2495 = vunpack.c.h.b16 %v301
    %v2496 = vunpack.c.l.b16 %v302
    %v2497 = vunpack.c.h.b16 %v302
    %v2498 = vunpack.c.l.b16 %v303
    %v2499 = vunpack.c.h.b16 %v303
    %v2500 = vunpack.c.l.b16 %v304
    %v2501 = vunpack.c.h.b16 %v304
    %v2502 = vunpack.c.l.b16 %v305
    %v2503 = vunpack.c.h.b16 %v305
    %v2504 = vunpack.c.l.b16 %v306
    %v2505 = vunpack.c.h.b16 %v306
    %v2506 = vunpack.c.l.b16 %v307
    %v2507 = vunpack.c.h.b16 %v307
    %v2508 = vunpack.c.l.b16 %v308
    %v2509 = vunpack.c.h.b16 %v308
    %v2510 = vunpack.c.l.b16 %v309
    %v2511 = vunpack.c.h.b16 %v309
    %v2512 = vunpack.c.l.b16 %v310
    %v2513 = vunpack.c.h.b16 %v310
    %v2514 = vunpack.c.l.b16 %v311
    %v2515 = vunpack.c.h.b16 %v311
    %v2516 = vunpack.c.l.b16 %v312
    %v2517 = vunpack.c.h.b16 %v312
    %v2518 = vunpack.c.l.b16 %v313
    %v2519 = vunpack.c.h.b16 %v313
    %v2520 = vunpack.c.l.b16 %v314
    %v2521 = vunpack.c.h.b16 %v314
    %v2522 = vunpack.c.l.b16 %v315
    %v2523 = vunpack.c.h.b16 %v315
    %v2524 = vunpack.c.l.b16 %v316
    %v2525 = vunpack.c.h.b16 %v316
    %v2526 = vunpack.c.l.b16 %v317
    %v2527 = vunpack.c.h.b16 %v317
    %v2528 = vunpack.c.l.b16 %v318
    %v2529 = vunpack.c.h.b16 %v318
    %v2530 = vunpack.c.l.b16 %v319
    %v2531 = vunpack.c.h.b16 %v319
    %v2532 = vunpack.c.l.b16 %v320
    %v2533 = vunpack.c.h.b16 %v320
    %v2534 = vunpack.c.l.b16 %v321
    %v2535 = vunpack.c.h.b16 %v321
    %v2536 = vunpack.c.l.b16 %v322
    %v2537 = vunpack.c.h.b16 %v322
    %v2538 = vunpack.c.l.b16 %v323
    %v2539 = vunpack.c.h.b16 %v323
    %v2540 = vunpack.c.l.b16 %v324
    %v2541 = vunpack.c.h.b16 %v324
    %v2542 = vunpack.c.l.b16 %v325
    %v2543 = vunpack.c.h.b16 %v325
    %v2544 = vunpack.c.l.b16 %v326
    %v2545 = vunpack.c.h.b16 %v326
    %v2546 = vunpack.c.l.b16 %v327
    %v2547 = vunpack.c.h.b16 %v327
    %v2548 = vunpack.c.l.b16 %v328
    %v2549 = vunpack.c.h.b16 %v328
    %v2550 = vunpack.c.l.b16 %v329
    %v2551 = vunpack.c.h.b16 %v329
    %v2552 = vunpack.c.l.b16 %v330
    %v2553 = vunpack.c.h.b16 %v330
    %v2554 = vunpack.c.l.b16 %v331
    %v2555 = vunpack.c.h.b16 %v331
    %v2556 = vunpack.c.l.b16 %v332
    %v2557 = vunpack.c.h.b16 %v332
    %v2558 = vunpack.c.l.b16 %v333
    %v2559 = vunpack.c.h.b16 %v333
    %v2560 = vunpack.c.l.b16 %v334
    %v2561 = vunpack.c.h.b16 %v334
    %v2562 = vunpack.c.l.b16 %v335
    %v2563 = vunpack.c.h.b16 %v335
    %v2564 = vunpack.c.l.b16 %v336
    %v2565 = vunpack.c.h.b16 %v336
    %v2566 = vunpack.c.l.b16 %v337
    %v2567 = vunpack.c.h.b16 %v337
    %v2568 = vunpack.c.l.b16 %v338
    %v2569 = vunpack.c.h.b16 %v338
    %v2570 = vunpack.c.l.b16 %v339
    %v2571 = vunpack.c.h.b16 %v339
    %v2572 = vunpack.c.l.b16 %v340
    %v2573 = vunpack.c.h.b16 %v340
    %v2574 = vunpack.c.l.b16 %v341
    %v2575 = vunpack.c.h.b16 %v341
    %v2576 = vunpack.c.l.b16 %v342
    %v2577 = vunpack.c.h.b16 %v342
    %v2578 = vunpack.c.l.b16 %v343
    %v2579 = vunpack.c.h.b16 %v343
    %v2580 = vunpack.c.l.b16 %v344
    %v2581 = vunpack.c.h.b16 %v344
    %v2582 = vunpack.c.l.b16 %v345
    %v2583 = vunpack.c.h.b16 %v345
    %v2584 = vunpack.c.l.b16 %v346
    %v2585 = vunpack.c.h.b16 %v346
    %v2586 = vunpack.c.l.b16 %v347
    %v2587 = vunpack.c.h.b16 %v347
    %v2588 = vunpack.c.l.b16 %v348
    %v2589 = vunpack.c.h.b16 %v348
    %v2590 = vunpack.c.l.b16 %v349
    %v2591 = vunpack.c.h.b16 %v349
    %v2592 = vunpack.c.l.b16 %v350
    %v2593 = vunpack.c.h.b16 %v350
    %v2594 = vunpack.c.l.b16 %v351
    %v2595 = vunpack.c.h.b16 %v351
    %v2596 = vunpack.c.l.b16 %v352
    %v2597 = vunpack.c.h.b16 %v352
    %v2598 = vunpack.c.l.b16 %v353
    %v2599 = vunpack.c.h.b16 %v353
    %v2600 = vunpack.c.l.b16 %v354
    %v2601 = vunpack.c.h.b16 %v354
    %v2602 = vunpack.c.l.b16 %v355
    %v2603 = vunpack.c.h.b16 %v355
    %v2604 = vunpack.c.l.b16 %v356
    %v2605 = vunpack.c.h.b16 %v356
    %v2606 = vunpack.c.l.b16 %v357
    %v2607 = vunpack.c.h.b16 %v357
    %v2608 = vunpack.c.l.b16 %v358
    %v2609 = vunpack.c.h.b16 %v358
    %v2610 = vunpack.c.l.b16 %v359
    %v2611 = vunpack.c.h.b16 %v359
    %v2612 = vunpack.c.l.b16 %v360
    %v2613 = vunpack.c.h.b16 %v360
    %v2614 = vunpack.c.l.b16 %v361
    %v2615 = vunpack.c.h.b16 %v361
    %v2616 = vunpack.c.l.b16 %v362
    %v2617 = vunpack.c.h.b16 %v362
    %v2618 = vunpack.c.l.b16 %v363
    %v2619 = vunpack.c.h.b16 %v363
    %v2620 = vunpack.c.l.b16 %v364
    %v2621 = vunpack.c.h.b16 %v364
    %v2622 = vunpack.c.l.b16 %v365
    %v2623 = vunpack.c.h.b16 %v365
    %v2624 = vunpack.c.l.b16 %v366
    %v2625 = vunpack.c.h.b16 %v366
    %v2626 = vunpack.c.l.b16 %v367
    %v2627 = vunpack.c.h.b16 %v367
    %v2628 = vunpack.c.l.b16 %v368
    %v2629 = vunpack.c.h.b16 %v368
    %v2630 = vunpack.c.l.b16 %v369
    %v2631 = vunpack.c.h.b16 %v369
    %v2632 = vunpack.c.l.b16 %v370
    %v2633 = vunpack.c.h.b16 %v370
    %v2634 = vunpack.c.l.b16 %v371
    %v2635 = vunpack.c.h.b16 %v371
    %v2636 = vunpack.c.l.b16 %v372
    %v2637 = vunpack.c.h.b16 %v372
    %v2638 = vunpack.c.l.b16 %v373
    %v2639 = vunpack.c.h.b16 %v373
    %v2640 = vunpack.c.l.b16 %v374
    %v2641 = vunpack.c.h.b16 %v374
    %v2642 = vunpack.c.l.b16 %v375
    %v2643 = vunpack.c.h.b16 %v375
    %v2644 = vunpack.c.l.b16 %v376
    %v2645 = vunpack.c.h.b16 %v376
    %v2646 = vunpack.c.l.b16 %v377
    %v2647 = vunpack.c.h.b16 %v377
    %v2648 = vunpack.c.l.b16 %v378
    %v2649 = vunpack.c.h.b16 %v378
    %v2650 = vunpack.c.l.b16 %v379
    %v2651 = vunpack.c.h.b16 %v379
    %v2652 = vunpack.c.l.b16 %v380
    %v2653 = vunpack.c.h.b16 %v380
    %v2654 = vunpack.c.l.b16 %v381
    %v2655 = vunpack.c.h.b16 %v381
    %v2656 = vunpack.c.l.b16 %v382
    %v2657 = vunpack.c.h.b16 %v382
    %v2658 = vunpack.c.l.b16 %v383
    %v2659 = vunpack.c.h.b16 %v383
    %v2660 = vunpack.c.l.b16 %v384
    %v2661 = vunpack.c.h.b16 %v384
    %v2662 = vunpack.c.l.b16 %v385
    %v2663 = vunpack.c.h.b16 %v385
    %v2664 = vunpack.c.l.b16 %v386
    %v2665 = vunpack.c.h.b16 %v386
    %v2666 = vunpack.c.l.b16 %v387
    %v2667 = vunpack.c.h.b16 %v387
    %v2668 = vunpack.c.l.b16 %v388
    %v2669 = vunpack.c.h.b16 %v388
    %v2670 = vunpack.c.l.b16 %v389
    %v2671 = vunpack.c.h.b16 %v389
    %v2672 = vunpack.c.l.b16 %v390
    %v2673 = vunpack.c.h.b16 %v390
    %v2674 = vunpack.c.l.b16 %v391
    %v2675 = vunpack.c.h.b16 %v391
    %v2676 = vunpack.c.l.b16 %v392
    %v2677 = vunpack.c.h.b16 %v392
    %v2678 = vunpack.c.l.b16 %v393
    %v2679 = vunpack.c.h.b16 %v393
    %v2680 = vunpack.c.l.b16 %v394
    %v2681 = vunpack.c.h.b16 %v394
    %v2682 = vunpack.c.l.b16 %v395
    %v2683 = vunpack.c.h.b16 %v395
    %v2684 = vunpack.c.l.b16 %v396
    %v2685 = vunpack.c.h.b16 %v396
    %v2686 = vunpack.c.l.b16 %v397
    %v2687 = vunpack.c.h.b16 %v397
    %v2688 = vunpack.c.l.b16 %v398
    %v2689 = vunpack.c.h.b16 %v398
    %v2690 = vunpack.c.l.b16 %v399
    %v2691 = vunpack.c.h.b16 %v399
    %v2692 = vunpack.c.l.b16 %v400
    %v2693 = vunpack.c.h.b16 %v400
    %v2694 = vunpack.c.l.b16 %v401
    %v2695 = vunpack.c.h.b16 %v401
    %v2696 = vunpack.c.l.b16 %v402
    %v2697 = vunpack.c.h.b16 %v402
    %v2698 = vunpack.c.l.b16 %v403
    %v2699 = vunpack.c.h.b16 %v403
    %v2700 = vunpack.c.l.b16 %v404
    %v2701 = vunpack.c.h.b16 %v404
    %v2702 = vunpack.c.l.b16 %v405
    %v2703 = vunpack.c.h.b16 %v405
    %v2704 = vunpack.c.l.b16 %v406
    %v2705 = vunpack.c.h.b16 %v406
    %v2706 = vunpack.c.l.b16 %v407
    %v2707 = vunpack.c.h.b16 %v407
    %v2708 = vunpack.c.l.b16 %v408
    %v2709 = vunpack.c.h.b16 %v408
    %v2710 = vunpack.c.l.b16 %v409
    %v2711 = vunpack.c.h.b16 %v409
    %v2712 = vunpack.c.l.b16 %v410
    %v2713 = vunpack.c.h.b16 %v410
    %v2714 = vunpack.c.l.b16 %v411
    %v2715 = vunpack.c.h.b16 %v411
    %v2716 = vunpack.c.l.b16 %v412
    %v2717 = vunpack.c.h.b16 %v412
    %v2718 = vunpack.c.l.b16 %v413
    %v2719 = vunpack.c.h.b16 %v413
    %v2720 = vunpack.c.l.b16 %v414
    %v2721 = vunpack.c.h.b16 %v414
    %v2722 = vunpack.c.l.b16 %v415
    %v2723 = vunpack.c.h.b16 %v415
    %v2724 = vunpack.c.l.b16 %v416
    %v2725 = vunpack.c.h.b16 %v416
    %v2726 = vunpack.c.l.b16 %v417
    %v2727 = vunpack.c.h.b16 %v417
    %v2728 = vunpack.c.l.b16 %v418
    %v2729 = vunpack.c.h.b16 %v418
    %v2730 = vunpack.c.l.b16 %v419
    %v2731 = vunpack.c.h.b16 %v419
    %v2732 = vunpack.c.l.b16 %v420
    %v2733 = vunpack.c.h.b16 %v420
    %v2734 = vunpack.c.l.b16 %v421
    %v2735 = vunpack.c.h.b16 %v421
    %v2736 = vunpack.c.l.b16 %v422
    %v2737 = vunpack.c.h.b16 %v422
    %v2738 = vunpack.c.l.b16 %v423
    %v2739 = vunpack.c.h.b16 %v423
    %v2740 = vunpack.c.l.b16 %v424
    %v2741 = vunpack.c.h.b16 %v424
    %v2742 = vunpack.c.l.b16 %v425
    %v2743 = vunpack.c.h.b16 %v425
    %v2744 = vunpack.c.l.b16 %v426
    %v2745 = vunpack.c.h.b16 %v426
    %v2746 = vunpack.c.l.b16 %v427
    %v2747 = vunpack.c.h.b16 %v427
    %v2748 = vunpack.c.l.b16 %v428
    %v2749 = vunpack.c.h.b16 %v428
    %v2750 = vunpack.c.l.b16 %v429
    %v2751 = vunpack.c.h.b16 %v429
    %v2752 = vunpack.c.l.b16 %v430
    %v2753 = vunpack.c.h.b16 %v430
    %v2754 = vunpack.c.l.b16 %v431
    %v2755 = vunpack.c.h.b16 %v431
    %v2756 = vunpack.c.l.b16 %v432
    %v2757 = vunpack.c.h.b16 %v432
    %v2758 = vunpack.c.l.b16 %v433
    %v2759 = vunpack.c.h.b16 %v433
    %v2760 = vunpack.c.l.b16 %v434
    %v2761 = vunpack.c.h.b16 %v434
    %v2762 = vunpack.c.l.b16 %v435
    %v2763 = vunpack.c.h.b16 %v435
    %v2764 = vunpack.c.l.b16 %v436
    %v2765 = vunpack.c.h.b16 %v436
    %v2766 = vunpack.c.l.b16 %v437
    %v2767 = vunpack.c.h.b16 %v437
    %v2768 = vunpack.c.l.b16 %v438
    %v2769 = vunpack.c.h.b16 %v438
    %v2770 = vunpack.c.l.b16 %v439
    %v2771 = vunpack.c.h.b16 %v439
    %v2772 = vunpack.c.l.b16 %v440
    %v2773 = vunpack.c.h.b16 %v440
    %v2774 = vunpack.c.l.b16 %v441
    %v2775 = vunpack.c.h.b16 %v441
    %v2776 = vunpack.c.l.b16 %v442
    %v2777 = vunpack.c.h.b16 %v442
    %v2778 = vunpack.c.l.b16 %v443
    %v2779 = vunpack.c.h.b16 %v443
    %v2780 = vunpack.c.l.b16 %v444
    %v2781 = vunpack.c.h.b16 %v444
    %v2782 = vunpack.c.l.b16 %v445
    %v2783 = vunpack.c.h.b16 %v445
    %v2784 = vunpack.c.l.b16 %v446
    %v2785 = vunpack.c.h.b16 %v446
    %v2786 = vunpack.c.l.b16 %v447
    %v2787 = vunpack.c.h.b16 %v447
    %v2788 = vunpack.c.l.b16 %v448
    %v2789 = vunpack.c.h.b16 %v448
    %v2790 = vunpack.c.l.b16 %v449
    %v2791 = vunpack.c.h.b16 %v449
    %v2792 = vunpack.c.l.b16 %v450
    %v2793 = vunpack.c.h.b16 %v450
    %v2794 = vunpack.c.l.b16 %v451
    %v2795 = vunpack.c.h.b16 %v451
    %v2796 = vunpack.c.l.b16 %v452
    %v2797 = vunpack.c.h.b16 %v452
    %v2798 = vunpack.c.l.b16 %v453
    %v2799 = vunpack.c.h.b16 %v453
    %v2800 = vunpack.c.l.b16 %v454
    %v2801 = vunpack.c.h.b16 %v454
    %v2802 = vunpack.c.l.b16 %v455
    %v2803 = vunpack.c.h.b16 %v455
    %v2804 = vunpack.c.l.b16 %v456
    %v2805 = vunpack.c.h.b16 %v456
    %v2806 = vunpack.c.l.b16 %v457
    %v2807 = vunpack.c.h.b16 %v457
    %v2808 = vunpack.c.l.b16 %v458
    %v2809 = vunpack.c.h.b16 %v458
    %v2810 = vunpack.c.l.b16 %v459
    %v2811 = vunpack.c.h.b16 %v459
    %v2812 = vunpack.c.l.b16 %v460
    %v2813 = vunpack.c.h.b16 %v460
    %v2814 = vunpack.c.l.b16 %v461
    %v2815 = vunpack.c.h.b16 %v461
    %v2816 = vunpack.c.l.b16 %v462
    %v2817 = vunpack.c.h.b16 %v462
    %v2818 = vunpack.c.l.b16 %v463
    %v2819 = vunpack.c.h.b16 %v463
    %v2820 = vunpack.c.l.b16 %v464
    %v2821 = vunpack.c.h.b16 %v464
    %v2822 = vunpack.c.l.b16 %v465
    %v2823 = vunpack.c.h.b16 %v465
    %v2824 = vunpack.c.l.b16 %v466
    %v2825 = vunpack.c.h.b16 %v466
    %v2826 = vunpack.c.l.b16 %v467
    %v2827 = vunpack.c.h.b16 %v467
    %v2828 = vunpack.c.l.b16 %v468
    %v2829 = vunpack.c.h.b16 %v468
    %v2830 = vunpack.c.l.b16 %v469
    %v2831 = vunpack.c.h.b16 %v469
    %v2832 = vunpack.c.l.b16 %v470
    %v2833 = vunpack.c.h.b16 %v470
    %v2834 = vunpack.c.l.b16 %v471
    %v2835 = vunpack.c.h.b16 %v471
    %v2836 = vunpack.c.l.b16 %v472
    %v2837 = vunpack.c.h.b16 %v472
    %v2838 = vunpack.c.l.b16 %v473
    %v2839 = vunpack.c.h.b16 %v473
    %v2840 = vunpack.c.l.b16 %v474
    %v2841 = vunpack.c.h.b16 %v474
    %v2842 = vunpack.c.l.b16 %v475
    %v2843 = vunpack.c.h.b16 %v475
    %v2844 = vunpack.c.l.b16 %v476
    %v2845 = vunpack.c.h.b16 %v476
    %v2846 = vunpack.c.l.b16 %v477
    %v2847 = vunpack.c.h.b16 %v477
    %v2848 = vunpack.c.l.b16 %v478
    %v2849 = vunpack.c.h.b16 %v478
    %v2850 = vunpack.c.l.b16 %v479
    %v2851 = vunpack.c.h.b16 %v479
    %v2852 = vunpack.c.l.b16 %v480
    %v2853 = vunpack.c.h.b16 %v480
    %v2854 = vunpack.c.l.b16 %v481
    %v2855 = vunpack.c.h.b16 %v481
    %v2856 = vunpack.c.l.b16 %v482
    %v2857 = vunpack.c.h.b16 %v482
    %v2858 = vunpack.c.l.b16 %v483
    %v2859 = vunpack.c.h.b16 %v483
    %v2860 = vunpack.c.l.b16 %v484
    %v2861 = vunpack.c.h.b16 %v484
    %v2862 = vunpack.c.l.b16 %v485
    %v2863 = vunpack.c.h.b16 %v485
    %v2864 = vunpack.c.l.b16 %v486
    %v2865 = vunpack.c.h.b16 %v486
    %v2866 = vunpack.c.l.b16 %v487
    %v2867 = vunpack.c.h.b16 %v487
    %v2868 = vunpack.c.l.b16 %v488
    %v2869 = vunpack.c.h.b16 %v488
    %v2870 = vunpack.c.l.b16 %v489
    %v2871 = vunpack.c.h.b16 %v489
    %v2872 = vunpack.c.l.b16 %v490
    %v2873 = vunpack.c.h.b16 %v490
    %v2874 = vunpack.c.l.b16 %v491
    %v2875 = vunpack.c.h.b16 %v491
    %v2876 = vunpack.c.l.b16 %v492
    %v2877 = vunpack.c.h.b16 %v492
    %v2878 = vunpack.c.l.b16 %v493
    %v2879 = vunpack.c.h.b16 %v493
    %v2880 = vunpack.c.l.b16 %v494
    %v2881 = vunpack.c.h.b16 %v494
    %v2882 = vunpack.c.l.b16 %v495
    %v2883 = vunpack.c.h.b16 %v495
    %v2884 = vunpack.c.l.b16 %v496
    %v2885 = vunpack.c.h.b16 %v496
    %v2886 = vunpack.c.l.b16 %v497
    %v2887 = vunpack.c.h.b16 %v497
    %v2888 = vunpack.c.l.b16 %v498
    %v2889 = vunpack.c.h.b16 %v498
    %v2890 = vunpack.c.l.b16 %v499
    %v2891 = vunpack.c.h.b16 %v499
    %v2892 = vunpack.c.l.b16 %v500
    %v2893 = vunpack.c.h.b16 %v500
    %v2894 = vunpack.c.l.b16 %v501
    %v2895 = vunpack.c.h.b16 %v501
    %v2896 = vunpack.c.l.b16 %v502
    %v2897 = vunpack.c.h.b16 %v502
    %v2898 = vunpack.c.l.b16 %v503
    %v2899 = vunpack.c.h.b16 %v503
    %v2900 = vunpack.c.l.b16 %v504
    %v2901 = vunpack.c.h.b16 %v504
    %v2902 = vunpack.c.l.b16 %v505
    %v2903 = vunpack.c.h.b16 %v505
    %v2904 = vunpack.c.l.b16 %v506
    %v2905 = vunpack.c.h.b16 %v506
    %v2906 = vunpack.c.l.b16 %v507
    %v2907 = vunpack.c.h.b16 %v507
    %v2908 = vunpack.c.l.b16 %v508
    %v2909 = vunpack.c.h.b16 %v508
    %v2910 = vunpack.c.l.b16 %v509
    %v2911 = vunpack.c.h.b16 %v509
    %v2912 = vunpack.c.l.b16 %v510
    %v2913 = vunpack.c.h.b16 %v510
    %v2914 = vunpack.c.l.b16 %v511
    %v2915 = vunpack.c.h.b16 %v511
    %v2916 = vunpack.c.l.b16 %v512
    %v2917 = vunpack.c.h.b16 %v512
    %v2918 = vunpack.c.l.b16 %v513
    %v2919 = vunpack.c.h.b16 %v513
    %v2920 = vunpack.c.l.b16 %v514
    %v2921 = vunpack.c.h.b16 %v514
    %v2922 = vunpack.c.l.b16 %v515
    %v2923 = vunpack.c.h.b16 %v515
    %v2924 = vunpack.c.l.b16 %v516
    %v2925 = vunpack.c.h.b16 %v516
    %v2926 = vunpack.c.l.b16 %v517
    %v2927 = vunpack.c.h.b16 %v517
    %v2928 = vunpack.c.l.b16 %v518
    %v2929 = vunpack.c.h.b16 %v518
    %v2930 = vunpack.c.l.b16 %v519
    %v2931 = vunpack.c.h.b16 %v519
    %v2932 = vunpack.c.l.b16 %v520
    %v2933 = vunpack.c.h.b16 %v520
    %v2934 = vunpack.c.l.b16 %v521
    %v2935 = vunpack.c.h.b16 %v521
    %v2936 = vunpack.c.l.b16 %v522
    %v2937 = vunpack.c.h.b16 %v522
    %v2938 = vunpack.c.l.b16 %v523
    %v2939 = vunpack.c.h.b16 %v523
    %v2940 = vunpack.c.l.b16 %v524
    %v2941 = vunpack.c.h.b16 %v524
    %v2942 = vunpack.c.l.b16 %v525
    %v2943 = vunpack.c.h.b16 %v525
    %v2944 = vunpack.c.l.b16 %v526
    %v2945 = vunpack.c.h.b16 %v526
    %v2946 = vunpack.c.l.b16 %v527
    %v2947 = vunpack.c.h.b16 %v527
    %v2948 = vunpack.c.l.b16 %v528
    %v2949 = vunpack.c.h.b16 %v528
    %v2950 = vunpack.c.l.b16 %v529
    %v2951 = vunpack.c.h.b16 %v529
    %v2952 = vunpack.c.l.b16 %v530
    %v2953 = vunpack.c.h.b16 %v530
    %v2954 = vunpack.c.l.b16 %v531
    %v2955 = vunpack.c.h.b16 %v531
    %v2956 = vunpack.c.l.b16 %v532
    %v2957 = vunpack.c.h.b16 %v532
    %v2958 = vunpack.c.l.b16 %v533
    %v2959 = vunpack.c.h.b16 %v533
    %v2960 = vunpack.c.l.b16 %v534
    %v2961 = vunpack.c.h.b16 %v534
    %v2962 = vunpack.c.l.b16 %v535
    %v2963 = vunpack.c.h.b16 %v535
    %v2964 = vunpack.c.l.b16 %v536
    %v2965 = vunpack.c.h.b16 %v536
    %v2966 = vunpack.c.l.b16 %v537
    %v2967 = vunpack.c.h.b16 %v537
    %v2968 = vunpack.c.l.b16 %v538
    %v2969 = vunpack.c.h.b16 %v538
    %v2970 = vunpack.c.l.b16 %v539
    %v2971 = vunpack.c.h.b16 %v539
    %v2972 = vunpack.c.l.b16 %v540
    %v2973 = vunpack.c.h.b16 %v540
    %v2974 = vunpack.c.l.b16 %v541
    %v2975 = vunpack.c.h.b16 %v541
    %v2976 = vunpack.c.l.b16 %v542
    %v2977 = vunpack.c.h.b16 %v542
    %v2978 = vunpack.c.l.b16 %v543
    %v2979 = vunpack.c.h.b16 %v543
    %v2980 = vunpack.c.l.b16 %v544
    %v2981 = vunpack.c.h.b16 %v544
    %v2982 = vunpack.c.l.b16 %v545
    %v2983 = vunpack.c.h.b16 %v545
    %v2984 = vunpack.c.l.b16 %v546
    %v2985 = vunpack.c.h.b16 %v546
    %v2986 = vunpack.c.l.b16 %v547
    %v2987 = vunpack.c.h.b16 %v547
    %v2988 = vunpack.c.l.b16 %v548
    %v2989 = vunpack.c.h.b16 %v548
    %v2990 = vunpack.c.l.b16 %v549
    %v2991 = vunpack.c.h.b16 %v549
    %v2992 = vunpack.c.l.b16 %v550
    %v2993 = vunpack.c.h.b16 %v550
    %v2994 = vunpack.c.l.b16 %v551
    %v2995 = vunpack.c.h.b16 %v551
    %v2996 = vunpack.c.l.b16 %v552
    %v2997 = vunpack.c.h.b16 %v552
    %v2998 = vunpack.c.l.b16 %v553
    %v2999 = vunpack.c.h.b16 %v553
    %v3000 = vunpack.c.l.b16 %v554
    %v3001 = vunpack.c.h.b16 %v554
    %v3002 = vunpack.c.l.b16 %v555
    %v3003 = vunpack.c.h.b16 %v555
    %v3004 = vunpack.c.l.b16 %v556
    %v3005 = vunpack.c.h.b16 %v556
    %v3006 = vunpack.c.l.b16 %v557
    %v3007 = vunpack.c.h.b16 %v557
    %v3008 = vunpack.c.l.b16 %v558
    %v3009 = vunpack.c.h.b16 %v558
    %v3010 = vunpack.c.l.b16 %v559
    %v3011 = vunpack.c.h.b16 %v559
    %v3012 = vunpack.c.l.b16 %v560
    %v3013 = vunpack.c.h.b16 %v560
    %v3014 = vunpack.c.l.b16 %v561
    %v3015 = vunpack.c.h.b16 %v561
    %v3016 = vunpack.c.l.b16 %v562
    %v3017 = vunpack.c.h.b16 %v562
    %v3018 = vunpack.c.l.b16 %v563
    %v3019 = vunpack.c.h.b16 %v563
    %v3020 = vunpack.c.l.b16 %v564
    %v3021 = vunpack.c.h.b16 %v564
    %v3022 = vunpack.c.l.b16 %v565
    %v3023 = vunpack.c.h.b16 %v565
    %v3024 = vunpack.c.l.b16 %v566
    %v3025 = vunpack.c.h.b16 %v566
    %v3026 = vunpack.c.l.b16 %v567
    %v3027 = vunpack.c.h.b16 %v567
    %v3028 = vunpack.c.l.b16 %v568
    %v3029 = vunpack.c.h.b16 %v568
    %v3030 = vunpack.c.l.b16 %v569
    %v3031 = vunpack.c.h.b16 %v569
    %v3032 = vunpack.c.l.b16 %v570
    %v3033 = vunpack.c.h.b16 %v570
    %v3034 = vunpack.c.l.b16 %v571
    %v3035 = vunpack.c.h.b16 %v571
    %v3036 = vunpack.c.l.b16 %v572
    %v3037 = vunpack.c.h.b16 %v572
    %v3038 = vunpack.c.l.b16 %v573
    %v3039 = vunpack.c.h.b16 %v573
    %v3040 = vunpack.c.l.b16 %v574
    %v3041 = vunpack.c.h.b16 %v574
    %v3042 = vunpack.c.l.b16 %v575
    %v3043 = vunpack.c.h.b16 %v575
    %v3044 = vunpack.c.l.b16 %v576
    %v3045 = vunpack.c.h.b16 %v576
    %v3046 = vunpack.c.l.b16 %v577
    %v3047 = vunpack.c.h.b16 %v577
    %v3048 = vunpack.c.l.b16 %v578
    %v3049 = vunpack.c.h.b16 %v578
    %v3050 = vunpack.c.l.b16 %v579
    %v3051 = vunpack.c.h.b16 %v579
    %v3052 = vunpack.c.l.b16 %v580
    %v3053 = vunpack.c.h.b16 %v580
    %v3054 = vunpack.c.l.b16 %v581
    %v3055 = vunpack.c.h.b16 %v581
    %v3056 = vunpack.c.l.b16 %v582
    %v3057 = vunpack.c.h.b16 %v582
    %v3058 = vunpack.c.l.b16 %v583
    %v3059 = vunpack.c.h.b16 %v583
    %v3060 = vunpack.c.l.b16 %v584
    %v3061 = vunpack.c.h.b16 %v584
    %v3062 = vunpack.c.l.b16 %v585
    %v3063 = vunpack.c.h.b16 %v585
    %v3064 = vunpack.c.l.b16 %v586
    %v3065 = vunpack.c.h.b16 %v586
    %v3066 = vunpack.c.l.b16 %v587
    %v3067 = vunpack.c.h.b16 %v587
    %v3068 = vunpack.c.l.b16 %v588
    %v3069 = vunpack.c.h.b16 %v588
    %v3070 = vunpack.c.l.b16 %v589
    %v3071 = vunpack.c.h.b16 %v589
    %v3072 = vunpack.c.l.b16 %v590
    %v3073 = vunpack.c.h.b16 %v590
    %v3074 = vunpack.c.l.b16 %v591
    %v3075 = vunpack.c.h.b16 %v591
    %v3076 = vunpack.c.l.b16 %v592
    %v3077 = vunpack.c.h.b16 %v592
    %v3078 = vunpack.c.l.b16 %v593
    %v3079 = vunpack.c.h.b16 %v593
    %v3080 = vunpack.c.l.b16 %v594
    %v3081 = vunpack.c.h.b16 %v594
    %v3082 = vunpack.c.l.b16 %v595
    %v3083 = vunpack.c.h.b16 %v595
    %v3084 = vunpack.c.l.b16 %v596
    %v3085 = vunpack.c.h.b16 %v596
    %v3086 = vunpack.c.l.b16 %v597
    %v3087 = vunpack.c.h.b16 %v597
    %v3088 = vunpack.c.l.b16 %v598
    %v3089 = vunpack.c.h.b16 %v598
    %v3090 = vunpack.c.l.b16 %v599
    %v3091 = vunpack.c.h.b16 %v599
    %v3092 = vunpack.c.l.b16 %v600
    %v3093 = vunpack.c.h.b16 %v600
    %v3094 = vunpack.c.l.b16 %v601
    %v3095 = vunpack.c.h.b16 %v601
    %v3096 = vunpack.c.l.b16 %v602
    %v3097 = vunpack.c.h.b16 %v602
    %v3098 = vunpack.c.l.b16 %v603
    %v3099 = vunpack.c.h.b16 %v603
    %v3100 = vunpack.c.l.b16 %v604
    %v3101 = vunpack.c.h.b16 %v604
    %v3102 = vunpack.c.l.b16 %v605
    %v3103 = vunpack.c.h.b16 %v605
    %v3104 = vunpack.c.l.b16 %v606
    %v3105 = vunpack.c.h.b16 %v606
    %v3106 = vunpack.c.l.b16 %v607
    %v3107 = vunpack.c.h.b16 %v607
    %v3108 = vunpack.c.l.b16 %v608
    %v3109 = vunpack.c.h.b16 %v608
    %v3110 = vunpack.c.l.b16 %v609
    %v3111 = vunpack.c.h.b16 %v609
    %v3112 = vunpack.c.l.b16 %v610
    %v3113 = vunpack.c.h.b16 %v610
    %v3114 = vunpack.c.l.b16 %v611
    %v3115 = vunpack.c.h.b16 %v611
    %v3116 = vunpack.c.l.b16 %v612
    %v3117 = vunpack.c.h.b16 %v612
    %v3118 = vunpack.c.l.b16 %v613
    %v3119 = vunpack.c.h.b16 %v613
    %v3120 = vunpack.c.l.b16 %v614
    %v3121 = vunpack.c.h.b16 %v614
    %v3122 = vunpack.c.l.b16 %v615
    %v3123 = vunpack.c.h.b16 %v615
    %v3124 = vunpack.c.l.b16 %v616
    %v3125 = vunpack.c.h.b16 %v616
    %v3126 = vunpack.c.l.b16 %v617
    %v3127 = vunpack.c.h.b16 %v617
    %v3128 = vunpack.c.l.b16 %v618
    %v3129 = vunpack.c.h.b16 %v618
    %v3130 = vunpack.c.l.b16 %v619
    %v3131 = vunpack.c.h.b16 %v619
    %v3132 = vunpack.c.l.b16 %v620
    %v3133 = vunpack.c.h.b16 %v620
    %v3134 = vunpack.c.l.b16 %v621
    %v3135 = vunpack.c.h.b16 %v621
    %v3136 = vunpack.c.l.b16 %v622
    %v3137 = vunpack.c.h.b16 %v622
    %v3138 = vunpack.c.l.b16 %v623
    %v3139 = vunpack.c.h.b16 %v623
    %v3140 = vunpack.c.l.b16 %v624
    %v3141 = vunpack.c.h.b16 %v624
    %v3142 = vunpack.c.l.b16 %v625
    %v3143 = vunpack.c.h.b16 %v625
    %v3144 = vunpack.c.l.b16 %v626
    %v3145 = vunpack.c.h.b16 %v626
    %v3146 = vunpack.c.l.b16 %v627
    %v3147 = vunpack.c.h.b16 %v627
    %v3148 = vunpack.c.l.b16 %v628
    %v3149 = vunpack.c.h.b16 %v628
    %v3150 = vunpack.c.l.b16 %v629
    %v3151 = vunpack.c.h.b16 %v629
    %v3152 = vunpack.c.l.b16 %v630
    %v3153 = vunpack.c.h.b16 %v630
    %v3154 = vunpack.c.l.b16 %v631
    %v3155 = vunpack.c.h.b16 %v631
    %v3156 = vunpack.c.l.b16 %v632
    %v3157 = vunpack.c.h.b16 %v632
    %v3158 = vunpack.c.l.b16 %v633
    %v3159 = vunpack.c.h.b16 %v633
    %v3160 = vunpack.c.l.b16 %v634
    %v3161 = vunpack.c.h.b16 %v634
    %v3162 = vunpack.c.l.b16 %v635
    %v3163 = vunpack.c.h.b16 %v635
    %v3164 = vunpack.c.l.b16 %v636
    %v3165 = vunpack.c.h.b16 %v636
    %v3166 = vunpack.c.l.b16 %v637
    %v3167 = vunpack.c.h.b16 %v637
    %v3168 = vunpack.c.l.b16 %v638
    %v3169 = vunpack.c.h.b16 %v638
    %v3170 = vunpack.c.l.b16 %v639
    %v3171 = vunpack.c.h.b16 %v639
    %v3172 = vunpack.c.l.b16 %v640
    %v3173 = vunpack.c.h.b16 %v640
    %v3174 = vunpack.c.l.b16 %v641
    %v3175 = vunpack.c.h.b16 %v641
    %v3176 = vunpack.c.l.b16 %v642
    %v3177 = vunpack.c.h.b16 %v642
    %v3178 = vunpack.c.l.b16 %v643
    %v3179 = vunpack.c.h.b16 %v643
    %v3180 = vunpack.c.l.b16 %v644
    %v3181 = vunpack.c.h.b16 %v644
    %v3182 = vunpack.c.l.b16 %v645
    %v3183 = vunpack.c.h.b16 %v645
    %v3184 = vunpack.c.l.b16 %v646
    %v3185 = vunpack.c.h.b16 %v646
    %v3186 = vunpack.c.l.b16 %v647
    %v3187 = vunpack.c.h.b16 %v647
    %v3188 = vunpack.c.l.b16 %v648
    %v3189 = vunpack.c.h.b16 %v648
    %v3190 = vunpack.c.l.b16 %v649
    %v3191 = vunpack.c.h.b16 %v649
    %v3192 = vunpack.c.l.b16 %v650
    %v3193 = vunpack.c.h.b16 %v650
    %v3194 = vunpack.c.l.b16 %v651
    %v3195 = vunpack.c.h.b16 %v651
    %v3196 = vunpack.c.l.b16 %v652
    %v3197 = vunpack.c.h.b16 %v652
    %v3198 = vunpack.c.l.b16 %v653
    %v3199 = vunpack.c.h.b16 %v653
    %v3200 = vunpack.c.l.b16 %v654
    %v3201 = vunpack.c.h.b16 %v654
    %v3202 = vunpack.c.l.b16 %v655
    %v3203 = vunpack.c.h.b16 %v655
    %v3204 = vunpack.c.l.b16 %v656
    %v3205 = vunpack.c.h.b16 %v656
    %v3206 = vunpack.c.l.b16 %v657
    %v3207 = vunpack.c.h.b16 %v657
    %v3208 = vunpack.c.l.b16 %v658
    %v3209 = vunpack.c.h.b16 %v658
    %v3210 = vunpack.c.l.b16 %v659
    %v3211 = vunpack.c.h.b16 %v659
    %v3212 = vunpack.c.l.b16 %v660
    %v3213 = vunpack.c.h.b16 %v660
    %v3214 = vunpack.c.l.b16 %v661
    %v3215 = vunpack.c.h.b16 %v661
    %v3216 = vunpack.c.l.b16 %v662
    %v3217 = vunpack.c.h.b16 %v662
    %v3218 = vunpack.c.l.b16 %v663
    %v3219 = vunpack.c.h.b16 %v663
    %v3220 = vunpack.c.l.b16 %v664
    %v3221 = vunpack.c.h.b16 %v664
    %v3222 = vunpack.c.l.b16 %v665
    %v3223 = vunpack.c.h.b16 %v665
    %v3224 = vunpack.c.l.b16 %v666
    %v3225 = vunpack.c.h.b16 %v666
    %v3226 = vunpack.c.l.b16 %v667
    %v3227 = vunpack.c.h.b16 %v667
    %v3228 = vunpack.c.l.b16 %v668
    %v3229 = vunpack.c.h.b16 %v668
    %v3230 = vunpack.c.l.b16 %v669
    %v3231 = vunpack.c.h.b16 %v669
    %v3232 = vunpack.c.l.b16 %v670
    %v3233 = vunpack.c.h.b16 %v670
    %v3234 = vunpack.c.l.b16 %v671
    %v3235 = vunpack.c.h.b16 %v671
    %v3236 = vunpack.c.l.b16 %v672
    %v3237 = vunpack.c.h.b16 %v672
    %v3238 = vunpack.c.l.b16 %v673
    %v3239 = vunpack.c.h.b16 %v673
    %v3240 = vunpack.c.l.b16 %v674
    %v3241 = vunpack.c.h.b16 %v674
    %v3242 = vunpack.c.l.b16 %v675
    %v3243 = vunpack.c.h.b16 %v675
    %v3244 = vunpack.c.l.b16 %v676
    %v3245 = vunpack.c.h.b16 %v676
    %v3246 = vunpack.c.l.b16 %v677
    %v3247 = vunpack.c.h.b16 %v677
    %v3248 = vunpack.c.l.b16 %v678
    %v3249 = vunpack.c.h.b16 %v678
    %v3250 = vunpack.c.l.b16 %v679
    %v3251 = vunpack.c.h.b16 %v679
    %v3252 = vunpack.c.l.b16 %v680
    %v3253 = vunpack.c.h.b16 %v680
    %v3254 = vunpack.c.l.b16 %v681
    %v3255 = vunpack.c.h.b16 %v681
    %v3256 = vunpack.c.l.b16 %v682
    %v3257 = vunpack.c.h.b16 %v682
    %v3258 = vunpack.c.l.b16 %v683
    %v3259 = vunpack.c.h.b16 %v683
    %v3260 = vunpack.c.l.b16 %v684
    %v3261 = vunpack.c.h.b16 %v684
    %v3262 = vunpack.c.l.b16 %v685
    %v3263 = vunpack.c.h.b16 %v685
    %v3264 = vunpack.c.l.b16 %v686
    %v3265 = vunpack.c.h.b16 %v686
    %v3266 = vunpack.c.l.b16 %v687
    %v3267 = vunpack.c.h.b16 %v687
    %v3268 = vunpack.c.l.b16 %v688
    %v3269 = vunpack.c.h.b16 %v688
    %v3270 = vunpack.c.l.b16 %v689
    %v3271 = vunpack.c.h.b16 %v689
    %v3272 = vunpack.c.l.b16 %v690
    %v3273 = vunpack.c.h.b16 %v690
    %v3274 = vunpack.c.l.b16 %v691
    %v3275 = vunpack.c.h.b16 %v691
    %v3276 = vunpack.c.l.b16 %v692
    %v3277 = vunpack.c.h.b16 %v692
    %v3278 = vunpack.c.l.b16 %v693
    %v3279 = vunpack.c.h.b16 %v693
    %v3280 = vunpack.c.l.b16 %v694
    %v3281 = vunpack.c.h.b16 %v694
    %v3282 = vunpack.c.l.b16 %v695
    %v3283 = vunpack.c.h.b16 %v695
    %v3284 = vunpack.c.l.b16 %v696
    %v3285 = vunpack.c.h.b16 %v696
    %v3286 = vunpack.c.l.b16 %v697
    %v3287 = vunpack.c.h.b16 %v697
    %v3288 = vunpack.c.l.b16 %v698
    %v3289 = vunpack.c.h.b16 %v698
    %v3290 = vunpack.c.l.b16 %v699
    %v3291 = vunpack.c.h.b16 %v699
    %v3292 = vunpack.c.l.b16 %v700
    %v3293 = vunpack.c.h.b16 %v700
    %v3294 = vunpack.c.l.b16 %v701
    %v3295 = vunpack.c.h.b16 %v701
    %v3296 = vunpack.c.l.b16 %v702
    %v3297 = vunpack.c.h.b16 %v702
    %v3298 = vunpack.c.l.b16 %v703
    %v3299 = vunpack.c.h.b16 %v703
    %v3300 = vunpack.c.l.b16 %v704
    %v3301 = vunpack.c.h.b16 %v704
    %v3302 = vunpack.c.l.b16 %v705
    %v3303 = vunpack.c.h.b16 %v705
    %v3304 = vunpack.c.l.b16 %v706
    %v3305 = vunpack.c.h.b16 %v706
    %v3306 = vunpack.c.l.b16 %v707
    %v3307 = vunpack.c.h.b16 %v707
    %v3308 = vunpack.c.l.b16 %v708
    %v3309 = vunpack.c.h.b16 %v708
    %v3310 = vunpack.c.l.b16 %v709
    %v3311 = vunpack.c.h.b16 %v709
    %v3312 = vunpack.c.l.b16 %v710
    %v3313 = vunpack.c.h.b16 %v710
    %v3314 = vunpack.c.l.b16 %v711
    %v3315 = vunpack.c.h.b16 %v711
    %v3316 = vunpack.c.l.b16 %v712
    %v3317 = vunpack.c.h.b16 %v712
    %v3318 = vunpack.c.l.b16 %v713
    %v3319 = vunpack.c.h.b16 %v713
    %v3320 = vunpack.c.l.b16 %v714
    %v3321 = vunpack.c.h.b16 %v714
    %v3322 = vunpack.c.l.b16 %v715
    %v3323 = vunpack.c.h.b16 %v715
    %v3324 = vunpack.c.l.b16 %v716
    %v3325 = vunpack.c.h.b16 %v716
    %v3326 = vunpack.c.l.b16 %v717
    %v3327 = vunpack.c.h.b16 %v717
    %v3328 = vunpack.c.l.b16 %v718
    %v3329 = vunpack.c.h.b16 %v718
    %v3330 = vunpack.c.l.b16 %v719
    %v3331 = vunpack.c.h.b16 %v719
    %v3332 = vunpack.c.l.b16 %v720
    %v3333 = vunpack.c.h.b16 %v720
    %v3334 = vunpack.c.l.b16 %v721
    %v3335 = vunpack.c.h.b16 %v721
    %v3336 = vunpack.c.l.b16 %v722
    %v3337 = vunpack.c.h.b16 %v722
    %v3338 = vunpack.c.l.b16 %v723
    %v3339 = vunpack.c.h.b16 %v723
    %v3340 = vunpack.c.l.b16 %v724
    %v3341 = vunpack.c.h.b16 %v724
    %v3342 = vunpack.c.l.b16 %v725
    %v3343 = vunpack.c.h.b16 %v725
    %v3344 = vunpack.c.l.b16 %v726
    %v3345 = vunpack.c.h.b16 %v726
    %v3346 = vunpack.c.l.b16 %v727
    %v3347 = vunpack.c.h.b16 %v727
    %v3348 = vunpack.c.l.b16 %v728
    %v3349 = vunpack.c.h.b16 %v728
    %v3350 = vunpack.c.l.b16 %v729
    %v3351 = vunpack.c.h.b16 %v729
    %v3352 = vunpack.c.l.b16 %v730
    %v3353 = vunpack.c.h.b16 %v730
    %v3354 = vunpack.c.l.b16 %v731
    %v3355 = vunpack.c.h.b16 %v731
    %v3356 = vunpack.c.l.b16 %v732
    %v3357 = vunpack.c.h.b16 %v732
    %v3358 = vunpack.c.l.b16 %v733
    %v3359 = vunpack.c.h.b16 %v733
    %v3360 = vunpack.c.l.b16 %v734
    %v3361 = vunpack.c.h.b16 %v734
    %v3362 = vunpack.c.l.b16 %v735
    %v3363 = vunpack.c.h.b16 %v735
    %v3364 = vunpack.c.l.b16 %v736
    %v3365 = vunpack.c.h.b16 %v736
    %v3366 = vunpack.c.l.b16 %v737
    %v3367 = vunpack.c.h.b16 %v737
    %v3368 = vunpack.c.l.b16 %v738
    %v3369 = vunpack.c.h.b16 %v738
    %v3370 = vunpack.c.l.b16 %v739
    %v3371 = vunpack.c.h.b16 %v739
    %v3372 = vunpack.c.l.b16 %v740
    %v3373 = vunpack.c.h.b16 %v740
    %v3374 = vunpack.c.l.b16 %v741
    %v3375 = vunpack.c.h.b16 %v741
    %v3376 = vunpack.c.l.b16 %v742
    %v3377 = vunpack.c.h.b16 %v742
    %v3378 = vunpack.c.l.b16 %v743
    %v3379 = vunpack.c.h.b16 %v743
    %v3380 = vunpack.c.l.b16 %v744
    %v3381 = vunpack.c.h.b16 %v744
    %v3382 = vunpack.c.l.b16 %v745
    %v3383 = vunpack.c.h.b16 %v745
    %v3384 = vunpack.c.l.b16 %v746
    %v3385 = vunpack.c.h.b16 %v746
    %v3386 = vunpack.c.l.b16 %v747
    %v3387 = vunpack.c.h.b16 %v747
    %v3388 = vunpack.c.l.b16 %v748
    %v3389 = vunpack.c.h.b16 %v748
    %v3390 = vunpack.c.l.b16 %v749
    %v3391 = vunpack.c.h.b16 %v749
    %v3392 = vunpack.c.l.b16 %v750
    %v3393 = vunpack.c.h.b16 %v750
    %v3394 = vunpack.c.l.b16 %v751
    %v3395 = vunpack.c.h.b16 %v751
    %v3396 = vunpack.c.l.b16 %v752
    %v3397 = vunpack.c.h.b16 %v752
    %v3398 = vunpack.c.l.b16 %v753
    %v3399 = vunpack.c.h.b16 %v753
    %v3400 = vunpack.c.l.b16 %v754
    %v3401 = vunpack.c.h.b16 %v754
    %v3402 = vunpack.c.l.b16 %v755
    %v3403 = vunpack.c.h.b16 %v755
    %v3404 = vunpack.c.l.b16 %v756
    %v3405 = vunpack.c.h.b16 %v756
    %v3406 = vunpack.c.l.b16 %v757
    %v3407 = vunpack.c.h.b16 %v757
    %v3408 = vunpack.c.l.b16 %v758
    %v3409 = vunpack.c.h.b16 %v758
    %v3410 = vunpack.c.l.b16 %v759
    %v3411 = vunpack.c.h.b16 %v759
    %v3412 = vunpack.c.l.b16 %v760
    %v3413 = vunpack.c.h.b16 %v760
    %v3414 = vunpack.c.l.b16 %v761
    %v3415 = vunpack.c.h.b16 %v761
    %v3416 = vunpack.c.l.b16 %v762
    %v3417 = vunpack.c.h.b16 %v762
    %v3418 = vunpack.c.l.b16 %v763
    %v3419 = vunpack.c.h.b16 %v763
    %v3420 = vunpack.c.l.b16 %v764
    %v3421 = vunpack.c.h.b16 %v764
    %v3422 = vunpack.c.l.b16 %v765
    %v3423 = vunpack.c.h.b16 %v765
    %v3424 = vunpack.c.l.b16 %v766
    %v3425 = vunpack.c.h.b16 %v766
    %v3426 = vunpack.c.l.b16 %v767
    %v3427 = vunpack.c.h.b16 %v767
    %v3428 = vunpack.c.l.b16 %v768
    %v3429 = vunpack.c.h.b16 %v768
    %v3430 = vunpack.c.l.b16 %v769
    %v3431 = vunpack.c.h.b16 %v769
    %v3432 = vunpack.c.l.b16 %v770
    %v3433 = vunpack.c.h.b16 %v770
    %v3434 = vunpack.c.l.b16 %v771
    %v3435 = vunpack.c.h.b16 %v771
    %v3436 = vunpack.c.l.b16 %v772
    %v3437 = vunpack.c.h.b16 %v772
    %v3438 = vunpack.c.l.b16 %v773
    %v3439 = vunpack.c.h.b16 %v773
    %v3440 = vunpack.c.l.b16 %v774
    %v3441 = vunpack.c.h.b16 %v774
    %v3442 = vunpack.c.l.b16 %v775
    %v3443 = vunpack.c.h.b16 %v775
    %v3444 = vunpack.c.l.b16 %v776
    %v3445 = vunpack.c.h.b16 %v776
    %v3446 = vunpack.c.l.b16 %v777
    %v3447 = vunpack.c.h.b16 %v777
    %v3448 = vunpack.c.l.b16 %v778
    %v3449 = vunpack.c.h.b16 %v778
    %v3450 = vunpack.c.l.b16 %v779
    %v3451 = vunpack.c.h.b16 %v779
    %v3452 = vunpack.c.l.b16 %v780
    %v3453 = vunpack.c.h.b16 %v780
    %v3454 = vunpack.c.l.b16 %v781
    %v3455 = vunpack.c.h.b16 %v781
    %v3456 = vunpack.c.l.b16 %v782
    %v3457 = vunpack.c.h.b16 %v782
    %v3458 = vunpack.c.l.b16 %v783
    %v3459 = vunpack.c.h.b16 %v783
    %v3460 = vunpack.c.l.b16 %v784
    %v3461 = vunpack.c.h.b16 %v784
    %v3462 = vunpack.c.l.b16 %v785
    %v3463 = vunpack.c.h.b16 %v785
    %v3464 = vunpack.c.l.b16 %v786
    %v3465 = vunpack.c.h.b16 %v786
    %v3466 = vunpack.c.l.b16 %v787
    %v3467 = vunpack.c.h.b16 %v787
    %v3468 = vunpack.c.l.b16 %v788
    %v3469 = vunpack.c.h.b16 %v788
    %v3470 = vunpack.c.l.b16 %v789
    %v3471 = vunpack.c.h.b16 %v789
    %v3472 = vunpack.c.l.b16 %v790
    %v3473 = vunpack.c.h.b16 %v790
    %v3474 = vunpack.c.l.b16 %v791
    %v3475 = vunpack.c.h.b16 %v791
    %v3476 = vunpack.c.l.b16 %v792
    %v3477 = vunpack.c.h.b16 %v792
    %v3478 = vunpack.c.l.b16 %v793
    %v3479 = vunpack.c.h.b16 %v793
    %v3480 = vunpack.c.l.b16 %v794
    %v3481 = vunpack.c.h.b16 %v794
    %v3482 = vunpack.c.l.b16 %v795
    %v3483 = vunpack.c.h.b16 %v795
    %v3484 = vunpack.c.l.b16 %v796
    %v3485 = vunpack.c.h.b16 %v796
    %v3486 = vunpack.c.l.b16 %v797
    %v3487 = vunpack.c.h.b16 %v797
    %v3488 = vunpack.c.l.b16 %v798
    %v3489 = vunpack.c.h.b16 %v798
    %v3490 = vunpack.c.l.b16 %v799
    %v3491 = vunpack.c.h.b16 %v799
    %v3492 = vunpack.c.l.b16 %v800
    %v3493 = vunpack.c.h.b16 %v800
    %v3494 = vunpack.c.l.b16 %v801
    %v3495 = vunpack.c.h.b16 %v801
    %v3496 = vunpack.c.l.b16 %v802
    %v3497 = vunpack.c.h.b16 %v802
    %v3498 = vunpack.c.l.b16 %v803
    %v3499 = vunpack.c.h.b16 %v803
    %v3500 = vunpack.c.l.b16 %v804
    %v3501 = vunpack.c.h.b16 %v804
    %v3502 = vunpack.c.l.b16 %v805
    %v3503 = vunpack.c.h.b16 %v805
    %v3504 = vunpack.c.l.b16 %v806
    %v3505 = vunpack.c.h.b16 %v806
    %v3506 = vunpack.c.l.b16 %v807
    %v3507 = vunpack.c.h.b16 %v807
    %v3508 = vunpack.c.l.b16 %v808
    %v3509 = vunpack.c.h.b16 %v808
    %v3510 = vunpack.c.l.b16 %v809
    %v3511 = vunpack.c.h.b16 %v809
    %v3512 = vunpack.c.l.b16 %v810
    %v3513 = vunpack.c.h.b16 %v810
    %v3514 = vunpack.c.l.b16 %v811
    %v3515 = vunpack.c.h.b16 %v811
    %v3516 = vunpack.c.l.b16 %v812
    %v3517 = vunpack.c.h.b16 %v812
    %v3518 = vunpack.c.l.b16 %v813
    %v3519 = vunpack.c.h.b16 %v813
    %v3520 = vunpack.c.l.b16 %v814
    %v3521 = vunpack.c.h.b16 %v814
    %v3522 = vunpack.c.l.b16 %v815
    %v3523 = vunpack.c.h.b16 %v815
    %v3524 = vunpack.c.l.b16 %v816
    %v3525 = vunpack.c.h.b16 %v816
    %v3526 = vunpack.c.l.b16 %v817
    %v3527 = vunpack.c.h.b16 %v817
    %v3528 = vunpack.c.l.b16 %v818
    %v3529 = vunpack.c.h.b16 %v818
    %v3530 = vunpack.c.l.b16 %v819
    %v3531 = vunpack.c.h.b16 %v819
    %v3532 = vunpack.c.l.b16 %v820
    %v3533 = vunpack.c.h.b16 %v820
    %v3534 = vunpack.c.l.b16 %v821
    %v3535 = vunpack.c.h.b16 %v821
    %v3536 = vunpack.c.l.b16 %v822
    %v3537 = vunpack.c.h.b16 %v822
    %v3538 = vunpack.c.l.b16 %v823
    %v3539 = vunpack.c.h.b16 %v823
    %v3540 = vunpack.c.l.b16 %v824
    %v3541 = vunpack.c.h.b16 %v824
    %v3542 = vunpack.c.l.b16 %v825
    %v3543 = vunpack.c.h.b16 %v825
    %v3544 = vunpack.c.l.b16 %v826
    %v3545 = vunpack.c.h.b16 %v826
    %v3546 = vunpack.c.l.b16 %v827
    %v3547 = vunpack.c.h.b16 %v827
    %v3548 = vunpack.c.l.b16 %v828
    %v3549 = vunpack.c.h.b16 %v828
    %v3550 = vunpack.c.l.b16 %v829
    %v3551 = vunpack.c.h.b16 %v829
    %v3552 = vunpack.c.l.b16 %v830
    %v3553 = vunpack.c.h.b16 %v830
    %v3554 = vunpack.c.l.b16 %v831
    %v3555 = vunpack.c.h.b16 %v831
    %v3556 = vunpack.c.l.b16 %v832
    %v3557 = vunpack.c.h.b16 %v832
    %v3558 = vunpack.c.l.b16 %v833
    %v3559 = vunpack.c.h.b16 %v833
    %v3560 = vunpack.c.l.b16 %v834
    %v3561 = vunpack.c.h.b16 %v834
    %v3562 = vunpack.c.l.b16 %v835
    %v3563 = vunpack.c.h.b16 %v835
    %v3564 = vunpack.c.l.b16 %v836
    %v3565 = vunpack.c.h.b16 %v836
    %v3566 = vunpack.c.l.b16 %v837
    %v3567 = vunpack.c.h.b16 %v837
    %v3568 = vunpack.c.l.b16 %v838
    %v3569 = vunpack.c.h.b16 %v838
    %v3570 = vunpack.c.l.b16 %v839
    %v3571 = vunpack.c.h.b16 %v839
    %v3572 = vunpack.c.l.b16 %v840
    %v3573 = vunpack.c.h.b16 %v840
    %v3574 = vunpack.c.l.b16 %v841
    %v3575 = vunpack.c.h.b16 %v841
    %v3576 = vunpack.c.l.b16 %v842
    %v3577 = vunpack.c.h.b16 %v842
    %v3578 = vunpack.c.l.b16 %v843
    %v3579 = vunpack.c.h.b16 %v843
    %v3580 = vunpack.c.l.b16 %v844
    %v3581 = vunpack.c.h.b16 %v844
    %v3582 = vunpack.c.l.b16 %v845
    %v3583 = vunpack.c.h.b16 %v845
    %v3584 = vunpack.c.l.b16 %v846
    %v3585 = vunpack.c.h.b16 %v846
    %v3586 = vunpack.c.l.b16 %v847
    %v3587 = vunpack.c.h.b16 %v847
    %v3588 = vunpack.c.l.b16 %v848
    %v3589 = vunpack.c.h.b16 %v848
    %v3590 = vunpack.c.l.b16 %v849
    %v3591 = vunpack.c.h.b16 %v849
    %v3592 = vunpack.c.l.b16 %v850
    %v3593 = vunpack.c.h.b16 %v850
    %v3594 = vunpack.c.l.b16 %v851
    %v3595 = vunpack.c.h.b16 %v851
    %v3596 = vunpack.c.l.b16 %v852
    %v3597 = vunpack.c.h.b16 %v852
    %v3598 = vunpack.c.l.b16 %v853
    %v3599 = vunpack.c.h.b16 %v853
    %v3600 = vunpack.c.l.b16 %v854
    %v3601 = vunpack.c.h.b16 %v854
    %v3602 = vunpack.c.l.b16 %v855
    %v3603 = vunpack.c.h.b16 %v855
    %v3604 = vunpack.c.l.b16 %v856
    %v3605 = vunpack.c.h.b16 %v856
    %v3606 = vunpack.c.l.b16 %v857
    %v3607 = vunpack.c.h.b16 %v857
    %v3608 = vunpack.c.l.b16 %v858
    %v3609 = vunpack.c.h.b16 %v858
    %v3610 = vunpack.c.l.b16 %v859
    %v3611 = vunpack.c.h.b16 %v859
    %v3612 = vunpack.c.l.b16 %v860
    %v3613 = vunpack.c.h.b16 %v860
    %v3614 = vunpack.c.l.b16 %v861
    %v3615 = vunpack.c.h.b16 %v861
    %v3616 = vunpack.c.l.b16 %v862
    %v3617 = vunpack.c.h.b16 %v862
    %v3618 = vunpack.c.l.b16 %v863
    %v3619 = vunpack.c.h.b16 %v863
    %v3620 = vunpack.c.l.b16 %v864
    %v3621 = vunpack.c.h.b16 %v864
    %v3622 = vunpack.c.l.b16 %v865
    %v3623 = vunpack.c.h.b16 %v865
    %v3624 = vunpack.c.l.b16 %v866
    %v3625 = vunpack.c.h.b16 %v866
    %v3626 = vunpack.c.l.b16 %v867
    %v3627 = vunpack.c.h.b16 %v867
    %v3628 = vunpack.c.l.b16 %v868
    %v3629 = vunpack.c.h.b16 %v868
    %v3630 = vunpack.c.l.b16 %v869
    %v3631 = vunpack.c.h.b16 %v869
    %v3632 = vunpack.c.l.b16 %v870
    %v3633 = vunpack.c.h.b16 %v870
    %v3634 = vunpack.c.l.b16 %v871
    %v3635 = vunpack.c.h.b16 %v871
    %v3636 = vunpack.c.l.b16 %v872
    %v3637 = vunpack.c.h.b16 %v872
    %v3638 = vunpack.c.l.b16 %v873
    %v3639 = vunpack.c.h.b16 %v873
    %v3640 = vunpack.c.l.b16 %v874
    %v3641 = vunpack.c.h.b16 %v874
    %v3642 = vunpack.c.l.b16 %v875
    %v3643 = vunpack.c.h.b16 %v875
    %v3644 = vunpack.c.l.b16 %v876
    %v3645 = vunpack.c.h.b16 %v876
    %v3646 = vunpack.c.l.b16 %v877
    %v3647 = vunpack.c.h.b16 %v877
    %v3648 = vunpack.c.l.b16 %v878
    %v3649 = vunpack.c.h.b16 %v878
    %v3650 = vunpack.c.l.b16 %v879
    %v3651 = vunpack.c.h.b16 %v879
    %v3652 = vunpack.c.l.b16 %v880
    %v3653 = vunpack.c.h.b16 %v880
    %v3654 = vunpack.c.l.b16 %v881
    %v3655 = vunpack.c.h.b16 %v881
    %v3656 = vunpack.c.l.b16 %v882
    %v3657 = vunpack.c.h.b16 %v882
    %v3658 = vunpack.c.l.b16 %v883
    %v3659 = vunpack.c.h.b16 %v883
    %v3660 = vunpack.c.l.b16 %v884
    %v3661 = vunpack.c.h.b16 %v884
    %v3662 = vunpack.c.l.b16 %v885
    %v3663 = vunpack.c.h.b16 %v885
    %v3664 = vunpack.c.l.b16 %v886
    %v3665 = vunpack.c.h.b16 %v886
    %v3666 = vunpack.c.l.b16 %v887
    %v3667 = vunpack.c.h.b16 %v887
    %v3668 = vunpack.c.l.b16 %v888
    %v3669 = vunpack.c.h.b16 %v888
    %v3670 = vunpack.c.l.b16 %v889
    %v3671 = vunpack.c.h.b16 %v889
    %v3672 = vunpack.c.l.b16 %v890
    %v3673 = vunpack.c.h.b16 %v890
    %v3674 = vunpack.c.l.b16 %v891
    %v3675 = vunpack.c.h.b16 %v891
    %v3676 = vunpack.c.l.b16 %v892
    %v3677 = vunpack.c.h.b16 %v892
    %v3678 = vunpack.c.l.b16 %v893
    %v3679 = vunpack.c.h.b16 %v893
    %v3680 = vunpack.c.l.b16 %v894
    %v3681 = vunpack.c.h.b16 %v894
    %v3682 = vunpack.c.l.b16 %v895
    %v3683 = vunpack.c.h.b16 %v895
    %v3684 = vunpack.c.l.b16 %v896
    %v3685 = vunpack.c.h.b16 %v896
    %v3686 = vunpack.c.l.b16 %v897
    %v3687 = vunpack.c.h.b16 %v897
    %v3688 = vunpack.c.l.b16 %v898
    %v3689 = vunpack.c.h.b16 %v898
    %v3690 = vunpack.c.l.b16 %v899
    %v3691 = vunpack.c.h.b16 %v899
    %v3692 = vunpack.c.l.b16 %v900
    %v3693 = vunpack.c.h.b16 %v900
    %v3694 = vunpack.c.l.b16 %v901
    %v3695 = vunpack.c.h.b16 %v901
    %v3696 = vunpack.c.l.b16 %v902
    %v3697 = vunpack.c.h.b16 %v902
    %v3698 = vunpack.c.l.b16 %v903
    %v3699 = vunpack.c.h.b16 %v903
    %v3700 = vunpack.c.l.b16 %v904
    %v3701 = vunpack.c.h.b16 %v904
    %v3702 = vunpack.c.l.b16 %v905
    %v3703 = vunpack.c.h.b16 %v905
    %v3704 = vunpack.c.l.b16 %v906
    %v3705 = vunpack.c.h.b16 %v906
    %v3706 = vunpack.c.l.b16 %v907
    %v3707 = vunpack.c.h.b16 %v907
    %v3708 = vunpack.c.l.b16 %v908
    %v3709 = vunpack.c.h.b16 %v908
    %v3710 = vunpack.c.l.b16 %v909
    %v3711 = vunpack.c.h.b16 %v909
    %v3712 = vunpack.c.l.b16 %v910
    %v3713 = vunpack.c.h.b16 %v910
    %v3714 = vunpack.c.l.b16 %v911
    %v3715 = vunpack.c.h.b16 %v911
    %v3716 = vunpack.c.l.b16 %v912
    %v3717 = vunpack.c.h.b16 %v912
    %v3718 = vunpack.c.l.b16 %v913
    %v3719 = vunpack.c.h.b16 %v913
    %v3720 = vunpack.c.l.b16 %v914
    %v3721 = vunpack.c.h.b16 %v914
    %v3722 = vunpack.c.l.b16 %v915
    %v3723 = vunpack.c.h.b16 %v915
    %v3724 = vunpack.c.l.b16 %v916
    %v3725 = vunpack.c.h.b16 %v916
    %v3726 = vunpack.c.l.b16 %v917
    %v3727 = vunpack.c.h.b16 %v917
    %v3728 = vunpack.c.l.b16 %v918
    %v3729 = vunpack.c.h.b16 %v918
    %v3730 = vunpack.c.l.b16 %v919
    %v3731 = vunpack.c.h.b16 %v919
    %v3732 = vunpack.c.l.b16 %v920
    %v3733 = vunpack.c.h.b16 %v920
    %v3734 = vunpack.c.l.b16 %v921
    %v3735 = vunpack.c.h.b16 %v921
    %v3736 = vunpack.c.l.b16 %v922
    %v3737 = vunpack.c.h.b16 %v922
    %v3738 = vunpack.c.l.b16 %v923
    %v3739 = vunpack.c.h.b16 %v923
    %v3740 = vunpack.c.l.b16 %v924
    %v3741 = vunpack.c.h.b16 %v924
    %v3742 = vunpack.c.l.b16 %v925
    %v3743 = vunpack.c.h.b16 %v925
    %v3744 = vunpack.c.l.b16 %v926
    %v3745 = vunpack.c.h.b16 %v926
    %v3746 = vunpack.c.l.b16 %v927
    %v3747 = vunpack.c.h.b16 %v927
    %v3748 = vunpack.c.l.b16 %v928
    %v3749 = vunpack.c.h.b16 %v928
    %v3750 = vunpack.c.l.b16 %v929
    %v3751 = vunpack.c.h.b16 %v929
    %v3752 = vunpack.c.l.b16 %v930
    %v3753 = vunpack.c.h.b16 %v930
    %v3754 = vunpack.c.l.b16 %v931
    %v3755 = vunpack.c.h.b16 %v931
    %v3756 = vunpack.c.l.b16 %v932
    %v3757 = vunpack.c.h.b16 %v932
    %v3758 = vunpack.c.l.b16 %v933
    %v3759 = vunpack.c.h.b16 %v933
    %v3760 = vunpack.c.l.b16 %v934
    %v3761 = vunpack.c.h.b16 %v934
    %v3762 = vunpack.c.l.b16 %v935
    %v3763 = vunpack.c.h.b16 %v935
    %v3764 = vunpack.c.l.b16 %v936
    %v3765 = vunpack.c.h.b16 %v936
    %v3766 = vunpack.c.l.b16 %v937
    %v3767 = vunpack.c.h.b16 %v937
    %v3768 = vunpack.c.l.b16 %v938
    %v3769 = vunpack.c.h.b16 %v938
    %v3770 = vunpack.c.l.b16 %v939
    %v3771 = vunpack.c.h.b16 %v939
    %v3772 = vunpack.c.l.b16 %v940
    %v3773 = vunpack.c.h.b16 %v940
    %v3774 = vunpack.c.l.b16 %v941
    %v3775 = vunpack.c.h.b16 %v941
    %v3776 = vunpack.c.l.b16 %v942
    %v3777 = vunpack.c.h.b16 %v942
    %v3778 = vunpack.c.l.b16 %v943
    %v3779 = vunpack.c.h.b16 %v943
    %v3780 = vunpack.c.l.b16 %v944
    %v3781 = vunpack.c.h.b16 %v944
    %v3782 = vunpack.c.l.b16 %v945
    %v3783 = vunpack.c.h.b16 %v945
    %v3784 = vunpack.c.l.b16 %v946
    %v3785 = vunpack.c.h.b16 %v946
    %v3786 = vunpack.c.l.b16 %v947
    %v3787 = vunpack.c.h.b16 %v947
    %v3788 = vunpack.c.l.b16 %v948
    %v3789 = vunpack.c.h.b16 %v948
    %v3790 = vunpack.c.l.b16 %v949
    %v3791 = vunpack.c.h.b16 %v949
    %v3792 = vunpack.c.l.b16 %v950
    %v3793 = vunpack.c.h.b16 %v950
    %v3794 = vunpack.c.l.b16 %v951
    %v3795 = vunpack.c.h.b16 %v951
    %v3796 = vunpack.c.l.b16 %v952
    %v3797 = vunpack.c.h.b16 %v952
    %v3798 = vunpack.c.l.b16 %v953
    %v3799 = vunpack.c.h.b16 %v953
    %v3800 = vunpack.c.l.b16 %v954
    %v3801 = vunpack.c.h.b16 %v954
    %v3802 = vunpack.c.l.b16 %v955
    %v3803 = vunpack.c.h.b16 %v955
    %v3804 = vunpack.c.l.b16 %v956
    %v3805 = vunpack.c.h.b16 %v956
    %v3806 = vunpack.c.l.b16 %v957
    %v3807 = vunpack.c.h.b16 %v957
    %v3808 = vunpack.c.l.b16 %v958
    %v3809 = vunpack.c.h.b16 %v958
    %v3810 = vunpack.c.l.b16 %v959
    %v3811 = vunpack.c.h.b16 %v959
    %v3812 = vunpack.c.l.b16 %v960
    %v3813 = vunpack.c.h.b16 %v960
    %v3814 = vunpack.c.l.b16 %v961
    %v3815 = vunpack.c.h.b16 %v961
    %v3816 = vunpack.c.l.b16 %v962
    %v3817 = vunpack.c.h.b16 %v962
    %v3818 = vunpack.c.l.b16 %v963
    %v3819 = vunpack.c.h.b16 %v963
    %v3820 = vunpack.c.l.b16 %v964
    %v3821 = vunpack.c.h.b16 %v964
    %v3822 = vunpack.c.l.b16 %v965
    %v3823 = vunpack.c.h.b16 %v965
    %v3824 = vunpack.c.l.b16 %v966
    %v3825 = vunpack.c.h.b16 %v966
    %v3826 = vunpack.c.l.b16 %v967
    %v3827 = vunpack.c.h.b16 %v967
    %v3828 = vunpack.c.l.b16 %v968
    %v3829 = vunpack.c.h.b16 %v968
    %v3830 = vunpack.c.l.b16 %v969
    %v3831 = vunpack.c.h.b16 %v969
    %v3832 = vunpack.c.l.b16 %v970
    %v3833 = vunpack.c.h.b16 %v970
    %v3834 = vunpack.c.l.b16 %v971
    %v3835 = vunpack.c.h.b16 %v971
    %v3836 = vunpack.c.l.b16 %v972
    %v3837 = vunpack.c.h.b16 %v972
    %v3838 = vunpack.c.l.b16 %v973
    %v3839 = vunpack.c.h.b16 %v973
    %v3840 = vunpack.c.l.b16 %v974
    %v3841 = vunpack.c.h.b16 %v974
    %v3842 = vunpack.c.l.b16 %v975
    %v3843 = vunpack.c.h.b16 %v975
    %v3844 = vunpack.c.l.b16 %v976
    %v3845 = vunpack.c.h.b16 %v976
    %v3846 = vunpack.c.l.b16 %v977
    %v3847 = vunpack.c.h.b16 %v977
    %v3848 = vunpack.c.l.b16 %v978
    %v3849 = vunpack.c.h.b16 %v978
    %v3850 = vunpack.c.l.b16 %v979
    %v3851 = vunpack.c.h.b16 %v979
    %v3852 = vunpack.c.l.b16 %v980
    %v3853 = vunpack.c.h.b16 %v980
    %v3854 = vunpack.c.l.b16 %v981
    %v3855 = vunpack.c.h.b16 %v981
    %v3856 = vunpack.c.l.b16 %v982
    %v3857 = vunpack.c.h.b16 %v982
    %v3858 = vunpack.c.l.b16 %v983
    %v3859 = vunpack.c.h.b16 %v983
    %v3860 = vunpack.c.l.b16 %v984
    %v3861 = vunpack.c.h.b16 %v984
    %v3862 = vunpack.c.l.b16 %v985
    %v3863 = vunpack.c.h.b16 %v985
    %v3864 = vunpack.c.l.b16 %v986
    %v3865 = vunpack.c.h.b16 %v986
    %v3866 = vunpack.c.l.b16 %v987
    %v3867 = vunpack.c.h.b16 %v987
    %v3868 = vunpack.c.l.b16 %v988
    %v3869 = vunpack.c.h.b16 %v988
    %v3870 = vunpack.c.l.b16 %v989
    %v3871 = vunpack.c.h.b16 %v989
    %v3872 = vunpack.c.l.b16 %v990
    %v3873 = vunpack.c.h.b16 %v990
    %v3874 = vunpack.c.l.b16 %v991
    %v3875 = vunpack.c.h.b16 %v991
    %v3876 = vunpack.c.l.b16 %v992
    %v3877 = vunpack.c.h.b16 %v992
    %v3878 = vunpack.c.l.b16 %v993
    %v3879 = vunpack.c.h.b16 %v993
    %v3880 = vunpack.c.l.b16 %v994
    %v3881 = vunpack.c.h.b16 %v994
    %v3882 = vunpack.c.l.b16 %v995
    %v3883 = vunpack.c.h.b16 %v995
    %v3884 = vunpack.c.l.b16 %v996
    %v3885 = vunpack.c.h.b16 %v996
    %v3886 = vunpack.c.l.b16 %v997
    %v3887 = vunpack.c.h.b16 %v997
    %v3888 = vunpack.c.l.b16 %v998
    %v3889 = vunpack.c.h.b16 %v998
    %v3890 = vunpack.c.l.b16 %v999
    %v3891 = vunpack.c.h.b16 %v999
    %v3892 = vunpack.c.l.b16 %v1000
    %v3893 = vunpack.c.h.b16 %v1000
    %v3894 = vunpack.c.l.b16 %v1001
    %v3895 = vunpack.c.h.b16 %v1001
    %v3896 = vunpack.c.l.b16 %v1002
    %v3897 = vunpack.c.h.b16 %v1002
    %v3898 = vunpack.c.l.b16 %v1003
    %v3899 = vunpack.c.h.b16 %v1003
    %v3900 = vunpack.c.l.b16 %v1004
    %v3901 = vunpack.c.h.b16 %v1004
    %v3902 = vunpack.c.l.b16 %v1005
    %v3903 = vunpack.c.h.b16 %v1005
    %v3904 = vunpack.c.l.b16 %v1006
    %v3905 = vunpack.c.h.b16 %v1006
    %v3906 = vunpack.c.l.b16 %v1007
    %v3907 = vunpack.c.h.b16 %v1007
    %v3908 = vunpack.c.l.b16 %v1008
    %v3909 = vunpack.c.h.b16 %v1008
    %v3910 = vunpack.c.l.b16 %v1009
    %v3911 = vunpack.c.h.b16 %v1009
    %v3912 = vunpack.c.l.b16 %v1010
    %v3913 = vunpack.c.h.b16 %v1010
    %v3914 = vunpack.c.l.b16 %v1011
    %v3915 = vunpack.c.h.b16 %v1011
    %v3916 = vunpack.c.l.b16 %v1012
    %v3917 = vunpack.c.h.b16 %v1012
    %v3918 = vunpack.c.l.b16 %v1013
    %v3919 = vunpack.c.h.b16 %v1013
    %v3920 = vunpack.c.l.b16 %v1014
    %v3921 = vunpack.c.h.b16 %v1014
    %v3922 = vunpack.c.l.b16 %v1015
    %v3923 = vunpack.c.h.b16 %v1015
    %v3924 = vunpack.c.l.b16 %v1016
    %v3925 = vunpack.c.h.b16 %v1016
    %v3926 = vunpack.c.l.b16 %v1017
    %v3927 = vunpack.c.h.b16 %v1017
    %v3928 = vunpack.c.l.b16 %v1018
    %v3929 = vunpack.c.h.b16 %v1018
    %v3930 = vunpack.c.l.b16 %v1019
    %v3931 = vunpack.c.h.b16 %v1019
    %v3932 = vunpack.c.l.b16 %v1020
    %v3933 = vunpack.c.h.b16 %v1020
    %v3934 = vunpack.c.l.b16 %v1021
    %v3935 = vunpack.c.h.b16 %v1021
    %v3936 = vunpack.c.l.b16 %v1022
    %v3937 = vunpack.c.h.b16 %v1022
    %v3938 = vunpack.c.l.b16 %v1023
    %v3939 = vunpack.c.h.b16 %v1023
    %v3940 = vunpack.c.l.b16 %v1024
    %v3941 = vunpack.c.h.b16 %v1024
    %v3942 = vunpack.c.l.b16 %v1025
    %v3943 = vunpack.c.h.b16 %v1025
    %v3944 = vunpack.c.l.b16 %v1026
    %v3945 = vunpack.c.h.b16 %v1026
    %v3946 = vunpack.c.l.b16 %v1027
    %v3947 = vunpack.c.h.b16 %v1027
    %v3948 = vunpack.c.l.b16 %v1028
    %v3949 = vunpack.c.h.b16 %v1028
    %v3950 = vunpack.c.l.b16 %v1029
    %v3951 = vunpack.c.h.b16 %v1029
    %v3952 = vunpack.c.l.b16 %v1030
    %v3953 = vunpack.c.h.b16 %v1030
    %v3954 = vunpack.c.l.b16 %v1031
    %v3955 = vunpack.c.h.b16 %v1031
    %v3956 = vunpack.c.l.b16 %v1032
    %v3957 = vunpack.c.h.b16 %v1032
    %v3958 = vunpack.c.l.b16 %v1033
    %v3959 = vunpack.c.h.b16 %v1033
    %v3960 = vunpack.c.l.b16 %v1034
    %v3961 = vunpack.c.h.b16 %v1034
    %v3962 = vunpack.c.l.b16 %v1035
    %v3963 = vunpack.c.h.b16 %v1035
    %v3964 = vunpack.c.l.b16 %v1036
    %v3965 = vunpack.c.h.b16 %v1036
    %v3966 = vunpack.c.l.b16 %v1037
    %v3967 = vunpack.c.h.b16 %v1037
    %v3968 = vunpack.c.l.b16 %v1038
    %v3969 = vunpack.c.h.b16 %v1038
    %v3970 = vunpack.c.l.b16 %v1039
    %v3971 = vunpack.c.h.b16 %v1039
    %v3972 = vunpack.c.l.b16 %v1040
    %v3973 = vunpack.c.h.b16 %v1040
    %v3974 = vunpack.c.l.b16 %v1041
    %v3975 = vunpack.c.h.b16 %v1041
    %v3976 = vunpack.c.l.b16 %v1042
    %v3977 = vunpack.c.h.b16 %v1042
    %v3978 = vunpack.c.l.b16 %v1043
    %v3979 = vunpack.c.h.b16 %v1043
    %v3980 = vunpack.c.l.b16 %v1044
    %v3981 = vunpack.c.h.b16 %v1044
    %v3982 = vunpack.c.l.b16 %v1045
    %v3983 = vunpack.c.h.b16 %v1045
    %v3984 = vunpack.c.l.b16 %v1046
    %v3985 = vunpack.c.h.b16 %v1046
    %v3986 = vunpack.c.l.b16 %v1047
    %v3987 = vunpack.c.h.b16 %v1047
    %v3988 = vunpack.c.l.b16 %v1048
    %v3989 = vunpack.c.h.b16 %v1048
    %v3990 = vunpack.c.l.b16 %v1049
    %v3991 = vunpack.c.h.b16 %v1049
    %v3992 = vunpack.c.l.b16 %v1050
    %v3993 = vunpack.c.h.b16 %v1050
    %v3994 = vunpack.c.l.b16 %v1051
    %v3995 = vunpack.c.h.b16 %v1051
    %v3996 = vunpack.c.l.b16 %v1052
    %v3997 = vunpack.c.h.b16 %v1052
    %v3998 = vunpack.c.l.b16 %v1053
    %v3999 = vunpack.c.h.b16 %v1053
    %v4000 = vunpack.c.l.b16 %v1054
    %v4001 = vunpack.c.h.b16 %v1054
    %v4002 = vunpack.c.l.b16 %v1055
    %v4003 = vunpack.c.h.b16 %v1055
    %v4004 = vunpack.c.l.b16 %v1056
    %v4005 = vunpack.c.h.b16 %v1056
    %v4006 = vunpack.c.l.b16 %v1057
    %v4007 = vunpack.c.h.b16 %v1057
    %v4008 = vunpack.c.l.b16 %v1058
    %v4009 = vunpack.c.h.b16 %v1058
    %v4010 = vunpack.c.l.b16 %v1059
    %v4011 = vunpack.c.h.b16 %v1059
    %v4012 = vunpack.c.l.b16 %v1060
    %v4013 = vunpack.c.h.b16 %v1060
    %v4014 = vunpack.c.l.b16 %v1061
    %v4015 = vunpack.c.h.b16 %v1061
    %v4016 = vunpack.c.l.b16 %v1062
    %v4017 = vunpack.c.h.b16 %v1062
    %v4018 = vunpack.c.l.b16 %v1063
    %v4019 = vunpack.c.h.b16 %v1063
    %v4020 = vunpack.c.l.b16 %v1064
    %v4021 = vunpack.c.h.b16 %v1064
    %v4022 = vunpack.c.l.b16 %v1065
    %v4023 = vunpack.c.h.b16 %v1065
    %v4024 = vunpack.c.l.b16 %v1066
    %v4025 = vunpack.c.h.b16 %v1066
    %v4026 = vunpack.c.l.b16 %v1067
    %v4027 = vunpack.c.h.b16 %v1067
    %v4028 = vunpack.c.l.b16 %v1068
    %v4029 = vunpack.c.h.b16 %v1068
    %v4030 = vunpack.c.l.b16 %v1069
    %v4031 = vunpack.c.h.b16 %v1069
    %v4032 = vunpack.c.l.b16 %v1070
    %v4033 = vunpack.c.h.b16 %v1070
    %v4034 = vunpack.c.l.b16 %v1071
    %v4035 = vunpack.c.h.b16 %v1071
    %v4036 = vunpack.c.l.b16 %v1072
    %v4037 = vunpack.c.h.b16 %v1072
    %v4038 = vunpack.c.l.b16 %v1073
    %v4039 = vunpack.c.h.b16 %v1073
    %v4040 = vunpack.c.l.b16 %v1074
    %v4041 = vunpack.c.h.b16 %v1074
    %v4042 = vunpack.c.l.b16 %v1075
    %v4043 = vunpack.c.h.b16 %v1075
    %v4044 = vunpack.c.l.b16 %v1076
    %v4045 = vunpack.c.h.b16 %v1076
    %v4046 = vunpack.c.l.b16 %v1077
    %v4047 = vunpack.c.h.b16 %v1077
    %v4048 = vunpack.c.l.b16 %v1078
    %v4049 = vunpack.c.h.b16 %v1078
    %v4050 = vunpack.c.l.b16 %v1079
    %v4051 = vunpack.c.h.b16 %v1079
    %v4052 = vunpack.c.l.b16 %v1080
    %v4053 = vunpack.c.h.b16 %v1080
    %v4054 = vunpack.c.l.b16 %v1081
    %v4055 = vunpack.c.h.b16 %v1081
    %v4056 = vunpack.c.l.b16 %v1082
    %v4057 = vunpack.c.h.b16 %v1082
    %v4058 = vunpack.c.l.b16 %v1083
    %v4059 = vunpack.c.h.b16 %v1083
    %v4060 = vunpack.c.l.b16 %v1084
    %v4061 = vunpack.c.h.b16 %v1084
    %v4062 = vunpack.c.l.b16 %v1085
    %v4063 = vunpack.c.h.b16 %v1085
    %v4064 = vunpack.c.l.b16 %v1086
    %v4065 = vunpack.c.h.b16 %v1086
    %v4066 = vunpack.c.l.b16 %v1087
    %v4067 = vunpack.c.h.b16 %v1087
    %v4068 = vunpack.c.l.b16 %v1088
    %v4069 = vunpack.c.h.b16 %v1088
    %v4070 = vunpack.c.l.b16 %v1089
    %v4071 = vunpack.c.h.b16 %v1089
    %v4072 = vunpack.c.l.b16 %v1090
    %v4073 = vunpack.c.h.b16 %v1090
    %v4074 = vunpack.c.l.b16 %v1091
    %v4075 = vunpack.c.h.b16 %v1091
    %v4076 = vunpack.c.l.b16 %v1092
    %v4077 = vunpack.c.h.b16 %v1092
    %v4078 = vunpack.c.l.b16 %v1093
    %v4079 = vunpack.c.h.b16 %v1093
    %v4080 = vunpack.c.l.b16 %v1094
    %v4081 = vunpack.c.h.b16 %v1094
    %v4082 = vunpack.c.l.b16 %v1095
    %v4083 = vunpack.c.h.b16 %v1095
    %v4084 = vunpack.c.l.b16 %v1096
    %v4085 = vunpack.c.h.b16 %v1096
    %v4086 = vunpack.c.l.b16 %v1097
    %v4087 = vunpack.c.h.b16 %v1097
    %v4088 = vunpack.c.l.b16 %v1098
    %v4089 = vunpack.c.h.b16 %v1098
    %v4090 = vunpack.c.l.b16 %v1099
    %v4091 = vunpack.c.h.b16 %v1099
    %v4092 = vunpack.c.l.b16 %v1100
    %v4093 = vunpack.c.h.b16 %v1100
    %v4094 = vunpack.c.l.b16 %v1101
    %v4095 = vunpack.c.h.b16 %v1101
    %v4096 = vunpack.c.l.b16 %v1102
    %v4097 = vunpack.c.h.b16 %v1102
    %v4098 = vunpack.c.l.b16 %v1103
    %v4099 = vunpack.c.h.b16 %v1103
    %v4100 = vunpack.c.l.b16 %v1104
    %v4101 = vunpack.c.h.b16 %v1104
    %v4102 = vunpack.c.l.b16 %v1105
    %v4103 = vunpack.c.h.b16 %v1105
    %v4104 = vunpack.c.l.b16 %v1106
    %v4105 = vunpack.c.h.b16 %v1106
    %v4106 = vunpack.c.l.b16 %v1107
    %v4107 = vunpack.c.h.b16 %v1107
    %v4108 = vunpack.c.l.b16 %v1108
    %v4109 = vunpack.c.h.b16 %v1108
    %v4110 = vunpack.c.l.b16 %v1109
    %v4111 = vunpack.c.h.b16 %v1109
    %v4112 = vunpack.c.l.b16 %v1110
    %v4113 = vunpack.c.h.b16 %v1110
    %v4114 = vunpack.c.l.b16 %v1111
    %v4115 = vunpack.c.h.b16 %v1111
    %v4116 = vunpack.c.l.b16 %v1112
    %v4117 = vunpack.c.h.b16 %v1112
    %v4118 = vunpack.c.l.b16 %v1113
    %v4119 = vunpack.c.h.b16 %v1113
    %v4120 = vunpack.c.l.b16 %v1114
    %v4121 = vunpack.c.h.b16 %v1114
    %v4122 = vunpack.c.l.b16 %v1115
    %v4123 = vunpack.c.h.b16 %v1115
    %v4124 = vunpack.c.l.b16 %v1116
    %v4125 = vunpack.c.h.b16 %v1116
    %v4126 = vunpack.c.l.b16 %v1117
    %v4127 = vunpack.c.h.b16 %v1117
    %v4128 = vunpack.c.l.b16 %v1118
    %v4129 = vunpack.c.h.b16 %v1118
    %v4130 = vunpack.c.l.b16 %v1119
    %v4131 = vunpack.c.h.b16 %v1119
    %v4132 = vunpack.c.l.b16 %v1120
    %v4133 = vunpack.c.h.b16 %v1120
    %v4134 = vunpack.c.l.b16 %v1121
    %v4135 = vunpack.c.h.b16 %v1121
    %v4136 = vunpack.c.l.b16 %v1122
    %v4137 = vunpack.c.h.b16 %v1122
    %v4138 = vunpack.c.l.b16 %v1123
    %v4139 = vunpack.c.h.b16 %v1123
    %v4140 = vunpack.c.l.b16 %v1124
    %v4141 = vunpack.c.h.b16 %v1124
    %v4142 = vunpack.c.l.b16 %v1125
    %v4143 = vunpack.c.h.b16 %v1125
    %v4144 = vunpack.c.l.b16 %v1126
    %v4145 = vunpack.c.h.b16 %v1126
    %v4146 = vunpack.c.l.b16 %v1127
    %v4147 = vunpack.c.h.b16 %v1127
    %v4148 = vunpack.c.l.b16 %v1128
    %v4149 = vunpack.c.h.b16 %v1128
    %v4150 = vunpack.c.l.b16 %v1129
    %v4151 = vunpack.c.h.b16 %v1129
    %v4152 = vunpack.c.l.b16 %v1130
    %v4153 = vunpack.c.h.b16 %v1130
    %v4154 = vunpack.c.l.b16 %v1131
    %v4155 = vunpack.c.h.b16 %v1131
    %v4156 = vunpack.c.l.b16 %v1132
    %v4157 = vunpack.c.h.b16 %v1132
    %v4158 = vunpack.c.l.b16 %v1133
    %v4159 = vunpack.c.h.b16 %v1133
    %v4160 = vunpack.c.l.b16 %v1134
    %v4161 = vunpack.c.h.b16 %v1134
    %v4162 = vunpack.c.l.b16 %v1135
    %v4163 = vunpack.c.h.b16 %v1135
    %v4164 = vunpack.c.l.b16 %v1136
    %v4165 = vunpack.c.h.b16 %v1136
    %v4166 = vunpack.c.l.b16 %v1137
    %v4167 = vunpack.c.h.b16 %v1137
    %v4168 = vunpack.c.l.b16 %v1138
    %v4169 = vunpack.c.h.b16 %v1138
    %v4170 = vunpack.c.l.b16 %v1139
    %v4171 = vunpack.c.h.b16 %v1139
    %v4172 = vunpack.c.l.b16 %v1140
    %v4173 = vunpack.c.h.b16 %v1140
    %v4174 = vunpack.c.l.b16 %v1141
    %v4175 = vunpack.c.h.b16 %v1141
    %v4176 = vunpack.c.l.b16 %v1142
    %v4177 = vunpack.c.h.b16 %v1142
    %v4178 = vunpack.c.l.b16 %v1143
    %v4179 = vunpack.c.h.b16 %v1143
    %v4180 = vunpack.c.l.b16 %v1144
    %v4181 = vunpack.c.h.b16 %v1144
    %v4182 = vunpack.c.l.b16 %v1145
    %v4183 = vunpack.c.h.b16 %v1145
    %v4184 = vunpack.c.l.b16 %v1146
    %v4185 = vunpack.c.h.b16 %v1146
    %v4186 = vunpack.c.l.b16 %v1147
    %v4187 = vunpack.c.h.b16 %v1147
    %v4188 = vunpack.c.l.b16 %v1148
    %v4189 = vunpack.c.h.b16 %v1148
    %v4190 = vunpack.c.l.b16 %v1149
    %v4191 = vunpack.c.h.b16 %v1149
    %v4192 = vunpack.c.l.b16 %v1150
    %v4193 = vunpack.c.h.b16 %v1150
    %v4194 = vunpack.c.l.b16 %v1151
    %v4195 = vunpack.c.h.b16 %v1151
    %v4196 = vunpack.c.l.b16 %v1152
    %v4197 = vunpack.c.h.b16 %v1152
    %v4198 = vunpack.c.l.b16 %v1153
    %v4199 = vunpack.c.h.b16 %v1153
    %v4200 = vunpack.c.l.b16 %v1154
    %v4201 = vunpack.c.h.b16 %v1154
    %v4202 = vunpack.c.l.b16 %v1155
    %v4203 = vunpack.c.h.b16 %v1155
    %v4204 = vunpack.c.l.b16 %v1156
    %v4205 = vunpack.c.h.b16 %v1156
    %v4206 = vunpack.c.l.b16 %v1157
    %v4207 = vunpack.c.h.b16 %v1157
    %v4208 = vunpack.c.l.b16 %v1158
    %v4209 = vunpack.c.h.b16 %v1158
    %v4210 = vunpack.c.l.b16 %v1159
    %v4211 = vunpack.c.h.b16 %v1159
    %v4212 = vunpack.c.l.b16 %v1160
    %v4213 = vunpack.c.h.b16 %v1160
    %v4214 = vunpack.c.l.b16 %v1161
    %v4215 = vunpack.c.h.b16 %v1161
    %v4216 = vunpack.c.l.b16 %v1162
    %v4217 = vunpack.c.h.b16 %v1162
    %v4218 = vunpack.c.l.b16 %v1163
    %v4219 = vunpack.c.h.b16 %v1163
    %v4220 = vunpack.c.l.b16 %v1164
    %v4221 = vunpack.c.h.b16 %v1164
    %v4222 = vunpack.c.l.b16 %v1165
    %v4223 = vunpack.c.h.b16 %v1165
    %v4224 = vunpack.c.l.b16 %v1166
    %v4225 = vunpack.c.h.b16 %v1166
    %v4226 = vunpack.c.l.b16 %v1167
    %v4227 = vunpack.c.h.b16 %v1167
    %v4228 = vunpack.c.l.b16 %v1168
    %v4229 = vunpack.c.h.b16 %v1168
    %v4230 = vunpack.c.l.b16 %v1169
    %v4231 = vunpack.c.h.b16 %v1169
    %v4232 = vunpack.c.l.b16 %v1170
    %v4233 = vunpack.c.h.b16 %v1170
    %v4234 = vunpack.c.l.b16 %v1171
    %v4235 = vunpack.c.h.b16 %v1171
    %v4236 = vunpack.c.l.b16 %v1172
    %v4237 = vunpack.c.h.b16 %v1172
    %v4238 = vunpack.c.l.b16 %v1173
    %v4239 = vunpack.c.h.b16 %v1173
    %v4240 = vunpack.c.l.b16 %v1174
    %v4241 = vunpack.c.h.b16 %v1174
    %v4242 = vunpack.c.l.b16 %v1175
    %v4243 = vunpack.c.h.b16 %v1175
    %v4244 = vunpack.c.l.b16 %v1176
    %v4245 = vunpack.c.h.b16 %v1176
    %v4246 = vunpack.c.l.b16 %v1177
    %v4247 = vunpack.c.h.b16 %v1177
    %v4248 = vunpack.c.l.b16 %v1178
    %v4249 = vunpack.c.h.b16 %v1178
    %v4250 = vunpack.c.l.b16 %v1179
    %v4251 = vunpack.c.h.b16 %v1179
    %v4252 = vunpack.c.l.b16 %v1180
    %v4253 = vunpack.c.h.b16 %v1180
    %v4254 = vunpack.c.l.b16 %v1181
    %v4255 = vunpack.c.h.b16 %v1181
    %v4256 = vunpack.c.l.b16 %v1182
    %v4257 = vunpack.c.h.b16 %v1182
    %v4258 = vunpack.c.l.b16 %v1183
    %v4259 = vunpack.c.h.b16 %v1183
    %v4260 = vunpack.c.l.b16 %v1184
    %v4261 = vunpack.c.h.b16 %v1184
    %v4262 = vunpack.c.l.b16 %v1185
    %v4263 = vunpack.c.h.b16 %v1185
    %v4264 = vunpack.c.l.b16 %v1186
    %v4265 = vunpack.c.h.b16 %v1186
    %v4266 = vunpack.c.l.b16 %v1187
    %v4267 = vunpack.c.h.b16 %v1187
    %v4268 = vunpack.c.l.b16 %v1188
    %v4269 = vunpack.c.h.b16 %v1188
    %v4270 = vunpack.c.l.b16 %v1189
    %v4271 = vunpack.c.h.b16 %v1189
    %v4272 = vunpack.c.l.b16 %v1190
    %v4273 = vunpack.c.h.b16 %v1190
    %v4274 = vunpack.c.l.b16 %v1191
    %v4275 = vunpack.c.h.b16 %v1191
    %v4276 = vunpack.c.l.b16 %v1192
    %v4277 = vunpack.c.h.b16 %v1192
    %v4278 = vunpack.c.l.b16 %v1193
    %v4279 = vunpack.c.h.b16 %v1193
    %v4280 = vunpack.c.l.b16 %v1194
    %v4281 = vunpack.c.h.b16 %v1194
    %v4282 = vunpack.c.l.b16 %v1195
    %v4283 = vunpack.c.h.b16 %v1195
    %v4284 = vunpack.c.l.b16 %v1196
    %v4285 = vunpack.c.h.b16 %v1196
    %v4286 = vunpack.c.l.b16 %v1197
    %v4287 = vunpack.c.h.b16 %v1197
    %v4288 = vpack.c.b16 %v2248, %v2240
    %v4289 = vpack.c.b16 %v2249, %v2241
    %v4290 = vpack.c.b16 %v2250, %v2242
    %v4291 = vpack.c.b16 %v2251, %v2243
    %v4292 = vpack.c.b16 %v2252, %v2244
    %v4293 = vpack.c.b16 %v2253, %v2245
    %v4294 = vpack.c.b16 %v2254, %v2246
    %v4295 = vpack.c.b16 %v2255, %v2247
    %v4296 = vpack.c.b16 %v2264, %v2256
    %v4297 = vpack.c.b16 %v2265, %v2257
    %v4298 = vpack.c.b16 %v2266, %v2258
    %v4299 = vpack.c.b16 %v2267, %v2259
    %v4300 = vpack.c.b16 %v2268, %v2260
    %v4301 = vpack.c.b16 %v2269, %v2261
    %v4302 = vpack.c.b16 %v2270, %v2262
    %v4303 = vpack.c.b16 %v2271, %v2263
    %v4304 = vpack.c.b16 %v2280, %v2272
    %v4305 = vpack.c.b16 %v2281, %v2273
    %v4306 = vpack.c.b16 %v2282, %v2274
    %v4307 = vpack.c.b16 %v2283, %v2275
    %v4308 = vpack.c.b16 %v2284, %v2276
    %v4309 = vpack.c.b16 %v2285, %v2277
    %v4310 = vpack.c.b16 %v2286, %v2278
    %v4311 = vpack.c.b16 %v2287, %v2279
    %v4312 = vpack.c.b16 %v2296, %v2288
    %v4313 = vpack.c.b16 %v2297, %v2289
    %v4314 = vpack.c.b16 %v2298, %v2290
    %v4315 = vpack.c.b16 %v2299, %v2291
    %v4316 = vpack.c.b16 %v2300, %v2292
    %v4317 = vpack.c.b16 %v2301, %v2293
    %v4318 = vpack.c.b16 %v2302, %v2294
    %v4319 = vpack.c.b16 %v2303, %v2295
    %v4320 = vpack.c.b16 %v2312, %v2304
    %v4321 = vpack.c.b16 %v2313, %v2305
    %v4322 = vpack.c.b16 %v2314, %v2306
    %v4323 = vpack.c.b16 %v2315, %v2307
    %v4324 = vpack.c.b16 %v2316, %v2308
    %v4325 = vpack.c.b16 %v2317, %v2309
    %v4326 = vpack.c.b16 %v2318, %v2310
    %v4327 = vpack.c.b16 %v2319, %v2311
    %v4328 = vpack.c.b16 %v2328, %v2320
    %v4329 = vpack.c.b16 %v2329, %v2321
    %v4330 = vpack.c.b16 %v2330, %v2322
    %v4331 = vpack.c.b16 %v2331, %v2323
    %v4332 = vpack.c.b16 %v2332, %v2324
    %v4333 = vpack.c.b16 %v2333, %v2325
    %v4334 = vpack.c.b16 %v2334, %v2326
    %v4335 = vpack.c.b16 %v2335, %v2327
    %v4336 = vpack.c.b16 %v2344, %v2336
    %v4337 = vpack.c.b16 %v2345, %v2337
    %v4338 = vpack.c.b16 %v2346, %v2338
    %v4339 = vpack.c.b16 %v2347, %v2339
    %v4340 = vpack.c.b16 %v2348, %v2340
    %v4341 = vpack.c.b16 %v2349, %v2341
    %v4342 = vpack.c.b16 %v2350, %v2342
    %v4343 = vpack.c.b16 %v2351, %v2343
    %v4344 = vpack.c.b16 %v2360, %v2352
    %v4345 = vpack.c.b16 %v2361, %v2353
    %v4346 = vpack.c.b16 %v2362, %v2354
    %v4347 = vpack.c.b16 %v2363, %v2355
    %v4348 = vpack.c.b16 %v2364, %v2356
    %v4349 = vpack.c.b16 %v2365, %v2357
    %v4350 = vpack.c.b16 %v2366, %v2358
    %v4351 = vpack.c.b16 %v2367, %v2359
    %v4352 = vpack.c.b16 %v2376, %v2368
    %v4353 = vpack.c.b16 %v2377, %v2369
    %v4354 = vpack.c.b16 %v2378, %v2370
    %v4355 = vpack.c.b16 %v2379, %v2371
    %v4356 = vpack.c.b16 %v2380, %v2372
    %v4357 = vpack.c.b16 %v2381, %v2373
    %v4358 = vpack.c.b16 %v2382, %v2374
    %v4359 = vpack.c.b16 %v2383, %v2375
    %v4360 = vpack.c.b16 %v2392, %v2384
    %v4361 = vpack.c.b16 %v2393, %v2385
    %v4362 = vpack.c.b16 %v2394, %v2386
    %v4363 = vpack.c.b16 %v2395, %v2387
    %v4364 = vpack.c.b16 %v2396, %v2388
    %v4365 = vpack.c.b16 %v2397, %v2389
    %v4366 = vpack.c.b16 %v2398, %v2390
    %v4367 = vpack.c.b16 %v2399, %v2391
    %v4368 = vpack.c.b16 %v2408, %v2400
    %v4369 = vpack.c.b16 %v2409, %v2401
    %v4370 = vpack.c.b16 %v2410, %v2402
    %v4371 = vpack.c.b16 %v2411, %v2403
    %v4372 = vpack.c.b16 %v2412, %v2404
    %v4373 = vpack.c.b16 %v2413, %v2405
    %v4374 = vpack.c.b16 %v2414, %v2406
    %v4375 = vpack.c.b16 %v2415, %v2407
    %v4376 = vpack.c.b16 %v2424, %v2416
    %v4377 = vpack.c.b16 %v2425, %v2417
    %v4378 = vpack.c.b16 %v2426, %v2418
    %v4379 = vpack.c.b16 %v2427, %v2419
    %v4380 = vpack.c.b16 %v2428, %v2420
    %v4381 = vpack.c.b16 %v2429, %v2421
    %v4382 = vpack.c.b16 %v2430, %v2422
    %v4383 = vpack.c.b16 %v2431, %v2423
    %v4384 = vpack.c.b16 %v2440, %v2432
    %v4385 = vpack.c.b16 %v2441, %v2433
    %v4386 = vpack.c.b16 %v2442, %v2434
    %v4387 = vpack.c.b16 %v2443, %v2435
    %v4388 = vpack.c.b16 %v2444, %v2436
    %v4389 = vpack.c.b16 %v2445, %v2437
    %v4390 = vpack.c.b16 %v2446, %v2438
    %v4391 = vpack.c.b16 %v2447, %v2439
    %v4392 = vpack.c.b16 %v2456, %v2448
    %v4393 = vpack.c.b16 %v2457, %v2449
    %v4394 = vpack.c.b16 %v2458, %v2450
    %v4395 = vpack.c.b16 %v2459, %v2451
    %v4396 = vpack.c.b16 %v2460, %v2452
    %v4397 = vpack.c.b16 %v2461, %v2453
    %v4398 = vpack.c.b16 %v2462, %v2454
    %v4399 = vpack.c.b16 %v2463, %v2455
    %v4400 = vpack.c.b16 %v2472, %v2464
    %v4401 = vpack.c.b16 %v2473, %v2465
    %v4402 = vpack.c.b16 %v2474, %v2466
    %v4403 = vpack.c.b16 %v2475, %v2467
    %v4404 = vpack.c.b16 %v2476, %v2468
    %v4405 = vpack.c.b16 %v2477, %v2469
    %v4406 = vpack.c.b16 %v2478, %v2470
    %v4407 = vpack.c.b16 %v2479, %v2471
    %v4408 = vpack.c.b16 %v2488, %v2480
    %v4409 = vpack.c.b16 %v2489, %v2481
    %v4410 = vpack.c.b16 %v2490, %v2482
    %v4411 = vpack.c.b16 %v2491, %v2483
    %v4412 = vpack.c.b16 %v2492, %v2484
    %v4413 = vpack.c.b16 %v2493, %v2485
    %v4414 = vpack.c.b16 %v2494, %v2486
    %v4415 = vpack.c.b16 %v2495, %v2487
    %v4416 = vpack.c.b16 %v2504, %v2496
    %v4417 = vpack.c.b16 %v2505, %v2497
    %v4418 = vpack.c.b16 %v2506, %v2498
    %v4419 = vpack.c.b16 %v2507, %v2499
    %v4420 = vpack.c.b16 %v2508, %v2500
    %v4421 = vpack.c.b16 %v2509, %v2501
    %v4422 = vpack.c.b16 %v2510, %v2502
    %v4423 = vpack.c.b16 %v2511, %v2503
    %v4424 = vpack.c.b16 %v2520, %v2512
    %v4425 = vpack.c.b16 %v2521, %v2513
    %v4426 = vpack.c.b16 %v2522, %v2514
    %v4427 = vpack.c.b16 %v2523, %v2515
    %v4428 = vpack.c.b16 %v2524, %v2516
    %v4429 = vpack.c.b16 %v2525, %v2517
    %v4430 = vpack.c.b16 %v2526, %v2518
    %v4431 = vpack.c.b16 %v2527, %v2519
    %v4432 = vpack.c.b16 %v2536, %v2528
    %v4433 = vpack.c.b16 %v2537, %v2529
    %v4434 = vpack.c.b16 %v2538, %v2530
    %v4435 = vpack.c.b16 %v2539, %v2531
    %v4436 = vpack.c.b16 %v2540, %v2532
    %v4437 = vpack.c.b16 %v2541, %v2533
    %v4438 = vpack.c.b16 %v2542, %v2534
    %v4439 = vpack.c.b16 %v2543, %v2535
    %v4440 = vpack.c.b16 %v2552, %v2544
    %v4441 = vpack.c.b16 %v2553, %v2545
    %v4442 = vpack.c.b16 %v2554, %v2546
    %v4443 = vpack.c.b16 %v2555, %v2547
    %v4444 = vpack.c.b16 %v2556, %v2548
    %v4445 = vpack.c.b16 %v2557, %v2549
    %v4446 = vpack.c.b16 %v2558, %v2550
    %v4447 = vpack.c.b16 %v2559, %v2551
    %v4448 = vpack.c.b16 %v2568, %v2560
    %v4449 = vpack.c.b16 %v2569, %v2561
    %v4450 = vpack.c.b16 %v2570, %v2562
    %v4451 = vpack.c.b16 %v2571, %v2563
    %v4452 = vpack.c.b16 %v2572, %v2564
    %v4453 = vpack.c.b16 %v2573, %v2565
    %v4454 = vpack.c.b16 %v2574, %v2566
    %v4455 = vpack.c.b16 %v2575, %v2567
    %v4456 = vpack.c.b16 %v2584, %v2576
    %v4457 = vpack.c.b16 %v2585, %v2577
    %v4458 = vpack.c.b16 %v2586, %v2578
    %v4459 = vpack.c.b16 %v2587, %v2579
    %v4460 = vpack.c.b16 %v2588, %v2580
    %v4461 = vpack.c.b16 %v2589, %v2581
    %v4462 = vpack.c.b16 %v2590, %v2582
    %v4463 = vpack.c.b16 %v2591, %v2583
    %v4464 = vpack.c.b16 %v2600, %v2592
    %v4465 = vpack.c.b16 %v2601, %v2593
    %v4466 = vpack.c.b16 %v2602, %v2594
    %v4467 = vpack.c.b16 %v2603, %v2595
    %v4468 = vpack.c.b16 %v2604, %v2596
    %v4469 = vpack.c.b16 %v2605, %v2597
    %v4470 = vpack.c.b16 %v2606, %v2598
    %v4471 = vpack.c.b16 %v2607, %v2599
    %v4472 = vpack.c.b16 %v2616, %v2608
    %v4473 = vpack.c.b16 %v2617, %v2609
    %v4474 = vpack.c.b16 %v2618, %v2610
    %v4475 = vpack.c.b16 %v2619, %v2611
    %v4476 = vpack.c.b16 %v2620, %v2612
    %v4477 = vpack.c.b16 %v2621, %v2613
    %v4478 = vpack.c.b16 %v2622, %v2614
    %v4479 = vpack.c.b16 %v2623, %v2615
    %v4480 = vpack.c.b16 %v2632, %v2624
    %v4481 = vpack.c.b16 %v2633, %v2625
    %v4482 = vpack.c.b16 %v2634, %v2626
    %v4483 = vpack.c.b16 %v2635, %v2627
    %v4484 = vpack.c.b16 %v2636, %v2628
    %v4485 = vpack.c.b16 %v2637, %v2629
    %v4486 = vpack.c.b16 %v2638, %v2630
    %v4487 = vpack.c.b16 %v2639, %v2631
    %v4488 = vpack.c.b16 %v2648, %v2640
    %v4489 = vpack.c.b16 %v2649, %v2641
    %v4490 = vpack.c.b16 %v2650, %v2642
    %v4491 = vpack.c.b16 %v2651, %v2643
    %v4492 = vpack.c.b16 %v2652, %v2644
    %v4493 = vpack.c.b16 %v2653, %v2645
    %v4494 = vpack.c.b16 %v2654, %v2646
    %v4495 = vpack.c.b16 %v2655, %v2647
    %v4496 = vpack.c.b16 %v2664, %v2656
    %v4497 = vpack.c.b16 %v2665, %v2657
    %v4498 = vpack.c.b16 %v2666, %v2658
    %v4499 = vpack.c.b16 %v2667, %v2659
    %v4500 = vpack.c.b16 %v2668, %v2660
    %v4501 = vpack.c.b16 %v2669, %v2661
    %v4502 = vpack.c.b16 %v2670, %v2662
    %v4503 = vpack.c.b16 %v2671, %v2663
    %v4504 = vpack.c.b16 %v2680, %v2672
    %v4505 = vpack.c.b16 %v2681, %v2673
    %v4506 = vpack.c.b16 %v2682, %v2674
    %v4507 = vpack.c.b16 %v2683, %v2675
    %v4508 = vpack.c.b16 %v2684, %v2676
    %v4509 = vpack.c.b16 %v2685, %v2677
    %v4510 = vpack.c.b16 %v2686, %v2678
    %v4511 = vpack.c.b16 %v2687, %v2679
    %v4512 = vpack.c.b16 %v2696, %v2688
    %v4513 = vpack.c.b16 %v2697, %v2689
    %v4514 = vpack.c.b16 %v2698, %v2690
    %v4515 = vpack.c.b16 %v2699, %v2691
    %v4516 = vpack.c.b16 %v2700, %v2692
    %v4517 = vpack.c.b16 %v2701, %v2693
    %v4518 = vpack.c.b16 %v2702, %v2694
    %v4519 = vpack.c.b16 %v2703, %v2695
    %v4520 = vpack.c.b16 %v2712, %v2704
    %v4521 = vpack.c.b16 %v2713, %v2705
    %v4522 = vpack.c.b16 %v2714, %v2706
    %v4523 = vpack.c.b16 %v2715, %v2707
    %v4524 = vpack.c.b16 %v2716, %v2708
    %v4525 = vpack.c.b16 %v2717, %v2709
    %v4526 = vpack.c.b16 %v2718, %v2710
    %v4527 = vpack.c.b16 %v2719, %v2711
    %v4528 = vpack.c.b16 %v2728, %v2720
    %v4529 = vpack.c.b16 %v2729, %v2721
    %v4530 = vpack.c.b16 %v2730, %v2722
    %v4531 = vpack.c.b16 %v2731, %v2723
    %v4532 = vpack.c.b16 %v2732, %v2724
    %v4533 = vpack.c.b16 %v2733, %v2725
    %v4534 = vpack.c.b16 %v2734, %v2726
    %v4535 = vpack.c.b16 %v2735, %v2727
    %v4536 = vpack.c.b16 %v2744, %v2736
    %v4537 = vpack.c.b16 %v2745, %v2737
    %v4538 = vpack.c.b16 %v2746, %v2738
    %v4539 = vpack.c.b16 %v2747, %v2739
    %v4540 = vpack.c.b16 %v2748, %v2740
    %v4541 = vpack.c.b16 %v2749, %v2741
    %v4542 = vpack.c.b16 %v2750, %v2742
    %v4543 = vpack.c.b16 %v2751, %v2743
    %v4544 = vpack.c.b16 %v2760, %v2752
    %v4545 = vpack.c.b16 %v2761, %v2753
    %v4546 = vpack.c.b16 %v2762, %v2754
    %v4547 = vpack.c.b16 %v2763, %v2755
    %v4548 = vpack.c.b16 %v2764, %v2756
    %v4549 = vpack.c.b16 %v2765, %v2757
    %v4550 = vpack.c.b16 %v2766, %v2758
    %v4551 = vpack.c.b16 %v2767, %v2759
    %v4552 = vpack.c.b16 %v2776, %v2768
    %v4553 = vpack.c.b16 %v2777, %v2769
    %v4554 = vpack.c.b16 %v2778, %v2770
    %v4555 = vpack.c.b16 %v2779, %v2771
    %v4556 = vpack.c.b16 %v2780, %v2772
    %v4557 = vpack.c.b16 %v2781, %v2773
    %v4558 = vpack.c.b16 %v2782, %v2774
    %v4559 = vpack.c.b16 %v2783, %v2775
    %v4560 = vpack.c.b16 %v2792, %v2784
    %v4561 = vpack.c.b16 %v2793, %v2785
    %v4562 = vpack.c.b16 %v2794, %v2786
    %v4563 = vpack.c.b16 %v2795, %v2787
    %v4564 = vpack.c.b16 %v2796, %v2788
    %v4565 = vpack.c.b16 %v2797, %v2789
    %v4566 = vpack.c.b16 %v2798, %v2790
    %v4567 = vpack.c.b16 %v2799, %v2791
    %v4568 = vpack.c.b16 %v2808, %v2800
    %v4569 = vpack.c.b16 %v2809, %v2801
    %v4570 = vpack.c.b16 %v2810, %v2802
    %v4571 = vpack.c.b16 %v2811, %v2803
    %v4572 = vpack.c.b16 %v2812, %v2804
    %v4573 = vpack.c.b16 %v2813, %v2805
    %v4574 = vpack.c.b16 %v2814, %v2806
    %v4575 = vpack.c.b16 %v2815, %v2807
    %v4576 = vpack.c.b16 %v2824, %v2816
    %v4577 = vpack.c.b16 %v2825, %v2817
    %v4578 = vpack.c.b16 %v2826, %v2818
    %v4579 = vpack.c.b16 %v2827, %v2819
    %v4580 = vpack.c.b16 %v2828, %v2820
    %v4581 = vpack.c.b16 %v2829, %v2821
    %v4582 = vpack.c.b16 %v2830, %v2822
    %v4583 = vpack.c.b16 %v2831, %v2823
    %v4584 = vpack.c.b16 %v2840, %v2832
    %v4585 = vpack.c.b16 %v2841, %v2833
    %v4586 = vpack.c.b16 %v2842, %v2834
    %v4587 = vpack.c.b16 %v2843, %v2835
    %v4588 = vpack.c.b16 %v2844, %v2836
    %v4589 = vpack.c.b16 %v2845, %v2837
    %v4590 = vpack.c.b16 %v2846, %v2838
    %v4591 = vpack.c.b16 %v2847, %v2839
    %v4592 = vpack.c.b16 %v2856, %v2848
    %v4593 = vpack.c.b16 %v2857, %v2849
    %v4594 = vpack.c.b16 %v2858, %v2850
    %v4595 = vpack.c.b16 %v2859, %v2851
    %v4596 = vpack.c.b16 %v2860, %v2852
    %v4597 = vpack.c.b16 %v2861, %v2853
    %v4598 = vpack.c.b16 %v2862, %v2854
    %v4599 = vpack.c.b16 %v2863, %v2855
    %v4600 = vpack.c.b16 %v2872, %v2864
    %v4601 = vpack.c.b16 %v2873, %v2865
    %v4602 = vpack.c.b16 %v2874, %v2866
    %v4603 = vpack.c.b16 %v2875, %v2867
    %v4604 = vpack.c.b16 %v2876, %v2868
    %v4605 = vpack.c.b16 %v2877, %v2869
    %v4606 = vpack.c.b16 %v2878, %v2870
    %v4607 = vpack.c.b16 %v2879, %v2871
    %v4608 = vpack.c.b16 %v2888, %v2880
    %v4609 = vpack.c.b16 %v2889, %v2881
    %v4610 = vpack.c.b16 %v2890, %v2882
    %v4611 = vpack.c.b16 %v2891, %v2883
    %v4612 = vpack.c.b16 %v2892, %v2884
    %v4613 = vpack.c.b16 %v2893, %v2885
    %v4614 = vpack.c.b16 %v2894, %v2886
    %v4615 = vpack.c.b16 %v2895, %v2887
    %v4616 = vpack.c.b16 %v2904, %v2896
    %v4617 = vpack.c.b16 %v2905, %v2897
    %v4618 = vpack.c.b16 %v2906, %v2898
    %v4619 = vpack.c.b16 %v2907, %v2899
    %v4620 = vpack.c.b16 %v2908, %v2900
    %v4621 = vpack.c.b16 %v2909, %v2901
    %v4622 = vpack.c.b16 %v2910, %v2902
    %v4623 = vpack.c.b16 %v2911, %v2903
    %v4624 = vpack.c.b16 %v2920, %v2912
    %v4625 = vpack.c.b16 %v2921, %v2913
    %v4626 = vpack.c.b16 %v2922, %v2914
    %v4627 = vpack.c.b16 %v2923, %v2915
    %v4628 = vpack.c.b16 %v2924, %v2916
    %v4629 = vpack.c.b16 %v2925, %v2917
    %v4630 = vpack.c.b16 %v2926, %v2918
    %v4631 = vpack.c.b16 %v2927, %v2919
    %v4632 = vpack.c.b16 %v2936, %v2928
    %v4633 = vpack.c.b16 %v2937, %v2929
    %v4634 = vpack.c.b16 %v2938, %v2930
    %v4635 = vpack.c.b16 %v2939, %v2931
    %v4636 = vpack.c.b16 %v2940, %v2932
    %v4637 = vpack.c.b16 %v2941, %v2933
    %v4638 = vpack.c.b16 %v2942, %v2934
    %v4639 = vpack.c.b16 %v2943, %v2935
    %v4640 = vpack.c.b16 %v2952, %v2944
    %v4641 = vpack.c.b16 %v2953, %v2945
    %v4642 = vpack.c.b16 %v2954, %v2946
    %v4643 = vpack.c.b16 %v2955, %v2947
    %v4644 = vpack.c.b16 %v2956, %v2948
    %v4645 = vpack.c.b16 %v2957, %v2949
    %v4646 = vpack.c.b16 %v2958, %v2950
    %v4647 = vpack.c.b16 %v2959, %v2951
    %v4648 = vpack.c.b16 %v2968, %v2960
    %v4649 = vpack.c.b16 %v2969, %v2961
    %v4650 = vpack.c.b16 %v2970, %v2962
    %v4651 = vpack.c.b16 %v2971, %v2963
    %v4652 = vpack.c.b16 %v2972, %v2964
    %v4653 = vpack.c.b16 %v2973, %v2965
    %v4654 = vpack.c.b16 %v2974, %v2966
    %v4655 = vpack.c.b16 %v2975, %v2967
    %v4656 = vpack.c.b16 %v2984, %v2976
    %v4657 = vpack.c.b16 %v2985, %v2977
    %v4658 = vpack.c.b16 %v2986, %v2978
    %v4659 = vpack.c.b16 %v2987, %v2979
    %v4660 = vpack.c.b16 %v2988, %v2980
    %v4661 = vpack.c.b16 %v2989, %v2981
    %v4662 = vpack.c.b16 %v2990, %v2982
    %v4663 = vpack.c.b16 %v2991, %v2983
    %v4664 = vpack.c.b16 %v3000, %v2992
    %v4665 = vpack.c.b16 %v3001, %v2993
    %v4666 = vpack.c.b16 %v3002, %v2994
    %v4667 = vpack.c.b16 %v3003, %v2995
    %v4668 = vpack.c.b16 %v3004, %v2996
    %v4669 = vpack.c.b16 %v3005, %v2997
    %v4670 = vpack.c.b16 %v3006, %v2998
    %v4671 = vpack.c.b16 %v3007, %v2999
    %v4672 = vpack.c.b16 %v3016, %v3008
    %v4673 = vpack.c.b16 %v3017, %v3009
    %v4674 = vpack.c.b16 %v3018, %v3010
    %v4675 = vpack.c.b16 %v3019, %v3011
    %v4676 = vpack.c.b16 %v3020, %v3012
    %v4677 = vpack.c.b16 %v3021, %v3013
    %v4678 = vpack.c.b16 %v3022, %v3014
    %v4679 = vpack.c.b16 %v3023, %v3015
    %v4680 = vpack.c.b16 %v3032, %v3024
    %v4681 = vpack.c.b16 %v3033, %v3025
    %v4682 = vpack.c.b16 %v3034, %v3026
    %v4683 = vpack.c.b16 %v3035, %v3027
    %v4684 = vpack.c.b16 %v3036, %v3028
    %v4685 = vpack.c.b16 %v3037, %v3029
    %v4686 = vpack.c.b16 %v3038, %v3030
    %v4687 = vpack.c.b16 %v3039, %v3031
    %v4688 = vpack.c.b16 %v3048, %v3040
    %v4689 = vpack.c.b16 %v3049, %v3041
    %v4690 = vpack.c.b16 %v3050, %v3042
    %v4691 = vpack.c.b16 %v3051, %v3043
    %v4692 = vpack.c.b16 %v3052, %v3044
    %v4693 = vpack.c.b16 %v3053, %v3045
    %v4694 = vpack.c.b16 %v3054, %v3046
    %v4695 = vpack.c.b16 %v3055, %v3047
    %v4696 = vpack.c.b16 %v3064, %v3056
    %v4697 = vpack.c.b16 %v3065, %v3057
    %v4698 = vpack.c.b16 %v3066, %v3058
    %v4699 = vpack.c.b16 %v3067, %v3059
    %v4700 = vpack.c.b16 %v3068, %v3060
    %v4701 = vpack.c.b16 %v3069, %v3061
    %v4702 = vpack.c.b16 %v3070, %v3062
    %v4703 = vpack.c.b16 %v3071, %v3063
    %v4704 = vpack.c.b16 %v3080, %v3072
    %v4705 = vpack.c.b16 %v3081, %v3073
    %v4706 = vpack.c.b16 %v3082, %v3074
    %v4707 = vpack.c.b16 %v3083, %v3075
    %v4708 = vpack.c.b16 %v3084, %v3076
    %v4709 = vpack.c.b16 %v3085, %v3077
    %v4710 = vpack.c.b16 %v3086, %v3078
    %v4711 = vpack.c.b16 %v3087, %v3079
    %v4712 = vpack.c.b16 %v3096, %v3088
    %v4713 = vpack.c.b16 %v3097, %v3089
    %v4714 = vpack.c.b16 %v3098, %v3090
    %v4715 = vpack.c.b16 %v3099, %v3091
    %v4716 = vpack.c.b16 %v3100, %v3092
    %v4717 = vpack.c.b16 %v3101, %v3093
    %v4718 = vpack.c.b16 %v3102, %v3094
    %v4719 = vpack.c.b16 %v3103, %v3095
    %v4720 = vpack.c.b16 %v3112, %v3104
    %v4721 = vpack.c.b16 %v3113, %v3105
    %v4722 = vpack.c.b16 %v3114, %v3106
    %v4723 = vpack.c.b16 %v3115, %v3107
    %v4724 = vpack.c.b16 %v3116, %v3108
    %v4725 = vpack.c.b16 %v3117, %v3109
    %v4726 = vpack.c.b16 %v3118, %v3110
    %v4727 = vpack.c.b16 %v3119, %v3111
    %v4728 = vpack.c.b16 %v3128, %v3120
    %v4729 = vpack.c.b16 %v3129, %v3121
    %v4730 = vpack.c.b16 %v3130, %v3122
    %v4731 = vpack.c.b16 %v3131, %v3123
    %v4732 = vpack.c.b16 %v3132, %v3124
    %v4733 = vpack.c.b16 %v3133, %v3125
    %v4734 = vpack.c.b16 %v3134, %v3126
    %v4735 = vpack.c.b16 %v3135, %v3127
    %v4736 = vpack.c.b16 %v3144, %v3136
    %v4737 = vpack.c.b16 %v3145, %v3137
    %v4738 = vpack.c.b16 %v3146, %v3138
    %v4739 = vpack.c.b16 %v3147, %v3139
    %v4740 = vpack.c.b16 %v3148, %v3140
    %v4741 = vpack.c.b16 %v3149, %v3141
    %v4742 = vpack.c.b16 %v3150, %v3142
    %v4743 = vpack.c.b16 %v3151, %v3143
    %v4744 = vpack.c.b16 %v3160, %v3152
    %v4745 = vpack.c.b16 %v3161, %v3153
    %v4746 = vpack.c.b16 %v3162, %v3154
    %v4747 = vpack.c.b16 %v3163, %v3155
    %v4748 = vpack.c.b16 %v3164, %v3156
    %v4749 = vpack.c.b16 %v3165, %v3157
    %v4750 = vpack.c.b16 %v3166, %v3158
    %v4751 = vpack.c.b16 %v3167, %v3159
    %v4752 = vpack.c.b16 %v3176, %v3168
    %v4753 = vpack.c.b16 %v3177, %v3169
    %v4754 = vpack.c.b16 %v3178, %v3170
    %v4755 = vpack.c.b16 %v3179, %v3171
    %v4756 = vpack.c.b16 %v3180, %v3172
    %v4757 = vpack.c.b16 %v3181, %v3173
    %v4758 = vpack.c.b16 %v3182, %v3174
    %v4759 = vpack.c.b16 %v3183, %v3175
    %v4760 = vpack.c.b16 %v3192, %v3184
    %v4761 = vpack.c.b16 %v3193, %v3185
    %v4762 = vpack.c.b16 %v3194, %v3186
    %v4763 = vpack.c.b16 %v3195, %v3187
    %v4764 = vpack.c.b16 %v3196, %v3188
    %v4765 = vpack.c.b16 %v3197, %v3189
    %v4766 = vpack.c.b16 %v3198, %v3190
    %v4767 = vpack.c.b16 %v3199, %v3191
    %v4768 = vpack.c.b16 %v3208, %v3200
    %v4769 = vpack.c.b16 %v3209, %v3201
    %v4770 = vpack.c.b16 %v3210, %v3202
    %v4771 = vpack.c.b16 %v3211, %v3203
    %v4772 = vpack.c.b16 %v3212, %v3204
    %v4773 = vpack.c.b16 %v3213, %v3205
    %v4774 = vpack.c.b16 %v3214, %v3206
    %v4775 = vpack.c.b16 %v3215, %v3207
    %v4776 = vpack.c.b16 %v3224, %v3216
    %v4777 = vpack.c.b16 %v3225, %v3217
    %v4778 = vpack.c.b16 %v3226, %v3218
    %v4779 = vpack.c.b16 %v3227, %v3219
    %v4780 = vpack.c.b16 %v3228, %v3220
    %v4781 = vpack.c.b16 %v3229, %v3221
    %v4782 = vpack.c.b16 %v3230, %v3222
    %v4783 = vpack.c.b16 %v3231, %v3223
    %v4784 = vpack.c.b16 %v3240, %v3232
    %v4785 = vpack.c.b16 %v3241, %v3233
    %v4786 = vpack.c.b16 %v3242, %v3234
    %v4787 = vpack.c.b16 %v3243, %v3235
    %v4788 = vpack.c.b16 %v3244, %v3236
    %v4789 = vpack.c.b16 %v3245, %v3237
    %v4790 = vpack.c.b16 %v3246, %v3238
    %v4791 = vpack.c.b16 %v3247, %v3239
    %v4792 = vpack.c.b16 %v3256, %v3248
    %v4793 = vpack.c.b16 %v3257, %v3249
    %v4794 = vpack.c.b16 %v3258, %v3250
    %v4795 = vpack.c.b16 %v3259, %v3251
    %v4796 = vpack.c.b16 %v3260, %v3252
    %v4797 = vpack.c.b16 %v3261, %v3253
    %v4798 = vpack.c.b16 %v3262, %v3254
    %v4799 = vpack.c.b16 %v3263, %v3255
    %v4800 = vpack.c.b16 %v3272, %v3264
    %v4801 = vpack.c.b16 %v3273, %v3265
    %v4802 = vpack.c.b16 %v3274, %v3266
    %v4803 = vpack.c.b16 %v3275, %v3267
    %v4804 = vpack.c.b16 %v3276, %v3268
    %v4805 = vpack.c.b16 %v3277, %v3269
    %v4806 = vpack.c.b16 %v3278, %v3270
    %v4807 = vpack.c.b16 %v3279, %v3271
    %v4808 = vpack.c.b16 %v3288, %v3280
    %v4809 = vpack.c.b16 %v3289, %v3281
    %v4810 = vpack.c.b16 %v3290, %v3282
    %v4811 = vpack.c.b16 %v3291, %v3283
    %v4812 = vpack.c.b16 %v3292, %v3284
    %v4813 = vpack.c.b16 %v3293, %v3285
    %v4814 = vpack.c.b16 %v3294, %v3286
    %v4815 = vpack.c.b16 %v3295, %v3287
    %v4816 = vpack.c.b16 %v3304, %v3296
    %v4817 = vpack.c.b16 %v3305, %v3297
    %v4818 = vpack.c.b16 %v3306, %v3298
    %v4819 = vpack.c.b16 %v3307, %v3299
    %v4820 = vpack.c.b16 %v3308, %v3300
    %v4821 = vpack.c.b16 %v3309, %v3301
    %v4822 = vpack.c.b16 %v3310, %v3302
    %v4823 = vpack.c.b16 %v3311, %v3303
    %v4824 = vpack.c.b16 %v3320, %v3312
    %v4825 = vpack.c.b16 %v3321, %v3313
    %v4826 = vpack.c.b16 %v3322, %v3314
    %v4827 = vpack.c.b16 %v3323, %v3315
    %v4828 = vpack.c.b16 %v3324, %v3316
    %v4829 = vpack.c.b16 %v3325, %v3317
    %v4830 = vpack.c.b16 %v3326, %v3318
    %v4831 = vpack.c.b16 %v3327, %v3319
    %v4832 = vpack.c.b16 %v3336, %v3328
    %v4833 = vpack.c.b16 %v3337, %v3329
    %v4834 = vpack.c.b16 %v3338, %v3330
    %v4835 = vpack.c.b16 %v3339, %v3331
    %v4836 = vpack.c.b16 %v3340, %v3332
    %v4837 = vpack.c.b16 %v3341, %v3333
    %v4838 = vpack.c.b16 %v3342, %v3334
    %v4839 = vpack.c.b16 %v3343, %v3335
    %v4840 = vpack.c.b16 %v3352, %v3344
    %v4841 = vpack.c.b16 %v3353, %v3345
    %v4842 = vpack.c.b16 %v3354, %v3346
    %v4843 = vpack.c.b16 %v3355, %v3347
    %v4844 = vpack.c.b16 %v3356, %v3348
    %v4845 = vpack.c.b16 %v3357, %v3349
    %v4846 = vpack.c.b16 %v3358, %v3350
    %v4847 = vpack.c.b16 %v3359, %v3351
    %v4848 = vpack.c.b16 %v3368, %v3360
    %v4849 = vpack.c.b16 %v3369, %v3361
    %v4850 = vpack.c.b16 %v3370, %v3362
    %v4851 = vpack.c.b16 %v3371, %v3363
    %v4852 = vpack.c.b16 %v3372, %v3364
    %v4853 = vpack.c.b16 %v3373, %v3365
    %v4854 = vpack.c.b16 %v3374, %v3366
    %v4855 = vpack.c.b16 %v3375, %v3367
    %v4856 = vpack.c.b16 %v3384, %v3376
    %v4857 = vpack.c.b16 %v3385, %v3377
    %v4858 = vpack.c.b16 %v3386, %v3378
    %v4859 = vpack.c.b16 %v3387, %v3379
    %v4860 = vpack.c.b16 %v3388, %v3380
    %v4861 = vpack.c.b16 %v3389, %v3381
    %v4862 = vpack.c.b16 %v3390, %v3382
    %v4863 = vpack.c.b16 %v3391, %v3383
    %v4864 = vpack.c.b16 %v3400, %v3392
    %v4865 = vpack.c.b16 %v3401, %v3393
    %v4866 = vpack.c.b16 %v3402, %v3394
    %v4867 = vpack.c.b16 %v3403, %v3395
    %v4868 = vpack.c.b16 %v3404, %v3396
    %v4869 = vpack.c.b16 %v3405, %v3397
    %v4870 = vpack.c.b16 %v3406, %v3398
    %v4871 = vpack.c.b16 %v3407, %v3399
    %v4872 = vpack.c.b16 %v3416, %v3408
    %v4873 = vpack.c.b16 %v3417, %v3409
    %v4874 = vpack.c.b16 %v3418, %v3410
    %v4875 = vpack.c.b16 %v3419, %v3411
    %v4876 = vpack.c.b16 %v3420, %v3412
    %v4877 = vpack.c.b16 %v3421, %v3413
    %v4878 = vpack.c.b16 %v3422, %v3414
    %v4879 = vpack.c.b16 %v3423, %v3415
    %v4880 = vpack.c.b16 %v3432, %v3424
    %v4881 = vpack.c.b16 %v3433, %v3425
    %v4882 = vpack.c.b16 %v3434, %v3426
    %v4883 = vpack.c.b16 %v3435, %v3427
    %v4884 = vpack.c.b16 %v3436, %v3428
    %v4885 = vpack.c.b16 %v3437, %v3429
    %v4886 = vpack.c.b16 %v3438, %v3430
    %v4887 = vpack.c.b16 %v3439, %v3431
    %v4888 = vpack.c.b16 %v3448, %v3440
    %v4889 = vpack.c.b16 %v3449, %v3441
    %v4890 = vpack.c.b16 %v3450, %v3442
    %v4891 = vpack.c.b16 %v3451, %v3443
    %v4892 = vpack.c.b16 %v3452, %v3444
    %v4893 = vpack.c.b16 %v3453, %v3445
    %v4894 = vpack.c.b16 %v3454, %v3446
    %v4895 = vpack.c.b16 %v3455, %v3447
    %v4896 = vpack.c.b16 %v3464, %v3456
    %v4897 = vpack.c.b16 %v3465, %v3457
    %v4898 = vpack.c.b16 %v3466, %v3458
    %v4899 = vpack.c.b16 %v3467, %v3459
    %v4900 = vpack.c.b16 %v3468, %v3460
    %v4901 = vpack.c.b16 %v3469, %v3461
    %v4902 = vpack.c.b16 %v3470, %v3462
    %v4903 = vpack.c.b16 %v3471, %v3463
    %v4904 = vpack.c.b16 %v3480, %v3472
    %v4905 = vpack.c.b16 %v3481, %v3473
    %v4906 = vpack.c.b16 %v3482, %v3474
    %v4907 = vpack.c.b16 %v3483, %v3475
    %v4908 = vpack.c.b16 %v3484, %v3476
    %v4909 = vpack.c.b16 %v3485, %v3477
    %v4910 = vpack.c.b16 %v3486, %v3478
    %v4911 = vpack.c.b16 %v3487, %v3479
    %v4912 = vpack.c.b16 %v3496, %v3488
    %v4913 = vpack.c.b16 %v3497, %v3489
    %v4914 = vpack.c.b16 %v3498, %v3490
    %v4915 = vpack.c.b16 %v3499, %v3491
    %v4916 = vpack.c.b16 %v3500, %v3492
    %v4917 = vpack.c.b16 %v3501, %v3493
    %v4918 = vpack.c.b16 %v3502, %v3494
    %v4919 = vpack.c.b16 %v3503, %v3495
    %v4920 = vpack.c.b16 %v3512, %v3504
    %v4921 = vpack.c.b16 %v3513, %v3505
    %v4922 = vpack.c.b16 %v3514, %v3506
    %v4923 = vpack.c.b16 %v3515, %v3507
    %v4924 = vpack.c.b16 %v3516, %v3508
    %v4925 = vpack.c.b16 %v3517, %v3509
    %v4926 = vpack.c.b16 %v3518, %v3510
    %v4927 = vpack.c.b16 %v3519, %v3511
    %v4928 = vpack.c.b16 %v3528, %v3520
    %v4929 = vpack.c.b16 %v3529, %v3521
    %v4930 = vpack.c.b16 %v3530, %v3522
    %v4931 = vpack.c.b16 %v3531, %v3523
    %v4932 = vpack.c.b16 %v3532, %v3524
    %v4933 = vpack.c.b16 %v3533, %v3525
    %v4934 = vpack.c.b16 %v3534, %v3526
    %v4935 = vpack.c.b16 %v3535, %v3527
    %v4936 = vpack.c.b16 %v3544, %v3536
    %v4937 = vpack.c.b16 %v3545, %v3537
    %v4938 = vpack.c.b16 %v3546, %v3538
    %v4939 = vpack.c.b16 %v3547, %v3539
    %v4940 = vpack.c.b16 %v3548, %v3540
    %v4941 = vpack.c.b16 %v3549, %v3541
    %v4942 = vpack.c.b16 %v3550, %v3542
    %v4943 = vpack.c.b16 %v3551, %v3543
    %v4944 = vpack.c.b16 %v3560, %v3552
    %v4945 = vpack.c.b16 %v3561, %v3553
    %v4946 = vpack.c.b16 %v3562, %v3554
    %v4947 = vpack.c.b16 %v3563, %v3555
    %v4948 = vpack.c.b16 %v3564, %v3556
    %v4949 = vpack.c.b16 %v3565, %v3557
    %v4950 = vpack.c.b16 %v3566, %v3558
    %v4951 = vpack.c.b16 %v3567, %v3559
    %v4952 = vpack.c.b16 %v3576, %v3568
    %v4953 = vpack.c.b16 %v3577, %v3569
    %v4954 = vpack.c.b16 %v3578, %v3570
    %v4955 = vpack.c.b16 %v3579, %v3571
    %v4956 = vpack.c.b16 %v3580, %v3572
    %v4957 = vpack.c.b16 %v3581, %v3573
    %v4958 = vpack.c.b16 %v3582, %v3574
    %v4959 = vpack.c.b16 %v3583, %v3575
    %v4960 = vpack.c.b16 %v3592, %v3584
    %v4961 = vpack.c.b16 %v3593, %v3585
    %v4962 = vpack.c.b16 %v3594, %v3586
    %v4963 = vpack.c.b16 %v3595, %v3587
    %v4964 = vpack.c.b16 %v3596, %v3588
    %v4965 = vpack.c.b16 %v3597, %v3589
    %v4966 = vpack.c.b16 %v3598, %v3590
    %v4967 = vpack.c.b16 %v3599, %v3591
    %v4968 = vpack.c.b16 %v3608, %v3600
    %v4969 = vpack.c.b16 %v3609, %v3601
    %v4970 = vpack.c.b16 %v3610, %v3602
    %v4971 = vpack.c.b16 %v3611, %v3603
    %v4972 = vpack.c.b16 %v3612, %v3604
    %v4973 = vpack.c.b16 %v3613, %v3605
    %v4974 = vpack.c.b16 %v3614, %v3606
    %v4975 = vpack.c.b16 %v3615, %v3607
    %v4976 = vpack.c.b16 %v3624, %v3616
    %v4977 = vpack.c.b16 %v3625, %v3617
    %v4978 = vpack.c.b16 %v3626, %v3618
    %v4979 = vpack.c.b16 %v3627, %v3619
    %v4980 = vpack.c.b16 %v3628, %v3620
    %v4981 = vpack.c.b16 %v3629, %v3621
    %v4982 = vpack.c.b16 %v3630, %v3622
    %v4983 = vpack.c.b16 %v3631, %v3623
    %v4984 = vpack.c.b16 %v3640, %v3632
    %v4985 = vpack.c.b16 %v3641, %v3633
    %v4986 = vpack.c.b16 %v3642, %v3634
    %v4987 = vpack.c.b16 %v3643, %v3635
    %v4988 = vpack.c.b16 %v3644, %v3636
    %v4989 = vpack.c.b16 %v3645, %v3637
    %v4990 = vpack.c.b16 %v3646, %v3638
    %v4991 = vpack.c.b16 %v3647, %v3639
    %v4992 = vpack.c.b16 %v3656, %v3648
    %v4993 = vpack.c.b16 %v3657, %v3649
    %v4994 = vpack.c.b16 %v3658, %v3650
    %v4995 = vpack.c.b16 %v3659, %v3651
    %v4996 = vpack.c.b16 %v3660, %v3652
    %v4997 = vpack.c.b16 %v3661, %v3653
    %v4998 = vpack.c.b16 %v3662, %v3654
    %v4999 = vpack.c.b16 %v3663, %v3655
    %v5000 = vpack.c.b16 %v3672, %v3664
    %v5001 = vpack.c.b16 %v3673, %v3665
    %v5002 = vpack.c.b16 %v3674, %v3666
    %v5003 = vpack.c.b16 %v3675, %v3667
    %v5004 = vpack.c.b16 %v3676, %v3668
    %v5005 = vpack.c.b16 %v3677, %v3669
    %v5006 = vpack.c.b16 %v3678, %v3670
    %v5007 = vpack.c.b16 %v3679, %v3671
    %v5008 = vpack.c.b16 %v3688, %v3680
    %v5009 = vpack.c.b16 %v3689, %v3681
    %v5010 = vpack.c.b16 %v3690, %v3682
    %v5011 = vpack.c.b16 %v3691, %v3683
    %v5012 = vpack.c.b16 %v3692, %v3684
    %v5013 = vpack.c.b16 %v3693, %v3685
    %v5014 = vpack.c.b16 %v3694, %v3686
    %v5015 = vpack.c.b16 %v3695, %v3687
    %v5016 = vpack.c.b16 %v3704, %v3696
    %v5017 = vpack.c.b16 %v3705, %v3697
    %v5018 = vpack.c.b16 %v3706, %v3698
    %v5019 = vpack.c.b16 %v3707, %v3699
    %v5020 = vpack.c.b16 %v3708, %v3700
    %v5021 = vpack.c.b16 %v3709, %v3701
    %v5022 = vpack.c.b16 %v3710, %v3702
    %v5023 = vpack.c.b16 %v3711, %v3703
    %v5024 = vpack.c.b16 %v3720, %v3712
    %v5025 = vpack.c.b16 %v3721, %v3713
    %v5026 = vpack.c.b16 %v3722, %v3714
    %v5027 = vpack.c.b16 %v3723, %v3715
    %v5028 = vpack.c.b16 %v3724, %v3716
    %v5029 = vpack.c.b16 %v3725, %v3717
    %v5030 = vpack.c.b16 %v3726, %v3718
    %v5031 = vpack.c.b16 %v3727, %v3719
    %v5032 = vpack.c.b16 %v3736, %v3728
    %v5033 = vpack.c.b16 %v3737, %v3729
    %v5034 = vpack.c.b16 %v3738, %v3730
    %v5035 = vpack.c.b16 %v3739, %v3731
    %v5036 = vpack.c.b16 %v3740, %v3732
    %v5037 = vpack.c.b16 %v3741, %v3733
    %v5038 = vpack.c.b16 %v3742, %v3734
    %v5039 = vpack.c.b16 %v3743, %v3735
    %v5040 = vpack.c.b16 %v3752, %v3744
    %v5041 = vpack.c.b16 %v3753, %v3745
    %v5042 = vpack.c.b16 %v3754, %v3746
    %v5043 = vpack.c.b16 %v3755, %v3747
    %v5044 = vpack.c.b16 %v3756, %v3748
    %v5045 = vpack.c.b16 %v3757, %v3749
    %v5046 = vpack.c.b16 %v3758, %v3750
    %v5047 = vpack.c.b16 %v3759, %v3751
    %v5048 = vpack.c.b16 %v3768, %v3760
    %v5049 = vpack.c.b16 %v3769, %v3761
    %v5050 = vpack.c.b16 %v3770, %v3762
    %v5051 = vpack.c.b16 %v3771, %v3763
    %v5052 = vpack.c.b16 %v3772, %v3764
    %v5053 = vpack.c.b16 %v3773, %v3765
    %v5054 = vpack.c.b16 %v3774, %v3766
    %v5055 = vpack.c.b16 %v3775, %v3767
    %v5056 = vpack.c.b16 %v3784, %v3776
    %v5057 = vpack.c.b16 %v3785, %v3777
    %v5058 = vpack.c.b16 %v3786, %v3778
    %v5059 = vpack.c.b16 %v3787, %v3779
    %v5060 = vpack.c.b16 %v3788, %v3780
    %v5061 = vpack.c.b16 %v3789, %v3781
    %v5062 = vpack.c.b16 %v3790, %v3782
    %v5063 = vpack.c.b16 %v3791, %v3783
    %v5064 = vpack.c.b16 %v3800, %v3792
    %v5065 = vpack.c.b16 %v3801, %v3793
    %v5066 = vpack.c.b16 %v3802, %v3794
    %v5067 = vpack.c.b16 %v3803, %v3795
    %v5068 = vpack.c.b16 %v3804, %v3796
    %v5069 = vpack.c.b16 %v3805, %v3797
    %v5070 = vpack.c.b16 %v3806, %v3798
    %v5071 = vpack.c.b16 %v3807, %v3799
    %v5072 = vpack.c.b16 %v3816, %v3808
    %v5073 = vpack.c.b16 %v3817, %v3809
    %v5074 = vpack.c.b16 %v3818, %v3810
    %v5075 = vpack.c.b16 %v3819, %v3811
    %v5076 = vpack.c.b16 %v3820, %v3812
    %v5077 = vpack.c.b16 %v3821, %v3813
    %v5078 = vpack.c.b16 %v3822, %v3814
    %v5079 = vpack.c.b16 %v3823, %v3815
    %v5080 = vpack.c.b16 %v3832, %v3824
    %v5081 = vpack.c.b16 %v3833, %v3825
    %v5082 = vpack.c.b16 %v3834, %v3826
    %v5083 = vpack.c.b16 %v3835, %v3827
    %v5084 = vpack.c.b16 %v3836, %v3828
    %v5085 = vpack.c.b16 %v3837, %v3829
    %v5086 = vpack.c.b16 %v3838, %v3830
    %v5087 = vpack.c.b16 %v3839, %v3831
    %v5088 = vpack.c.b16 %v3848, %v3840
    %v5089 = vpack.c.b16 %v3849, %v3841
    %v5090 = vpack.c.b16 %v3850, %v3842
    %v5091 = vpack.c.b16 %v3851, %v3843
    %v5092 = vpack.c.b16 %v3852, %v3844
    %v5093 = vpack.c.b16 %v3853, %v3845
    %v5094 = vpack.c.b16 %v3854, %v3846
    %v5095 = vpack.c.b16 %v3855, %v3847
    %v5096 = vpack.c.b16 %v3864, %v3856
    %v5097 = vpack.c.b16 %v3865, %v3857
    %v5098 = vpack.c.b16 %v3866, %v3858
    %v5099 = vpack.c.b16 %v3867, %v3859
    %v5100 = vpack.c.b16 %v3868, %v3860
    %v5101 = vpack.c.b16 %v3869, %v3861
    %v5102 = vpack.c.b16 %v3870, %v3862
    %v5103 = vpack.c.b16 %v3871, %v3863
    %v5104 = vpack.c.b16 %v3880, %v3872
    %v5105 = vpack.c.b16 %v3881, %v3873
    %v5106 = vpack.c.b16 %v3882, %v3874
    %v5107 = vpack.c.b16 %v3883, %v3875
    %v5108 = vpack.c.b16 %v3884, %v3876
    %v5109 = vpack.c.b16 %v3885, %v3877
    %v5110 = vpack.c.b16 %v3886, %v3878
    %v5111 = vpack.c.b16 %v3887, %v3879
    %v5112 = vpack.c.b16 %v3896, %v3888
    %v5113 = vpack.c.b16 %v3897, %v3889
    %v5114 = vpack.c.b16 %v3898, %v3890
    %v5115 = vpack.c.b16 %v3899, %v3891
    %v5116 = vpack.c.b16 %v3900, %v3892
    %v5117 = vpack.c.b16 %v3901, %v3893
    %v5118 = vpack.c.b16 %v3902, %v3894
    %v5119 = vpack.c.b16 %v3903, %v3895
    %v5120 = vpack.c.b16 %v3912, %v3904
    %v5121 = vpack.c.b16 %v3913, %v3905
    %v5122 = vpack.c.b16 %v3914, %v3906
    %v5123 = vpack.c.b16 %v3915, %v3907
    %v5124 = vpack.c.b16 %v3916, %v3908
    %v5125 = vpack.c.b16 %v3917, %v3909
    %v5126 = vpack.c.b16 %v3918, %v3910
    %v5127 = vpack.c.b16 %v3919, %v3911
    %v5128 = vpack.c.b16 %v3928, %v3920
    %v5129 = vpack.c.b16 %v3929, %v3921
    %v5130 = vpack.c.b16 %v3930, %v3922
    %v5131 = vpack.c.b16 %v3931, %v3923
    %v5132 = vpack.c.b16 %v3932, %v3924
    %v5133 = vpack.c.b16 %v3933, %v3925
    %v5134 = vpack.c.b16 %v3934, %v3926
    %v5135 = vpack.c.b16 %v3935, %v3927
    %v5136 = vpack.c.b16 %v3944, %v3936
    %v5137 = vpack.c.b16 %v3945, %v3937
    %v5138 = vpack.c.b16 %v3946, %v3938
    %v5139 = vpack.c.b16 %v3947, %v3939
    %v5140 = vpack.c.b16 %v3948, %v3940
    %v5141 = vpack.c.b16 %v3949, %v3941
    %v5142 = vpack.c.b16 %v3950, %v3942
    %v5143 = vpack.c.b16 %v3951, %v3943
    %v5144 = vpack.c.b16 %v3960, %v3952
    %v5145 = vpack.c.b16 %v3961, %v3953
    %v5146 = vpack.c.b16 %v3962, %v3954
    %v5147 = vpack.c.b16 %v3963, %v3955
    %v5148 = vpack.c.b16 %v3964, %v3956
    %v5149 = vpack.c.b16 %v3965, %v3957
    %v5150 = vpack.c.b16 %v3966, %v3958
    %v5151 = vpack.c.b16 %v3967, %v3959
    %v5152 = vpack.c.b16 %v3976, %v3968
    %v5153 = vpack.c.b16 %v3977, %v3969
    %v5154 = vpack.c.b16 %v3978, %v3970
    %v5155 = vpack.c.b16 %v3979, %v3971
    %v5156 = vpack.c.b16 %v3980, %v3972
    %v5157 = vpack.c.b16 %v3981, %v3973
    %v5158 = vpack.c.b16 %v3982, %v3974
    %v5159 = vpack.c.b16 %v3983, %v3975
    %v5160 = vpack.c.b16 %v3992, %v3984
    %v5161 = vpack.c.b16 %v3993, %v3985
    %v5162 = vpack.c.b16 %v3994, %v3986
    %v5163 = vpack.c.b16 %v3995, %v3987
    %v5164 = vpack.c.b16 %v3996, %v3988
    %v5165 = vpack.c.b16 %v3997, %v3989
    %v5166 = vpack.c.b16 %v3998, %v3990
    %v5167 = vpack.c.b16 %v3999, %v3991
    %v5168 = vpack.c.b16 %v4008, %v4000
    %v5169 = vpack.c.b16 %v4009, %v4001
    %v5170 = vpack.c.b16 %v4010, %v4002
    %v5171 = vpack.c.b16 %v4011, %v4003
    %v5172 = vpack.c.b16 %v4012, %v4004
    %v5173 = vpack.c.b16 %v4013, %v4005
    %v5174 = vpack.c.b16 %v4014, %v4006
    %v5175 = vpack.c.b16 %v4015, %v4007
    %v5176 = vpack.c.b16 %v4024, %v4016
    %v5177 = vpack.c.b16 %v4025, %v4017
    %v5178 = vpack.c.b16 %v4026, %v4018
    %v5179 = vpack.c.b16 %v4027, %v4019
    %v5180 = vpack.c.b16 %v4028, %v4020
    %v5181 = vpack.c.b16 %v4029, %v4021
    %v5182 = vpack.c.b16 %v4030, %v4022
    %v5183 = vpack.c.b16 %v4031, %v4023
    %v5184 = vpack.c.b16 %v4040, %v4032
    %v5185 = vpack.c.b16 %v4041, %v4033
    %v5186 = vpack.c.b16 %v4042, %v4034
    %v5187 = vpack.c.b16 %v4043, %v4035
    %v5188 = vpack.c.b16 %v4044, %v4036
    %v5189 = vpack.c.b16 %v4045, %v4037
    %v5190 = vpack.c.b16 %v4046, %v4038
    %v5191 = vpack.c.b16 %v4047, %v4039
    %v5192 = vpack.c.b16 %v4056, %v4048
    %v5193 = vpack.c.b16 %v4057, %v4049
    %v5194 = vpack.c.b16 %v4058, %v4050
    %v5195 = vpack.c.b16 %v4059, %v4051
    %v5196 = vpack.c.b16 %v4060, %v4052
    %v5197 = vpack.c.b16 %v4061, %v4053
    %v5198 = vpack.c.b16 %v4062, %v4054
    %v5199 = vpack.c.b16 %v4063, %v4055
    %v5200 = vpack.c.b16 %v4072, %v4064
    %v5201 = vpack.c.b16 %v4073, %v4065
    %v5202 = vpack.c.b16 %v4074, %v4066
    %v5203 = vpack.c.b16 %v4075, %v4067
    %v5204 = vpack.c.b16 %v4076, %v4068
    %v5205 = vpack.c.b16 %v4077, %v4069
    %v5206 = vpack.c.b16 %v4078, %v4070
    %v5207 = vpack.c.b16 %v4079, %v4071
    %v5208 = vpack.c.b16 %v4088, %v4080
    %v5209 = vpack.c.b16 %v4089, %v4081
    %v5210 = vpack.c.b16 %v4090, %v4082
    %v5211 = vpack.c.b16 %v4091, %v4083
    %v5212 = vpack.c.b16 %v4092, %v4084
    %v5213 = vpack.c.b16 %v4093, %v4085
    %v5214 = vpack.c.b16 %v4094, %v4086
    %v5215 = vpack.c.b16 %v4095, %v4087
    %v5216 = vpack.c.b16 %v4104, %v4096
    %v5217 = vpack.c.b16 %v4105, %v4097
    %v5218 = vpack.c.b16 %v4106, %v4098
    %v5219 = vpack.c.b16 %v4107, %v4099
    %v5220 = vpack.c.b16 %v4108, %v4100
    %v5221 = vpack.c.b16 %v4109, %v4101
    %v5222 = vpack.c.b16 %v4110, %v4102
    %v5223 = vpack.c.b16 %v4111, %v4103
    %v5224 = vpack.c.b16 %v4120, %v4112
    %v5225 = vpack.c.b16 %v4121, %v4113
    %v5226 = vpack.c.b16 %v4122, %v4114
    %v5227 = vpack.c.b16 %v4123, %v4115
    %v5228 = vpack.c.b16 %v4124, %v4116
    %v5229 = vpack.c.b16 %v4125, %v4117
    %v5230 = vpack.c.b16 %v4126, %v4118
    %v5231 = vpack.c.b16 %v4127, %v4119
    %v5232 = vpack.c.b16 %v4136, %v4128
    %v5233 = vpack.c.b16 %v4137, %v4129
    %v5234 = vpack.c.b16 %v4138, %v4130
    %v5235 = vpack.c.b16 %v4139, %v4131
    %v5236 = vpack.c.b16 %v4140, %v4132
    %v5237 = vpack.c.b16 %v4141, %v4133
    %v5238 = vpack.c.b16 %v4142, %v4134
    %v5239 = vpack.c.b16 %v4143, %v4135
    %v5240 = vpack.c.b16 %v4152, %v4144
    %v5241 = vpack.c.b16 %v4153, %v4145
    %v5242 = vpack.c.b16 %v4154, %v4146
    %v5243 = vpack.c.b16 %v4155, %v4147
    %v5244 = vpack.c.b16 %v4156, %v4148
    %v5245 = vpack.c.b16 %v4157, %v4149
    %v5246 = vpack.c.b16 %v4158, %v4150
    %v5247 = vpack.c.b16 %v4159, %v4151
    %v5248 = vpack.c.b16 %v4168, %v4160
    %v5249 = vpack.c.b16 %v4169, %v4161
    %v5250 = vpack.c.b16 %v4170, %v4162
    %v5251 = vpack.c.b16 %v4171, %v4163
    %v5252 = vpack.c.b16 %v4172, %v4164
    %v5253 = vpack.c.b16 %v4173, %v4165
    %v5254 = vpack.c.b16 %v4174, %v4166
    %v5255 = vpack.c.b16 %v4175, %v4167
    %v5256 = vpack.c.b16 %v4184, %v4176
    %v5257 = vpack.c.b16 %v4185, %v4177
    %v5258 = vpack.c.b16 %v4186, %v4178
    %v5259 = vpack.c.b16 %v4187, %v4179
    %v5260 = vpack.c.b16 %v4188, %v4180
    %v5261 = vpack.c.b16 %v4189, %v4181
    %v5262 = vpack.c.b16 %v4190, %v4182
    %v5263 = vpack.c.b16 %v4191, %v4183
    %v5264 = vpack.c.b16 %v4200, %v4192
    %v5265 = vpack.c.b16 %v4201, %v4193
    %v5266 = vpack.c.b16 %v4202, %v4194
    %v5267 = vpack.c.b16 %v4203, %v4195
    %v5268 = vpack.c.b16 %v4204, %v4196
    %v5269 = vpack.c.b16 %v4205, %v4197
    %v5270 = vpack.c.b16 %v4206, %v4198
    %v5271 = vpack.c.b16 %v4207, %v4199
    %v5272 = vpack.c.b16 %v4216, %v4208
    %v5273 = vpack.c.b16 %v4217, %v4209
    %v5274 = vpack.c.b16 %v4218, %v4210
    %v5275 = vpack.c.b16 %v4219, %v4211
    %v5276 = vpack.c.b16 %v4220, %v4212
    %v5277 = vpack.c.b16 %v4221, %v4213
    %v5278 = vpack.c.b16 %v4222, %v4214
    %v5279 = vpack.c.b16 %v4223, %v4215
    %v5280 = vpack.c.b16 %v4232, %v4224
    %v5281 = vpack.c.b16 %v4233, %v4225
    %v5282 = vpack.c.b16 %v4234, %v4226
    %v5283 = vpack.c.b16 %v4235, %v4227
    %v5284 = vpack.c.b16 %v4236, %v4228
    %v5285 = vpack.c.b16 %v4237, %v4229
    %v5286 = vpack.c.b16 %v4238, %v4230
    %v5287 = vpack.c.b16 %v4239, %v4231
    %v5288 = vpack.c.b16 %v4248, %v4240
    %v5289 = vpack.c.b16 %v4249, %v4241
    %v5290 = vpack.c.b16 %v4250, %v4242
    %v5291 = vpack.c.b16 %v4251, %v4243
    %v5292 = vpack.c.b16 %v4252, %v4244
    %v5293 = vpack.c.b16 %v4253, %v4245
    %v5294 = vpack.c.b16 %v4254, %v4246
    %v5295 = vpack.c.b16 %v4255, %v4247
    %v5296 = vpack.c.b16 %v4264, %v4256
    %v5297 = vpack.c.b16 %v4265, %v4257
    %v5298 = vpack.c.b16 %v4266, %v4258
    %v5299 = vpack.c.b16 %v4267, %v4259
    %v5300 = vpack.c.b16 %v4268, %v4260
    %v5301 = vpack.c.b16 %v4269, %v4261
    %v5302 = vpack.c.b16 %v4270, %v4262
    %v5303 = vpack.c.b16 %v4271, %v4263
    %v5304 = vpack.c.b16 %v4280, %v4272
    %v5305 = vpack.c.b16 %v4281, %v4273
    %v5306 = vpack.c.b16 %v4282, %v4274
    %v5307 = vpack.c.b16 %v4283, %v4275
    %v5308 = vpack.c.b16 %v4284, %v4276
    %v5309 = vpack.c.b16 %v4285, %v4277
    %v5310 = vpack.c.b16 %v4286, %v4278
    %v5311 = vpack.c.b16 %v4287, %v4279
    %6336 = vmatpush.bf16.msra.mxu0 %v4344
    %6337 = vmatpush.bf16.msra.mxu0 %v4336
    %6338 = vmatpush.bf16.msra.mxu0 %v4328
    %6339 = vmatpush.bf16.msra.mxu0 %v4320
    %6340 = vmatpush.bf16.msra.mxu0 %v4312
    %6341 = vmatpush.bf16.msra.mxu0 %v4304
    %6342 = vmatpush.bf16.msra.mxu0 %v4296
    %6343 = vmatpush.bf16.msra.mxu0 %v4288
    %6344 = vmatmul.bf16.gmra.mxu0 %v158
    %v6345 = vpop.f32.mrf.mxu0
    %v6346 = vadd.f32 %v1200, %v6345
    %v6347 = vpop.f32.mrf.mxu0
    %6348 = vdwg.mxu0
    %6349 = vmatpush.bf16.msra.mxu0 %v4408
    %6350 = vmatpush.bf16.msra.mxu0 %v4400
    %6351 = vmatpush.bf16.msra.mxu0 %v4392
    %6352 = vmatpush.bf16.msra.mxu0 %v4384
    %6353 = vmatpush.bf16.msra.mxu0 %v4376
    %6354 = vmatpush.bf16.msra.mxu0 %v4368
    %6355 = vmatpush.bf16.msra.mxu0 %v4360
    %6356 = vmatpush.bf16.msra.mxu0 %v4352
    %6357 = vmatmul.bf16.gmra.mxu0 %v159
    %v6358 = vpop.f32.mrf.mxu0
    %v6359 = vadd.f32 %v6346, %v6358
    %v6360 = vpop.f32.mrf.mxu0
    %6361 = vdwg.mxu0
    %6362 = vmatpush.bf16.msra.mxu0 %v4472
    %6363 = vmatpush.bf16.msra.mxu0 %v4464
    %6364 = vmatpush.bf16.msra.mxu0 %v4456
    %6365 = vmatpush.bf16.msra.mxu0 %v4448
    %6366 = vmatpush.bf16.msra.mxu0 %v4440
    %6367 = vmatpush.bf16.msra.mxu0 %v4432
    %6368 = vmatpush.bf16.msra.mxu0 %v4424
    %6369 = vmatpush.bf16.msra.mxu0 %v4416
    %6370 = vmatmul.bf16.gmra.mxu0 %v160
    %v6371 = vpop.f32.mrf.mxu0
    %v6372 = vadd.f32 %v6359, %v6371
    %v6373 = vpop.f32.mrf.mxu0
    %6374 = vdwg.mxu0
    %6375 = vmatpush.bf16.msra.mxu0 %v4536
    %6376 = vmatpush.bf16.msra.mxu0 %v4528
    %6377 = vmatpush.bf16.msra.mxu0 %v4520
    %6378 = vmatpush.bf16.msra.mxu0 %v4512
    %6379 = vmatpush.bf16.msra.mxu0 %v4504
    %6380 = vmatpush.bf16.msra.mxu0 %v4496
    %6381 = vmatpush.bf16.msra.mxu0 %v4488
    %6382 = vmatpush.bf16.msra.mxu0 %v4480
    %6383 = vmatmul.bf16.gmra.mxu0 %v161
    %v6384 = vpop.f32.mrf.mxu0
    %v6385 = vadd.f32 %v6372, %v6384
    %v6386 = vpop.f32.mrf.mxu0
    %6387 = vdwg.mxu0
    %6388 = vmatpush.bf16.msra.mxu0 %v4600
    %6389 = vmatpush.bf16.msra.mxu0 %v4592
    %6390 = vmatpush.bf16.msra.mxu0 %v4584
    %6391 = vmatpush.bf16.msra.mxu0 %v4576
    %6392 = vmatpush.bf16.msra.mxu0 %v4568
    %6393 = vmatpush.bf16.msra.mxu0 %v4560
    %6394 = vmatpush.bf16.msra.mxu0 %v4552
    %6395 = vmatpush.bf16.msra.mxu0 %v4544
    %6396 = vmatmul.bf16.gmra.mxu0 %v162
    %v6397 = vpop.f32.mrf.mxu0
    %v6398 = vadd.f32 %v6385, %v6397
    %v6399 = vpop.f32.mrf.mxu0
    %6400 = vdwg.mxu0
    %6401 = vmatpush.bf16.msra.mxu0 %v4664
    %6402 = vmatpush.bf16.msra.mxu0 %v4656
    %6403 = vmatpush.bf16.msra.mxu0 %v4648
    %6404 = vmatpush.bf16.msra.mxu0 %v4640
    %6405 = vmatpush.bf16.msra.mxu0 %v4632
    %6406 = vmatpush.bf16.msra.mxu0 %v4624
    %6407 = vmatpush.bf16.msra.mxu0 %v4616
    %6408 = vmatpush.bf16.msra.mxu0 %v4608
    %6409 = vmatmul.bf16.gmra.mxu0 %v163
    %v6410 = vpop.f32.mrf.mxu0
    %v6411 = vadd.f32 %v6398, %v6410
    %v6412 = vpop.f32.mrf.mxu0
    %6413 = vdwg.mxu0
    %6414 = vmatpush.bf16.msra.mxu0 %v4728
    %6415 = vmatpush.bf16.msra.mxu0 %v4720
    %6416 = vmatpush.bf16.msra.mxu0 %v4712
    %6417 = vmatpush.bf16.msra.mxu0 %v4704
    %6418 = vmatpush.bf16.msra.mxu0 %v4696
    %6419 = vmatpush.bf16.msra.mxu0 %v4688
    %6420 = vmatpush.bf16.msra.mxu0 %v4680
    %6421 = vmatpush.bf16.msra.mxu0 %v4672
    %6422 = vmatmul.bf16.gmra.mxu0 %v164
    %v6423 = vpop.f32.mrf.mxu0
    %v6424 = vadd.f32 %v6411, %v6423
    %v6425 = vpop.f32.mrf.mxu0
    %6426 = vdwg.mxu0
    %6427 = vmatpush.bf16.msra.mxu0 %v4792
    %6428 = vmatpush.bf16.msra.mxu0 %v4784
    %6429 = vmatpush.bf16.msra.mxu0 %v4776
    %6430 = vmatpush.bf16.msra.mxu0 %v4768
    %6431 = vmatpush.bf16.msra.mxu0 %v4760
    %6432 = vmatpush.bf16.msra.mxu0 %v4752
    %6433 = vmatpush.bf16.msra.mxu0 %v4744
    %6434 = vmatpush.bf16.msra.mxu0 %v4736
    %6435 = vmatmul.bf16.gmra.mxu0 %v165
    %v6436 = vpop.f32.mrf.mxu0
    %v6437 = vadd.f32 %v6424, %v6436
    %v6438 = vpop.f32.mrf.mxu0
    %6439 = vdwg.mxu0
    %6440 = vmatpush.bf16.msra.mxu0 %v4856
    %6441 = vmatpush.bf16.msra.mxu0 %v4848
    %6442 = vmatpush.bf16.msra.mxu0 %v4840
    %6443 = vmatpush.bf16.msra.mxu0 %v4832
    %6444 = vmatpush.bf16.msra.mxu0 %v4824
    %6445 = vmatpush.bf16.msra.mxu0 %v4816
    %6446 = vmatpush.bf16.msra.mxu0 %v4808
    %6447 = vmatpush.bf16.msra.mxu0 %v4800
    %6448 = vmatmul.bf16.gmra.mxu0 %v166
    %v6449 = vpop.f32.mrf.mxu0
    %v6450 = vadd.f32 %v6437, %v6449
    %v6451 = vpop.f32.mrf.mxu0
    %6452 = vdwg.mxu0
    %6453 = vmatpush.bf16.msra.mxu0 %v4920
    %6454 = vmatpush.bf16.msra.mxu0 %v4912
    %6455 = vmatpush.bf16.msra.mxu0 %v4904
    %6456 = vmatpush.bf16.msra.mxu0 %v4896
    %6457 = vmatpush.bf16.msra.mxu0 %v4888
    %6458 = vmatpush.bf16.msra.mxu0 %v4880
    %6459 = vmatpush.bf16.msra.mxu0 %v4872
    %6460 = vmatpush.bf16.msra.mxu0 %v4864
    %6461 = vmatmul.bf16.gmra.mxu0 %v167
    %v6462 = vpop.f32.mrf.mxu0
    %v6463 = vadd.f32 %v6450, %v6462
    %v6464 = vpop.f32.mrf.mxu0
    %6465 = vdwg.mxu0
    %6466 = vmatpush.bf16.msra.mxu0 %v4984
    %6467 = vmatpush.bf16.msra.mxu0 %v4976
    %6468 = vmatpush.bf16.msra.mxu0 %v4968
    %6469 = vmatpush.bf16.msra.mxu0 %v4960
    %6470 = vmatpush.bf16.msra.mxu0 %v4952
    %6471 = vmatpush.bf16.msra.mxu0 %v4944
    %6472 = vmatpush.bf16.msra.mxu0 %v4936
    %6473 = vmatpush.bf16.msra.mxu0 %v4928
    %6474 = vmatmul.bf16.gmra.mxu0 %v168
    %v6475 = vpop.f32.mrf.mxu0
    %v6476 = vadd.f32 %v6463, %v6475
    %v6477 = vpop.f32.mrf.mxu0
    %6478 = vdwg.mxu0
    %6479 = vmatpush.bf16.msra.mxu0 %v5048
    %6480 = vmatpush.bf16.msra.mxu0 %v5040
    %6481 = vmatpush.bf16.msra.mxu0 %v5032
    %6482 = vmatpush.bf16.msra.mxu0 %v5024
    %6483 = vmatpush.bf16.msra.mxu0 %v5016
    %6484 = vmatpush.bf16.msra.mxu0 %v5008
    %6485 = vmatpush.bf16.msra.mxu0 %v5000
    %6486 = vmatpush.bf16.msra.mxu0 %v4992
    %6487 = vmatmul.bf16.gmra.mxu0 %v169
    %v6488 = vpop.f32.mrf.mxu0
    %v6489 = vadd.f32 %v6476, %v6488
    %v6490 = vpop.f32.mrf.mxu0
    %6491 = vdwg.mxu0
    %6492 = vmatpush.bf16.msra.mxu0 %v5112
    %6493 = vmatpush.bf16.msra.mxu0 %v5104
    %6494 = vmatpush.bf16.msra.mxu0 %v5096
    %6495 = vmatpush.bf16.msra.mxu0 %v5088
    %6496 = vmatpush.bf16.msra.mxu0 %v5080
    %6497 = vmatpush.bf16.msra.mxu0 %v5072
    %6498 = vmatpush.bf16.msra.mxu0 %v5064
    %6499 = vmatpush.bf16.msra.mxu0 %v5056
    %6500 = vmatmul.bf16.gmra.mxu0 %v170
    %v6501 = vpop.f32.mrf.mxu0
    %v6502 = vadd.f32 %v6489, %v6501
    %v6503 = vpop.f32.mrf.mxu0
    %6504 = vdwg.mxu0
    %6505 = vmatpush.bf16.msra.mxu0 %v5176
    %6506 = vmatpush.bf16.msra.mxu0 %v5168
    %6507 = vmatpush.bf16.msra.mxu0 %v5160
    %6508 = vmatpush.bf16.msra.mxu0 %v5152
    %6509 = vmatpush.bf16.msra.mxu0 %v5144
    %6510 = vmatpush.bf16.msra.mxu0 %v5136
    %6511 = vmatpush.bf16.msra.mxu0 %v5128
    %6512 = vmatpush.bf16.msra.mxu0 %v5120
    %6513 = vmatmul.bf16.gmra.mxu0 %v171
    %v6514 = vpop.f32.mrf.mxu0
    %v6515 = vadd.f32 %v6502, %v6514
    %v6516 = vpop.f32.mrf.mxu0
    %6517 = vdwg.mxu0
    %6518 = vmatpush.bf16.msra.mxu0 %v5240
    %6519 = vmatpush.bf16.msra.mxu0 %v5232
    %6520 = vmatpush.bf16.msra.mxu0 %v5224
    %6521 = vmatpush.bf16.msra.mxu0 %v5216
    %6522 = vmatpush.bf16.msra.mxu0 %v5208
    %6523 = vmatpush.bf16.msra.mxu0 %v5200
    %6524 = vmatpush.bf16.msra.mxu0 %v5192
    %6525 = vmatpush.bf16.msra.mxu0 %v5184
    %6526 = vmatmul.bf16.gmra.mxu0 %v172
    %v6527 = vpop.f32.mrf.mxu0
    %v6528 = vadd.f32 %v6515, %v6527
    %v6529 = vpop.f32.mrf.mxu0
    %6530 = vdwg.mxu0
    %6531 = vmatpush.bf16.msra.mxu0 %v5304
    %6532 = vmatpush.bf16.msra.mxu0 %v5296
    %6533 = vmatpush.bf16.msra.mxu0 %v5288
    %6534 = vmatpush.bf16.msra.mxu0 %v5280
    %6535 = vmatpush.bf16.msra.mxu0 %v5272
    %6536 = vmatpush.bf16.msra.mxu0 %v5264
    %6537 = vmatpush.bf16.msra.mxu0 %v5256
    %6538 = vmatpush.bf16.msra.mxu0 %v5248
    %6539 = vmatmul.bf16.gmra.mxu0 %v173
    %v6540 = vpop.f32.mrf.mxu0
    %v6541 = vadd.f32 %v6528, %v6540
    %v6542 = vpop.f32.mrf.mxu0
    %6543 = vdwg.mxu0
    %6544 = vmatpush.bf16.msra.mxu0 %v4345
    %6545 = vmatpush.bf16.msra.mxu0 %v4337
    %6546 = vmatpush.bf16.msra.mxu0 %v4329
    %6547 = vmatpush.bf16.msra.mxu0 %v4321
    %6548 = vmatpush.bf16.msra.mxu0 %v4313
    %6549 = vmatpush.bf16.msra.mxu0 %v4305
    %6550 = vmatpush.bf16.msra.mxu0 %v4297
    %6551 = vmatpush.bf16.msra.mxu0 %v4289
    %6552 = vmatmul.bf16.gmra.mxu0 %v158
    %v6553 = vpop.f32.mrf.mxu0
    %v6554 = vadd.f32 %v1201, %v6553
    %v6555 = vpop.f32.mrf.mxu0
    %6556 = vdwg.mxu0
    %6557 = vmatpush.bf16.msra.mxu0 %v4409
    %6558 = vmatpush.bf16.msra.mxu0 %v4401
    %6559 = vmatpush.bf16.msra.mxu0 %v4393
    %6560 = vmatpush.bf16.msra.mxu0 %v4385
    %6561 = vmatpush.bf16.msra.mxu0 %v4377
    %6562 = vmatpush.bf16.msra.mxu0 %v4369
    %6563 = vmatpush.bf16.msra.mxu0 %v4361
    %6564 = vmatpush.bf16.msra.mxu0 %v4353
    %6565 = vmatmul.bf16.gmra.mxu0 %v159
    %v6566 = vpop.f32.mrf.mxu0
    %v6567 = vadd.f32 %v6554, %v6566
    %v6568 = vpop.f32.mrf.mxu0
    %6569 = vdwg.mxu0
    %6570 = vmatpush.bf16.msra.mxu0 %v4473
    %6571 = vmatpush.bf16.msra.mxu0 %v4465
    %6572 = vmatpush.bf16.msra.mxu0 %v4457
    %6573 = vmatpush.bf16.msra.mxu0 %v4449
    %6574 = vmatpush.bf16.msra.mxu0 %v4441
    %6575 = vmatpush.bf16.msra.mxu0 %v4433
    %6576 = vmatpush.bf16.msra.mxu0 %v4425
    %6577 = vmatpush.bf16.msra.mxu0 %v4417
    %6578 = vmatmul.bf16.gmra.mxu0 %v160
    %v6579 = vpop.f32.mrf.mxu0
    %v6580 = vadd.f32 %v6567, %v6579
    %v6581 = vpop.f32.mrf.mxu0
    %6582 = vdwg.mxu0
    %6583 = vmatpush.bf16.msra.mxu0 %v4537
    %6584 = vmatpush.bf16.msra.mxu0 %v4529
    %6585 = vmatpush.bf16.msra.mxu0 %v4521
    %6586 = vmatpush.bf16.msra.mxu0 %v4513
    %6587 = vmatpush.bf16.msra.mxu0 %v4505
    %6588 = vmatpush.bf16.msra.mxu0 %v4497
    %6589 = vmatpush.bf16.msra.mxu0 %v4489
    %6590 = vmatpush.bf16.msra.mxu0 %v4481
    %6591 = vmatmul.bf16.gmra.mxu0 %v161
    %v6592 = vpop.f32.mrf.mxu0
    %v6593 = vadd.f32 %v6580, %v6592
    %v6594 = vpop.f32.mrf.mxu0
    %6595 = vdwg.mxu0
    %6596 = vmatpush.bf16.msra.mxu0 %v4601
    %6597 = vmatpush.bf16.msra.mxu0 %v4593
    %6598 = vmatpush.bf16.msra.mxu0 %v4585
    %6599 = vmatpush.bf16.msra.mxu0 %v4577
    %6600 = vmatpush.bf16.msra.mxu0 %v4569
    %6601 = vmatpush.bf16.msra.mxu0 %v4561
    %6602 = vmatpush.bf16.msra.mxu0 %v4553
    %6603 = vmatpush.bf16.msra.mxu0 %v4545
    %6604 = vmatmul.bf16.gmra.mxu0 %v162
    %v6605 = vpop.f32.mrf.mxu0
    %v6606 = vadd.f32 %v6593, %v6605
    %v6607 = vpop.f32.mrf.mxu0
    %6608 = vdwg.mxu0
    %6609 = vmatpush.bf16.msra.mxu0 %v4665
    %6610 = vmatpush.bf16.msra.mxu0 %v4657
    %6611 = vmatpush.bf16.msra.mxu0 %v4649
    %6612 = vmatpush.bf16.msra.mxu0 %v4641
    %6613 = vmatpush.bf16.msra.mxu0 %v4633
    %6614 = vmatpush.bf16.msra.mxu0 %v4625
    %6615 = vmatpush.bf16.msra.mxu0 %v4617
    %6616 = vmatpush.bf16.msra.mxu0 %v4609
    %6617 = vmatmul.bf16.gmra.mxu0 %v163
    %v6618 = vpop.f32.mrf.mxu0
    %v6619 = vadd.f32 %v6606, %v6618
    %v6620 = vpop.f32.mrf.mxu0
    %6621 = vdwg.mxu0
    %6622 = vmatpush.bf16.msra.mxu0 %v4729
    %6623 = vmatpush.bf16.msra.mxu0 %v4721
    %6624 = vmatpush.bf16.msra.mxu0 %v4713
    %6625 = vmatpush.bf16.msra.mxu0 %v4705
    %6626 = vmatpush.bf16.msra.mxu0 %v4697
    %6627 = vmatpush.bf16.msra.mxu0 %v4689
    %6628 = vmatpush.bf16.msra.mxu0 %v4681
    %6629 = vmatpush.bf16.msra.mxu0 %v4673
    %6630 = vmatmul.bf16.gmra.mxu0 %v164
    %v6631 = vpop.f32.mrf.mxu0
    %v6632 = vadd.f32 %v6619, %v6631
    %v6633 = vpop.f32.mrf.mxu0
    %6634 = vdwg.mxu0
    %6635 = vmatpush.bf16.msra.mxu0 %v4793
    %6636 = vmatpush.bf16.msra.mxu0 %v4785
    %6637 = vmatpush.bf16.msra.mxu0 %v4777
    %6638 = vmatpush.bf16.msra.mxu0 %v4769
    %6639 = vmatpush.bf16.msra.mxu0 %v4761
    %6640 = vmatpush.bf16.msra.mxu0 %v4753
    %6641 = vmatpush.bf16.msra.mxu0 %v4745
    %6642 = vmatpush.bf16.msra.mxu0 %v4737
    %6643 = vmatmul.bf16.gmra.mxu0 %v165
    %v6644 = vpop.f32.mrf.mxu0
    %v6645 = vadd.f32 %v6632, %v6644
    %v6646 = vpop.f32.mrf.mxu0
    %6647 = vdwg.mxu0
    %6648 = vmatpush.bf16.msra.mxu0 %v4857
    %6649 = vmatpush.bf16.msra.mxu0 %v4849
    %6650 = vmatpush.bf16.msra.mxu0 %v4841
    %6651 = vmatpush.bf16.msra.mxu0 %v4833
    %6652 = vmatpush.bf16.msra.mxu0 %v4825
    %6653 = vmatpush.bf16.msra.mxu0 %v4817
    %6654 = vmatpush.bf16.msra.mxu0 %v4809
    %6655 = vmatpush.bf16.msra.mxu0 %v4801
    %6656 = vmatmul.bf16.gmra.mxu0 %v166
    %v6657 = vpop.f32.mrf.mxu0
    %v6658 = vadd.f32 %v6645, %v6657
    %v6659 = vpop.f32.mrf.mxu0
    %6660 = vdwg.mxu0
    %6661 = vmatpush.bf16.msra.mxu0 %v4921
    %6662 = vmatpush.bf16.msra.mxu0 %v4913
    %6663 = vmatpush.bf16.msra.mxu0 %v4905
    %6664 = vmatpush.bf16.msra.mxu0 %v4897
    %6665 = vmatpush.bf16.msra.mxu0 %v4889
    %6666 = vmatpush.bf16.msra.mxu0 %v4881
    %6667 = vmatpush.bf16.msra.mxu0 %v4873
    %6668 = vmatpush.bf16.msra.mxu0 %v4865
    %6669 = vmatmul.bf16.gmra.mxu0 %v167
    %v6670 = vpop.f32.mrf.mxu0
    %v6671 = vadd.f32 %v6658, %v6670
    %v6672 = vpop.f32.mrf.mxu0
    %6673 = vdwg.mxu0
    %6674 = vmatpush.bf16.msra.mxu0 %v4985
    %6675 = vmatpush.bf16.msra.mxu0 %v4977
    %6676 = vmatpush.bf16.msra.mxu0 %v4969
    %6677 = vmatpush.bf16.msra.mxu0 %v4961
    %6678 = vmatpush.bf16.msra.mxu0 %v4953
    %6679 = vmatpush.bf16.msra.mxu0 %v4945
    %6680 = vmatpush.bf16.msra.mxu0 %v4937
    %6681 = vmatpush.bf16.msra.mxu0 %v4929
    %6682 = vmatmul.bf16.gmra.mxu0 %v168
    %v6683 = vpop.f32.mrf.mxu0
    %v6684 = vadd.f32 %v6671, %v6683
    %v6685 = vpop.f32.mrf.mxu0
    %6686 = vdwg.mxu0
    %6687 = vmatpush.bf16.msra.mxu0 %v5049
    %6688 = vmatpush.bf16.msra.mxu0 %v5041
    %6689 = vmatpush.bf16.msra.mxu0 %v5033
    %6690 = vmatpush.bf16.msra.mxu0 %v5025
    %6691 = vmatpush.bf16.msra.mxu0 %v5017
    %6692 = vmatpush.bf16.msra.mxu0 %v5009
    %6693 = vmatpush.bf16.msra.mxu0 %v5001
    %6694 = vmatpush.bf16.msra.mxu0 %v4993
    %6695 = vmatmul.bf16.gmra.mxu0 %v169
    %v6696 = vpop.f32.mrf.mxu0
    %v6697 = vadd.f32 %v6684, %v6696
    %v6698 = vpop.f32.mrf.mxu0
    %6699 = vdwg.mxu0
    %6700 = vmatpush.bf16.msra.mxu0 %v5113
    %6701 = vmatpush.bf16.msra.mxu0 %v5105
    %6702 = vmatpush.bf16.msra.mxu0 %v5097
    %6703 = vmatpush.bf16.msra.mxu0 %v5089
    %6704 = vmatpush.bf16.msra.mxu0 %v5081
    %6705 = vmatpush.bf16.msra.mxu0 %v5073
    %6706 = vmatpush.bf16.msra.mxu0 %v5065
    %6707 = vmatpush.bf16.msra.mxu0 %v5057
    %6708 = vmatmul.bf16.gmra.mxu0 %v170
    %v6709 = vpop.f32.mrf.mxu0
    %v6710 = vadd.f32 %v6697, %v6709
    %v6711 = vpop.f32.mrf.mxu0
    %6712 = vdwg.mxu0
    %6713 = vmatpush.bf16.msra.mxu0 %v5177
    %6714 = vmatpush.bf16.msra.mxu0 %v5169
    %6715 = vmatpush.bf16.msra.mxu0 %v5161
    %6716 = vmatpush.bf16.msra.mxu0 %v5153
    %6717 = vmatpush.bf16.msra.mxu0 %v5145
    %6718 = vmatpush.bf16.msra.mxu0 %v5137
    %6719 = vmatpush.bf16.msra.mxu0 %v5129
    %6720 = vmatpush.bf16.msra.mxu0 %v5121
    %6721 = vmatmul.bf16.gmra.mxu0 %v171
    %v6722 = vpop.f32.mrf.mxu0
    %v6723 = vadd.f32 %v6710, %v6722
    %v6724 = vpop.f32.mrf.mxu0
    %6725 = vdwg.mxu0
    %6726 = vmatpush.bf16.msra.mxu0 %v5241
    %6727 = vmatpush.bf16.msra.mxu0 %v5233
    %6728 = vmatpush.bf16.msra.mxu0 %v5225
    %6729 = vmatpush.bf16.msra.mxu0 %v5217
    %6730 = vmatpush.bf16.msra.mxu0 %v5209
    %6731 = vmatpush.bf16.msra.mxu0 %v5201
    %6732 = vmatpush.bf16.msra.mxu0 %v5193
    %6733 = vmatpush.bf16.msra.mxu0 %v5185
    %6734 = vmatmul.bf16.gmra.mxu0 %v172
    %v6735 = vpop.f32.mrf.mxu0
    %v6736 = vadd.f32 %v6723, %v6735
    %v6737 = vpop.f32.mrf.mxu0
    %6738 = vdwg.mxu0
    %6739 = vmatpush.bf16.msra.mxu0 %v5305
    %6740 = vmatpush.bf16.msra.mxu0 %v5297
    %6741 = vmatpush.bf16.msra.mxu0 %v5289
    %6742 = vmatpush.bf16.msra.mxu0 %v5281
    %6743 = vmatpush.bf16.msra.mxu0 %v5273
    %6744 = vmatpush.bf16.msra.mxu0 %v5265
    %6745 = vmatpush.bf16.msra.mxu0 %v5257
    %6746 = vmatpush.bf16.msra.mxu0 %v5249
    %6747 = vmatmul.bf16.gmra.mxu0 %v173
    %v6748 = vpop.f32.mrf.mxu0
    %v6749 = vadd.f32 %v6736, %v6748
    %v6750 = vpop.f32.mrf.mxu0
    %6751 = vdwg.mxu0
    %6752 = vmatpush.bf16.msra.mxu0 %v4346
    %6753 = vmatpush.bf16.msra.mxu0 %v4338
    %6754 = vmatpush.bf16.msra.mxu0 %v4330
    %6755 = vmatpush.bf16.msra.mxu0 %v4322
    %6756 = vmatpush.bf16.msra.mxu0 %v4314
    %6757 = vmatpush.bf16.msra.mxu0 %v4306
    %6758 = vmatpush.bf16.msra.mxu0 %v4298
    %6759 = vmatpush.bf16.msra.mxu0 %v4290
    %6760 = vmatmul.bf16.gmra.mxu0 %v158
    %v6761 = vpop.f32.mrf.mxu0
    %v6762 = vadd.f32 %v1202, %v6761
    %v6763 = vpop.f32.mrf.mxu0
    %6764 = vdwg.mxu0
    %6765 = vmatpush.bf16.msra.mxu0 %v4410
    %6766 = vmatpush.bf16.msra.mxu0 %v4402
    %6767 = vmatpush.bf16.msra.mxu0 %v4394
    %6768 = vmatpush.bf16.msra.mxu0 %v4386
    %6769 = vmatpush.bf16.msra.mxu0 %v4378
    %6770 = vmatpush.bf16.msra.mxu0 %v4370
    %6771 = vmatpush.bf16.msra.mxu0 %v4362
    %6772 = vmatpush.bf16.msra.mxu0 %v4354
    %6773 = vmatmul.bf16.gmra.mxu0 %v159
    %v6774 = vpop.f32.mrf.mxu0
    %v6775 = vadd.f32 %v6762, %v6774
    %v6776 = vpop.f32.mrf.mxu0
    %6777 = vdwg.mxu0
    %6778 = vmatpush.bf16.msra.mxu0 %v4474
    %6779 = vmatpush.bf16.msra.mxu0 %v4466
    %6780 = vmatpush.bf16.msra.mxu0 %v4458
    %6781 = vmatpush.bf16.msra.mxu0 %v4450
    %6782 = vmatpush.bf16.msra.mxu0 %v4442
    %6783 = vmatpush.bf16.msra.mxu0 %v4434
    %6784 = vmatpush.bf16.msra.mxu0 %v4426
    %6785 = vmatpush.bf16.msra.mxu0 %v4418
    %6786 = vmatmul.bf16.gmra.mxu0 %v160
    %v6787 = vpop.f32.mrf.mxu0
    %v6788 = vadd.f32 %v6775, %v6787
    %v6789 = vpop.f32.mrf.mxu0
    %6790 = vdwg.mxu0
    %6791 = vmatpush.bf16.msra.mxu0 %v4538
    %6792 = vmatpush.bf16.msra.mxu0 %v4530
    %6793 = vmatpush.bf16.msra.mxu0 %v4522
    %6794 = vmatpush.bf16.msra.mxu0 %v4514
    %6795 = vmatpush.bf16.msra.mxu0 %v4506
    %6796 = vmatpush.bf16.msra.mxu0 %v4498
    %6797 = vmatpush.bf16.msra.mxu0 %v4490
    %6798 = vmatpush.bf16.msra.mxu0 %v4482
    %6799 = vmatmul.bf16.gmra.mxu0 %v161
    %v6800 = vpop.f32.mrf.mxu0
    %v6801 = vadd.f32 %v6788, %v6800
    %v6802 = vpop.f32.mrf.mxu0
    %6803 = vdwg.mxu0
    %6804 = vmatpush.bf16.msra.mxu0 %v4602
    %6805 = vmatpush.bf16.msra.mxu0 %v4594
    %6806 = vmatpush.bf16.msra.mxu0 %v4586
    %6807 = vmatpush.bf16.msra.mxu0 %v4578
    %6808 = vmatpush.bf16.msra.mxu0 %v4570
    %6809 = vmatpush.bf16.msra.mxu0 %v4562
    %6810 = vmatpush.bf16.msra.mxu0 %v4554
    %6811 = vmatpush.bf16.msra.mxu0 %v4546
    %6812 = vmatmul.bf16.gmra.mxu0 %v162
    %v6813 = vpop.f32.mrf.mxu0
    %v6814 = vadd.f32 %v6801, %v6813
    %v6815 = vpop.f32.mrf.mxu0
    %6816 = vdwg.mxu0
    %6817 = vmatpush.bf16.msra.mxu0 %v4666
    %6818 = vmatpush.bf16.msra.mxu0 %v4658
    %6819 = vmatpush.bf16.msra.mxu0 %v4650
    %6820 = vmatpush.bf16.msra.mxu0 %v4642
    %6821 = vmatpush.bf16.msra.mxu0 %v4634
    %6822 = vmatpush.bf16.msra.mxu0 %v4626
    %6823 = vmatpush.bf16.msra.mxu0 %v4618
    %6824 = vmatpush.bf16.msra.mxu0 %v4610
    %6825 = vmatmul.bf16.gmra.mxu0 %v163
    %v6826 = vpop.f32.mrf.mxu0
    %v6827 = vadd.f32 %v6814, %v6826
    %v6828 = vpop.f32.mrf.mxu0
    %6829 = vdwg.mxu0
    %6830 = vmatpush.bf16.msra.mxu0 %v4730
    %6831 = vmatpush.bf16.msra.mxu0 %v4722
    %6832 = vmatpush.bf16.msra.mxu0 %v4714
    %6833 = vmatpush.bf16.msra.mxu0 %v4706
    %6834 = vmatpush.bf16.msra.mxu0 %v4698
    %6835 = vmatpush.bf16.msra.mxu0 %v4690
    %6836 = vmatpush.bf16.msra.mxu0 %v4682
    %6837 = vmatpush.bf16.msra.mxu0 %v4674
    %6838 = vmatmul.bf16.gmra.mxu0 %v164
    %v6839 = vpop.f32.mrf.mxu0
    %v6840 = vadd.f32 %v6827, %v6839
    %v6841 = vpop.f32.mrf.mxu0
    %6842 = vdwg.mxu0
    %6843 = vmatpush.bf16.msra.mxu0 %v4794
    %6844 = vmatpush.bf16.msra.mxu0 %v4786
    %6845 = vmatpush.bf16.msra.mxu0 %v4778
    %6846 = vmatpush.bf16.msra.mxu0 %v4770
    %6847 = vmatpush.bf16.msra.mxu0 %v4762
    %6848 = vmatpush.bf16.msra.mxu0 %v4754
    %6849 = vmatpush.bf16.msra.mxu0 %v4746
    %6850 = vmatpush.bf16.msra.mxu0 %v4738
    %6851 = vmatmul.bf16.gmra.mxu0 %v165
    %v6852 = vpop.f32.mrf.mxu0
    %v6853 = vadd.f32 %v6840, %v6852
    %v6854 = vpop.f32.mrf.mxu0
    %6855 = vdwg.mxu0
    %6856 = vmatpush.bf16.msra.mxu0 %v4858
    %6857 = vmatpush.bf16.msra.mxu0 %v4850
    %6858 = vmatpush.bf16.msra.mxu0 %v4842
    %6859 = vmatpush.bf16.msra.mxu0 %v4834
    %6860 = vmatpush.bf16.msra.mxu0 %v4826
    %6861 = vmatpush.bf16.msra.mxu0 %v4818
    %6862 = vmatpush.bf16.msra.mxu0 %v4810
    %6863 = vmatpush.bf16.msra.mxu0 %v4802
    %6864 = vmatmul.bf16.gmra.mxu0 %v166
    %v6865 = vpop.f32.mrf.mxu0
    %v6866 = vadd.f32 %v6853, %v6865
    %v6867 = vpop.f32.mrf.mxu0
    %6868 = vdwg.mxu0
    %6869 = vmatpush.bf16.msra.mxu0 %v4922
    %6870 = vmatpush.bf16.msra.mxu0 %v4914
    %6871 = vmatpush.bf16.msra.mxu0 %v4906
    %6872 = vmatpush.bf16.msra.mxu0 %v4898
    %6873 = vmatpush.bf16.msra.mxu0 %v4890
    %6874 = vmatpush.bf16.msra.mxu0 %v4882
    %6875 = vmatpush.bf16.msra.mxu0 %v4874
    %6876 = vmatpush.bf16.msra.mxu0 %v4866
    %6877 = vmatmul.bf16.gmra.mxu0 %v167
    %v6878 = vpop.f32.mrf.mxu0
    %v6879 = vadd.f32 %v6866, %v6878
    %v6880 = vpop.f32.mrf.mxu0
    %6881 = vdwg.mxu0
    %6882 = vmatpush.bf16.msra.mxu0 %v4986
    %6883 = vmatpush.bf16.msra.mxu0 %v4978
    %6884 = vmatpush.bf16.msra.mxu0 %v4970
    %6885 = vmatpush.bf16.msra.mxu0 %v4962
    %6886 = vmatpush.bf16.msra.mxu0 %v4954
    %6887 = vmatpush.bf16.msra.mxu0 %v4946
    %6888 = vmatpush.bf16.msra.mxu0 %v4938
    %6889 = vmatpush.bf16.msra.mxu0 %v4930
    %6890 = vmatmul.bf16.gmra.mxu0 %v168
    %v6891 = vpop.f32.mrf.mxu0
    %v6892 = vadd.f32 %v6879, %v6891
    %v6893 = vpop.f32.mrf.mxu0
    %6894 = vdwg.mxu0
    %6895 = vmatpush.bf16.msra.mxu0 %v5050
    %6896 = vmatpush.bf16.msra.mxu0 %v5042
    %6897 = vmatpush.bf16.msra.mxu0 %v5034
    %6898 = vmatpush.bf16.msra.mxu0 %v5026
    %6899 = vmatpush.bf16.msra.mxu0 %v5018
    %6900 = vmatpush.bf16.msra.mxu0 %v5010
    %6901 = vmatpush.bf16.msra.mxu0 %v5002
    %6902 = vmatpush.bf16.msra.mxu0 %v4994
    %6903 = vmatmul.bf16.gmra.mxu0 %v169
    %v6904 = vpop.f32.mrf.mxu0
    %v6905 = vadd.f32 %v6892, %v6904
    %v6906 = vpop.f32.mrf.mxu0
    %6907 = vdwg.mxu0
    %6908 = vmatpush.bf16.msra.mxu0 %v5114
    %6909 = vmatpush.bf16.msra.mxu0 %v5106
    %6910 = vmatpush.bf16.msra.mxu0 %v5098
    %6911 = vmatpush.bf16.msra.mxu0 %v5090
    %6912 = vmatpush.bf16.msra.mxu0 %v5082
    %6913 = vmatpush.bf16.msra.mxu0 %v5074
    %6914 = vmatpush.bf16.msra.mxu0 %v5066
    %6915 = vmatpush.bf16.msra.mxu0 %v5058
    %6916 = vmatmul.bf16.gmra.mxu0 %v170
    %v6917 = vpop.f32.mrf.mxu0
    %v6918 = vadd.f32 %v6905, %v6917
    %v6919 = vpop.f32.mrf.mxu0
    %6920 = vdwg.mxu0
    %6921 = vmatpush.bf16.msra.mxu0 %v5178
    %6922 = vmatpush.bf16.msra.mxu0 %v5170
    %6923 = vmatpush.bf16.msra.mxu0 %v5162
    %6924 = vmatpush.bf16.msra.mxu0 %v5154
    %6925 = vmatpush.bf16.msra.mxu0 %v5146
    %6926 = vmatpush.bf16.msra.mxu0 %v5138
    %6927 = vmatpush.bf16.msra.mxu0 %v5130
    %6928 = vmatpush.bf16.msra.mxu0 %v5122
    %6929 = vmatmul.bf16.gmra.mxu0 %v171
    %v6930 = vpop.f32.mrf.mxu0
    %v6931 = vadd.f32 %v6918, %v6930
    %v6932 = vpop.f32.mrf.mxu0
    %6933 = vdwg.mxu0
    %6934 = vmatpush.bf16.msra.mxu0 %v5242
    %6935 = vmatpush.bf16.msra.mxu0 %v5234
    %6936 = vmatpush.bf16.msra.mxu0 %v5226
    %6937 = vmatpush.bf16.msra.mxu0 %v5218
    %6938 = vmatpush.bf16.msra.mxu0 %v5210
    %6939 = vmatpush.bf16.msra.mxu0 %v5202
    %6940 = vmatpush.bf16.msra.mxu0 %v5194
    %6941 = vmatpush.bf16.msra.mxu0 %v5186
    %6942 = vmatmul.bf16.gmra.mxu0 %v172
    %v6943 = vpop.f32.mrf.mxu0
    %v6944 = vadd.f32 %v6931, %v6943
    %v6945 = vpop.f32.mrf.mxu0
    %6946 = vdwg.mxu0
    %6947 = vmatpush.bf16.msra.mxu0 %v5306
    %6948 = vmatpush.bf16.msra.mxu0 %v5298
    %6949 = vmatpush.bf16.msra.mxu0 %v5290
    %6950 = vmatpush.bf16.msra.mxu0 %v5282
    %6951 = vmatpush.bf16.msra.mxu0 %v5274
    %6952 = vmatpush.bf16.msra.mxu0 %v5266
    %6953 = vmatpush.bf16.msra.mxu0 %v5258
    %6954 = vmatpush.bf16.msra.mxu0 %v5250
    %6955 = vmatmul.bf16.gmra.mxu0 %v173
    %v6956 = vpop.f32.mrf.mxu0
    %v6957 = vadd.f32 %v6944, %v6956
    %v6958 = vpop.f32.mrf.mxu0
    %6959 = vdwg.mxu0
    %6960 = vmatpush.bf16.msra.mxu0 %v4347
    %6961 = vmatpush.bf16.msra.mxu0 %v4339
    %6962 = vmatpush.bf16.msra.mxu0 %v4331
    %6963 = vmatpush.bf16.msra.mxu0 %v4323
    %6964 = vmatpush.bf16.msra.mxu0 %v4315
    %6965 = vmatpush.bf16.msra.mxu0 %v4307
    %6966 = vmatpush.bf16.msra.mxu0 %v4299
    %6967 = vmatpush.bf16.msra.mxu0 %v4291
    %6968 = vmatmul.bf16.gmra.mxu0 %v158
    %v6969 = vpop.f32.mrf.mxu0
    %v6970 = vadd.f32 %v1203, %v6969
    %v6971 = vpop.f32.mrf.mxu0
    %6972 = vdwg.mxu0
    %6973 = vmatpush.bf16.msra.mxu0 %v4411
    %6974 = vmatpush.bf16.msra.mxu0 %v4403
    %6975 = vmatpush.bf16.msra.mxu0 %v4395
    %6976 = vmatpush.bf16.msra.mxu0 %v4387
    %6977 = vmatpush.bf16.msra.mxu0 %v4379
    %6978 = vmatpush.bf16.msra.mxu0 %v4371
    %6979 = vmatpush.bf16.msra.mxu0 %v4363
    %6980 = vmatpush.bf16.msra.mxu0 %v4355
    %6981 = vmatmul.bf16.gmra.mxu0 %v159
    %v6982 = vpop.f32.mrf.mxu0
    %v6983 = vadd.f32 %v6970, %v6982
    %v6984 = vpop.f32.mrf.mxu0
    %6985 = vdwg.mxu0
    %6986 = vmatpush.bf16.msra.mxu0 %v4475
    %6987 = vmatpush.bf16.msra.mxu0 %v4467
    %6988 = vmatpush.bf16.msra.mxu0 %v4459
    %6989 = vmatpush.bf16.msra.mxu0 %v4451
    %6990 = vmatpush.bf16.msra.mxu0 %v4443
    %6991 = vmatpush.bf16.msra.mxu0 %v4435
    %6992 = vmatpush.bf16.msra.mxu0 %v4427
    %6993 = vmatpush.bf16.msra.mxu0 %v4419
    %6994 = vmatmul.bf16.gmra.mxu0 %v160
    %v6995 = vpop.f32.mrf.mxu0
    %v6996 = vadd.f32 %v6983, %v6995
    %v6997 = vpop.f32.mrf.mxu0
    %6998 = vdwg.mxu0
    %6999 = vmatpush.bf16.msra.mxu0 %v4539
    %7000 = vmatpush.bf16.msra.mxu0 %v4531
    %7001 = vmatpush.bf16.msra.mxu0 %v4523
    %7002 = vmatpush.bf16.msra.mxu0 %v4515
    %7003 = vmatpush.bf16.msra.mxu0 %v4507
    %7004 = vmatpush.bf16.msra.mxu0 %v4499
    %7005 = vmatpush.bf16.msra.mxu0 %v4491
    %7006 = vmatpush.bf16.msra.mxu0 %v4483
    %7007 = vmatmul.bf16.gmra.mxu0 %v161
    %v7008 = vpop.f32.mrf.mxu0
    %v7009 = vadd.f32 %v6996, %v7008
    %v7010 = vpop.f32.mrf.mxu0
    %7011 = vdwg.mxu0
    %7012 = vmatpush.bf16.msra.mxu0 %v4603
    %7013 = vmatpush.bf16.msra.mxu0 %v4595
    %7014 = vmatpush.bf16.msra.mxu0 %v4587
    %7015 = vmatpush.bf16.msra.mxu0 %v4579
    %7016 = vmatpush.bf16.msra.mxu0 %v4571
    %7017 = vmatpush.bf16.msra.mxu0 %v4563
    %7018 = vmatpush.bf16.msra.mxu0 %v4555
    %7019 = vmatpush.bf16.msra.mxu0 %v4547
    %7020 = vmatmul.bf16.gmra.mxu0 %v162
    %v7021 = vpop.f32.mrf.mxu0
    %v7022 = vadd.f32 %v7009, %v7021
    %v7023 = vpop.f32.mrf.mxu0
    %7024 = vdwg.mxu0
    %7025 = vmatpush.bf16.msra.mxu0 %v4667
    %7026 = vmatpush.bf16.msra.mxu0 %v4659
    %7027 = vmatpush.bf16.msra.mxu0 %v4651
    %7028 = vmatpush.bf16.msra.mxu0 %v4643
    %7029 = vmatpush.bf16.msra.mxu0 %v4635
    %7030 = vmatpush.bf16.msra.mxu0 %v4627
    %7031 = vmatpush.bf16.msra.mxu0 %v4619
    %7032 = vmatpush.bf16.msra.mxu0 %v4611
    %7033 = vmatmul.bf16.gmra.mxu0 %v163
    %v7034 = vpop.f32.mrf.mxu0
    %v7035 = vadd.f32 %v7022, %v7034
    %v7036 = vpop.f32.mrf.mxu0
    %7037 = vdwg.mxu0
    %7038 = vmatpush.bf16.msra.mxu0 %v4731
    %7039 = vmatpush.bf16.msra.mxu0 %v4723
    %7040 = vmatpush.bf16.msra.mxu0 %v4715
    %7041 = vmatpush.bf16.msra.mxu0 %v4707
    %7042 = vmatpush.bf16.msra.mxu0 %v4699
    %7043 = vmatpush.bf16.msra.mxu0 %v4691
    %7044 = vmatpush.bf16.msra.mxu0 %v4683
    %7045 = vmatpush.bf16.msra.mxu0 %v4675
    %7046 = vmatmul.bf16.gmra.mxu0 %v164
    %v7047 = vpop.f32.mrf.mxu0
    %v7048 = vadd.f32 %v7035, %v7047
    %v7049 = vpop.f32.mrf.mxu0
    %7050 = vdwg.mxu0
    %7051 = vmatpush.bf16.msra.mxu0 %v4795
    %7052 = vmatpush.bf16.msra.mxu0 %v4787
    %7053 = vmatpush.bf16.msra.mxu0 %v4779
    %7054 = vmatpush.bf16.msra.mxu0 %v4771
    %7055 = vmatpush.bf16.msra.mxu0 %v4763
    %7056 = vmatpush.bf16.msra.mxu0 %v4755
    %7057 = vmatpush.bf16.msra.mxu0 %v4747
    %7058 = vmatpush.bf16.msra.mxu0 %v4739
    %7059 = vmatmul.bf16.gmra.mxu0 %v165
    %v7060 = vpop.f32.mrf.mxu0
    %v7061 = vadd.f32 %v7048, %v7060
    %v7062 = vpop.f32.mrf.mxu0
    %7063 = vdwg.mxu0
    %7064 = vmatpush.bf16.msra.mxu0 %v4859
    %7065 = vmatpush.bf16.msra.mxu0 %v4851
    %7066 = vmatpush.bf16.msra.mxu0 %v4843
    %7067 = vmatpush.bf16.msra.mxu0 %v4835
    %7068 = vmatpush.bf16.msra.mxu0 %v4827
    %7069 = vmatpush.bf16.msra.mxu0 %v4819
    %7070 = vmatpush.bf16.msra.mxu0 %v4811
    %7071 = vmatpush.bf16.msra.mxu0 %v4803
    %7072 = vmatmul.bf16.gmra.mxu0 %v166
    %v7073 = vpop.f32.mrf.mxu0
    %v7074 = vadd.f32 %v7061, %v7073
    %v7075 = vpop.f32.mrf.mxu0
    %7076 = vdwg.mxu0
    %7077 = vmatpush.bf16.msra.mxu0 %v4923
    %7078 = vmatpush.bf16.msra.mxu0 %v4915
    %7079 = vmatpush.bf16.msra.mxu0 %v4907
    %7080 = vmatpush.bf16.msra.mxu0 %v4899
    %7081 = vmatpush.bf16.msra.mxu0 %v4891
    %7082 = vmatpush.bf16.msra.mxu0 %v4883
    %7083 = vmatpush.bf16.msra.mxu0 %v4875
    %7084 = vmatpush.bf16.msra.mxu0 %v4867
    %7085 = vmatmul.bf16.gmra.mxu0 %v167
    %v7086 = vpop.f32.mrf.mxu0
    %v7087 = vadd.f32 %v7074, %v7086
    %v7088 = vpop.f32.mrf.mxu0
    %7089 = vdwg.mxu0
    %7090 = vmatpush.bf16.msra.mxu0 %v4987
    %7091 = vmatpush.bf16.msra.mxu0 %v4979
    %7092 = vmatpush.bf16.msra.mxu0 %v4971
    %7093 = vmatpush.bf16.msra.mxu0 %v4963
    %7094 = vmatpush.bf16.msra.mxu0 %v4955
    %7095 = vmatpush.bf16.msra.mxu0 %v4947
    %7096 = vmatpush.bf16.msra.mxu0 %v4939
    %7097 = vmatpush.bf16.msra.mxu0 %v4931
    %7098 = vmatmul.bf16.gmra.mxu0 %v168
    %v7099 = vpop.f32.mrf.mxu0
    %v7100 = vadd.f32 %v7087, %v7099
    %v7101 = vpop.f32.mrf.mxu0
    %7102 = vdwg.mxu0
    %7103 = vmatpush.bf16.msra.mxu0 %v5051
    %7104 = vmatpush.bf16.msra.mxu0 %v5043
    %7105 = vmatpush.bf16.msra.mxu0 %v5035
    %7106 = vmatpush.bf16.msra.mxu0 %v5027
    %7107 = vmatpush.bf16.msra.mxu0 %v5019
    %7108 = vmatpush.bf16.msra.mxu0 %v5011
    %7109 = vmatpush.bf16.msra.mxu0 %v5003
    %7110 = vmatpush.bf16.msra.mxu0 %v4995
    %7111 = vmatmul.bf16.gmra.mxu0 %v169
    %v7112 = vpop.f32.mrf.mxu0
    %v7113 = vadd.f32 %v7100, %v7112
    %v7114 = vpop.f32.mrf.mxu0
    %7115 = vdwg.mxu0
    %7116 = vmatpush.bf16.msra.mxu0 %v5115
    %7117 = vmatpush.bf16.msra.mxu0 %v5107
    %7118 = vmatpush.bf16.msra.mxu0 %v5099
    %7119 = vmatpush.bf16.msra.mxu0 %v5091
    %7120 = vmatpush.bf16.msra.mxu0 %v5083
    %7121 = vmatpush.bf16.msra.mxu0 %v5075
    %7122 = vmatpush.bf16.msra.mxu0 %v5067
    %7123 = vmatpush.bf16.msra.mxu0 %v5059
    %7124 = vmatmul.bf16.gmra.mxu0 %v170
    %v7125 = vpop.f32.mrf.mxu0
    %v7126 = vadd.f32 %v7113, %v7125
    %v7127 = vpop.f32.mrf.mxu0
    %7128 = vdwg.mxu0
    %7129 = vmatpush.bf16.msra.mxu0 %v5179
    %7130 = vmatpush.bf16.msra.mxu0 %v5171
    %7131 = vmatpush.bf16.msra.mxu0 %v5163
    %7132 = vmatpush.bf16.msra.mxu0 %v5155
    %7133 = vmatpush.bf16.msra.mxu0 %v5147
    %7134 = vmatpush.bf16.msra.mxu0 %v5139
    %7135 = vmatpush.bf16.msra.mxu0 %v5131
    %7136 = vmatpush.bf16.msra.mxu0 %v5123
    %7137 = vmatmul.bf16.gmra.mxu0 %v171
    %v7138 = vpop.f32.mrf.mxu0
    %v7139 = vadd.f32 %v7126, %v7138
    %v7140 = vpop.f32.mrf.mxu0
    %7141 = vdwg.mxu0
    %7142 = vmatpush.bf16.msra.mxu0 %v5243
    %7143 = vmatpush.bf16.msra.mxu0 %v5235
    %7144 = vmatpush.bf16.msra.mxu0 %v5227
    %7145 = vmatpush.bf16.msra.mxu0 %v5219
    %7146 = vmatpush.bf16.msra.mxu0 %v5211
    %7147 = vmatpush.bf16.msra.mxu0 %v5203
    %7148 = vmatpush.bf16.msra.mxu0 %v5195
    %7149 = vmatpush.bf16.msra.mxu0 %v5187
    %7150 = vmatmul.bf16.gmra.mxu0 %v172
    %v7151 = vpop.f32.mrf.mxu0
    %v7152 = vadd.f32 %v7139, %v7151
    %v7153 = vpop.f32.mrf.mxu0
    %7154 = vdwg.mxu0
    %7155 = vmatpush.bf16.msra.mxu0 %v5307
    %7156 = vmatpush.bf16.msra.mxu0 %v5299
    %7157 = vmatpush.bf16.msra.mxu0 %v5291
    %7158 = vmatpush.bf16.msra.mxu0 %v5283
    %7159 = vmatpush.bf16.msra.mxu0 %v5275
    %7160 = vmatpush.bf16.msra.mxu0 %v5267
    %7161 = vmatpush.bf16.msra.mxu0 %v5259
    %7162 = vmatpush.bf16.msra.mxu0 %v5251
    %7163 = vmatmul.bf16.gmra.mxu0 %v173
    %v7164 = vpop.f32.mrf.mxu0
    %v7165 = vadd.f32 %v7152, %v7164
    %v7166 = vpop.f32.mrf.mxu0
    %7167 = vdwg.mxu0
    %7168 = vmatpush.bf16.msra.mxu0 %v4348
    %7169 = vmatpush.bf16.msra.mxu0 %v4340
    %7170 = vmatpush.bf16.msra.mxu0 %v4332
    %7171 = vmatpush.bf16.msra.mxu0 %v4324
    %7172 = vmatpush.bf16.msra.mxu0 %v4316
    %7173 = vmatpush.bf16.msra.mxu0 %v4308
    %7174 = vmatpush.bf16.msra.mxu0 %v4300
    %7175 = vmatpush.bf16.msra.mxu0 %v4292
    %7176 = vmatmul.bf16.gmra.mxu0 %v158
    %v7177 = vpop.f32.mrf.mxu0
    %v7178 = vadd.f32 %v1204, %v7177
    %v7179 = vpop.f32.mrf.mxu0
    %7180 = vdwg.mxu0
    %7181 = vmatpush.bf16.msra.mxu0 %v4412
    %7182 = vmatpush.bf16.msra.mxu0 %v4404
    %7183 = vmatpush.bf16.msra.mxu0 %v4396
    %7184 = vmatpush.bf16.msra.mxu0 %v4388
    %7185 = vmatpush.bf16.msra.mxu0 %v4380
    %7186 = vmatpush.bf16.msra.mxu0 %v4372
    %7187 = vmatpush.bf16.msra.mxu0 %v4364
    %7188 = vmatpush.bf16.msra.mxu0 %v4356
    %7189 = vmatmul.bf16.gmra.mxu0 %v159
    %v7190 = vpop.f32.mrf.mxu0
    %v7191 = vadd.f32 %v7178, %v7190
    %v7192 = vpop.f32.mrf.mxu0
    %7193 = vdwg.mxu0
    %7194 = vmatpush.bf16.msra.mxu0 %v4476
    %7195 = vmatpush.bf16.msra.mxu0 %v4468
    %7196 = vmatpush.bf16.msra.mxu0 %v4460
    %7197 = vmatpush.bf16.msra.mxu0 %v4452
    %7198 = vmatpush.bf16.msra.mxu0 %v4444
    %7199 = vmatpush.bf16.msra.mxu0 %v4436
    %7200 = vmatpush.bf16.msra.mxu0 %v4428
    %7201 = vmatpush.bf16.msra.mxu0 %v4420
    %7202 = vmatmul.bf16.gmra.mxu0 %v160
    %v7203 = vpop.f32.mrf.mxu0
    %v7204 = vadd.f32 %v7191, %v7203
    %v7205 = vpop.f32.mrf.mxu0
    %7206 = vdwg.mxu0
    %7207 = vmatpush.bf16.msra.mxu0 %v4540
    %7208 = vmatpush.bf16.msra.mxu0 %v4532
    %7209 = vmatpush.bf16.msra.mxu0 %v4524
    %7210 = vmatpush.bf16.msra.mxu0 %v4516
    %7211 = vmatpush.bf16.msra.mxu0 %v4508
    %7212 = vmatpush.bf16.msra.mxu0 %v4500
    %7213 = vmatpush.bf16.msra.mxu0 %v4492
    %7214 = vmatpush.bf16.msra.mxu0 %v4484
    %7215 = vmatmul.bf16.gmra.mxu0 %v161
    %v7216 = vpop.f32.mrf.mxu0
    %v7217 = vadd.f32 %v7204, %v7216
    %v7218 = vpop.f32.mrf.mxu0
    %7219 = vdwg.mxu0
    %7220 = vmatpush.bf16.msra.mxu0 %v4604
    %7221 = vmatpush.bf16.msra.mxu0 %v4596
    %7222 = vmatpush.bf16.msra.mxu0 %v4588
    %7223 = vmatpush.bf16.msra.mxu0 %v4580
    %7224 = vmatpush.bf16.msra.mxu0 %v4572
    %7225 = vmatpush.bf16.msra.mxu0 %v4564
    %7226 = vmatpush.bf16.msra.mxu0 %v4556
    %7227 = vmatpush.bf16.msra.mxu0 %v4548
    %7228 = vmatmul.bf16.gmra.mxu0 %v162
    %v7229 = vpop.f32.mrf.mxu0
    %v7230 = vadd.f32 %v7217, %v7229
    %v7231 = vpop.f32.mrf.mxu0
    %7232 = vdwg.mxu0
    %7233 = vmatpush.bf16.msra.mxu0 %v4668
    %7234 = vmatpush.bf16.msra.mxu0 %v4660
    %7235 = vmatpush.bf16.msra.mxu0 %v4652
    %7236 = vmatpush.bf16.msra.mxu0 %v4644
    %7237 = vmatpush.bf16.msra.mxu0 %v4636
    %7238 = vmatpush.bf16.msra.mxu0 %v4628
    %7239 = vmatpush.bf16.msra.mxu0 %v4620
    %7240 = vmatpush.bf16.msra.mxu0 %v4612
    %7241 = vmatmul.bf16.gmra.mxu0 %v163
    %v7242 = vpop.f32.mrf.mxu0
    %v7243 = vadd.f32 %v7230, %v7242
    %v7244 = vpop.f32.mrf.mxu0
    %7245 = vdwg.mxu0
    %7246 = vmatpush.bf16.msra.mxu0 %v4732
    %7247 = vmatpush.bf16.msra.mxu0 %v4724
    %7248 = vmatpush.bf16.msra.mxu0 %v4716
    %7249 = vmatpush.bf16.msra.mxu0 %v4708
    %7250 = vmatpush.bf16.msra.mxu0 %v4700
    %7251 = vmatpush.bf16.msra.mxu0 %v4692
    %7252 = vmatpush.bf16.msra.mxu0 %v4684
    %7253 = vmatpush.bf16.msra.mxu0 %v4676
    %7254 = vmatmul.bf16.gmra.mxu0 %v164
    %v7255 = vpop.f32.mrf.mxu0
    %v7256 = vadd.f32 %v7243, %v7255
    %v7257 = vpop.f32.mrf.mxu0
    %7258 = vdwg.mxu0
    %7259 = vmatpush.bf16.msra.mxu0 %v4796
    %7260 = vmatpush.bf16.msra.mxu0 %v4788
    %7261 = vmatpush.bf16.msra.mxu0 %v4780
    %7262 = vmatpush.bf16.msra.mxu0 %v4772
    %7263 = vmatpush.bf16.msra.mxu0 %v4764
    %7264 = vmatpush.bf16.msra.mxu0 %v4756
    %7265 = vmatpush.bf16.msra.mxu0 %v4748
    %7266 = vmatpush.bf16.msra.mxu0 %v4740
    %7267 = vmatmul.bf16.gmra.mxu0 %v165
    %v7268 = vpop.f32.mrf.mxu0
    %v7269 = vadd.f32 %v7256, %v7268
    %v7270 = vpop.f32.mrf.mxu0
    %7271 = vdwg.mxu0
    %7272 = vmatpush.bf16.msra.mxu0 %v4860
    %7273 = vmatpush.bf16.msra.mxu0 %v4852
    %7274 = vmatpush.bf16.msra.mxu0 %v4844
    %7275 = vmatpush.bf16.msra.mxu0 %v4836
    %7276 = vmatpush.bf16.msra.mxu0 %v4828
    %7277 = vmatpush.bf16.msra.mxu0 %v4820
    %7278 = vmatpush.bf16.msra.mxu0 %v4812
    %7279 = vmatpush.bf16.msra.mxu0 %v4804
    %7280 = vmatmul.bf16.gmra.mxu0 %v166
    %v7281 = vpop.f32.mrf.mxu0
    %v7282 = vadd.f32 %v7269, %v7281
    %v7283 = vpop.f32.mrf.mxu0
    %7284 = vdwg.mxu0
    %7285 = vmatpush.bf16.msra.mxu0 %v4924
    %7286 = vmatpush.bf16.msra.mxu0 %v4916
    %7287 = vmatpush.bf16.msra.mxu0 %v4908
    %7288 = vmatpush.bf16.msra.mxu0 %v4900
    %7289 = vmatpush.bf16.msra.mxu0 %v4892
    %7290 = vmatpush.bf16.msra.mxu0 %v4884
    %7291 = vmatpush.bf16.msra.mxu0 %v4876
    %7292 = vmatpush.bf16.msra.mxu0 %v4868
    %7293 = vmatmul.bf16.gmra.mxu0 %v167
    %v7294 = vpop.f32.mrf.mxu0
    %v7295 = vadd.f32 %v7282, %v7294
    %v7296 = vpop.f32.mrf.mxu0
    %7297 = vdwg.mxu0
    %7298 = vmatpush.bf16.msra.mxu0 %v4988
    %7299 = vmatpush.bf16.msra.mxu0 %v4980
    %7300 = vmatpush.bf16.msra.mxu0 %v4972
    %7301 = vmatpush.bf16.msra.mxu0 %v4964
    %7302 = vmatpush.bf16.msra.mxu0 %v4956
    %7303 = vmatpush.bf16.msra.mxu0 %v4948
    %7304 = vmatpush.bf16.msra.mxu0 %v4940
    %7305 = vmatpush.bf16.msra.mxu0 %v4932
    %7306 = vmatmul.bf16.gmra.mxu0 %v168
    %v7307 = vpop.f32.mrf.mxu0
    %v7308 = vadd.f32 %v7295, %v7307
    %v7309 = vpop.f32.mrf.mxu0
    %7310 = vdwg.mxu0
    %7311 = vmatpush.bf16.msra.mxu0 %v5052
    %7312 = vmatpush.bf16.msra.mxu0 %v5044
    %7313 = vmatpush.bf16.msra.mxu0 %v5036
    %7314 = vmatpush.bf16.msra.mxu0 %v5028
    %7315 = vmatpush.bf16.msra.mxu0 %v5020
    %7316 = vmatpush.bf16.msra.mxu0 %v5012
    %7317 = vmatpush.bf16.msra.mxu0 %v5004
    %7318 = vmatpush.bf16.msra.mxu0 %v4996
    %7319 = vmatmul.bf16.gmra.mxu0 %v169
    %v7320 = vpop.f32.mrf.mxu0
    %v7321 = vadd.f32 %v7308, %v7320
    %v7322 = vpop.f32.mrf.mxu0
    %7323 = vdwg.mxu0
    %7324 = vmatpush.bf16.msra.mxu0 %v5116
    %7325 = vmatpush.bf16.msra.mxu0 %v5108
    %7326 = vmatpush.bf16.msra.mxu0 %v5100
    %7327 = vmatpush.bf16.msra.mxu0 %v5092
    %7328 = vmatpush.bf16.msra.mxu0 %v5084
    %7329 = vmatpush.bf16.msra.mxu0 %v5076
    %7330 = vmatpush.bf16.msra.mxu0 %v5068
    %7331 = vmatpush.bf16.msra.mxu0 %v5060
    %7332 = vmatmul.bf16.gmra.mxu0 %v170
    %v7333 = vpop.f32.mrf.mxu0
    %v7334 = vadd.f32 %v7321, %v7333
    %v7335 = vpop.f32.mrf.mxu0
    %7336 = vdwg.mxu0
    %7337 = vmatpush.bf16.msra.mxu0 %v5180
    %7338 = vmatpush.bf16.msra.mxu0 %v5172
    %7339 = vmatpush.bf16.msra.mxu0 %v5164
    %7340 = vmatpush.bf16.msra.mxu0 %v5156
    %7341 = vmatpush.bf16.msra.mxu0 %v5148
    %7342 = vmatpush.bf16.msra.mxu0 %v5140
    %7343 = vmatpush.bf16.msra.mxu0 %v5132
    %7344 = vmatpush.bf16.msra.mxu0 %v5124
    %7345 = vmatmul.bf16.gmra.mxu0 %v171
    %v7346 = vpop.f32.mrf.mxu0
    %v7347 = vadd.f32 %v7334, %v7346
    %v7348 = vpop.f32.mrf.mxu0
    %7349 = vdwg.mxu0
    %7350 = vmatpush.bf16.msra.mxu0 %v5244
    %7351 = vmatpush.bf16.msra.mxu0 %v5236
    %7352 = vmatpush.bf16.msra.mxu0 %v5228
    %7353 = vmatpush.bf16.msra.mxu0 %v5220
    %7354 = vmatpush.bf16.msra.mxu0 %v5212
    %7355 = vmatpush.bf16.msra.mxu0 %v5204
    %7356 = vmatpush.bf16.msra.mxu0 %v5196
    %7357 = vmatpush.bf16.msra.mxu0 %v5188
    %7358 = vmatmul.bf16.gmra.mxu0 %v172
    %v7359 = vpop.f32.mrf.mxu0
    %v7360 = vadd.f32 %v7347, %v7359
    %v7361 = vpop.f32.mrf.mxu0
    %7362 = vdwg.mxu0
    %7363 = vmatpush.bf16.msra.mxu0 %v5308
    %7364 = vmatpush.bf16.msra.mxu0 %v5300
    %7365 = vmatpush.bf16.msra.mxu0 %v5292
    %7366 = vmatpush.bf16.msra.mxu0 %v5284
    %7367 = vmatpush.bf16.msra.mxu0 %v5276
    %7368 = vmatpush.bf16.msra.mxu0 %v5268
    %7369 = vmatpush.bf16.msra.mxu0 %v5260
    %7370 = vmatpush.bf16.msra.mxu0 %v5252
    %7371 = vmatmul.bf16.gmra.mxu0 %v173
    %v7372 = vpop.f32.mrf.mxu0
    %v7373 = vadd.f32 %v7360, %v7372
    %v7374 = vpop.f32.mrf.mxu0
    %7375 = vdwg.mxu0
    %7376 = vmatpush.bf16.msra.mxu0 %v4349
    %7377 = vmatpush.bf16.msra.mxu0 %v4341
    %7378 = vmatpush.bf16.msra.mxu0 %v4333
    %7379 = vmatpush.bf16.msra.mxu0 %v4325
    %7380 = vmatpush.bf16.msra.mxu0 %v4317
    %7381 = vmatpush.bf16.msra.mxu0 %v4309
    %7382 = vmatpush.bf16.msra.mxu0 %v4301
    %7383 = vmatpush.bf16.msra.mxu0 %v4293
    %7384 = vmatmul.bf16.gmra.mxu0 %v158
    %v7385 = vpop.f32.mrf.mxu0
    %v7386 = vadd.f32 %v1205, %v7385
    %v7387 = vpop.f32.mrf.mxu0
    %7388 = vdwg.mxu0
    %7389 = vmatpush.bf16.msra.mxu0 %v4413
    %7390 = vmatpush.bf16.msra.mxu0 %v4405
    %7391 = vmatpush.bf16.msra.mxu0 %v4397
    %7392 = vmatpush.bf16.msra.mxu0 %v4389
    %7393 = vmatpush.bf16.msra.mxu0 %v4381
    %7394 = vmatpush.bf16.msra.mxu0 %v4373
    %7395 = vmatpush.bf16.msra.mxu0 %v4365
    %7396 = vmatpush.bf16.msra.mxu0 %v4357
    %7397 = vmatmul.bf16.gmra.mxu0 %v159
    %v7398 = vpop.f32.mrf.mxu0
    %v7399 = vadd.f32 %v7386, %v7398
    %v7400 = vpop.f32.mrf.mxu0
    %7401 = vdwg.mxu0
    %7402 = vmatpush.bf16.msra.mxu0 %v4477
    %7403 = vmatpush.bf16.msra.mxu0 %v4469
    %7404 = vmatpush.bf16.msra.mxu0 %v4461
    %7405 = vmatpush.bf16.msra.mxu0 %v4453
    %7406 = vmatpush.bf16.msra.mxu0 %v4445
    %7407 = vmatpush.bf16.msra.mxu0 %v4437
    %7408 = vmatpush.bf16.msra.mxu0 %v4429
    %7409 = vmatpush.bf16.msra.mxu0 %v4421
    %7410 = vmatmul.bf16.gmra.mxu0 %v160
    %v7411 = vpop.f32.mrf.mxu0
    %v7412 = vadd.f32 %v7399, %v7411
    %v7413 = vpop.f32.mrf.mxu0
    %7414 = vdwg.mxu0
    %7415 = vmatpush.bf16.msra.mxu0 %v4541
    %7416 = vmatpush.bf16.msra.mxu0 %v4533
    %7417 = vmatpush.bf16.msra.mxu0 %v4525
    %7418 = vmatpush.bf16.msra.mxu0 %v4517
    %7419 = vmatpush.bf16.msra.mxu0 %v4509
    %7420 = vmatpush.bf16.msra.mxu0 %v4501
    %7421 = vmatpush.bf16.msra.mxu0 %v4493
    %7422 = vmatpush.bf16.msra.mxu0 %v4485
    %7423 = vmatmul.bf16.gmra.mxu0 %v161
    %v7424 = vpop.f32.mrf.mxu0
    %v7425 = vadd.f32 %v7412, %v7424
    %v7426 = vpop.f32.mrf.mxu0
    %7427 = vdwg.mxu0
    %7428 = vmatpush.bf16.msra.mxu0 %v4605
    %7429 = vmatpush.bf16.msra.mxu0 %v4597
    %7430 = vmatpush.bf16.msra.mxu0 %v4589
    %7431 = vmatpush.bf16.msra.mxu0 %v4581
    %7432 = vmatpush.bf16.msra.mxu0 %v4573
    %7433 = vmatpush.bf16.msra.mxu0 %v4565
    %7434 = vmatpush.bf16.msra.mxu0 %v4557
    %7435 = vmatpush.bf16.msra.mxu0 %v4549
    %7436 = vmatmul.bf16.gmra.mxu0 %v162
    %v7437 = vpop.f32.mrf.mxu0
    %v7438 = vadd.f32 %v7425, %v7437
    %v7439 = vpop.f32.mrf.mxu0
    %7440 = vdwg.mxu0
    %7441 = vmatpush.bf16.msra.mxu0 %v4669
    %7442 = vmatpush.bf16.msra.mxu0 %v4661
    %7443 = vmatpush.bf16.msra.mxu0 %v4653
    %7444 = vmatpush.bf16.msra.mxu0 %v4645
    %7445 = vmatpush.bf16.msra.mxu0 %v4637
    %7446 = vmatpush.bf16.msra.mxu0 %v4629
    %7447 = vmatpush.bf16.msra.mxu0 %v4621
    %7448 = vmatpush.bf16.msra.mxu0 %v4613
    %7449 = vmatmul.bf16.gmra.mxu0 %v163
    %v7450 = vpop.f32.mrf.mxu0
    %v7451 = vadd.f32 %v7438, %v7450
    %v7452 = vpop.f32.mrf.mxu0
    %7453 = vdwg.mxu0
    %7454 = vmatpush.bf16.msra.mxu0 %v4733
    %7455 = vmatpush.bf16.msra.mxu0 %v4725
    %7456 = vmatpush.bf16.msra.mxu0 %v4717
    %7457 = vmatpush.bf16.msra.mxu0 %v4709
    %7458 = vmatpush.bf16.msra.mxu0 %v4701
    %7459 = vmatpush.bf16.msra.mxu0 %v4693
    %7460 = vmatpush.bf16.msra.mxu0 %v4685
    %7461 = vmatpush.bf16.msra.mxu0 %v4677
    %7462 = vmatmul.bf16.gmra.mxu0 %v164
    %v7463 = vpop.f32.mrf.mxu0
    %v7464 = vadd.f32 %v7451, %v7463
    %v7465 = vpop.f32.mrf.mxu0
    %7466 = vdwg.mxu0
    %7467 = vmatpush.bf16.msra.mxu0 %v4797
    %7468 = vmatpush.bf16.msra.mxu0 %v4789
    %7469 = vmatpush.bf16.msra.mxu0 %v4781
    %7470 = vmatpush.bf16.msra.mxu0 %v4773
    %7471 = vmatpush.bf16.msra.mxu0 %v4765
    %7472 = vmatpush.bf16.msra.mxu0 %v4757
    %7473 = vmatpush.bf16.msra.mxu0 %v4749
    %7474 = vmatpush.bf16.msra.mxu0 %v4741
    %7475 = vmatmul.bf16.gmra.mxu0 %v165
    %v7476 = vpop.f32.mrf.mxu0
    %v7477 = vadd.f32 %v7464, %v7476
    %v7478 = vpop.f32.mrf.mxu0
    %7479 = vdwg.mxu0
    %7480 = vmatpush.bf16.msra.mxu0 %v4861
    %7481 = vmatpush.bf16.msra.mxu0 %v4853
    %7482 = vmatpush.bf16.msra.mxu0 %v4845
    %7483 = vmatpush.bf16.msra.mxu0 %v4837
    %7484 = vmatpush.bf16.msra.mxu0 %v4829
    %7485 = vmatpush.bf16.msra.mxu0 %v4821
    %7486 = vmatpush.bf16.msra.mxu0 %v4813
    %7487 = vmatpush.bf16.msra.mxu0 %v4805
    %7488 = vmatmul.bf16.gmra.mxu0 %v166
    %v7489 = vpop.f32.mrf.mxu0
    %v7490 = vadd.f32 %v7477, %v7489
    %v7491 = vpop.f32.mrf.mxu0
    %7492 = vdwg.mxu0
    %7493 = vmatpush.bf16.msra.mxu0 %v4925
    %7494 = vmatpush.bf16.msra.mxu0 %v4917
    %7495 = vmatpush.bf16.msra.mxu0 %v4909
    %7496 = vmatpush.bf16.msra.mxu0 %v4901
    %7497 = vmatpush.bf16.msra.mxu0 %v4893
    %7498 = vmatpush.bf16.msra.mxu0 %v4885
    %7499 = vmatpush.bf16.msra.mxu0 %v4877
    %7500 = vmatpush.bf16.msra.mxu0 %v4869
    %7501 = vmatmul.bf16.gmra.mxu0 %v167
    %v7502 = vpop.f32.mrf.mxu0
    %v7503 = vadd.f32 %v7490, %v7502
    %v7504 = vpop.f32.mrf.mxu0
    %7505 = vdwg.mxu0
    %7506 = vmatpush.bf16.msra.mxu0 %v4989
    %7507 = vmatpush.bf16.msra.mxu0 %v4981
    %7508 = vmatpush.bf16.msra.mxu0 %v4973
    %7509 = vmatpush.bf16.msra.mxu0 %v4965
    %7510 = vmatpush.bf16.msra.mxu0 %v4957
    %7511 = vmatpush.bf16.msra.mxu0 %v4949
    %7512 = vmatpush.bf16.msra.mxu0 %v4941
    %7513 = vmatpush.bf16.msra.mxu0 %v4933
    %7514 = vmatmul.bf16.gmra.mxu0 %v168
    %v7515 = vpop.f32.mrf.mxu0
    %v7516 = vadd.f32 %v7503, %v7515
    %v7517 = vpop.f32.mrf.mxu0
    %7518 = vdwg.mxu0
    %7519 = vmatpush.bf16.msra.mxu0 %v5053
    %7520 = vmatpush.bf16.msra.mxu0 %v5045
    %7521 = vmatpush.bf16.msra.mxu0 %v5037
    %7522 = vmatpush.bf16.msra.mxu0 %v5029
    %7523 = vmatpush.bf16.msra.mxu0 %v5021
    %7524 = vmatpush.bf16.msra.mxu0 %v5013
    %7525 = vmatpush.bf16.msra.mxu0 %v5005
    %7526 = vmatpush.bf16.msra.mxu0 %v4997
    %7527 = vmatmul.bf16.gmra.mxu0 %v169
    %v7528 = vpop.f32.mrf.mxu0
    %v7529 = vadd.f32 %v7516, %v7528
    %v7530 = vpop.f32.mrf.mxu0
    %7531 = vdwg.mxu0
    %7532 = vmatpush.bf16.msra.mxu0 %v5117
    %7533 = vmatpush.bf16.msra.mxu0 %v5109
    %7534 = vmatpush.bf16.msra.mxu0 %v5101
    %7535 = vmatpush.bf16.msra.mxu0 %v5093
    %7536 = vmatpush.bf16.msra.mxu0 %v5085
    %7537 = vmatpush.bf16.msra.mxu0 %v5077
    %7538 = vmatpush.bf16.msra.mxu0 %v5069
    %7539 = vmatpush.bf16.msra.mxu0 %v5061
    %7540 = vmatmul.bf16.gmra.mxu0 %v170
    %v7541 = vpop.f32.mrf.mxu0
    %v7542 = vadd.f32 %v7529, %v7541
    %v7543 = vpop.f32.mrf.mxu0
    %7544 = vdwg.mxu0
    %7545 = vmatpush.bf16.msra.mxu0 %v5181
    %7546 = vmatpush.bf16.msra.mxu0 %v5173
    %7547 = vmatpush.bf16.msra.mxu0 %v5165
    %7548 = vmatpush.bf16.msra.mxu0 %v5157
    %7549 = vmatpush.bf16.msra.mxu0 %v5149
    %7550 = vmatpush.bf16.msra.mxu0 %v5141
    %7551 = vmatpush.bf16.msra.mxu0 %v5133
    %7552 = vmatpush.bf16.msra.mxu0 %v5125
    %7553 = vmatmul.bf16.gmra.mxu0 %v171
    %v7554 = vpop.f32.mrf.mxu0
    %v7555 = vadd.f32 %v7542, %v7554
    %v7556 = vpop.f32.mrf.mxu0
    %7557 = vdwg.mxu0
    %7558 = vmatpush.bf16.msra.mxu0 %v5245
    %7559 = vmatpush.bf16.msra.mxu0 %v5237
    %7560 = vmatpush.bf16.msra.mxu0 %v5229
    %7561 = vmatpush.bf16.msra.mxu0 %v5221
    %7562 = vmatpush.bf16.msra.mxu0 %v5213
    %7563 = vmatpush.bf16.msra.mxu0 %v5205
    %7564 = vmatpush.bf16.msra.mxu0 %v5197
    %7565 = vmatpush.bf16.msra.mxu0 %v5189
    %7566 = vmatmul.bf16.gmra.mxu0 %v172
    %v7567 = vpop.f32.mrf.mxu0
    %v7568 = vadd.f32 %v7555, %v7567
    %v7569 = vpop.f32.mrf.mxu0
    %7570 = vdwg.mxu0
    %7571 = vmatpush.bf16.msra.mxu0 %v5309
    %7572 = vmatpush.bf16.msra.mxu0 %v5301
    %7573 = vmatpush.bf16.msra.mxu0 %v5293
    %7574 = vmatpush.bf16.msra.mxu0 %v5285
    %7575 = vmatpush.bf16.msra.mxu0 %v5277
    %7576 = vmatpush.bf16.msra.mxu0 %v5269
    %7577 = vmatpush.bf16.msra.mxu0 %v5261
    %7578 = vmatpush.bf16.msra.mxu0 %v5253
    %7579 = vmatmul.bf16.gmra.mxu0 %v173
    %v7580 = vpop.f32.mrf.mxu0
    %v7581 = vadd.f32 %v7568, %v7580
    %v7582 = vpop.f32.mrf.mxu0
    %7583 = vdwg.mxu0
    %7584 = vmatpush.bf16.msra.mxu0 %v4350
    %7585 = vmatpush.bf16.msra.mxu0 %v4342
    %7586 = vmatpush.bf16.msra.mxu0 %v4334
    %7587 = vmatpush.bf16.msra.mxu0 %v4326
    %7588 = vmatpush.bf16.msra.mxu0 %v4318
    %7589 = vmatpush.bf16.msra.mxu0 %v4310
    %7590 = vmatpush.bf16.msra.mxu0 %v4302
    %7591 = vmatpush.bf16.msra.mxu0 %v4294
    %7592 = vmatmul.bf16.gmra.mxu0 %v158
    %v7593 = vpop.f32.mrf.mxu0
    %v7594 = vadd.f32 %v1206, %v7593
    %v7595 = vpop.f32.mrf.mxu0
    %7596 = vdwg.mxu0
    %7597 = vmatpush.bf16.msra.mxu0 %v4414
    %7598 = vmatpush.bf16.msra.mxu0 %v4406
    %7599 = vmatpush.bf16.msra.mxu0 %v4398
    %7600 = vmatpush.bf16.msra.mxu0 %v4390
    %7601 = vmatpush.bf16.msra.mxu0 %v4382
    %7602 = vmatpush.bf16.msra.mxu0 %v4374
    %7603 = vmatpush.bf16.msra.mxu0 %v4366
    %7604 = vmatpush.bf16.msra.mxu0 %v4358
    %7605 = vmatmul.bf16.gmra.mxu0 %v159
    %v7606 = vpop.f32.mrf.mxu0
    %v7607 = vadd.f32 %v7594, %v7606
    %v7608 = vpop.f32.mrf.mxu0
    %7609 = vdwg.mxu0
    %7610 = vmatpush.bf16.msra.mxu0 %v4478
    %7611 = vmatpush.bf16.msra.mxu0 %v4470
    %7612 = vmatpush.bf16.msra.mxu0 %v4462
    %7613 = vmatpush.bf16.msra.mxu0 %v4454
    %7614 = vmatpush.bf16.msra.mxu0 %v4446
    %7615 = vmatpush.bf16.msra.mxu0 %v4438
    %7616 = vmatpush.bf16.msra.mxu0 %v4430
    %7617 = vmatpush.bf16.msra.mxu0 %v4422
    %7618 = vmatmul.bf16.gmra.mxu0 %v160
    %v7619 = vpop.f32.mrf.mxu0
    %v7620 = vadd.f32 %v7607, %v7619
    %v7621 = vpop.f32.mrf.mxu0
    %7622 = vdwg.mxu0
    %7623 = vmatpush.bf16.msra.mxu0 %v4542
    %7624 = vmatpush.bf16.msra.mxu0 %v4534
    %7625 = vmatpush.bf16.msra.mxu0 %v4526
    %7626 = vmatpush.bf16.msra.mxu0 %v4518
    %7627 = vmatpush.bf16.msra.mxu0 %v4510
    %7628 = vmatpush.bf16.msra.mxu0 %v4502
    %7629 = vmatpush.bf16.msra.mxu0 %v4494
    %7630 = vmatpush.bf16.msra.mxu0 %v4486
    %7631 = vmatmul.bf16.gmra.mxu0 %v161
    %v7632 = vpop.f32.mrf.mxu0
    %v7633 = vadd.f32 %v7620, %v7632
    %v7634 = vpop.f32.mrf.mxu0
    %7635 = vdwg.mxu0
    %7636 = vmatpush.bf16.msra.mxu0 %v4606
    %7637 = vmatpush.bf16.msra.mxu0 %v4598
    %7638 = vmatpush.bf16.msra.mxu0 %v4590
    %7639 = vmatpush.bf16.msra.mxu0 %v4582
    %7640 = vmatpush.bf16.msra.mxu0 %v4574
    %7641 = vmatpush.bf16.msra.mxu0 %v4566
    %7642 = vmatpush.bf16.msra.mxu0 %v4558
    %7643 = vmatpush.bf16.msra.mxu0 %v4550
    %7644 = vmatmul.bf16.gmra.mxu0 %v162
    %v7645 = vpop.f32.mrf.mxu0
    %v7646 = vadd.f32 %v7633, %v7645
    %v7647 = vpop.f32.mrf.mxu0
    %7648 = vdwg.mxu0
    %7649 = vmatpush.bf16.msra.mxu0 %v4670
    %7650 = vmatpush.bf16.msra.mxu0 %v4662
    %7651 = vmatpush.bf16.msra.mxu0 %v4654
    %7652 = vmatpush.bf16.msra.mxu0 %v4646
    %7653 = vmatpush.bf16.msra.mxu0 %v4638
    %7654 = vmatpush.bf16.msra.mxu0 %v4630
    %7655 = vmatpush.bf16.msra.mxu0 %v4622
    %7656 = vmatpush.bf16.msra.mxu0 %v4614
    %7657 = vmatmul.bf16.gmra.mxu0 %v163
    %v7658 = vpop.f32.mrf.mxu0
    %v7659 = vadd.f32 %v7646, %v7658
    %v7660 = vpop.f32.mrf.mxu0
    %7661 = vdwg.mxu0
    %7662 = vmatpush.bf16.msra.mxu0 %v4734
    %7663 = vmatpush.bf16.msra.mxu0 %v4726
    %7664 = vmatpush.bf16.msra.mxu0 %v4718
    %7665 = vmatpush.bf16.msra.mxu0 %v4710
    %7666 = vmatpush.bf16.msra.mxu0 %v4702
    %7667 = vmatpush.bf16.msra.mxu0 %v4694
    %7668 = vmatpush.bf16.msra.mxu0 %v4686
    %7669 = vmatpush.bf16.msra.mxu0 %v4678
    %7670 = vmatmul.bf16.gmra.mxu0 %v164
    %v7671 = vpop.f32.mrf.mxu0
    %v7672 = vadd.f32 %v7659, %v7671
    %v7673 = vpop.f32.mrf.mxu0
    %7674 = vdwg.mxu0
    %7675 = vmatpush.bf16.msra.mxu0 %v4798
    %7676 = vmatpush.bf16.msra.mxu0 %v4790
    %7677 = vmatpush.bf16.msra.mxu0 %v4782
    %7678 = vmatpush.bf16.msra.mxu0 %v4774
    %7679 = vmatpush.bf16.msra.mxu0 %v4766
    %7680 = vmatpush.bf16.msra.mxu0 %v4758
    %7681 = vmatpush.bf16.msra.mxu0 %v4750
    %7682 = vmatpush.bf16.msra.mxu0 %v4742
    %7683 = vmatmul.bf16.gmra.mxu0 %v165
    %v7684 = vpop.f32.mrf.mxu0
    %v7685 = vadd.f32 %v7672, %v7684
    %v7686 = vpop.f32.mrf.mxu0
    %7687 = vdwg.mxu0
    %7688 = vmatpush.bf16.msra.mxu0 %v4862
    %7689 = vmatpush.bf16.msra.mxu0 %v4854
    %7690 = vmatpush.bf16.msra.mxu0 %v4846
    %7691 = vmatpush.bf16.msra.mxu0 %v4838
    %7692 = vmatpush.bf16.msra.mxu0 %v4830
    %7693 = vmatpush.bf16.msra.mxu0 %v4822
    %7694 = vmatpush.bf16.msra.mxu0 %v4814
    %7695 = vmatpush.bf16.msra.mxu0 %v4806
    %7696 = vmatmul.bf16.gmra.mxu0 %v166
    %v7697 = vpop.f32.mrf.mxu0
    %v7698 = vadd.f32 %v7685, %v7697
    %v7699 = vpop.f32.mrf.mxu0
    %7700 = vdwg.mxu0
    %7701 = vmatpush.bf16.msra.mxu0 %v4926
    %7702 = vmatpush.bf16.msra.mxu0 %v4918
    %7703 = vmatpush.bf16.msra.mxu0 %v4910
    %7704 = vmatpush.bf16.msra.mxu0 %v4902
    %7705 = vmatpush.bf16.msra.mxu0 %v4894
    %7706 = vmatpush.bf16.msra.mxu0 %v4886
    %7707 = vmatpush.bf16.msra.mxu0 %v4878
    %7708 = vmatpush.bf16.msra.mxu0 %v4870
    %7709 = vmatmul.bf16.gmra.mxu0 %v167
    %v7710 = vpop.f32.mrf.mxu0
    %v7711 = vadd.f32 %v7698, %v7710
    %v7712 = vpop.f32.mrf.mxu0
    %7713 = vdwg.mxu0
    %7714 = vmatpush.bf16.msra.mxu0 %v4990
    %7715 = vmatpush.bf16.msra.mxu0 %v4982
    %7716 = vmatpush.bf16.msra.mxu0 %v4974
    %7717 = vmatpush.bf16.msra.mxu0 %v4966
    %7718 = vmatpush.bf16.msra.mxu0 %v4958
    %7719 = vmatpush.bf16.msra.mxu0 %v4950
    %7720 = vmatpush.bf16.msra.mxu0 %v4942
    %7721 = vmatpush.bf16.msra.mxu0 %v4934
    %7722 = vmatmul.bf16.gmra.mxu0 %v168
    %v7723 = vpop.f32.mrf.mxu0
    %v7724 = vadd.f32 %v7711, %v7723
    %v7725 = vpop.f32.mrf.mxu0
    %7726 = vdwg.mxu0
    %7727 = vmatpush.bf16.msra.mxu0 %v5054
    %7728 = vmatpush.bf16.msra.mxu0 %v5046
    %7729 = vmatpush.bf16.msra.mxu0 %v5038
    %7730 = vmatpush.bf16.msra.mxu0 %v5030
    %7731 = vmatpush.bf16.msra.mxu0 %v5022
    %7732 = vmatpush.bf16.msra.mxu0 %v5014
    %7733 = vmatpush.bf16.msra.mxu0 %v5006
    %7734 = vmatpush.bf16.msra.mxu0 %v4998
    %7735 = vmatmul.bf16.gmra.mxu0 %v169
    %v7736 = vpop.f32.mrf.mxu0
    %v7737 = vadd.f32 %v7724, %v7736
    %v7738 = vpop.f32.mrf.mxu0
    %7739 = vdwg.mxu0
    %7740 = vmatpush.bf16.msra.mxu0 %v5118
    %7741 = vmatpush.bf16.msra.mxu0 %v5110
    %7742 = vmatpush.bf16.msra.mxu0 %v5102
    %7743 = vmatpush.bf16.msra.mxu0 %v5094
    %7744 = vmatpush.bf16.msra.mxu0 %v5086
    %7745 = vmatpush.bf16.msra.mxu0 %v5078
    %7746 = vmatpush.bf16.msra.mxu0 %v5070
    %7747 = vmatpush.bf16.msra.mxu0 %v5062
    %7748 = vmatmul.bf16.gmra.mxu0 %v170
    %v7749 = vpop.f32.mrf.mxu0
    %v7750 = vadd.f32 %v7737, %v7749
    %v7751 = vpop.f32.mrf.mxu0
    %7752 = vdwg.mxu0
    %7753 = vmatpush.bf16.msra.mxu0 %v5182
    %7754 = vmatpush.bf16.msra.mxu0 %v5174
    %7755 = vmatpush.bf16.msra.mxu0 %v5166
    %7756 = vmatpush.bf16.msra.mxu0 %v5158
    %7757 = vmatpush.bf16.msra.mxu0 %v5150
    %7758 = vmatpush.bf16.msra.mxu0 %v5142
    %7759 = vmatpush.bf16.msra.mxu0 %v5134
    %7760 = vmatpush.bf16.msra.mxu0 %v5126
    %7761 = vmatmul.bf16.gmra.mxu0 %v171
    %v7762 = vpop.f32.mrf.mxu0
    %v7763 = vadd.f32 %v7750, %v7762
    %v7764 = vpop.f32.mrf.mxu0
    %7765 = vdwg.mxu0
    %7766 = vmatpush.bf16.msra.mxu0 %v5246
    %7767 = vmatpush.bf16.msra.mxu0 %v5238
    %7768 = vmatpush.bf16.msra.mxu0 %v5230
    %7769 = vmatpush.bf16.msra.mxu0 %v5222
    %7770 = vmatpush.bf16.msra.mxu0 %v5214
    %7771 = vmatpush.bf16.msra.mxu0 %v5206
    %7772 = vmatpush.bf16.msra.mxu0 %v5198
    %7773 = vmatpush.bf16.msra.mxu0 %v5190
    %7774 = vmatmul.bf16.gmra.mxu0 %v172
    %v7775 = vpop.f32.mrf.mxu0
    %v7776 = vadd.f32 %v7763, %v7775
    %v7777 = vpop.f32.mrf.mxu0
    %7778 = vdwg.mxu0
    %7779 = vmatpush.bf16.msra.mxu0 %v5310
    %7780 = vmatpush.bf16.msra.mxu0 %v5302
    %7781 = vmatpush.bf16.msra.mxu0 %v5294
    %7782 = vmatpush.bf16.msra.mxu0 %v5286
    %7783 = vmatpush.bf16.msra.mxu0 %v5278
    %7784 = vmatpush.bf16.msra.mxu0 %v5270
    %7785 = vmatpush.bf16.msra.mxu0 %v5262
    %7786 = vmatpush.bf16.msra.mxu0 %v5254
    %7787 = vmatmul.bf16.gmra.mxu0 %v173
    %v7788 = vpop.f32.mrf.mxu0
    %v7789 = vadd.f32 %v7776, %v7788
    %v7790 = vpop.f32.mrf.mxu0
    %7791 = vdwg.mxu0
    %7792 = vmatpush.bf16.msra.mxu0 %v4351
    %7793 = vmatpush.bf16.msra.mxu0 %v4343
    %7794 = vmatpush.bf16.msra.mxu0 %v4335
    %7795 = vmatpush.bf16.msra.mxu0 %v4327
    %7796 = vmatpush.bf16.msra.mxu0 %v4319
    %7797 = vmatpush.bf16.msra.mxu0 %v4311
    %7798 = vmatpush.bf16.msra.mxu0 %v4303
    %7799 = vmatpush.bf16.msra.mxu0 %v4295
    %7800 = vmatmul.bf16.gmra.mxu0 %v158
    %v7801 = vpop.f32.mrf.mxu0
    %v7802 = vadd.f32 %v1207, %v7801
    %v7803 = vpop.f32.mrf.mxu0
    %7804 = vdwg.mxu0
    %7805 = vmatpush.bf16.msra.mxu0 %v4415
    %7806 = vmatpush.bf16.msra.mxu0 %v4407
    %7807 = vmatpush.bf16.msra.mxu0 %v4399
    %7808 = vmatpush.bf16.msra.mxu0 %v4391
    %7809 = vmatpush.bf16.msra.mxu0 %v4383
    %7810 = vmatpush.bf16.msra.mxu0 %v4375
    %7811 = vmatpush.bf16.msra.mxu0 %v4367
    %7812 = vmatpush.bf16.msra.mxu0 %v4359
    %7813 = vmatmul.bf16.gmra.mxu0 %v159
    %v7814 = vpop.f32.mrf.mxu0
    %v7815 = vadd.f32 %v7802, %v7814
    %v7816 = vpop.f32.mrf.mxu0
    %7817 = vdwg.mxu0
    %7818 = vmatpush.bf16.msra.mxu0 %v4479
    %7819 = vmatpush.bf16.msra.mxu0 %v4471
    %7820 = vmatpush.bf16.msra.mxu0 %v4463
    %7821 = vmatpush.bf16.msra.mxu0 %v4455
    %7822 = vmatpush.bf16.msra.mxu0 %v4447
    %7823 = vmatpush.bf16.msra.mxu0 %v4439
    %7824 = vmatpush.bf16.msra.mxu0 %v4431
    %7825 = vmatpush.bf16.msra.mxu0 %v4423
    %7826 = vmatmul.bf16.gmra.mxu0 %v160
    %v7827 = vpop.f32.mrf.mxu0
    %v7828 = vadd.f32 %v7815, %v7827
    %v7829 = vpop.f32.mrf.mxu0
    %7830 = vdwg.mxu0
    %7831 = vmatpush.bf16.msra.mxu0 %v4543
    %7832 = vmatpush.bf16.msra.mxu0 %v4535
    %7833 = vmatpush.bf16.msra.mxu0 %v4527
    %7834 = vmatpush.bf16.msra.mxu0 %v4519
    %7835 = vmatpush.bf16.msra.mxu0 %v4511
    %7836 = vmatpush.bf16.msra.mxu0 %v4503
    %7837 = vmatpush.bf16.msra.mxu0 %v4495
    %7838 = vmatpush.bf16.msra.mxu0 %v4487
    %7839 = vmatmul.bf16.gmra.mxu0 %v161
    %v7840 = vpop.f32.mrf.mxu0
    %v7841 = vadd.f32 %v7828, %v7840
    %v7842 = vpop.f32.mrf.mxu0
    %7843 = vdwg.mxu0
    %7844 = vmatpush.bf16.msra.mxu0 %v4607
    %7845 = vmatpush.bf16.msra.mxu0 %v4599
    %7846 = vmatpush.bf16.msra.mxu0 %v4591
    %7847 = vmatpush.bf16.msra.mxu0 %v4583
    %7848 = vmatpush.bf16.msra.mxu0 %v4575
    %7849 = vmatpush.bf16.msra.mxu0 %v4567
    %7850 = vmatpush.bf16.msra.mxu0 %v4559
    %7851 = vmatpush.bf16.msra.mxu0 %v4551
    %7852 = vmatmul.bf16.gmra.mxu0 %v162
    %v7853 = vpop.f32.mrf.mxu0
    %v7854 = vadd.f32 %v7841, %v7853
    %v7855 = vpop.f32.mrf.mxu0
    %7856 = vdwg.mxu0
    %7857 = vmatpush.bf16.msra.mxu0 %v4671
    %7858 = vmatpush.bf16.msra.mxu0 %v4663
    %7859 = vmatpush.bf16.msra.mxu0 %v4655
    %7860 = vmatpush.bf16.msra.mxu0 %v4647
    %7861 = vmatpush.bf16.msra.mxu0 %v4639
    %7862 = vmatpush.bf16.msra.mxu0 %v4631
    %7863 = vmatpush.bf16.msra.mxu0 %v4623
    %7864 = vmatpush.bf16.msra.mxu0 %v4615
    %7865 = vmatmul.bf16.gmra.mxu0 %v163
    %v7866 = vpop.f32.mrf.mxu0
    %v7867 = vadd.f32 %v7854, %v7866
    %v7868 = vpop.f32.mrf.mxu0
    %7869 = vdwg.mxu0
    %7870 = vmatpush.bf16.msra.mxu0 %v4735
    %7871 = vmatpush.bf16.msra.mxu0 %v4727
    %7872 = vmatpush.bf16.msra.mxu0 %v4719
    %7873 = vmatpush.bf16.msra.mxu0 %v4711
    %7874 = vmatpush.bf16.msra.mxu0 %v4703
    %7875 = vmatpush.bf16.msra.mxu0 %v4695
    %7876 = vmatpush.bf16.msra.mxu0 %v4687
    %7877 = vmatpush.bf16.msra.mxu0 %v4679
    %7878 = vmatmul.bf16.gmra.mxu0 %v164
    %v7879 = vpop.f32.mrf.mxu0
    %v7880 = vadd.f32 %v7867, %v7879
    %v7881 = vpop.f32.mrf.mxu0
    %7882 = vdwg.mxu0
    %7883 = vmatpush.bf16.msra.mxu0 %v4799
    %7884 = vmatpush.bf16.msra.mxu0 %v4791
    %7885 = vmatpush.bf16.msra.mxu0 %v4783
    %7886 = vmatpush.bf16.msra.mxu0 %v4775
    %7887 = vmatpush.bf16.msra.mxu0 %v4767
    %7888 = vmatpush.bf16.msra.mxu0 %v4759
    %7889 = vmatpush.bf16.msra.mxu0 %v4751
    %7890 = vmatpush.bf16.msra.mxu0 %v4743
    %7891 = vmatmul.bf16.gmra.mxu0 %v165
    %v7892 = vpop.f32.mrf.mxu0
    %v7893 = vadd.f32 %v7880, %v7892
    %v7894 = vpop.f32.mrf.mxu0
    %7895 = vdwg.mxu0
    %7896 = vmatpush.bf16.msra.mxu0 %v4863
    %7897 = vmatpush.bf16.msra.mxu0 %v4855
    %7898 = vmatpush.bf16.msra.mxu0 %v4847
    %7899 = vmatpush.bf16.msra.mxu0 %v4839
    %7900 = vmatpush.bf16.msra.mxu0 %v4831
    %7901 = vmatpush.bf16.msra.mxu0 %v4823
    %7902 = vmatpush.bf16.msra.mxu0 %v4815
    %7903 = vmatpush.bf16.msra.mxu0 %v4807
    %7904 = vmatmul.bf16.gmra.mxu0 %v166
    %v7905 = vpop.f32.mrf.mxu0
    %v7906 = vadd.f32 %v7893, %v7905
    %v7907 = vpop.f32.mrf.mxu0
    %7908 = vdwg.mxu0
    %7909 = vmatpush.bf16.msra.mxu0 %v4927
    %7910 = vmatpush.bf16.msra.mxu0 %v4919
    %7911 = vmatpush.bf16.msra.mxu0 %v4911
    %7912 = vmatpush.bf16.msra.mxu0 %v4903
    %7913 = vmatpush.bf16.msra.mxu0 %v4895
    %7914 = vmatpush.bf16.msra.mxu0 %v4887
    %7915 = vmatpush.bf16.msra.mxu0 %v4879
    %7916 = vmatpush.bf16.msra.mxu0 %v4871
    %7917 = vmatmul.bf16.gmra.mxu0 %v167
    %v7918 = vpop.f32.mrf.mxu0
    %v7919 = vadd.f32 %v7906, %v7918
    %v7920 = vpop.f32.mrf.mxu0
    %7921 = vdwg.mxu0
    %7922 = vmatpush.bf16.msra.mxu0 %v4991
    %7923 = vmatpush.bf16.msra.mxu0 %v4983
    %7924 = vmatpush.bf16.msra.mxu0 %v4975
    %7925 = vmatpush.bf16.msra.mxu0 %v4967
    %7926 = vmatpush.bf16.msra.mxu0 %v4959
    %7927 = vmatpush.bf16.msra.mxu0 %v4951
    %7928 = vmatpush.bf16.msra.mxu0 %v4943
    %7929 = vmatpush.bf16.msra.mxu0 %v4935
    %7930 = vmatmul.bf16.gmra.mxu0 %v168
    %v7931 = vpop.f32.mrf.mxu0
    %v7932 = vadd.f32 %v7919, %v7931
    %v7933 = vpop.f32.mrf.mxu0
    %7934 = vdwg.mxu0
    %7935 = vmatpush.bf16.msra.mxu0 %v5055
    %7936 = vmatpush.bf16.msra.mxu0 %v5047
    %7937 = vmatpush.bf16.msra.mxu0 %v5039
    %7938 = vmatpush.bf16.msra.mxu0 %v5031
    %7939 = vmatpush.bf16.msra.mxu0 %v5023
    %7940 = vmatpush.bf16.msra.mxu0 %v5015
    %7941 = vmatpush.bf16.msra.mxu0 %v5007
    %7942 = vmatpush.bf16.msra.mxu0 %v4999
    %7943 = vmatmul.bf16.gmra.mxu0 %v169
    %v7944 = vpop.f32.mrf.mxu0
    %v7945 = vadd.f32 %v7932, %v7944
    %v7946 = vpop.f32.mrf.mxu0
    %7947 = vdwg.mxu0
    %7948 = vmatpush.bf16.msra.mxu0 %v5119
    %7949 = vmatpush.bf16.msra.mxu0 %v5111
    %7950 = vmatpush.bf16.msra.mxu0 %v5103
    %7951 = vmatpush.bf16.msra.mxu0 %v5095
    %7952 = vmatpush.bf16.msra.mxu0 %v5087
    %7953 = vmatpush.bf16.msra.mxu0 %v5079
    %7954 = vmatpush.bf16.msra.mxu0 %v5071
    %7955 = vmatpush.bf16.msra.mxu0 %v5063
    %7956 = vmatmul.bf16.gmra.mxu0 %v170
    %v7957 = vpop.f32.mrf.mxu0
    %v7958 = vadd.f32 %v7945, %v7957
    %v7959 = vpop.f32.mrf.mxu0
    %7960 = vdwg.mxu0
    %7961 = vmatpush.bf16.msra.mxu0 %v5183
    %7962 = vmatpush.bf16.msra.mxu0 %v5175
    %7963 = vmatpush.bf16.msra.mxu0 %v5167
    %7964 = vmatpush.bf16.msra.mxu0 %v5159
    %7965 = vmatpush.bf16.msra.mxu0 %v5151
    %7966 = vmatpush.bf16.msra.mxu0 %v5143
    %7967 = vmatpush.bf16.msra.mxu0 %v5135
    %7968 = vmatpush.bf16.msra.mxu0 %v5127
    %7969 = vmatmul.bf16.gmra.mxu0 %v171
    %v7970 = vpop.f32.mrf.mxu0
    %v7971 = vadd.f32 %v7958, %v7970
    %v7972 = vpop.f32.mrf.mxu0
    %7973 = vdwg.mxu0
    %7974 = vmatpush.bf16.msra.mxu0 %v5247
    %7975 = vmatpush.bf16.msra.mxu0 %v5239
    %7976 = vmatpush.bf16.msra.mxu0 %v5231
    %7977 = vmatpush.bf16.msra.mxu0 %v5223
    %7978 = vmatpush.bf16.msra.mxu0 %v5215
    %7979 = vmatpush.bf16.msra.mxu0 %v5207
    %7980 = vmatpush.bf16.msra.mxu0 %v5199
    %7981 = vmatpush.bf16.msra.mxu0 %v5191
    %7982 = vmatmul.bf16.gmra.mxu0 %v172
    %v7983 = vpop.f32.mrf.mxu0
    %v7984 = vadd.f32 %v7971, %v7983
    %v7985 = vpop.f32.mrf.mxu0
    %7986 = vdwg.mxu0
    %7987 = vmatpush.bf16.msra.mxu0 %v5311
    %7988 = vmatpush.bf16.msra.mxu0 %v5303
    %7989 = vmatpush.bf16.msra.mxu0 %v5295
    %7990 = vmatpush.bf16.msra.mxu0 %v5287
    %7991 = vmatpush.bf16.msra.mxu0 %v5279
    %7992 = vmatpush.bf16.msra.mxu0 %v5271
    %7993 = vmatpush.bf16.msra.mxu0 %v5263
    %7994 = vmatpush.bf16.msra.mxu0 %v5255
    %7995 = vmatmul.bf16.gmra.mxu0 %v173
    %v7996 = vpop.f32.mrf.mxu0
    %v7997 = vadd.f32 %v7984, %v7996
    %v7998 = vpop.f32.mrf.mxu0
    %7999 = vdwg.mxu0
    %v8000 = vmax.f32 %v6541, 0.0
    %v8001 = vmax.f32 %v6749, 0.0
    %v8002 = vmax.f32 %v6957, 0.0
    %v8003 = vmax.f32 %v7165, 0.0
    %v8004 = vmax.f32 %v7373, 0.0
    %v8005 = vmax.f32 %v7581, 0.0
    %v8006 = vmax.f32 %v7789, 0.0
    %v8007 = vmax.f32 %v7997, 0.0
    %v8008 = vpack.c.bf16 %v8000, %v8000
    %v8009 = vpack.c.bf16 %v8001, %v8001
    %v8010 = vpack.c.bf16 %v8002, %v8002
    %v8011 = vpack.c.bf16 %v8003, %v8003
    %v8012 = vpack.c.bf16 %v8004, %v8004
    %v8013 = vpack.c.bf16 %v8005, %v8005
    %v8014 = vpack.c.bf16 %v8006, %v8006
    %v8015 = vpack.c.bf16 %v8007, %v8007
    %v8016 = vld [vmem:[#allocation8] sm:$0xff]
    %v8017 = vld [vmem:[#allocation8 + $0x8] sm:$0xff]
    %v8018 = vld [vmem:[#allocation8 + $0x10] sm:$0xff]
    %v8019 = vld [vmem:[#allocation8 + $0x18] sm:$0xff]
    %v8020 = vld [vmem:[#allocation8 + $0x20] sm:$0xff]
    %v8021 = vld [vmem:[#allocation8 + $0x28] sm:$0xff]
    %v8022 = vld [vmem:[#allocation8 + $0x30] sm:$0xff]
    %v8023 = vld [vmem:[#allocation8 + $0x38] sm:$0xff]
    %v8024 = vld [vmem:[#allocation8 + $0x40] sm:$0xff]
    %v8025 = vld [vmem:[#allocation8 + $0x48] sm:$0xff]
    %v8026 = vld [vmem:[#allocation8 + $0x50] sm:$0xff]
    %v8027 = vld [vmem:[#allocation8 + $0x58] sm:$0xff]
    %v8028 = vld [vmem:[#allocation8 + $0x60] sm:$0xff]
    %v8029 = vld [vmem:[#allocation8 + $0x68] sm:$0xff]
    %v8030 = vld [vmem:[#allocation8 + $0x70] sm:$0xff]
    %v8031 = vld [vmem:[#allocation8 + $0x78] sm:$0xff]
    %v8032 = vld [vmem:[#allocation8 + $0x80] sm:$0xff]
    %v8033 = vld [vmem:[#allocation8 + $0x88] sm:$0xff]
    %v8034 = vld [vmem:[#allocation8 + $0x90] sm:$0xff]
    %v8035 = vld [vmem:[#allocation8 + $0x98] sm:$0xff]
    %v8036 = vld [vmem:[#allocation8 + $0xa0] sm:$0xff]
    %v8037 = vld [vmem:[#allocation8 + $0xa8] sm:$0xff]
    %v8038 = vld [vmem:[#allocation8 + $0xb0] sm:$0xff]
    %v8039 = vld [vmem:[#allocation8 + $0xb8] sm:$0xff]
    %v8040 = vld [vmem:[#allocation8 + $0xc0] sm:$0xff]
    %v8041 = vld [vmem:[#allocation8 + $0xc8] sm:$0xff]
    %v8042 = vld [vmem:[#allocation8 + $0xd0] sm:$0xff]
    %v8043 = vld [vmem:[#allocation8 + $0xd8] sm:$0xff]
    %v8044 = vld [vmem:[#allocation8 + $0xe0] sm:$0xff]
    %v8045 = vld [vmem:[#allocation8 + $0xe8] sm:$0xff]
    %v8046 = vld [vmem:[#allocation8 + $0xf0] sm:$0xff]
    %v8047 = vld [vmem:[#allocation8 + $0xf8] sm:$0xff]
    %v8048 = vld [vmem:[#allocation8 + $0x100] sm:$0xff]
    %v8049 = vld [vmem:[#allocation8 + $0x108] sm:$0xff]
    %v8050 = vld [vmem:[#allocation8 + $0x110] sm:$0xff]
    %v8051 = vld [vmem:[#allocation8 + $0x118] sm:$0xff]
    %v8052 = vld [vmem:[#allocation8 + $0x120] sm:$0xff]
    %v8053 = vld [vmem:[#allocation8 + $0x128] sm:$0xff]
    %v8054 = vld [vmem:[#allocation8 + $0x130] sm:$0xff]
    %v8055 = vld [vmem:[#allocation8 + $0x138] sm:$0xff]
    %v8056 = vld [vmem:[#allocation8 + $0x140] sm:$0xff]
    %v8057 = vld [vmem:[#allocation8 + $0x148] sm:$0xff]
    %v8058 = vld [vmem:[#allocation8 + $0x150] sm:$0xff]
    %v8059 = vld [vmem:[#allocation8 + $0x158] sm:$0xff]
    %v8060 = vld [vmem:[#allocation8 + $0x160] sm:$0xff]
    %v8061 = vld [vmem:[#allocation8 + $0x168] sm:$0xff]
    %v8062 = vld [vmem:[#allocation8 + $0x170] sm:$0xff]
    %v8063 = vld [vmem:[#allocation8 + $0x178] sm:$0xff]
    %v8064 = vld [vmem:[#allocation8 + $0x180] sm:$0xff]
    %v8065 = vld [vmem:[#allocation8 + $0x188] sm:$0xff]
    %v8066 = vld [vmem:[#allocation8 + $0x190] sm:$0xff]
    %v8067 = vld [vmem:[#allocation8 + $0x198] sm:$0xff]
    %v8068 = vld [vmem:[#allocation8 + $0x1a0] sm:$0xff]
    %v8069 = vld [vmem:[#allocation8 + $0x1a8] sm:$0xff]
    %v8070 = vld [vmem:[#allocation8 + $0x1b0] sm:$0xff]
    %v8071 = vld [vmem:[#allocation8 + $0x1b8] sm:$0xff]
    %v8072 = vld [vmem:[#allocation8 + $0x1c0] sm:$0xff]
    %v8073 = vld [vmem:[#allocation8 + $0x1c8] sm:$0xff]
    %v8074 = vld [vmem:[#allocation8 + $0x1d0] sm:$0xff]
    %v8075 = vld [vmem:[#allocation8 + $0x1d8] sm:$0xff]
    %v8076 = vld [vmem:[#allocation8 + $0x1e0] sm:$0xff]
    %v8077 = vld [vmem:[#allocation8 + $0x1e8] sm:$0xff]
    %v8078 = vld [vmem:[#allocation8 + $0x1f0] sm:$0xff]
    %v8079 = vld [vmem:[#allocation8 + $0x1f8] sm:$0xff]
    %v8080 = vld [vmem:[#allocation8 + $0x200] sm:$0xff]
    %v8081 = vld [vmem:[#allocation8 + $0x208] sm:$0xff]
    %v8082 = vld [vmem:[#allocation8 + $0x210] sm:$0xff]
    %v8083 = vld [vmem:[#allocation8 + $0x218] sm:$0xff]
    %v8084 = vld [vmem:[#allocation8 + $0x220] sm:$0xff]
    %v8085 = vld [vmem:[#allocation8 + $0x228] sm:$0xff]
    %v8086 = vld [vmem:[#allocation8 + $0x230] sm:$0xff]
    %v8087 = vld [vmem:[#allocation8 + $0x238] sm:$0xff]
    %v8088 = vld [vmem:[#allocation8 + $0x240] sm:$0xff]
    %v8089 = vld [vmem:[#allocation8 + $0x248] sm:$0xff]
    %v8090 = vld [vmem:[#allocation8 + $0x250] sm:$0xff]
    %v8091 = vld [vmem:[#allocation8 + $0x258] sm:$0xff]
    %v8092 = vld [vmem:[#allocation8 + $0x260] sm:$0xff]
    %v8093 = vld [vmem:[#allocation8 + $0x268] sm:$0xff]
    %v8094 = vld [vmem:[#allocation8 + $0x270] sm:$0xff]
    %v8095 = vld [vmem:[#allocation8 + $0x278] sm:$0xff]
    %v8096 = vld [vmem:[#allocation8 + $0x280] sm:$0xff]
    %v8097 = vld [vmem:[#allocation8 + $0x288] sm:$0xff]
    %v8098 = vld [vmem:[#allocation8 + $0x290] sm:$0xff]
    %v8099 = vld [vmem:[#allocation8 + $0x298] sm:$0xff]
    %v8100 = vld [vmem:[#allocation8 + $0x2a0] sm:$0xff]
    %v8101 = vld [vmem:[#allocation8 + $0x2a8] sm:$0xff]
    %v8102 = vld [vmem:[#allocation8 + $0x2b0] sm:$0xff]
    %v8103 = vld [vmem:[#allocation8 + $0x2b8] sm:$0xff]
    %v8104 = vld [vmem:[#allocation8 + $0x2c0] sm:$0xff]
    %v8105 = vld [vmem:[#allocation8 + $0x2c8] sm:$0xff]
    %v8106 = vld [vmem:[#allocation8 + $0x2d0] sm:$0xff]
    %v8107 = vld [vmem:[#allocation8 + $0x2d8] sm:$0xff]
    %v8108 = vld [vmem:[#allocation8 + $0x2e0] sm:$0xff]
    %v8109 = vld [vmem:[#allocation8 + $0x2e8] sm:$0xff]
    %v8110 = vld [vmem:[#allocation8 + $0x2f0] sm:$0xff]
    %v8111 = vld [vmem:[#allocation8 + $0x2f8] sm:$0xff]
    %v8112 = vld [vmem:[#allocation8 + $0x300] sm:$0xff]
    %v8113 = vld [vmem:[#allocation8 + $0x308] sm:$0xff]
    %v8114 = vld [vmem:[#allocation8 + $0x310] sm:$0xff]
    %v8115 = vld [vmem:[#allocation8 + $0x318] sm:$0xff]
    %v8116 = vld [vmem:[#allocation8 + $0x320] sm:$0xff]
    %v8117 = vld [vmem:[#allocation8 + $0x328] sm:$0xff]
    %v8118 = vld [vmem:[#allocation8 + $0x330] sm:$0xff]
    %v8119 = vld [vmem:[#allocation8 + $0x338] sm:$0xff]
    %v8120 = vld [vmem:[#allocation8 + $0x340] sm:$0xff]
    %v8121 = vld [vmem:[#allocation8 + $0x348] sm:$0xff]
    %v8122 = vld [vmem:[#allocation8 + $0x350] sm:$0xff]
    %v8123 = vld [vmem:[#allocation8 + $0x358] sm:$0xff]
    %v8124 = vld [vmem:[#allocation8 + $0x360] sm:$0xff]
    %v8125 = vld [vmem:[#allocation8 + $0x368] sm:$0xff]
    %v8126 = vld [vmem:[#allocation8 + $0x370] sm:$0xff]
    %v8127 = vld [vmem:[#allocation8 + $0x378] sm:$0xff]
    %v8128 = vld [vmem:[#allocation8 + $0x380] sm:$0xff]
    %v8129 = vld [vmem:[#allocation8 + $0x388] sm:$0xff]
    %v8130 = vld [vmem:[#allocation8 + $0x390] sm:$0xff]
    %v8131 = vld [vmem:[#allocation8 + $0x398] sm:$0xff]
    %v8132 = vld [vmem:[#allocation8 + $0x3a0] sm:$0xff]
    %v8133 = vld [vmem:[#allocation8 + $0x3a8] sm:$0xff]
    %v8134 = vld [vmem:[#allocation8 + $0x3b0] sm:$0xff]
    %v8135 = vld [vmem:[#allocation8 + $0x3b8] sm:$0xff]
    %v8136 = vld [vmem:[#allocation8 + $0x3c0] sm:$0xff]
    %v8137 = vld [vmem:[#allocation8 + $0x3c8] sm:$0xff]
    %v8138 = vld [vmem:[#allocation8 + $0x3d0] sm:$0xff]
    %v8139 = vld [vmem:[#allocation8 + $0x3d8] sm:$0xff]
    %v8140 = vld [vmem:[#allocation8 + $0x3e0] sm:$0xff]
    %v8141 = vld [vmem:[#allocation8 + $0x3e8] sm:$0xff]
    %v8142 = vld [vmem:[#allocation8 + $0x3f0] sm:$0xff]
    %v8143 = vld [vmem:[#allocation8 + $0x3f8] sm:$0xff]
    %v8144 = vld [vmem:[#allocation10] sm:$0x3]
    %v8146 = vperm.slane %v8144, 0
    %v8147 = vperm.slane %v8144, 1
    %v8278 = vunpack.c.l.b16 %v8016
    %v8279 = vunpack.c.h.b16 %v8016
    %v8280 = vunpack.c.l.b16 %v8017
    %v8281 = vunpack.c.h.b16 %v8017
    %v8282 = vunpack.c.l.b16 %v8018
    %v8283 = vunpack.c.h.b16 %v8018
    %v8284 = vunpack.c.l.b16 %v8019
    %v8285 = vunpack.c.h.b16 %v8019
    %v8286 = vunpack.c.l.b16 %v8020
    %v8287 = vunpack.c.h.b16 %v8020
    %v8288 = vunpack.c.l.b16 %v8021
    %v8289 = vunpack.c.h.b16 %v8021
    %v8290 = vunpack.c.l.b16 %v8022
    %v8291 = vunpack.c.h.b16 %v8022
    %v8292 = vunpack.c.l.b16 %v8023
    %v8293 = vunpack.c.h.b16 %v8023
    %v8294 = vunpack.c.l.b16 %v8024
    %v8295 = vunpack.c.h.b16 %v8024
    %v8296 = vunpack.c.l.b16 %v8025
    %v8297 = vunpack.c.h.b16 %v8025
    %v8298 = vunpack.c.l.b16 %v8026
    %v8299 = vunpack.c.h.b16 %v8026
    %v8300 = vunpack.c.l.b16 %v8027
    %v8301 = vunpack.c.h.b16 %v8027
    %v8302 = vunpack.c.l.b16 %v8028
    %v8303 = vunpack.c.h.b16 %v8028
    %v8304 = vunpack.c.l.b16 %v8029
    %v8305 = vunpack.c.h.b16 %v8029
    %v8306 = vunpack.c.l.b16 %v8030
    %v8307 = vunpack.c.h.b16 %v8030
    %v8308 = vunpack.c.l.b16 %v8031
    %v8309 = vunpack.c.h.b16 %v8031
    %v8310 = vunpack.c.l.b16 %v8032
    %v8311 = vunpack.c.h.b16 %v8032
    %v8312 = vunpack.c.l.b16 %v8033
    %v8313 = vunpack.c.h.b16 %v8033
    %v8314 = vunpack.c.l.b16 %v8034
    %v8315 = vunpack.c.h.b16 %v8034
    %v8316 = vunpack.c.l.b16 %v8035
    %v8317 = vunpack.c.h.b16 %v8035
    %v8318 = vunpack.c.l.b16 %v8036
    %v8319 = vunpack.c.h.b16 %v8036
    %v8320 = vunpack.c.l.b16 %v8037
    %v8321 = vunpack.c.h.b16 %v8037
    %v8322 = vunpack.c.l.b16 %v8038
    %v8323 = vunpack.c.h.b16 %v8038
    %v8324 = vunpack.c.l.b16 %v8039
    %v8325 = vunpack.c.h.b16 %v8039
    %v8326 = vunpack.c.l.b16 %v8040
    %v8327 = vunpack.c.h.b16 %v8040
    %v8328 = vunpack.c.l.b16 %v8041
    %v8329 = vunpack.c.h.b16 %v8041
    %v8330 = vunpack.c.l.b16 %v8042
    %v8331 = vunpack.c.h.b16 %v8042
    %v8332 = vunpack.c.l.b16 %v8043
    %v8333 = vunpack.c.h.b16 %v8043
    %v8334 = vunpack.c.l.b16 %v8044
    %v8335 = vunpack.c.h.b16 %v8044
    %v8336 = vunpack.c.l.b16 %v8045
    %v8337 = vunpack.c.h.b16 %v8045
    %v8338 = vunpack.c.l.b16 %v8046
    %v8339 = vunpack.c.h.b16 %v8046
    %v8340 = vunpack.c.l.b16 %v8047
    %v8341 = vunpack.c.h.b16 %v8047
    %v8342 = vunpack.c.l.b16 %v8048
    %v8343 = vunpack.c.h.b16 %v8048
    %v8344 = vunpack.c.l.b16 %v8049
    %v8345 = vunpack.c.h.b16 %v8049
    %v8346 = vunpack.c.l.b16 %v8050
    %v8347 = vunpack.c.h.b16 %v8050
    %v8348 = vunpack.c.l.b16 %v8051
    %v8349 = vunpack.c.h.b16 %v8051
    %v8350 = vunpack.c.l.b16 %v8052
    %v8351 = vunpack.c.h.b16 %v8052
    %v8352 = vunpack.c.l.b16 %v8053
    %v8353 = vunpack.c.h.b16 %v8053
    %v8354 = vunpack.c.l.b16 %v8054
    %v8355 = vunpack.c.h.b16 %v8054
    %v8356 = vunpack.c.l.b16 %v8055
    %v8357 = vunpack.c.h.b16 %v8055
    %v8358 = vunpack.c.l.b16 %v8056
    %v8359 = vunpack.c.h.b16 %v8056
    %v8360 = vunpack.c.l.b16 %v8057
    %v8361 = vunpack.c.h.b16 %v8057
    %v8362 = vunpack.c.l.b16 %v8058
    %v8363 = vunpack.c.h.b16 %v8058
    %v8364 = vunpack.c.l.b16 %v8059
    %v8365 = vunpack.c.h.b16 %v8059
    %v8366 = vunpack.c.l.b16 %v8060
    %v8367 = vunpack.c.h.b16 %v8060
    %v8368 = vunpack.c.l.b16 %v8061
    %v8369 = vunpack.c.h.b16 %v8061
    %v8370 = vunpack.c.l.b16 %v8062
    %v8371 = vunpack.c.h.b16 %v8062
    %v8372 = vunpack.c.l.b16 %v8063
    %v8373 = vunpack.c.h.b16 %v8063
    %v8374 = vunpack.c.l.b16 %v8064
    %v8375 = vunpack.c.h.b16 %v8064
    %v8376 = vunpack.c.l.b16 %v8065
    %v8377 = vunpack.c.h.b16 %v8065
    %v8378 = vunpack.c.l.b16 %v8066
    %v8379 = vunpack.c.h.b16 %v8066
    %v8380 = vunpack.c.l.b16 %v8067
    %v8381 = vunpack.c.h.b16 %v8067
    %v8382 = vunpack.c.l.b16 %v8068
    %v8383 = vunpack.c.h.b16 %v8068
    %v8384 = vunpack.c.l.b16 %v8069
    %v8385 = vunpack.c.h.b16 %v8069
    %v8386 = vunpack.c.l.b16 %v8070
    %v8387 = vunpack.c.h.b16 %v8070
    %v8388 = vunpack.c.l.b16 %v8071
    %v8389 = vunpack.c.h.b16 %v8071
    %v8390 = vunpack.c.l.b16 %v8072
    %v8391 = vunpack.c.h.b16 %v8072
    %v8392 = vunpack.c.l.b16 %v8073
    %v8393 = vunpack.c.h.b16 %v8073
    %v8394 = vunpack.c.l.b16 %v8074
    %v8395 = vunpack.c.h.b16 %v8074
    %v8396 = vunpack.c.l.b16 %v8075
    %v8397 = vunpack.c.h.b16 %v8075
    %v8398 = vunpack.c.l.b16 %v8076
    %v8399 = vunpack.c.h.b16 %v8076
    %v8400 = vunpack.c.l.b16 %v8077
    %v8401 = vunpack.c.h.b16 %v8077
    %v8402 = vunpack.c.l.b16 %v8078
    %v8403 = vunpack.c.h.b16 %v8078
    %v8404 = vunpack.c.l.b16 %v8079
    %v8405 = vunpack.c.h.b16 %v8079
    %v8406 = vunpack.c.l.b16 %v8080
    %v8407 = vunpack.c.h.b16 %v8080
    %v8408 = vunpack.c.l.b16 %v8081
    %v8409 = vunpack.c.h.b16 %v8081
    %v8410 = vunpack.c.l.b16 %v8082
    %v8411 = vunpack.c.h.b16 %v8082
    %v8412 = vunpack.c.l.b16 %v8083
    %v8413 = vunpack.c.h.b16 %v8083
    %v8414 = vunpack.c.l.b16 %v8084
    %v8415 = vunpack.c.h.b16 %v8084
    %v8416 = vunpack.c.l.b16 %v8085
    %v8417 = vunpack.c.h.b16 %v8085
    %v8418 = vunpack.c.l.b16 %v8086
    %v8419 = vunpack.c.h.b16 %v8086
    %v8420 = vunpack.c.l.b16 %v8087
    %v8421 = vunpack.c.h.b16 %v8087
    %v8422 = vunpack.c.l.b16 %v8088
    %v8423 = vunpack.c.h.b16 %v8088
    %v8424 = vunpack.c.l.b16 %v8089
    %v8425 = vunpack.c.h.b16 %v8089
    %v8426 = vunpack.c.l.b16 %v8090
    %v8427 = vunpack.c.h.b16 %v8090
    %v8428 = vunpack.c.l.b16 %v8091
    %v8429 = vunpack.c.h.b16 %v8091
    %v8430 = vunpack.c.l.b16 %v8092
    %v8431 = vunpack.c.h.b16 %v8092
    %v8432 = vunpack.c.l.b16 %v8093
    %v8433 = vunpack.c.h.b16 %v8093
    %v8434 = vunpack.c.l.b16 %v8094
    %v8435 = vunpack.c.h.b16 %v8094
    %v8436 = vunpack.c.l.b16 %v8095
    %v8437 = vunpack.c.h.b16 %v8095
    %v8438 = vunpack.c.l.b16 %v8096
    %v8439 = vunpack.c.h.b16 %v8096
    %v8440 = vunpack.c.l.b16 %v8097
    %v8441 = vunpack.c.h.b16 %v8097
    %v8442 = vunpack.c.l.b16 %v8098
    %v8443 = vunpack.c.h.b16 %v8098
    %v8444 = vunpack.c.l.b16 %v8099
    %v8445 = vunpack.c.h.b16 %v8099
    %v8446 = vunpack.c.l.b16 %v8100
    %v8447 = vunpack.c.h.b16 %v8100
    %v8448 = vunpack.c.l.b16 %v8101
    %v8449 = vunpack.c.h.b16 %v8101
    %v8450 = vunpack.c.l.b16 %v8102
    %v8451 = vunpack.c.h.b16 %v8102
    %v8452 = vunpack.c.l.b16 %v8103
    %v8453 = vunpack.c.h.b16 %v8103
    %v8454 = vunpack.c.l.b16 %v8104
    %v8455 = vunpack.c.h.b16 %v8104
    %v8456 = vunpack.c.l.b16 %v8105
    %v8457 = vunpack.c.h.b16 %v8105
    %v8458 = vunpack.c.l.b16 %v8106
    %v8459 = vunpack.c.h.b16 %v8106
    %v8460 = vunpack.c.l.b16 %v8107
    %v8461 = vunpack.c.h.b16 %v8107
    %v8462 = vunpack.c.l.b16 %v8108
    %v8463 = vunpack.c.h.b16 %v8108
    %v8464 = vunpack.c.l.b16 %v8109
    %v8465 = vunpack.c.h.b16 %v8109
    %v8466 = vunpack.c.l.b16 %v8110
    %v8467 = vunpack.c.h.b16 %v8110
    %v8468 = vunpack.c.l.b16 %v8111
    %v8469 = vunpack.c.h.b16 %v8111
    %v8470 = vunpack.c.l.b16 %v8112
    %v8471 = vunpack.c.h.b16 %v8112
    %v8472 = vunpack.c.l.b16 %v8113
    %v8473 = vunpack.c.h.b16 %v8113
    %v8474 = vunpack.c.l.b16 %v8114
    %v8475 = vunpack.c.h.b16 %v8114
    %v8476 = vunpack.c.l.b16 %v8115
    %v8477 = vunpack.c.h.b16 %v8115
    %v8478 = vunpack.c.l.b16 %v8116
    %v8479 = vunpack.c.h.b16 %v8116
    %v8480 = vunpack.c.l.b16 %v8117
    %v8481 = vunpack.c.h.b16 %v8117
    %v8482 = vunpack.c.l.b16 %v8118
    %v8483 = vunpack.c.h.b16 %v8118
    %v8484 = vunpack.c.l.b16 %v8119
    %v8485 = vunpack.c.h.b16 %v8119
    %v8486 = vunpack.c.l.b16 %v8120
    %v8487 = vunpack.c.h.b16 %v8120
    %v8488 = vunpack.c.l.b16 %v8121
    %v8489 = vunpack.c.h.b16 %v8121
    %v8490 = vunpack.c.l.b16 %v8122
    %v8491 = vunpack.c.h.b16 %v8122
    %v8492 = vunpack.c.l.b16 %v8123
    %v8493 = vunpack.c.h.b16 %v8123
    %v8494 = vunpack.c.l.b16 %v8124
    %v8495 = vunpack.c.h.b16 %v8124
    %v8496 = vunpack.c.l.b16 %v8125
    %v8497 = vunpack.c.h.b16 %v8125
    %v8498 = vunpack.c.l.b16 %v8126
    %v8499 = vunpack.c.h.b16 %v8126
    %v8500 = vunpack.c.l.b16 %v8127
    %v8501 = vunpack.c.h.b16 %v8127
    %v8502 = vunpack.c.l.b16 %v8128
    %v8503 = vunpack.c.h.b16 %v8128
    %v8504 = vunpack.c.l.b16 %v8129
    %v8505 = vunpack.c.h.b16 %v8129
    %v8506 = vunpack.c.l.b16 %v8130
    %v8507 = vunpack.c.h.b16 %v8130
    %v8508 = vunpack.c.l.b16 %v8131
    %v8509 = vunpack.c.h.b16 %v8131
    %v8510 = vunpack.c.l.b16 %v8132
    %v8511 = vunpack.c.h.b16 %v8132
    %v8512 = vunpack.c.l.b16 %v8133
    %v8513 = vunpack.c.h.b16 %v8133
    %v8514 = vunpack.c.l.b16 %v8134
    %v8515 = vunpack.c.h.b16 %v8134
    %v8516 = vunpack.c.l.b16 %v8135
    %v8517 = vunpack.c.h.b16 %v8135
    %v8518 = vunpack.c.l.b16 %v8136
    %v8519 = vunpack.c.h.b16 %v8136
    %v8520 = vunpack.c.l.b16 %v8137
    %v8521 = vunpack.c.h.b16 %v8137
    %v8522 = vunpack.c.l.b16 %v8138
    %v8523 = vunpack.c.h.b16 %v8138
    %v8524 = vunpack.c.l.b16 %v8139
    %v8525 = vunpack.c.h.b16 %v8139
    %v8526 = vunpack.c.l.b16 %v8140
    %v8527 = vunpack.c.h.b16 %v8140
    %v8528 = vunpack.c.l.b16 %v8141
    %v8529 = vunpack.c.h.b16 %v8141
    %v8530 = vunpack.c.l.b16 %v8142
    %v8531 = vunpack.c.h.b16 %v8142
    %v8532 = vunpack.c.l.b16 %v8143
    %v8533 = vunpack.c.h.b16 %v8143
    %v8534 = vpack.c.b16 %v8280, %v8278
    %v8535 = vpack.c.b16 %v8281, %v8279
    %v8536 = vpack.c.b16 %v8284, %v8282
    %v8537 = vpack.c.b16 %v8285, %v8283
    %v8538 = vpack.c.b16 %v8288, %v8286
    %v8539 = vpack.c.b16 %v8289, %v8287
    %v8540 = vpack.c.b16 %v8292, %v8290
    %v8541 = vpack.c.b16 %v8293, %v8291
    %v8542 = vpack.c.b16 %v8296, %v8294
    %v8543 = vpack.c.b16 %v8297, %v8295
    %v8544 = vpack.c.b16 %v8300, %v8298
    %v8545 = vpack.c.b16 %v8301, %v8299
    %v8546 = vpack.c.b16 %v8304, %v8302
    %v8547 = vpack.c.b16 %v8305, %v8303
    %v8548 = vpack.c.b16 %v8308, %v8306
    %v8549 = vpack.c.b16 %v8309, %v8307
    %v8550 = vpack.c.b16 %v8312, %v8310
    %v8551 = vpack.c.b16 %v8313, %v8311
    %v8552 = vpack.c.b16 %v8316, %v8314
    %v8553 = vpack.c.b16 %v8317, %v8315
    %v8554 = vpack.c.b16 %v8320, %v8318
    %v8555 = vpack.c.b16 %v8321, %v8319
    %v8556 = vpack.c.b16 %v8324, %v8322
    %v8557 = vpack.c.b16 %v8325, %v8323
    %v8558 = vpack.c.b16 %v8328, %v8326
    %v8559 = vpack.c.b16 %v8329, %v8327
    %v8560 = vpack.c.b16 %v8332, %v8330
    %v8561 = vpack.c.b16 %v8333, %v8331
    %v8562 = vpack.c.b16 %v8336, %v8334
    %v8563 = vpack.c.b16 %v8337, %v8335
    %v8564 = vpack.c.b16 %v8340, %v8338
    %v8565 = vpack.c.b16 %v8341, %v8339
    %v8566 = vpack.c.b16 %v8344, %v8342
    %v8567 = vpack.c.b16 %v8345, %v8343
    %v8568 = vpack.c.b16 %v8348, %v8346
    %v8569 = vpack.c.b16 %v8349, %v8347
    %v8570 = vpack.c.b16 %v8352, %v8350
    %v8571 = vpack.c.b16 %v8353, %v8351
    %v8572 = vpack.c.b16 %v8356, %v8354
    %v8573 = vpack.c.b16 %v8357, %v8355
    %v8574 = vpack.c.b16 %v8360, %v8358
    %v8575 = vpack.c.b16 %v8361, %v8359
    %v8576 = vpack.c.b16 %v8364, %v8362
    %v8577 = vpack.c.b16 %v8365, %v8363
    %v8578 = vpack.c.b16 %v8368, %v8366
    %v8579 = vpack.c.b16 %v8369, %v8367
    %v8580 = vpack.c.b16 %v8372, %v8370
    %v8581 = vpack.c.b16 %v8373, %v8371
    %v8582 = vpack.c.b16 %v8376, %v8374
    %v8583 = vpack.c.b16 %v8377, %v8375
    %v8584 = vpack.c.b16 %v8380, %v8378
    %v8585 = vpack.c.b16 %v8381, %v8379
    %v8586 = vpack.c.b16 %v8384, %v8382
    %v8587 = vpack.c.b16 %v8385, %v8383
    %v8588 = vpack.c.b16 %v8388, %v8386
    %v8589 = vpack.c.b16 %v8389, %v8387
    %v8590 = vpack.c.b16 %v8392, %v8390
    %v8591 = vpack.c.b16 %v8393, %v8391
    %v8592 = vpack.c.b16 %v8396, %v8394
    %v8593 = vpack.c.b16 %v8397, %v8395
    %v8594 = vpack.c.b16 %v8400, %v8398
    %v8595 = vpack.c.b16 %v8401, %v8399
    %v8596 = vpack.c.b16 %v8404, %v8402
    %v8597 = vpack.c.b16 %v8405, %v8403
    %v8598 = vpack.c.b16 %v8408, %v8406
    %v8599 = vpack.c.b16 %v8409, %v8407
    %v8600 = vpack.c.b16 %v8412, %v8410
    %v8601 = vpack.c.b16 %v8413, %v8411
    %v8602 = vpack.c.b16 %v8416, %v8414
    %v8603 = vpack.c.b16 %v8417, %v8415
    %v8604 = vpack.c.b16 %v8420, %v8418
    %v8605 = vpack.c.b16 %v8421, %v8419
    %v8606 = vpack.c.b16 %v8424, %v8422
    %v8607 = vpack.c.b16 %v8425, %v8423
    %v8608 = vpack.c.b16 %v8428, %v8426
    %v8609 = vpack.c.b16 %v8429, %v8427
    %v8610 = vpack.c.b16 %v8432, %v8430
    %v8611 = vpack.c.b16 %v8433, %v8431
    %v8612 = vpack.c.b16 %v8436, %v8434
    %v8613 = vpack.c.b16 %v8437, %v8435
    %v8614 = vpack.c.b16 %v8440, %v8438
    %v8615 = vpack.c.b16 %v8441, %v8439
    %v8616 = vpack.c.b16 %v8444, %v8442
    %v8617 = vpack.c.b16 %v8445, %v8443
    %v8618 = vpack.c.b16 %v8448, %v8446
    %v8619 = vpack.c.b16 %v8449, %v8447
    %v8620 = vpack.c.b16 %v8452, %v8450
    %v8621 = vpack.c.b16 %v8453, %v8451
    %v8622 = vpack.c.b16 %v8456, %v8454
    %v8623 = vpack.c.b16 %v8457, %v8455
    %v8624 = vpack.c.b16 %v8460, %v8458
    %v8625 = vpack.c.b16 %v8461, %v8459
    %v8626 = vpack.c.b16 %v8464, %v8462
    %v8627 = vpack.c.b16 %v8465, %v8463
    %v8628 = vpack.c.b16 %v8468, %v8466
    %v8629 = vpack.c.b16 %v8469, %v8467
    %v8630 = vpack.c.b16 %v8472, %v8470
    %v8631 = vpack.c.b16 %v8473, %v8471
    %v8632 = vpack.c.b16 %v8476, %v8474
    %v8633 = vpack.c.b16 %v8477, %v8475
    %v8634 = vpack.c.b16 %v8480, %v8478
    %v8635 = vpack.c.b16 %v8481, %v8479
    %v8636 = vpack.c.b16 %v8484, %v8482
    %v8637 = vpack.c.b16 %v8485, %v8483
    %v8638 = vpack.c.b16 %v8488, %v8486
    %v8639 = vpack.c.b16 %v8489, %v8487
    %v8640 = vpack.c.b16 %v8492, %v8490
    %v8641 = vpack.c.b16 %v8493, %v8491
    %v8642 = vpack.c.b16 %v8496, %v8494
    %v8643 = vpack.c.b16 %v8497, %v8495
    %v8644 = vpack.c.b16 %v8500, %v8498
    %v8645 = vpack.c.b16 %v8501, %v8499
    %v8646 = vpack.c.b16 %v8504, %v8502
    %v8647 = vpack.c.b16 %v8505, %v8503
    %v8648 = vpack.c.b16 %v8508, %v8506
    %v8649 = vpack.c.b16 %v8509, %v8507
    %v8650 = vpack.c.b16 %v8512, %v8510
    %v8651 = vpack.c.b16 %v8513, %v8511
    %v8652 = vpack.c.b16 %v8516, %v8514
    %v8653 = vpack.c.b16 %v8517, %v8515
    %v8654 = vpack.c.b16 %v8520, %v8518
    %v8655 = vpack.c.b16 %v8521, %v8519
    %v8656 = vpack.c.b16 %v8524, %v8522
    %v8657 = vpack.c.b16 %v8525, %v8523
    %v8658 = vpack.c.b16 %v8528, %v8526
    %v8659 = vpack.c.b16 %v8529, %v8527
    %v8660 = vpack.c.b16 %v8532, %v8530
    %v8661 = vpack.c.b16 %v8533, %v8531
    %8790 = vmatpush.bf16.msra.mxu0 %v8548
    %8791 = vmatpush.bf16.msra.mxu0 %v8546
    %8792 = vmatpush.bf16.msra.mxu0 %v8544
    %8793 = vmatpush.bf16.msra.mxu0 %v8542
    %8794 = vmatpush.bf16.msra.mxu0 %v8540
    %8795 = vmatpush.bf16.msra.mxu0 %v8538
    %8796 = vmatpush.bf16.msra.mxu0 %v8536
    %8797 = vmatpush.bf16.msra.mxu0 %v8534
    %8798 = vmatmul.bf16.gmra.mxu0 %v8008
    %v8799 = vpop.f32.mrf.mxu0
    %v8800 = vadd.f32 %v8146, %v8799
    %v8801 = vpop.f32.mrf.mxu0
    %8802 = vdwg.mxu0
    %8803 = vmatpush.bf16.msra.mxu0 %v8564
    %8804 = vmatpush.bf16.msra.mxu0 %v8562
    %8805 = vmatpush.bf16.msra.mxu0 %v8560
    %8806 = vmatpush.bf16.msra.mxu0 %v8558
    %8807 = vmatpush.bf16.msra.mxu0 %v8556
    %8808 = vmatpush.bf16.msra.mxu0 %v8554
    %8809 = vmatpush.bf16.msra.mxu0 %v8552
    %8810 = vmatpush.bf16.msra.mxu0 %v8550
    %8811 = vmatmul.bf16.gmra.mxu0 %v8009
    %v8812 = vpop.f32.mrf.mxu0
    %v8813 = vadd.f32 %v8800, %v8812
    %v8814 = vpop.f32.mrf.mxu0
    %8815 = vdwg.mxu0
    %8816 = vmatpush.bf16.msra.mxu0 %v8580
    %8817 = vmatpush.bf16.msra.mxu0 %v8578
    %8818 = vmatpush.bf16.msra.mxu0 %v8576
    %8819 = vmatpush.bf16.msra.mxu0 %v8574
    %8820 = vmatpush.bf16.msra.mxu0 %v8572
    %8821 = vmatpush.bf16.msra.mxu0 %v8570
    %8822 = vmatpush.bf16.msra.mxu0 %v8568
    %8823 = vmatpush.bf16.msra.mxu0 %v8566
    %8824 = vmatmul.bf16.gmra.mxu0 %v8010
    %v8825 = vpop.f32.mrf.mxu0
    %v8826 = vadd.f32 %v8813, %v8825
    %v8827 = vpop.f32.mrf.mxu0
    %8828 = vdwg.mxu0
    %8829 = vmatpush.bf16.msra.mxu0 %v8596
    %8830 = vmatpush.bf16.msra.mxu0 %v8594
    %8831 = vmatpush.bf16.msra.mxu0 %v8592
    %8832 = vmatpush.bf16.msra.mxu0 %v8590
    %8833 = vmatpush.bf16.msra.mxu0 %v8588
    %8834 = vmatpush.bf16.msra.mxu0 %v8586
    %8835 = vmatpush.bf16.msra.mxu0 %v8584
    %8836 = vmatpush.bf16.msra.mxu0 %v8582
    %8837 = vmatmul.bf16.gmra.mxu0 %v8011
    %v8838 = vpop.f32.mrf.mxu0
    %v8839 = vadd.f32 %v8826, %v8838
    %v8840 = vpop.f32.mrf.mxu0
    %8841 = vdwg.mxu0
    %8842 = vmatpush.bf16.msra.mxu0 %v8612
    %8843 = vmatpush.bf16.msra.mxu0 %v8610
    %8844 = vmatpush.bf16.msra.mxu0 %v8608
    %8845 = vmatpush.bf16.msra.mxu0 %v8606
    %8846 = vmatpush.bf16.msra.mxu0 %v8604
    %8847 = vmatpush.bf16.msra.mxu0 %v8602
    %8848 = vmatpush.bf16.msra.mxu0 %v8600
    %8849 = vmatpush.bf16.msra.mxu0 %v8598
    %8850 = vmatmul.bf16.gmra.mxu0 %v8012
    %v8851 = vpop.f32.mrf.mxu0
    %v8852 = vadd.f32 %v8839, %v8851
    %v8853 = vpop.f32.mrf.mxu0
    %8854 = vdwg.mxu0
    %8855 = vmatpush.bf16.msra.mxu0 %v8628
    %8856 = vmatpush.bf16.msra.mxu0 %v8626
    %8857 = vmatpush.bf16.msra.mxu0 %v8624
    %8858 = vmatpush.bf16.msra.mxu0 %v8622
    %8859 = vmatpush.bf16.msra.mxu0 %v8620
    %8860 = vmatpush.bf16.msra.mxu0 %v8618
    %8861 = vmatpush.bf16.msra.mxu0 %v8616
    %8862 = vmatpush.bf16.msra.mxu0 %v8614
    %8863 = vmatmul.bf16.gmra.mxu0 %v8013
    %v8864 = vpop.f32.mrf.mxu0
    %v8865 = vadd.f32 %v8852, %v8864
    %v8866 = vpop.f32.mrf.mxu0
    %8867 = vdwg.mxu0
    %8868 = vmatpush.bf16.msra.mxu0 %v8644
    %8869 = vmatpush.bf16.msra.mxu0 %v8642
    %8870 = vmatpush.bf16.msra.mxu0 %v8640
    %8871 = vmatpush.bf16.msra.mxu0 %v8638
    %8872 = vmatpush.bf16.msra.mxu0 %v8636
    %8873 = vmatpush.bf16.msra.mxu0 %v8634
    %8874 = vmatpush.bf16.msra.mxu0 %v8632
    %8875 = vmatpush.bf16.msra.mxu0 %v8630
    %8876 = vmatmul.bf16.gmra.mxu0 %v8014
    %v8877 = vpop.f32.mrf.mxu0
    %v8878 = vadd.f32 %v8865, %v8877
    %v8879 = vpop.f32.mrf.mxu0
    %8880 = vdwg.mxu0
    %8881 = vmatpush.bf16.msra.mxu0 %v8660
    %8882 = vmatpush.bf16.msra.mxu0 %v8658
    %8883 = vmatpush.bf16.msra.mxu0 %v8656
    %8884 = vmatpush.bf16.msra.mxu0 %v8654
    %8885 = vmatpush.bf16.msra.mxu0 %v8652
    %8886 = vmatpush.bf16.msra.mxu0 %v8650
    %8887 = vmatpush.bf16.msra.mxu0 %v8648
    %8888 = vmatpush.bf16.msra.mxu0 %v8646
    %8889 = vmatmul.bf16.gmra.mxu0 %v8015
    %v8890 = vpop.f32.mrf.mxu0
    %v8891 = vadd.f32 %v8878, %v8890
    %v8892 = vpop.f32.mrf.mxu0
    %8893 = vdwg.mxu0
    %8894 = vmatpush.bf16.msra.mxu0 %v8549
    %8895 = vmatpush.bf16.msra.mxu0 %v8547
    %8896 = vmatpush.bf16.msra.mxu0 %v8545
    %8897 = vmatpush.bf16.msra.mxu0 %v8543
    %8898 = vmatpush.bf16.msra.mxu0 %v8541
    %8899 = vmatpush.bf16.msra.mxu0 %v8539
    %8900 = vmatpush.bf16.msra.mxu0 %v8537
    %8901 = vmatpush.bf16.msra.mxu0 %v8535
    %8902 = vmatmul.bf16.gmra.mxu0 %v8008
    %v8903 = vpop.f32.mrf.mxu0
    %v8904 = vadd.f32 %v8147, %v8903
    %v8905 = vpop.f32.mrf.mxu0
    %8906 = vdwg.mxu0
    %8907 = vmatpush.bf16.msra.mxu0 %v8565
    %8908 = vmatpush.bf16.msra.mxu0 %v8563
    %8909 = vmatpush.bf16.msra.mxu0 %v8561
    %8910 = vmatpush.bf16.msra.mxu0 %v8559
    %8911 = vmatpush.bf16.msra.mxu0 %v8557
    %8912 = vmatpush.bf16.msra.mxu0 %v8555
    %8913 = vmatpush.bf16.msra.mxu0 %v8553
    %8914 = vmatpush.bf16.msra.mxu0 %v8551
    %8915 = vmatmul.bf16.gmra.mxu0 %v8009
    %v8916 = vpop.f32.mrf.mxu0
    %v8917 = vadd.f32 %v8904, %v8916
    %v8918 = vpop.f32.mrf.mxu0
    %8919 = vdwg.mxu0
    %8920 = vmatpush.bf16.msra.mxu0 %v8581
    %8921 = vmatpush.bf16.msra.mxu0 %v8579
    %8922 = vmatpush.bf16.msra.mxu0 %v8577
    %8923 = vmatpush.bf16.msra.mxu0 %v8575
    %8924 = vmatpush.bf16.msra.mxu0 %v8573
    %8925 = vmatpush.bf16.msra.mxu0 %v8571
    %8926 = vmatpush.bf16.msra.mxu0 %v8569
    %8927 = vmatpush.bf16.msra.mxu0 %v8567
    %8928 = vmatmul.bf16.gmra.mxu0 %v8010
    %v8929 = vpop.f32.mrf.mxu0
    %v8930 = vadd.f32 %v8917, %v8929
    %v8931 = vpop.f32.mrf.mxu0
    %8932 = vdwg.mxu0
    %8933 = vmatpush.bf16.msra.mxu0 %v8597
    %8934 = vmatpush.bf16.msra.mxu0 %v8595
    %8935 = vmatpush.bf16.msra.mxu0 %v8593
    %8936 = vmatpush.bf16.msra.mxu0 %v8591
    %8937 = vmatpush.bf16.msra.mxu0 %v8589
    %8938 = vmatpush.bf16.msra.mxu0 %v8587
    %8939 = vmatpush.bf16.msra.mxu0 %v8585
    %8940 = vmatpush.bf16.msra.mxu0 %v8583
    %8941 = vmatmul.bf16.gmra.mxu0 %v8011
    %v8942 = vpop.f32.mrf.mxu0
    %v8943 = vadd.f32 %v8930, %v8942
    %v8944 = vpop.f32.mrf.mxu0
    %8945 = vdwg.mxu0
    %8946 = vmatpush.bf16.msra.mxu0 %v8613
    %8947 = vmatpush.bf16.msra.mxu0 %v8611
    %8948 = vmatpush.bf16.msra.mxu0 %v8609
    %8949 = vmatpush.bf16.msra.mxu0 %v8607
    %8950 = vmatpush.bf16.msra.mxu0 %v8605
    %8951 = vmatpush.bf16.msra.mxu0 %v8603
    %8952 = vmatpush.bf16.msra.mxu0 %v8601
    %8953 = vmatpush.bf16.msra.mxu0 %v8599
    %8954 = vmatmul.bf16.gmra.mxu0 %v8012
    %v8955 = vpop.f32.mrf.mxu0
    %v8956 = vadd.f32 %v8943, %v8955
    %v8957 = vpop.f32.mrf.mxu0
    %8958 = vdwg.mxu0
    %8959 = vmatpush.bf16.msra.mxu0 %v8629
    %8960 = vmatpush.bf16.msra.mxu0 %v8627
    %8961 = vmatpush.bf16.msra.mxu0 %v8625
    %8962 = vmatpush.bf16.msra.mxu0 %v8623
    %8963 = vmatpush.bf16.msra.mxu0 %v8621
    %8964 = vmatpush.bf16.msra.mxu0 %v8619
    %8965 = vmatpush.bf16.msra.mxu0 %v8617
    %8966 = vmatpush.bf16.msra.mxu0 %v8615
    %8967 = vmatmul.bf16.gmra.mxu0 %v8013
    %v8968 = vpop.f32.mrf.mxu0
    %v8969 = vadd.f32 %v8956, %v8968
    %v8970 = vpop.f32.mrf.mxu0
    %8971 = vdwg.mxu0
    %8972 = vmatpush.bf16.msra.mxu0 %v8645
    %8973 = vmatpush.bf16.msra.mxu0 %v8643
    %8974 = vmatpush.bf16.msra.mxu0 %v8641
    %8975 = vmatpush.bf16.msra.mxu0 %v8639
    %8976 = vmatpush.bf16.msra.mxu0 %v8637
    %8977 = vmatpush.bf16.msra.mxu0 %v8635
    %8978 = vmatpush.bf16.msra.mxu0 %v8633
    %8979 = vmatpush.bf16.msra.mxu0 %v8631
    %8980 = vmatmul.bf16.gmra.mxu0 %v8014
    %v8981 = vpop.f32.mrf.mxu0
    %v8982 = vadd.f32 %v8969, %v8981
    %v8983 = vpop.f32.mrf.mxu0
    %8984 = vdwg.mxu0
    %8985 = vmatpush.bf16.msra.mxu0 %v8661
    %8986 = vmatpush.bf16.msra.mxu0 %v8659
    %8987 = vmatpush.bf16.msra.mxu0 %v8657
    %8988 = vmatpush.bf16.msra.mxu0 %v8655
    %8989 = vmatpush.bf16.msra.mxu0 %v8653
    %8990 = vmatpush.bf16.msra.mxu0 %v8651
    %8991 = vmatpush.bf16.msra.mxu0 %v8649
    %8992 = vmatpush.bf16.msra.mxu0 %v8647
    %8993 = vmatmul.bf16.gmra.mxu0 %v8015
    %v8994 = vpop.f32.mrf.mxu0
    %v8995 = vadd.f32 %v8982, %v8994
    %v8996 = vpop.f32.mrf.mxu0
    %8997 = vdwg.mxu0
    %v8998 = vmax.f32 %v8891, 0.0
    %v8999 = vmax.f32 %v8995, 0.0
    %v9000 = vpack.c.bf16 %v8998, %v8998
    %v9001 = vpack.c.bf16 %v8999, %v8999
    %v9002 = vld [vmem:[%s5] sm:$0xf]
    %v9003 = vld [vmem:[%s5 + $0x4] sm:$0xf]
    %v9004 = vld [vmem:[%s5 + $0x8] sm:$0xf]
    %v9005 = vld [vmem:[%s5 + $0xc] sm:$0xf]
    %v9006 = vld [vmem:[%s5 + $0x10] sm:$0xf]
    %v9007 = vld [vmem:[%s5 + $0x14] sm:$0xf]
    %v9008 = vld [vmem:[%s5 + $0x18] sm:$0xf]
    %v9009 = vld [vmem:[%s5 + $0x1c] sm:$0xf]
    %v9010 = vld [vmem:[%s5 + $0x20] sm:$0xf]
    %v9011 = vld [vmem:[%s5 + $0x24] sm:$0xf]
    %v9012 = vld [vmem:[%s5 + $0x28] sm:$0xf]
    %v9013 = vld [vmem:[%s5 + $0x2c] sm:$0xf]
    %v9014 = vld [vmem:[%s5 + $0x30] sm:$0xf]
    %v9015 = vld [vmem:[%s5 + $0x34] sm:$0xf]
    %v9016 = vld [vmem:[%s5 + $0x38] sm:$0xf]
    %v9017 = vld [vmem:[%s5 + $0x3c] sm:$0xf]
    %v9018 = vld [vmem:[%s5 + $0x40] sm:$0xf]
    %v9019 = vld [vmem:[%s5 + $0x44] sm:$0xf]
    %v9020 = vld [vmem:[%s5 + $0x48] sm:$0xf]
    %v9021 = vld [vmem:[%s5 + $0x4c] sm:$0xf]
    %v9022 = vld [vmem:[%s5 + $0x50] sm:$0xf]
    %v9023 = vld [vmem:[%s5 + $0x54] sm:$0xf]
    %v9024 = vld [vmem:[%s5 + $0x58] sm:$0xf]
    %v9025 = vld [vmem:[%s5 + $0x5c] sm:$0xf]
    %v9026 = vld [vmem:[%s5 + $0x60] sm:$0xf]
    %v9027 = vld [vmem:[%s5 + $0x64] sm:$0xf]
    %v9028 = vld [vmem:[%s5 + $0x68] sm:$0xf]
    %v9029 = vld [vmem:[%s5 + $0x6c] sm:$0xf]
    %v9030 = vld [vmem:[%s5 + $0x70] sm:$0xf]
    %v9031 = vld [vmem:[%s5 + $0x74] sm:$0xf]
    %v9032 = vld [vmem:[%s5 + $0x78] sm:$0xf]
    %v9033 = vld [vmem:[%s5 + $0x7c] sm:$0xf]
    %v9034 = vld [vmem:[#allocation11] sm:$0x1]
    %v9036 = vperm.slane %v9034, 0
    %v9070 = vunpack.c.l.b16 %v9002
    %v9071 = vunpack.c.l.b16 %v9003
    %v9072 = vunpack.c.l.b16 %v9004
    %v9073 = vunpack.c.l.b16 %v9005
    %v9074 = vunpack.c.l.b16 %v9006
    %v9075 = vunpack.c.l.b16 %v9007
    %v9076 = vunpack.c.l.b16 %v9008
    %v9077 = vunpack.c.l.b16 %v9009
    %v9078 = vunpack.c.l.b16 %v9010
    %v9079 = vunpack.c.l.b16 %v9011
    %v9080 = vunpack.c.l.b16 %v9012
    %v9081 = vunpack.c.l.b16 %v9013
    %v9082 = vunpack.c.l.b16 %v9014
    %v9083 = vunpack.c.l.b16 %v9015
    %v9084 = vunpack.c.l.b16 %v9016
    %v9085 = vunpack.c.l.b16 %v9017
    %v9086 = vunpack.c.l.b16 %v9018
    %v9087 = vunpack.c.l.b16 %v9019
    %v9088 = vunpack.c.l.b16 %v9020
    %v9089 = vunpack.c.l.b16 %v9021
    %v9090 = vunpack.c.l.b16 %v9022
    %v9091 = vunpack.c.l.b16 %v9023
    %v9092 = vunpack.c.l.b16 %v9024
    %v9093 = vunpack.c.l.b16 %v9025
    %v9094 = vunpack.c.l.b16 %v9026
    %v9095 = vunpack.c.l.b16 %v9027
    %v9096 = vunpack.c.l.b16 %v9028
    %v9097 = vunpack.c.l.b16 %v9029
    %v9098 = vunpack.c.l.b16 %v9030
    %v9099 = vunpack.c.l.b16 %v9031
    %v9100 = vunpack.c.l.b16 %v9032
    %v9101 = vunpack.c.l.b16 %v9033
    %v9102 = vpack.c.b16 %v9071, %v9070
    %v9103 = vpack.c.b16 %v9073, %v9072
    %v9104 = vpack.c.b16 %v9075, %v9074
    %v9105 = vpack.c.b16 %v9077, %v9076
    %v9106 = vpack.c.b16 %v9079, %v9078
    %v9107 = vpack.c.b16 %v9081, %v9080
    %v9108 = vpack.c.b16 %v9083, %v9082
    %v9109 = vpack.c.b16 %v9085, %v9084
    %v9110 = vpack.c.b16 %v9087, %v9086
    %v9111 = vpack.c.b16 %v9089, %v9088
    %v9112 = vpack.c.b16 %v9091, %v9090
    %v9113 = vpack.c.b16 %v9093, %v9092
    %v9114 = vpack.c.b16 %v9095, %v9094
    %v9115 = vpack.c.b16 %v9097, %v9096
    %v9116 = vpack.c.b16 %v9099, %v9098
    %v9117 = vpack.c.b16 %v9101, %v9100
    %9134 = vmatpush.bf16.msra.mxu0 %v9109
    %9135 = vmatpush.bf16.msra.mxu0 %v9108
    %9136 = vmatpush.bf16.msra.mxu0 %v9107
    %9137 = vmatpush.bf16.msra.mxu0 %v9106
    %9138 = vmatpush.bf16.msra.mxu0 %v9105
    %9139 = vmatpush.bf16.msra.mxu0 %v9104
    %9140 = vmatpush.bf16.msra.mxu0 %v9103
    %9141 = vmatpush.bf16.msra.mxu0 %v9102
    %9142 = vmatmul.bf16.gmra.mxu0 %v9000
    %v9143 = vpop.f32.mrf.mxu0
    %v9144 = vadd.f32 %v9036, %v9143
    %v9145 = vpop.f32.mrf.mxu0
    %9146 = vdwg.mxu0
    %9147 = vmatpush.bf16.msra.mxu0 %v9117
    %9148 = vmatpush.bf16.msra.mxu0 %v9116
    %9149 = vmatpush.bf16.msra.mxu0 %v9115
    %9150 = vmatpush.bf16.msra.mxu0 %v9114
    %9151 = vmatpush.bf16.msra.mxu0 %v9113
    %9152 = vmatpush.bf16.msra.mxu0 %v9112
    %9153 = vmatpush.bf16.msra.mxu0 %v9111
    %9154 = vmatpush.bf16.msra.mxu0 %v9110
    %9155 = vmatmul.bf16.gmra.mxu0 %v9001
    %v9156 = vpop.f32.mrf.mxu0
    %v9157 = vadd.f32 %v9144, %v9156
    %v9158 = vpop.f32.mrf.mxu0
    %9159 = vdwg.mxu0
    %v9160 = vlaneseq
    %v9161 = vand.u32 %v9160, 127
    %vm9162 = vcmp.eq.s32.totalorder %v9161, 0
    %v9163 = vxor.u32 %v9157, 2147483648
    %v9164 = vmul.f32 %v9163, 1.442695
    %v9165 = vpow.pop %v9164
    %v9166 = vadd.f32 %v9165, 1.0
    %v9167 = vrcp.pop %v9166
    %v9168 = vmul.f32 %v9166, %v9167
    %v9169 = vsub.f32 1.0, %v9168
    %v9170 = vmul.f32 %v9167, %v9169
    %v9171 = vadd.f32 %v9167, %v9170
    %vm9172 = vweird.f32 %v9166
    %vm9173 = vweird.f32 %v9167
    %vm9174 = vmor %vm9172, %vm9173
    %v9175 = vsel %vm9174, %v9167, %v9171
    %v9176 = vand.u32 2147483647, %v9166
    %vm9177 = vcmp.eq.f32.partialorder %v9176, 8.507059e+37
    %v9178 = vand.u32 %v9166, 2147483648
    %v9179 = vor.u32 1.1754944e-38, %v9178
    %v9180 = vsel %vm9177, %v9179, %v9175
    %v9181 = vmul.f32 1.0, %v9180
    %v9182 = vmul.f32 %v9181, 1.5707964
    %v9183 = vsel %vm9162, %v9157, %v9182
    %vm9184 = vcmask 9216
    %9185 = vst.msk [vmem:[#allocation13] sm:$0x3] %vm9184, %v9183
    // Predicated region
    $region54: #{tpu_custom_call.1} parent=1 // pred_check
      _
    $region55: #{tpu_custom_call.1} parent=1 // pred_check_branch
      %9187 = sbr.rel (0) target = $region57
    $region56: #{tpu_custom_call.1} parent=1 // pred_region
      %9189 = vsyncadd [#allocation4], 0
      %s9191 = sshll.u32 [#allocation13], 4
      %s9192 = int_to_ptr.vmem [resolvable:$true] %s9191
      %s9193 = sshll.u32 %s7, 4
      %s9194 = int_to_ptr.hbm [resolvable:$true] %s9193
      %9196 = dma.vmem_to_hbm [thread:$0]  %s9192, 32, %s9194, [#allocation4]
    $region57: #{tpu_custom_call.1} parent=1 // pred_fallthru
      _
    // Predicated region
    $region58: #{tpu_custom_call.1} parent=1 // pred_check
      _
    $region59: #{tpu_custom_call.1} parent=1 // pred_check_branch
      %9198 = sbr.rel (0) target = $region61
    $region60: #{tpu_custom_call.1} parent=1 // pred_region
      %9200 = dma.done [#allocation4], 32
    $region61: #{tpu_custom_call.1} parent=1 // pred_fallthru
      _
    %9201 = vsyncpa [#allocation3], 1
    %9202 = vsyncpa [#allocation6], 1
    %9203 = vsyncpa [#allocation9], 1
    %9204 = vsyncpa [#allocation12], 1
    %9205 = vsyncpa [#allocation4], 1

</llo_original>
